<compile_context>
chip_gen: v7x
topology: tpu7x:2x2x1
jax: 0.10.0
libtpu: 0.0.40
codegen_flags: <defaults>
</compile_context>

<pallas_src>
import jax
import jax.numpy as jnp
from jax import lax
from jax.experimental import pallas as pl
from jax.experimental.pallas import tpu as pltpu


# -------------------- fused Pallas kernel --------------------

def _self_attn_fused_kernel(x_cn_ref, x4_ref, wqkh_ref, bqkh_ref, wc_ref, bc_ref,
                            y4_ref, attn_ref=None):
    """Fused Self_Attn forward for one batch element.

    x_cn_ref : (1, C, N)        bf16  channels x pixels (projection input)
    x4_ref   : (1, C, Nq, C8)   f32   residual input (raw-view grouping of (C, N))
    wqkh_ref : (3*SEG, C)       bf16  [Wq ; Wk ; Wh], each segment SEG-row padded
    bqkh_ref : (3*SEG, 1)       f32   merged (padded) biases, column vector
    wc_ref   : (C8, C, 1, 1)    f32   gamma * final 1x1-conv weight, per c8 group
    bc_ref   : (C, 1, 1)        f32   gamma * final 1x1-conv bias
    y4_ref   : (1, C, Nq, C8)   f32   output (flattens row-major to (C, N))
    attn_ref : (1, N, N)        f32   optional attention-map output
    """
    C8 = wc_ref.shape[0]
    Nq = y4_ref.shape[2]
    SEG = wqkh_ref.shape[0] // 3

    x = x_cn_ref[0]                                                    # (C, N) bf16

    # Merged q/k/h projection in channel-major orientation: one MXU pass.
    qkh = jnp.dot(wqkh_ref[...], x,
                  preferred_element_type=jnp.float32) + bqkh_ref[...]  # (3*SEG, N) f32

    # Sublane-aligned static slices; rows >= C8 within each segment are zero.
    q = qkh[0 * SEG:1 * SEG, :].astype(jnp.bfloat16)                   # (SEG, N)
    k = qkh[1 * SEG:2 * SEG, :].astype(jnp.bfloat16)
    h = qkh[2 * SEG:3 * SEG, :].astype(jnp.bfloat16)

    # energy[n, m] = sum_d q[d, n] * k[d, m]   (zero-padded rows contribute 0)
    energy = lax.dot_general(q, k, (((0,), (0,)), ((), ())),
                             preferred_element_type=jnp.float32)        # (N, N)

    # row-wise softmax (dim=-1); reciprocal runs on the EUP slot.
    m = jnp.max(energy, axis=-1, keepdims=True)
    p = jnp.exp(energy - m)
    s = jnp.sum(p, axis=-1, keepdims=True)
    attn = p * pl.reciprocal(s, approx=True)                            # (N, N) f32

    if attn_ref is not None:
        attn_ref[0] = attn

    # out_bmm[n, d] = sum_m attn[n, m] * h[d, m]   (== attention @ proj_hhh)
    out_bmm = lax.dot_general(attn.astype(jnp.bfloat16), h,
                              (((1,), (1,)), ((), ())),
                              preferred_element_type=jnp.float32)       # (N, SEG)

    # PyTorch `out.view(B, C//8, W, H)` reinterprets the (N, C8) buffer row-major
    # as (C8, N).  With pixel n' = C8*q + r that is o[c8, n'] = out_bmm[c8*Nq+q, r],
    # so (with gamma folded into wc/bc):
    #   y[ci, q, r] = x[ci, q, r] + bc_eff[ci]
    #               + sum_c8 wc_eff[c8, ci] * out_bmm[c8*Nq + q, r]
    acc = x4_ref[0] + bc_ref[...]                        # (C, Nq, C8) + (C, 1, 1)
    for g in range(C8):
        blk = out_bmm[g * Nq:(g + 1) * Nq, 0:C8]         # (Nq, C8) aligned slice
        acc = acc + wc_ref[g] * blk[None, :, :]          # (C,1,1) * (1,Nq,C8)
    y4_ref[0] = acc


# -------------------- wrapper --------------------

def self_attn_forward(x, params, *, return_attention=True):
    """x: (B, C, W, H) float32 NCHW. Returns (out, attention) like Self_Attn."""
    B, C, W, H = x.shape
    N = W * H
    assert C % 8 == 0
    C8 = C // 8
    assert N % C8 == 0, "fused raw-view handling assumes (W*H) % (C//8) == 0"
    Nq = N // C8
    SEG = 128 * ((C8 + 127) // 128)          # sublane/lane-aligned q/k/h segment stride

    x_cn = x.reshape(B, C, N).astype(jnp.float32)                      # (B, C, N)
    x_cn_bf = x_cn.astype(jnp.bfloat16)                                # projection input
    x4 = x_cn.reshape(B, C, Nq, C8)                                    # free raw-view split

    def seg_w(w):   # (C8, C, 1, 1) conv weight -> (SEG, C), zero-padded rows
        return jnp.pad(w.reshape(C8, C), ((0, SEG - C8), (0, 0)))

    def seg_b(b):
        return jnp.pad(b, (0, SEG - C8))

    wqkh = jnp.concatenate(
        [seg_w(params["wq"]), seg_w(params["wk"]), seg_w(params["wh"])],
        axis=0).astype(jnp.bfloat16)                                   # (3*SEG, C)
    bqkh = jnp.concatenate(
        [seg_b(params["bq"]), seg_b(params["bk"]), seg_b(params["bh"])]
    ).reshape(3 * SEG, 1).astype(jnp.float32)

    # gamma folded into the final 1x1 conv (tiny wrapper-side constants).
    gamma = params["gamma"].reshape(())
    wc_eff = (gamma * params["wc"].reshape(C, C8)).T.reshape(C8, C, 1, 1)
    wc_eff = wc_eff.astype(jnp.float32)
    bc_eff = (gamma * params["bc"]).reshape(C, 1, 1).astype(jnp.float32)

    out_shape = [jax.ShapeDtypeStruct((B, C, Nq, C8), jnp.float32)]
    out_specs = [pl.BlockSpec((1, C, Nq, C8), lambda b: (b, 0, 0, 0))]
    if return_attention:
        out_shape.append(jax.ShapeDtypeStruct((B, N, N), jnp.float32))
        out_specs.append(pl.BlockSpec((1, N, N), lambda b: (b, 0, 0)))

    results = pl.pallas_call(
        _self_attn_fused_kernel,
        out_shape=tuple(out_shape),
        grid=(B,),
        in_specs=[
            pl.BlockSpec((1, C, N), lambda b: (b, 0, 0)),
            pl.BlockSpec((1, C, Nq, C8), lambda b: (b, 0, 0, 0)),
            pl.BlockSpec((3 * SEG, C), lambda b: (0, 0)),
            pl.BlockSpec((3 * SEG, 1), lambda b: (0, 0)),
            pl.BlockSpec((C8, C, 1, 1), lambda b: (0, 0, 0, 0)),
            pl.BlockSpec((C, 1, 1), lambda b: (0, 0, 0)),
        ],
        out_specs=tuple(out_specs),
        compiler_params=pltpu.CompilerParams(
            dimension_semantics=("parallel",),
            vmem_limit_bytes=64 * 1024 * 1024,
        ),
    )(x_cn_bf, x4, wqkh, bqkh, wc_eff, bc_eff)

    y4 = results[0]
    out = y4.reshape(B, C, N).reshape(B, C, W, H)   # row-major merge: no data shuffle
    attn = results[1] if return_attention else None
    return out, attn


# -------------------- pure-JAX reference (for verification) --------------------

def self_attn_reference(x, params):
    B, C, W, H = x.shape
    N = W * H
    C8 = C // 8
    x_cn = x.reshape(B, C, N)

    def conv1x1(w, b, inp, o):
        return jnp.einsum("oc,bcn->bon", w.reshape(o, inp.shape[1]), inp) + b[None, :, None]

    q = conv1x1(params["wq"], params["bq"], x_cn, C8)        # (B, C8, N)
    k = conv1x1(params["wk"], params["bk"], x_cn, C8)
    h = conv1x1(params["wh"], params["bh"], x_cn, C8)

    proj_query = jnp.transpose(q, (0, 2, 1))                 # (B, N, C8)
    proj_hhh = jnp.transpose(h, (0, 2, 1))                   # (B, N, C8)
    energy = proj_query @ k                                  # (B, N, N)
    attention = jax.nn.softmax(energy, axis=-1)
    out = attention @ proj_hhh                               # (B, N, C8)
    out = out.reshape(B, C8, W, H).reshape(B, C8, N)         # raw reinterpretation
    y = conv1x1(params["wc"], params["bc"], out, C)          # (B, C, N)
    out_final = params["gamma"][0] * y + x_cn
    return out_final.reshape(B, C, W, H), attention


# -------------------- main --------------------

if __name__ == "__main__":
    B, C, W, H = 2, 32, 16, 16          # in_dim = 32 -> C//8 = 4, N = 256
    C8 = C // 8

    key = jax.random.PRNGKey(0)
    keys = jax.random.split(key, 12)

    params = {
        "wq": 0.1 * jax.random.normal(keys[0], (C8, C, 1, 1), jnp.float32),
        "bq": 0.1 * jax.random.normal(keys[1], (C8,), jnp.float32),
        "wk": 0.1 * jax.random.normal(keys[2], (C8, C, 1, 1), jnp.float32),
        "bk": 0.1 * jax.random.normal(keys[3], (C8,), jnp.float32),
        "wh": 0.1 * jax.random.normal(keys[4], (C8, C, 1, 1), jnp.float32),
        "bh": 0.1 * jax.random.normal(keys[5], (C8,), jnp.float32),
        # value_conv params exist in the module but its output is unused (dead code)
        "wv": 0.1 * jax.random.normal(keys[6], (C, C, 1, 1), jnp.float32),
        "bv": 0.1 * jax.random.normal(keys[7], (C,), jnp.float32),
        "wc": 0.1 * jax.random.normal(keys[8], (C, C8, 1, 1), jnp.float32),
        "bc": 0.1 * jax.random.normal(keys[9], (C,), jnp.float32),
        # nn.Parameter(torch.zeros(1)) in the module; nonzero here to exercise the path
        "gamma": 0.5 + 0.1 * jax.random.normal(keys[10], (1,), jnp.float32),
    }

    x = jax.random.normal(keys[11], (B, C, W, H), jnp.float32)

    out, attn = self_attn_forward(x, params)
    out, attn = jax.block_until_ready((out, attn))

    ref_out, ref_attn = self_attn_reference(x, params)
    assert out.shape == (B, C, W, H) and attn.shape == (B, W * H, W * H)
    # Tolerances account for bf16 MXU operands + approx reciprocal (f32 accumulation).
    assert jnp.allclose(out, ref_out, rtol=5e-3, atol=5e-3), \
        float(jnp.max(jnp.abs(out - ref_out)))
    assert jnp.allclose(attn, ref_attn, rtol=5e-3, atol=5e-3), \
        float(jnp.max(jnp.abs(attn - ref_attn)))

    # VGGSSM itself discards the attention map; exercise the O(N^2)-write-free path.
    out_na, attn_na = self_attn_forward(x, params, return_attention=False)
    out_na = jax.block_until_ready(out_na)
    assert attn_na is None
    assert jnp.allclose(out_na, ref_out, rtol=5e-3, atol=5e-3)

    print("KERNEL_OK")
</pallas_src>

<mosaic_0001>
module attributes {stable_mosaic.version = 11 : i64} {
  func.func @_self_attn_fused_kernel(%arg0: i32, %arg1: memref<1x32x256xbf16, #tpu.memory_space<vmem>>, %arg2: memref<1x32x64x4xf32, #tpu.memory_space<vmem>>, %arg3: memref<384x32xbf16, #tpu.memory_space<vmem>>, %arg4: memref<384x1xf32, #tpu.memory_space<vmem>>, %arg5: memref<4x32x1x1xf32, #tpu.memory_space<vmem>>, %arg6: memref<32x1x1xf32, #tpu.memory_space<vmem>>, %arg7: memref<1x32x64x4xf32, #tpu.memory_space<vmem>>, %arg8: memref<1x256x256xf32, #tpu.memory_space<vmem>>) attributes {dimension_semantics = [#tpu.dimension_semantics<parallel>], iteration_bounds = array<i64: 2>, scalar_prefetch = 0 : i64, scratch_operands = 0 : i64, tpu.core_type = #tpu.core_type<tc>, window_params = [{transform_indices = @transform_0, window_bounds = array<i64: 1, 32, 256>}, {transform_indices = @transform_1, window_bounds = array<i64: 1, 32, 64, 4>}, {pipeline_mode = #tpu.pipeline_mode<synchronous>, transform_indices = @transform_2, window_bounds = array<i64: 384, 32>}, {pipeline_mode = #tpu.pipeline_mode<synchronous>, transform_indices = @transform_3, window_bounds = array<i64: 384, 1>}, {pipeline_mode = #tpu.pipeline_mode<synchronous>, transform_indices = @transform_4, window_bounds = array<i64: 4, 32, 1, 1>}, {pipeline_mode = #tpu.pipeline_mode<synchronous>, transform_indices = @transform_5, window_bounds = array<i64: 32, 1, 1>}, {transform_indices = @transform_6, window_bounds = array<i64: 1, 32, 64, 4>}, {transform_indices = @transform_7, window_bounds = array<i64: 1, 256, 256>}]} {
    %c0 = arith.constant 0 : index
    %c0_0 = arith.constant 0 : index
    %c0_1 = arith.constant 0 : index
    %0 = vector.load %arg1[%c0, %c0_0, %c0_1] : memref<1x32x256xbf16, #tpu.memory_space<vmem>>, vector<1x32x256xbf16>
    %1 = vector.shape_cast %0 : vector<1x32x256xbf16> to vector<32x256xbf16>
    %c0_2 = arith.constant 0 : index
    %c0_3 = arith.constant 0 : index
    %2 = vector.load %arg3[%c0_2, %c0_3] : memref<384x32xbf16, #tpu.memory_space<vmem>>, vector<384x32xbf16>
    %cst = arith.constant dense<0.000000e+00> : vector<384x256xf32>
    %3 = tpu.matmul %2, %1, %cst {dimension_numbers = #tpu.dot_dimension_numbers<[1], [0], [0], [1], [0, 0, 1, 1], [], []>} : vector<384x32xbf16>, vector<32x256xbf16>, vector<384x256xf32> -> vector<384x256xf32>
    %c0_4 = arith.constant 0 : index
    %c0_5 = arith.constant 0 : index
    %4 = vector.load %arg4[%c0_4, %c0_5] : memref<384x1xf32, #tpu.memory_space<vmem>>, vector<384x1xf32>
    %5 = vector.broadcast %4 : vector<384x1xf32> to vector<384x256xf32>
    %6 = arith.addf %3, %5 : vector<384x256xf32>
    %7 = vector.extract_strided_slice %6 {offsets = [0, 0], sizes = [128, 256], strides = [1, 1]} : vector<384x256xf32> to vector<128x256xf32>
    %8 = arith.truncf %7 : vector<128x256xf32> to vector<128x256xbf16>
    %9 = vector.extract_strided_slice %6 {offsets = [128, 0], sizes = [128, 256], strides = [1, 1]} : vector<384x256xf32> to vector<128x256xf32>
    %10 = arith.truncf %9 : vector<128x256xf32> to vector<128x256xbf16>
    %11 = vector.extract_strided_slice %6 {offsets = [256, 0], sizes = [128, 256], strides = [1, 1]} : vector<384x256xf32> to vector<128x256xf32>
    %12 = arith.truncf %11 : vector<128x256xf32> to vector<128x256xbf16>
    %cst_6 = arith.constant dense<0.000000e+00> : vector<256x256xf32>
    %13 = tpu.matmul %8, %10, %cst_6 {dimension_numbers = #tpu.dot_dimension_numbers<[0], [0], [1], [1], [0, 1, 1, 1], [], []>} : vector<128x256xbf16>, vector<128x256xbf16>, vector<256x256xf32> -> vector<256x256xf32>
    %cst_7 = arith.constant dense<0xFF800000> : vector<256xf32>
    %14 = vector.multi_reduction <maximumf>, %13, %cst_7 [1] : vector<256x256xf32> to vector<256xf32>
    %15 = vector.shape_cast %14 : vector<256xf32> to vector<256x1xf32>
    %16 = vector.broadcast %15 : vector<256x1xf32> to vector<256x256xf32>
    %17 = arith.subf %13, %16 : vector<256x256xf32>
    %18 = math.exp %17 : vector<256x256xf32>
    %cst_8 = arith.constant dense<0.000000e+00> : vector<256xf32>
    %19 = vector.multi_reduction <add>, %18, %cst_8 [1] : vector<256x256xf32> to vector<256xf32>
    %20 = vector.shape_cast %19 : vector<256xf32> to vector<256x1xf32>
    %21 = tpu.reciprocal %20 {approx = true} : vector<256x1xf32> -> vector<256x1xf32>
    %22 = vector.broadcast %21 : vector<256x1xf32> to vector<256x256xf32>
    %23 = arith.mulf %18, %22 : vector<256x256xf32>
    %c0_9 = arith.constant 0 : index
    %c0_10 = arith.constant 0 : index
    %c0_11 = arith.constant 0 : index
    %24 = vector.load %arg8[%c0_9, %c0_10, %c0_11] : memref<1x256x256xf32, #tpu.memory_space<vmem>>, vector<1x256x256xf32>
    %25 = vector.shape_cast %24 : vector<1x256x256xf32> to vector<256x256xf32>
    %26 = vector.shape_cast %23 : vector<256x256xf32> to vector<1x256x256xf32>
    tpu.vector_store %arg8[%c0_9, %c0_10, %c0_11], %26 {strides = array<i32>} : memref<1x256x256xf32, #tpu.memory_space<vmem>>, vector<1x256x256xf32>,
    %27 = arith.truncf %23 : vector<256x256xf32> to vector<256x256xbf16>
    %cst_12 = arith.constant dense<0.000000e+00> : vector<256x128xf32>
    %28 = tpu.matmul %27, %12, %cst_12 {dimension_numbers = #tpu.dot_dimension_numbers<[1], [1], [0], [0], [0, 0, 1, 0], [], []>} : vector<256x256xbf16>, vector<128x256xbf16>, vector<256x128xf32> -> vector<256x128xf32>
    %c0_13 = arith.constant 0 : index
    %c0_14 = arith.constant 0 : index
    %c0_15 = arith.constant 0 : index
    %c0_16 = arith.constant 0 : index
    %29 = vector.load %arg2[%c0_13, %c0_14, %c0_15, %c0_16] : memref<1x32x64x4xf32, #tpu.memory_space<vmem>>, vector<1x32x64x4xf32>
    %30 = vector.shape_cast %29 : vector<1x32x64x4xf32> to vector<32x64x4xf32>
    %c0_17 = arith.constant 0 : index
    %c0_18 = arith.constant 0 : index
    %c0_19 = arith.constant 0 : index
    %31 = vector.load %arg6[%c0_17, %c0_18, %c0_19] : memref<32x1x1xf32, #tpu.memory_space<vmem>>, vector<32x1x1xf32>
    %32 = vector.broadcast %31 : vector<32x1x1xf32> to vector<32x64x4xf32>
    %33 = arith.addf %30, %32 : vector<32x64x4xf32>
    %34 = vector.extract_strided_slice %28 {offsets = [0, 0], sizes = [64, 4], strides = [1, 1]} : vector<256x128xf32> to vector<64x4xf32>
    %c0_20 = arith.constant 0 : index
    %c0_21 = arith.constant 0 : index
    %c0_22 = arith.constant 0 : index
    %c0_23 = arith.constant 0 : index
    %35 = vector.load %arg5[%c0_20, %c0_21, %c0_22, %c0_23] : memref<4x32x1x1xf32, #tpu.memory_space<vmem>>, vector<1x32x1x1xf32>
    %36 = vector.shape_cast %35 : vector<1x32x1x1xf32> to vector<32x1x1xf32>
    %37 = vector.shape_cast %34 : vector<64x4xf32> to vector<1x64x4xf32>
    %38 = vector.broadcast %36 : vector<32x1x1xf32> to vector<32x64x4xf32>
    %39 = vector.broadcast %37 : vector<1x64x4xf32> to vector<32x64x4xf32>
    %40 = arith.mulf %38, %39 : vector<32x64x4xf32>
    %41 = arith.addf %33, %40 : vector<32x64x4xf32>
    %42 = vector.extract_strided_slice %28 {offsets = [64, 0], sizes = [64, 4], strides = [1, 1]} : vector<256x128xf32> to vector<64x4xf32>
    %c1 = arith.constant 1 : index
    %c0_24 = arith.constant 0 : index
    %c0_25 = arith.constant 0 : index
    %c0_26 = arith.constant 0 : index
    %43 = vector.load %arg5[%c1, %c0_24, %c0_25, %c0_26] : memref<4x32x1x1xf32, #tpu.memory_space<vmem>>, vector<1x32x1x1xf32>
    %44 = vector.shape_cast %43 : vector<1x32x1x1xf32> to vector<32x1x1xf32>
    %45 = vector.shape_cast %42 : vector<64x4xf32> to vector<1x64x4xf32>
    %46 = vector.broadcast %44 : vector<32x1x1xf32> to vector<32x64x4xf32>
    %47 = vector.broadcast %45 : vector<1x64x4xf32> to vector<32x64x4xf32>
    %48 = arith.mulf %46, %47 : vector<32x64x4xf32>
    %49 = arith.addf %41, %48 : vector<32x64x4xf32>
    %50 = vector.extract_strided_slice %28 {offsets = [128, 0], sizes = [64, 4], strides = [1, 1]} : vector<256x128xf32> to vector<64x4xf32>
    %c2 = arith.constant 2 : index
    %c0_27 = arith.constant 0 : index
    %c0_28 = arith.constant 0 : index
    %c0_29 = arith.constant 0 : index
    %51 = vector.load %arg5[%c2, %c0_27, %c0_28, %c0_29] : memref<4x32x1x1xf32, #tpu.memory_space<vmem>>, vector<1x32x1x1xf32>
    %52 = vector.shape_cast %51 : vector<1x32x1x1xf32> to vector<32x1x1xf32>
    %53 = vector.shape_cast %50 : vector<64x4xf32> to vector<1x64x4xf32>
    %54 = vector.broadcast %52 : vector<32x1x1xf32> to vector<32x64x4xf32>
    %55 = vector.broadcast %53 : vector<1x64x4xf32> to vector<32x64x4xf32>
    %56 = arith.mulf %54, %55 : vector<32x64x4xf32>
    %57 = arith.addf %49, %56 : vector<32x64x4xf32>
    %58 = vector.extract_strided_slice %28 {offsets = [192, 0], sizes = [64, 4], strides = [1, 1]} : vector<256x128xf32> to vector<64x4xf32>
    %c3 = arith.constant 3 : index
    %c0_30 = arith.constant 0 : index
    %c0_31 = arith.constant 0 : index
    %c0_32 = arith.constant 0 : index
    %59 = vector.load %arg5[%c3, %c0_30, %c0_31, %c0_32] : memref<4x32x1x1xf32, #tpu.memory_space<vmem>>, vector<1x32x1x1xf32>
    %60 = vector.shape_cast %59 : vector<1x32x1x1xf32> to vector<32x1x1xf32>
    %61 = vector.shape_cast %58 : vector<64x4xf32> to vector<1x64x4xf32>
    %62 = vector.broadcast %60 : vector<32x1x1xf32> to vector<32x64x4xf32>
    %63 = vector.broadcast %61 : vector<1x64x4xf32> to vector<32x64x4xf32>
    %64 = arith.mulf %62, %63 : vector<32x64x4xf32>
    %65 = arith.addf %57, %64 : vector<32x64x4xf32>
    %c0_33 = arith.constant 0 : index
    %c0_34 = arith.constant 0 : index
    %c0_35 = arith.constant 0 : index
    %c0_36 = arith.constant 0 : index
    %66 = vector.load %arg7[%c0_33, %c0_34, %c0_35, %c0_36] : memref<1x32x64x4xf32, #tpu.memory_space<vmem>>, vector<1x32x64x4xf32>
    %67 = vector.shape_cast %66 : vector<1x32x64x4xf32> to vector<32x64x4xf32>
    %68 = vector.shape_cast %65 : vector<32x64x4xf32> to vector<1x32x64x4xf32>
    tpu.vector_store %arg7[%c0_33, %c0_34, %c0_35, %c0_36], %68 {strides = array<i32>} : memref<1x32x64x4xf32, #tpu.memory_space<vmem>>, vector<1x32x64x4xf32>,
    return
  }
  func.func @transform_0(%arg0: i32) -> (i32, i32, i32) {
    %c0_i32 = arith.constant 0 : i32
    %c0_i32_0 = arith.constant 0 : i32
    %c0_i32_1 = arith.constant 0 : i32
    return %arg0, %c0_i32, %c0_i32_0 : i32, i32, i32
  }
  func.func @transform_1(%arg0: i32) -> (i32, i32, i32, i32) {
    %c0_i32 = arith.constant 0 : i32
    %c0_i32_0 = arith.constant 0 : i32
    %c0_i32_1 = arith.constant 0 : i32
    %c0_i32_2 = arith.constant 0 : i32
    return %arg0, %c0_i32, %c0_i32_0, %c0_i32_1 : i32, i32, i32, i32
  }
  func.func @transform_2(%arg0: i32) -> (i32, i32) {
    %c0_i32 = arith.constant 0 : i32
    %c0_i32_0 = arith.constant 0 : i32
    %c0_i32_1 = arith.constant 0 : i32
    return %c0_i32, %c0_i32_0 : i32, i32
  }
  func.func @transform_3(%arg0: i32) -> (i32, i32) {
    %c0_i32 = arith.constant 0 : i32
    %c0_i32_0 = arith.constant 0 : i32
    %c0_i32_1 = arith.constant 0 : i32
    return %c0_i32, %c0_i32_0 : i32, i32
  }
  func.func @transform_4(%arg0: i32) -> (i32, i32, i32, i32) {
    %c0_i32 = arith.constant 0 : i32
    %c0_i32_0 = arith.constant 0 : i32
    %c0_i32_1 = arith.constant 0 : i32
    %c0_i32_2 = arith.constant 0 : i32
    %c0_i32_3 = arith.constant 0 : i32
    return %c0_i32, %c0_i32_0, %c0_i32_1, %c0_i32_2 : i32, i32, i32, i32
  }
  func.func @transform_5(%arg0: i32) -> (i32, i32, i32) {
    %c0_i32 = arith.constant 0 : i32
    %c0_i32_0 = arith.constant 0 : i32
    %c0_i32_1 = arith.constant 0 : i32
    %c0_i32_2 = arith.constant 0 : i32
    return %c0_i32, %c0_i32_0, %c0_i32_1 : i32, i32, i32
  }
  func.func @transform_6(%arg0: i32) -> (i32, i32, i32, i32) {
    %c0_i32 = arith.constant 0 : i32
    %c0_i32_0 = arith.constant 0 : i32
    %c0_i32_1 = arith.constant 0 : i32
    %c0_i32_2 = arith.constant 0 : i32
    return %arg0, %c0_i32, %c0_i32_0, %c0_i32_1 : i32, i32, i32, i32
  }
  func.func @transform_7(%arg0: i32) -> (i32, i32, i32) {
    %c0_i32 = arith.constant 0 : i32
    %c0_i32_0 = arith.constant 0 : i32
    %c0_i32_1 = arith.constant 0 : i32
    return %arg0, %c0_i32, %c0_i32_0 : i32, i32, i32
  }
}

</mosaic_0001>

<llo_original>
// kernel: tpu_custom_call.1
$region0: #{tpu_custom_call.1}
  #allocation0 [shape = 'u32[]', space=smem, size = 0x4, offset = 0x4, fixed_abs, tag = 'smem constant byte address 0x4 - core index']
  #allocation1 [shape = 'u32[144,128]{1,0:T(1,128)}', space=vmem, size = 0x12000, scoped, tag = 'internal scratch']
  %s0 = inlined_call_operand.hbm [shape: bf16[2,32,256], index: 0, kind: input, shape index: {}]
  %s1 = inlined_call_operand.hbm [shape: f32[2,32,64,4], index: 1, kind: input, shape index: {}]
  %s2 = inlined_call_operand.hbm [shape: bf16[384,32], index: 2, kind: input, shape index: {}]
  %s3 = inlined_call_operand.hbm [shape: f32[384,1], index: 3, kind: input, shape index: {}]
  %s4 = inlined_call_operand.hbm [shape: f32[4,32,1,1], index: 4, kind: input, shape index: {}]
  %s5 = inlined_call_operand.hbm [shape: f32[32,1,1], index: 5, kind: input, shape index: {}]
  %s6 = inlined_call_operand.hbm [shape: f32[2,32,64,4], index: 6, kind: output, shape index: {0}]
  %s7 = inlined_call_operand.hbm [shape: f32[2,256,256], index: 7, kind: output, shape index: {1}]
  %8 = xla_tuple %s6, %s7
  %s9 = sld [smem:[#allocation0]]
  $region89: #{tpu_custom_call.1} parent=0
    _
  %s11 = ssub.s32 1, %s9
  %s12 = scalar_select 0, %s11, %s9
  $region1: #{tpu_custom_call.1} parent=0
    #allocation2 [shape = 'u8[32768]{0}', space=vmem, size = 0x8000, scoped, tag = 'input window, operand 0']
    #allocation3 [shape = 's32[2]{0}', space=sflag, size = 0x8, scoped, tag = 'scoped memory for tpu_custom_call.1']
    #allocation4 [shape = 's32[2]{0}', space=sflag, size = 0x8, scoped, tag = 'scoped memory for tpu_custom_call.1']
    #allocation5 [shape = 'u8[2097152]{0}', space=vmem, size = 0x200000, scoped, tag = 'input window, operand 1']
    #allocation6 [shape = 's32[2]{0}', space=sflag, size = 0x8, scoped, tag = 'scoped memory for tpu_custom_call.1']
    #allocation7 [shape = 'u8[98304]{0}', space=vmem, size = 0x18000, scoped, tag = 'input window, operand 2, single buffered']
    #allocation8 [shape = 'u8[196608]{0}', space=vmem, size = 0x30000, scoped, tag = 'input window, operand 3, single buffered']
    #allocation9 [shape = 's32[1]{0}', space=sflag, size = 0x4, scoped, tag = 'scoped memory for tpu_custom_call.1']
    #allocation10 [shape = 'u8[65536]{0}', space=vmem, size = 0x10000, scoped, tag = 'input window, operand 4, single buffered']
    #allocation11 [shape = 'u8[16384]{0}', space=vmem, size = 0x4000, scoped, tag = 'input window, operand 5, single buffered']
    #allocation12 [shape = 's32[1]{0}', space=sflag, size = 0x4, scoped, tag = 'scoped memory for tpu_custom_call.1']
    #allocation13 [shape = 'u8[2097152]{0}', space=vmem, size = 0x200000, scoped, tag = 'output window, operand 0']
    #allocation14 [shape = 'u8[524288]{0}', space=vmem, size = 0x80000, scoped, tag = 'output window, operand 1']
    #allocation15 [shape = 's32[2]{0}', space=sflag, size = 0x8, scoped, tag = 'scoped memory for tpu_custom_call.1']
    %13 = vsyncpa [#allocation3], 0
    %s14 = scalar_lea.sflag [#allocation3], 1
    %15 = vsyncpa %s14, 0
    %16 = vsyncpa [#allocation6], 0
    %s17 = scalar_lea.sflag [#allocation6], 1
    %18 = vsyncpa %s17, 0
    %19 = vsyncpa [#allocation9], 0
    %20 = vsyncpa [#allocation12], 0
    %21 = vsyncpa [#allocation4], 0
    %s22 = scalar_lea.sflag [#allocation4], 1
    %23 = vsyncpa %s22, 0
    %24 = vsyncpa [#allocation15], 0
    %s25 = scalar_lea.sflag [#allocation15], 1
    %26 = vsyncpa %s25, 0
    loop: start=0, step=1, limit=4
    $region2: #{tpu_custom_call.1} parent=1 // loop_pre_header
      _
    $region3: #{tpu_custom_call.1} parent=1 // loop_header
      %s28 = sphi 0, %s32
      %p29 = scmp.ge.s32.totalorder %s28, 4
      %s38 = sphi 0, %s40
      %s41 = sphi 0, %s38
      %s42 = sphi 0, %s41
      %s58 = sphi 0, %s42
      %s64 = sphi 0, %s66
      %s67 = sphi 0, %s64
      %s68 = sphi 0, %s67
      %s84 = sphi 0, %s68
      %s88 = sphi 0, %s88
      %s90 = sphi 0, %s88
      %s91 = sphi 0, %s90
      %s105 = sphi 0, %s91
      %s109 = sphi 0, %s109
      %s111 = sphi 0, %s109
      %s112 = sphi 0, %s111
      %s126 = sphi 0, %s112
      %s130 = sphi 0, %s130
      %s132 = sphi 0, %s130
      %s133 = sphi 0, %s132
      %s147 = sphi 0, %s133
      %s151 = sphi 0, %s151
      %s153 = sphi 0, %s151
      %s154 = sphi 0, %s153
      %s168 = sphi 0, %s154
      %s174 = sphi 0, %s176
      %s177 = sphi 0, %s174
      %s178 = sphi 0, %s177
      %s194 = sphi 0, %s178
      %s200 = sphi 0, %s202
      %s203 = sphi 0, %s200
      %s204 = sphi 0, %s203
      %s220 = sphi 0, %s204
    $region4: #{tpu_custom_call.1} parent=1 // loop_header_branch
      %31 = sbr.rel (%p29) target = $region8
    $region5: #{tpu_custom_call.1} parent=1 // loop_body
      %s33 = ssub.s32 %s28, 1
      %s34 = ssub.s32 %s28, 2
      %s35 = sadd.s32 %s28, 1
      %s36 = ssub.s32 %s28, %s35
      %p37 = scmp.eq.s32.totalorder %s36, 0
      %s39 = sadd.s32 %s38, 1
      %s40 = scalar_select %p37, %s38, %s39
      %p43 = pneg %p37
      %p44 = scmp.eq.s32.totalorder %s28, 1
      %p45 = por %p43, %p44
      %p46 = scmp.ne.s32.totalorder %s38, %s41
      %p47 = scmp.eq.s32.totalorder %s28, 0
      %p48 = por %p46, %p47
      %p49 = scmp.ne.s32.totalorder %s38, %s41
      %p50 = scmp.eq.s32.totalorder %s33, 1
      %p51 = por %p49, %p50
      %p52 = scmp.ne.s32.totalorder %s41, %s42
      %p53 = scmp.eq.s32.totalorder %s33, 0
      %p54 = por %p52, %p53
      %p55 = scmp.ne.s32.totalorder %s41, %s42
      %p56 = scmp.eq.s32.totalorder %s34, 1
      %p57 = por %p55, %p56
      %p59 = scmp.ne.s32.totalorder %s42, %s58
      %p60 = scmp.eq.s32.totalorder %s34, 0
      %p61 = por %p59, %p60
      %s62 = ssub.s32 %s28, %s35
      %p63 = scmp.eq.s32.totalorder %s62, 0
      %s65 = sadd.s32 %s64, 1
      %s66 = scalar_select %p63, %s64, %s65
      %p69 = pneg %p63
      %p70 = scmp.eq.s32.totalorder %s28, 1
      %p71 = por %p69, %p70
      %p72 = scmp.ne.s32.totalorder %s64, %s67
      %p73 = scmp.eq.s32.totalorder %s28, 0
      %p74 = por %p72, %p73
      %p75 = scmp.ne.s32.totalorder %s64, %s67
      %p76 = scmp.eq.s32.totalorder %s33, 1
      %p77 = por %p75, %p76
      %p78 = scmp.ne.s32.totalorder %s67, %s68
      %p79 = scmp.eq.s32.totalorder %s33, 0
      %p80 = por %p78, %p79
      %p81 = scmp.ne.s32.totalorder %s67, %s68
      %p82 = scmp.eq.s32.totalorder %s34, 1
      %p83 = por %p81, %p82
      %p85 = scmp.ne.s32.totalorder %s68, %s84
      %p86 = scmp.eq.s32.totalorder %s34, 0
      %p87 = por %p85, %p86
      %s89 = sadd.s32 %s88, 1
      %p92 = scmp.eq.s32.totalorder %s28, 1
      %p93 = scmp.ne.s32.totalorder %s88, %s90
      %p94 = scmp.eq.s32.totalorder %s28, 0
      %p95 = por %p93, %p94
      %p96 = scmp.ne.s32.totalorder %s88, %s90
      %p97 = scmp.eq.s32.totalorder %s33, 1
      %p98 = por %p96, %p97
      %p99 = scmp.ne.s32.totalorder %s90, %s91
      %p100 = scmp.eq.s32.totalorder %s33, 0
      %p101 = por %p99, %p100
      %p102 = scmp.ne.s32.totalorder %s90, %s91
      %p103 = scmp.eq.s32.totalorder %s34, 1
      %p104 = por %p102, %p103
      %p106 = scmp.ne.s32.totalorder %s91, %s105
      %p107 = scmp.eq.s32.totalorder %s34, 0
      %p108 = por %p106, %p107
      %s110 = sadd.s32 %s109, 1
      %p113 = scmp.eq.s32.totalorder %s28, 1
      %p114 = scmp.ne.s32.totalorder %s109, %s111
      %p115 = scmp.eq.s32.totalorder %s28, 0
      %p116 = por %p114, %p115
      %p117 = scmp.ne.s32.totalorder %s109, %s111
      %p118 = scmp.eq.s32.totalorder %s33, 1
      %p119 = por %p117, %p118
      %p120 = scmp.ne.s32.totalorder %s111, %s112
      %p121 = scmp.eq.s32.totalorder %s33, 0
      %p122 = por %p120, %p121
      %p123 = scmp.ne.s32.totalorder %s111, %s112
      %p124 = scmp.eq.s32.totalorder %s34, 1
      %p125 = por %p123, %p124
      %p127 = scmp.ne.s32.totalorder %s112, %s126
      %p128 = scmp.eq.s32.totalorder %s34, 0
      %p129 = por %p127, %p128
      %s131 = sadd.s32 %s130, 1
      %p134 = scmp.eq.s32.totalorder %s28, 1
      %p135 = scmp.ne.s32.totalorder %s130, %s132
      %p136 = scmp.eq.s32.totalorder %s28, 0
      %p137 = por %p135, %p136
      %p138 = scmp.ne.s32.totalorder %s130, %s132
      %p139 = scmp.eq.s32.totalorder %s33, 1
      %p140 = por %p138, %p139
      %p141 = scmp.ne.s32.totalorder %s132, %s133
      %p142 = scmp.eq.s32.totalorder %s33, 0
      %p143 = por %p141, %p142
      %p144 = scmp.ne.s32.totalorder %s132, %s133
      %p145 = scmp.eq.s32.totalorder %s34, 1
      %p146 = por %p144, %p145
      %p148 = scmp.ne.s32.totalorder %s133, %s147
      %p149 = scmp.eq.s32.totalorder %s34, 0
      %p150 = por %p148, %p149
      %s152 = sadd.s32 %s151, 1
      %p155 = scmp.eq.s32.totalorder %s28, 1
      %p156 = scmp.ne.s32.totalorder %s151, %s153
      %p157 = scmp.eq.s32.totalorder %s28, 0
      %p158 = por %p156, %p157
      %p159 = scmp.ne.s32.totalorder %s151, %s153
      %p160 = scmp.eq.s32.totalorder %s33, 1
      %p161 = por %p159, %p160
      %p162 = scmp.ne.s32.totalorder %s153, %s154
      %p163 = scmp.eq.s32.totalorder %s33, 0
      %p164 = por %p162, %p163
      %p165 = scmp.ne.s32.totalorder %s153, %s154
      %p166 = scmp.eq.s32.totalorder %s34, 1
      %p167 = por %p165, %p166
      %p169 = scmp.ne.s32.totalorder %s154, %s168
      %p170 = scmp.eq.s32.totalorder %s34, 0
      %p171 = por %p169, %p170
      %s172 = ssub.s32 %s28, %s35
      %p173 = scmp.eq.s32.totalorder %s172, 0
      %s175 = sadd.s32 %s174, 1
      %s176 = scalar_select %p173, %s174, %s175
      %p179 = pneg %p173
      %p180 = scmp.eq.s32.totalorder %s28, 1
      %p181 = por %p179, %p180
      %p182 = scmp.ne.s32.totalorder %s174, %s177
      %p183 = scmp.eq.s32.totalorder %s28, 0
      %p184 = por %p182, %p183
      %p185 = scmp.ne.s32.totalorder %s174, %s177
      %p186 = scmp.eq.s32.totalorder %s33, 1
      %p187 = por %p185, %p186
      %p188 = scmp.ne.s32.totalorder %s177, %s178
      %p189 = scmp.eq.s32.totalorder %s33, 0
      %p190 = por %p188, %p189
      %p191 = scmp.ne.s32.totalorder %s177, %s178
      %p192 = scmp.eq.s32.totalorder %s34, 1
      %p193 = por %p191, %p192
      %p195 = scmp.ne.s32.totalorder %s178, %s194
      %p196 = scmp.eq.s32.totalorder %s34, 0
      %p197 = por %p195, %p196
      %s198 = ssub.s32 %s28, %s35
      %p199 = scmp.eq.s32.totalorder %s198, 0
      %s201 = sadd.s32 %s200, 1
      %s202 = scalar_select %p199, %s200, %s201
      %p205 = pneg %p199
      %p206 = scmp.eq.s32.totalorder %s28, 1
      %p207 = por %p205, %p206
      %p208 = scmp.ne.s32.totalorder %s200, %s203
      %p209 = scmp.eq.s32.totalorder %s28, 0
      %p210 = por %p208, %p209
      %p211 = scmp.ne.s32.totalorder %s200, %s203
      %p212 = scmp.eq.s32.totalorder %s33, 1
      %p213 = por %p211, %p212
      %p214 = scmp.ne.s32.totalorder %s203, %s204
      %p215 = scmp.eq.s32.totalorder %s33, 0
      %p216 = por %p214, %p215
      %p217 = scmp.ne.s32.totalorder %s203, %s204
      %p218 = scmp.eq.s32.totalorder %s34, 1
      %p219 = por %p217, %p218
      %p221 = scmp.ne.s32.totalorder %s204, %s220
      %p222 = scmp.eq.s32.totalorder %s34, 0
      %p223 = por %p221, %p222
      %p224 = scmp.le.s32.totalorder 1, %s28
      %p225 = scmp.lt.s32.totalorder %s28, 3
      %p226 = pnand %p224, %p225
      %p227 = pneg %p226
      // Predicated region
      $region9: #{tpu_custom_call.1} parent=5 // pred_check
        _
      $region10: #{tpu_custom_call.1} parent=5 // pred_check_branch
        %229 = sbr.rel (%p226) target = $region12
      $region11: #{tpu_custom_call.1} parent=5 // pred_region
        %s230 = ssub.s32 %s28, 1
        // Predicated region
        $region13: #{tpu_custom_call.1} parent=11 // pred_check
          %p231 = pneg %p101
        $region14: #{tpu_custom_call.1} parent=11 // pred_check_branch
          %233 = sbr.rel (%p231) target = $region16
        $region15: #{tpu_custom_call.1} parent=11 // pred_region
          %s235 = ssub.s32 3072, 3072
          %236 = vsyncadd [#allocation6], %s235
          %s237 = sshll.u32 [#allocation7], 4
          %s238 = int_to_ptr.vmem [resolvable:$true] %s237
          %243 = dma.hbm_to_vmem [thread:$0]  %s2, 3072, %s238, [#allocation6], 64, 64, 4
        $region16: #{tpu_custom_call.1} parent=11 // pred_fallthru
          _
        // Predicated region
        $region17: #{tpu_custom_call.1} parent=11 // pred_check
          %p244 = pneg %p122
        $region18: #{tpu_custom_call.1} parent=11 // pred_check_branch
          %246 = sbr.rel (%p244) target = $region20
        $region19: #{tpu_custom_call.1} parent=11 // pred_region
          %s248 = ssub.s32 6144, 6144
          %249 = vsyncadd [#allocation9], %s248
          %s250 = sshll.u32 [#allocation8], 4
          %s251 = int_to_ptr.vmem [resolvable:$true] %s250
          %256 = dma.hbm_to_vmem [thread:$0]  %s3, 6144, %s251, [#allocation9], 128, 128, 8
        $region20: #{tpu_custom_call.1} parent=11 // pred_fallthru
          _
        // Predicated region
        $region21: #{tpu_custom_call.1} parent=11 // pred_check
          %p257 = pneg %p143
        $region22: #{tpu_custom_call.1} parent=11 // pred_check_branch
          %259 = sbr.rel (%p257) target = $region24
        $region23: #{tpu_custom_call.1} parent=11 // pred_region
          %s261 = ssub.s32 2048, 2048
          %262 = vsyncadd [#allocation9], %s261
          %s263 = sshll.u32 [#allocation10], 4
          %s264 = int_to_ptr.vmem [resolvable:$true] %s263
          %269 = dma.hbm_to_vmem [thread:$0]  %s4, 2048, %s264, [#allocation9], 16, 16, 1
        $region24: #{tpu_custom_call.1} parent=11 // pred_fallthru
          _
        // Predicated region
        $region25: #{tpu_custom_call.1} parent=11 // pred_check
          %p270 = pneg %p164
        $region26: #{tpu_custom_call.1} parent=11 // pred_check_branch
          %272 = sbr.rel (%p270) target = $region28
        $region27: #{tpu_custom_call.1} parent=11 // pred_region
          %s274 = ssub.s32 512, 512
          %275 = vsyncadd [#allocation12], %s274
          %s276 = sshll.u32 [#allocation11], 4
          %s277 = int_to_ptr.vmem [resolvable:$true] %s276
          %282 = dma.hbm_to_vmem [thread:$0]  %s5, 512, %s277, [#allocation12], 16, 16, 1
        $region28: #{tpu_custom_call.1} parent=11 // pred_fallthru
          _
      $region12: #{tpu_custom_call.1} parent=5 // pred_fallthru
        _
      %p283 = scmp.lt.s32.totalorder %s28, 2
      // Predicated region
      $region29: #{tpu_custom_call.1} parent=5 // pred_check
        %p284 = pneg %p283
      $region30: #{tpu_custom_call.1} parent=5 // pred_check_branch
        %286 = sbr.rel (%p284) target = $region32
      $region31: #{tpu_custom_call.1} parent=5 // pred_region
        // Predicated region
        $region33: #{tpu_custom_call.1} parent=31 // pred_check
          %p287 = pneg %p48
        $region34: #{tpu_custom_call.1} parent=31 // pred_check_branch
          %289 = sbr.rel (%p287) target = $region36
        $region35: #{tpu_custom_call.1} parent=31 // pred_region
          %s290 = sand.u32 %s38, 1
          %s291 = scalar_lea.sflag [#allocation3], %s290
          %s292 = sand.u32 %s38, 1
          %s293 = smul.addr %s292, 32
          %s294 = scalar_lea.vmem [#allocation2], %s293
          %s296 = ssub.s32 512, 512
          %297 = vsyncadd %s291, %s296
          %s298 = smul.addr %s28, 8
          %s299 = smul.addr %s298, 64
          %s300 = scalar_lea.hbm %s0, %s299
          %s301 = sshll.u32 %s294, 4
          %s302 = int_to_ptr.vmem [resolvable:$true] %s301
          %307 = dma.hbm_to_vmem [thread:$0]  %s300, 512, %s302, %s291, 128, 128, 8
        $region36: #{tpu_custom_call.1} parent=31 // pred_fallthru
          _
        // Predicated region
        $region37: #{tpu_custom_call.1} parent=31 // pred_check
          %p308 = pneg %p74
        $region38: #{tpu_custom_call.1} parent=31 // pred_check_branch
          %310 = sbr.rel (%p308) target = $region40
        $region39: #{tpu_custom_call.1} parent=31 // pred_region
          %s311 = sand.u32 %s28, 1
          %s312 = scalar_lea.sflag [#allocation6], %s311
          %s313 = sand.u32 %s64, 1
          %s314 = smul.addr %s313, 2048
          %s315 = scalar_lea.vmem [#allocation5], %s314
          %s317 = ssub.s32 32768, 32768
          %318 = vsyncadd %s312, %s317
          %s319 = smul.addr %s28, 256
          %s320 = smul.addr %s319, 128
          %s321 = scalar_lea.hbm %s1, %s320
          %s322 = sshll.u32 %s315, 4
          %s323 = int_to_ptr.vmem [resolvable:$true] %s322
          %328 = dma.hbm_to_vmem [thread:$0]  %s321, 32768, %s323, %s312, 128, 128, 8
        $region40: #{tpu_custom_call.1} parent=31 // pred_fallthru
          _
      $region32: #{tpu_custom_call.1} parent=5 // pred_fallthru
        _
      %p329 = scmp.le.s32.totalorder 1, %s28
      %p330 = scmp.lt.s32.totalorder %s28, 3
      %p331 = pnand %p329, %p330
      %p332 = pneg %p331
      // Predicated region
      $region41: #{tpu_custom_call.1} parent=5 // pred_check
        _
      $region42: #{tpu_custom_call.1} parent=5 // pred_check_branch
        %334 = sbr.rel (%p331) target = $region44
      $region43: #{tpu_custom_call.1} parent=5 // pred_region
        %s335 = ssub.s32 %s28, 1
        %s336 = sand.u32 %s41, 1
        %s337 = scalar_lea.sflag [#allocation3], %s336
        %s338 = sand.u32 %s41, 1
        %s339 = smul.addr %s338, 32
        %s340 = scalar_lea.vmem [#allocation2], %s339
        // Predicated region
        $region45: #{tpu_custom_call.1} parent=43 // pred_check
          %p341 = pneg %p54
        $region46: #{tpu_custom_call.1} parent=43 // pred_check_branch
          %343 = sbr.rel (%p341) target = $region48
        $region47: #{tpu_custom_call.1} parent=43 // pred_region
          %344 = dma.done %s337, 512
        $region48: #{tpu_custom_call.1} parent=43 // pred_fallthru
          _
        %s345 = sand.u32 %s33, 1
        %s346 = scalar_lea.sflag [#allocation6], %s345
        %s347 = sand.u32 %s67, 1
        %s348 = smul.addr %s347, 2048
        %s349 = scalar_lea.vmem [#allocation5], %s348
        // Predicated region
        $region49: #{tpu_custom_call.1} parent=43 // pred_check
          %p350 = pneg %p80
        $region50: #{tpu_custom_call.1} parent=43 // pred_check_branch
          %352 = sbr.rel (%p350) target = $region52
        $region51: #{tpu_custom_call.1} parent=43 // pred_region
          %353 = dma.done %s346, 32768
        $region52: #{tpu_custom_call.1} parent=43 // pred_fallthru
          _
        // Predicated region
        $region53: #{tpu_custom_call.1} parent=43 // pred_check
          %p354 = pneg %p101
        $region54: #{tpu_custom_call.1} parent=43 // pred_check_branch
          %356 = sbr.rel (%p354) target = $region56
        $region55: #{tpu_custom_call.1} parent=43 // pred_region
          %357 = dma.done [#allocation6], 3072
        $region56: #{tpu_custom_call.1} parent=43 // pred_fallthru
          _
        // Predicated region
        $region57: #{tpu_custom_call.1} parent=43 // pred_check
          %p358 = pneg %p122
        $region58: #{tpu_custom_call.1} parent=43 // pred_check_branch
          %360 = sbr.rel (%p358) target = $region60
        $region59: #{tpu_custom_call.1} parent=43 // pred_region
          %361 = dma.done [#allocation9], 6144
        $region60: #{tpu_custom_call.1} parent=43 // pred_fallthru
          _
        // Predicated region
        $region61: #{tpu_custom_call.1} parent=43 // pred_check
          %p362 = pneg %p143
        $region62: #{tpu_custom_call.1} parent=43 // pred_check_branch
          %364 = sbr.rel (%p362) target = $region64
        $region63: #{tpu_custom_call.1} parent=43 // pred_region
          %365 = dma.done [#allocation9], 2048
        $region64: #{tpu_custom_call.1} parent=43 // pred_fallthru
          _
        // Predicated region
        $region65: #{tpu_custom_call.1} parent=43 // pred_check
          %p366 = pneg %p164
        $region66: #{tpu_custom_call.1} parent=43 // pred_check_branch
          %368 = sbr.rel (%p366) target = $region68
        $region67: #{tpu_custom_call.1} parent=43 // pred_region
          %369 = dma.done [#allocation12], 512
        $region68: #{tpu_custom_call.1} parent=43 // pred_fallthru
          _
        %s370 = sand.u32 %s41, 1
        %s371 = scalar_lea.sflag [#allocation3], %s370
        %s372 = sand.u32 %s41, 1
        %s373 = smul.addr %s372, 32
        %s374 = scalar_lea.vmem [#allocation2], %s373
        %p375 = pneg %p54
        %p376 = pneg %p51
        %s377 = sand.u32 %s33, 1
        %s378 = scalar_lea.sflag [#allocation6], %s377
        %s379 = sand.u32 %s67, 1
        %s380 = smul.addr %s379, 2048
        %s381 = scalar_lea.vmem [#allocation5], %s380
        %p382 = pneg %p80
        %p383 = pneg %p77
        %p384 = pneg %p101
        %p385 = pneg %p98
        %p386 = pneg %p122
        %p387 = pneg %p119
        %p388 = pneg %p143
        %p389 = pneg %p140
        %p390 = pneg %p164
        %p391 = pneg %p161
        %p392 = pneg %p190
        %p393 = pneg %p187
        %s394 = sand.u32 %s177, 1
        %s395 = scalar_lea.sflag [#allocation4], %s394
        %s396 = sand.u32 %s177, 1
        %s397 = smul.addr %s396, 2048
        %s398 = scalar_lea.vmem [#allocation13], %s397
        %p399 = pneg %p216
        %p400 = pneg %p213
        %s401 = sand.u32 %s203, 1
        %s402 = scalar_lea.sflag [#allocation15], %s401
        %s403 = sand.u32 %s203, 1
        %s404 = smul.addr %s403, 512
        %s405 = scalar_lea.vmem [#allocation14], %s404
        %v407 = vld [vmem:[%s340] sm:$0xff]
        %v408 = vld [vmem:[%s340 + $0x8] sm:$0xff]
        %v409 = vld [vmem:[%s340 + $0x10] sm:$0xff]
        %v410 = vld [vmem:[%s340 + $0x18] sm:$0xff]
        %v411 = vld [vmem:[#allocation7] sm:$0xf]
        %v412 = vld [vmem:[#allocation7 + $0x4] sm:$0xf]
        %v413 = vld [vmem:[#allocation7 + $0x8] sm:$0xf]
        %v414 = vld [vmem:[#allocation7 + $0xc] sm:$0xf]
        %v415 = vld [vmem:[#allocation7 + $0x10] sm:$0xf]
        %v416 = vld [vmem:[#allocation7 + $0x14] sm:$0xf]
        %v417 = vld [vmem:[#allocation7 + $0x18] sm:$0xf]
        %v418 = vld [vmem:[#allocation7 + $0x1c] sm:$0xf]
        %v419 = vld [vmem:[#allocation7 + $0x20] sm:$0xf]
        %v420 = vld [vmem:[#allocation7 + $0x24] sm:$0xf]
        %v421 = vld [vmem:[#allocation7 + $0x28] sm:$0xf]
        %v422 = vld [vmem:[#allocation7 + $0x2c] sm:$0xf]
        %v423 = vld [vmem:[#allocation7 + $0x30] sm:$0xf]
        %v424 = vld [vmem:[#allocation7 + $0x34] sm:$0xf]
        %v425 = vld [vmem:[#allocation7 + $0x38] sm:$0xf]
        %v426 = vld [vmem:[#allocation7 + $0x3c] sm:$0xf]
        %v427 = vld [vmem:[#allocation7 + $0x40] sm:$0xf]
        %v428 = vld [vmem:[#allocation7 + $0x44] sm:$0xf]
        %v429 = vld [vmem:[#allocation7 + $0x48] sm:$0xf]
        %v430 = vld [vmem:[#allocation7 + $0x4c] sm:$0xf]
        %v431 = vld [vmem:[#allocation7 + $0x50] sm:$0xf]
        %v432 = vld [vmem:[#allocation7 + $0x54] sm:$0xf]
        %v433 = vld [vmem:[#allocation7 + $0x58] sm:$0xf]
        %v434 = vld [vmem:[#allocation7 + $0x5c] sm:$0xf]
        %v435 = vld [vmem:[#allocation7 + $0x60] sm:$0xf]
        %v436 = vld [vmem:[#allocation7 + $0x64] sm:$0xf]
        %v437 = vld [vmem:[#allocation7 + $0x68] sm:$0xf]
        %v438 = vld [vmem:[#allocation7 + $0x6c] sm:$0xf]
        %v439 = vld [vmem:[#allocation7 + $0x70] sm:$0xf]
        %v440 = vld [vmem:[#allocation7 + $0x74] sm:$0xf]
        %v441 = vld [vmem:[#allocation7 + $0x78] sm:$0xf]
        %v442 = vld [vmem:[#allocation7 + $0x7c] sm:$0xf]
        %v443 = vld [vmem:[#allocation7 + $0x80] sm:$0xf]
        %v444 = vld [vmem:[#allocation7 + $0x84] sm:$0xf]
        %v445 = vld [vmem:[#allocation7 + $0x88] sm:$0xf]
        %v446 = vld [vmem:[#allocation7 + $0x8c] sm:$0xf]
        %v447 = vld [vmem:[#allocation7 + $0x90] sm:$0xf]
        %v448 = vld [vmem:[#allocation7 + $0x94] sm:$0xf]
        %v449 = vld [vmem:[#allocation7 + $0x98] sm:$0xf]
        %v450 = vld [vmem:[#allocation7 + $0x9c] sm:$0xf]
        %v451 = vld [vmem:[#allocation7 + $0xa0] sm:$0xf]
        %v452 = vld [vmem:[#allocation7 + $0xa4] sm:$0xf]
        %v453 = vld [vmem:[#allocation7 + $0xa8] sm:$0xf]
        %v454 = vld [vmem:[#allocation7 + $0xac] sm:$0xf]
        %v455 = vld [vmem:[#allocation7 + $0xb0] sm:$0xf]
        %v456 = vld [vmem:[#allocation7 + $0xb4] sm:$0xf]
        %v457 = vld [vmem:[#allocation7 + $0xb8] sm:$0xf]
        %v458 = vld [vmem:[#allocation7 + $0xbc] sm:$0xf]
        %v459 = vld [vmem:[#allocation8] sm:$0xff]
        %v460 = vld [vmem:[#allocation8 + $0x8] sm:$0xff]
        %v461 = vld [vmem:[#allocation8 + $0x10] sm:$0xff]
        %v462 = vld [vmem:[#allocation8 + $0x18] sm:$0xff]
        %v463 = vld [vmem:[#allocation8 + $0x20] sm:$0xff]
        %v464 = vld [vmem:[#allocation8 + $0x28] sm:$0xff]
        %v465 = vld [vmem:[#allocation8 + $0x30] sm:$0xff]
        %v466 = vld [vmem:[#allocation8 + $0x38] sm:$0xff]
        %v467 = vld [vmem:[#allocation8 + $0x40] sm:$0xff]
        %v468 = vld [vmem:[#allocation8 + $0x48] sm:$0xff]
        %v469 = vld [vmem:[#allocation8 + $0x50] sm:$0xff]
        %v470 = vld [vmem:[#allocation8 + $0x58] sm:$0xff]
        %v471 = vld [vmem:[#allocation8 + $0x60] sm:$0xff]
        %v472 = vld [vmem:[#allocation8 + $0x68] sm:$0xff]
        %v473 = vld [vmem:[#allocation8 + $0x70] sm:$0xff]
        %v474 = vld [vmem:[#allocation8 + $0x78] sm:$0xff]
        %v475 = vld [vmem:[#allocation8 + $0x80] sm:$0xff]
        %v476 = vld [vmem:[#allocation8 + $0x88] sm:$0xff]
        %v477 = vld [vmem:[#allocation8 + $0x90] sm:$0xff]
        %v478 = vld [vmem:[#allocation8 + $0x98] sm:$0xff]
        %v479 = vld [vmem:[#allocation8 + $0xa0] sm:$0xff]
        %v480 = vld [vmem:[#allocation8 + $0xa8] sm:$0xff]
        %v481 = vld [vmem:[#allocation8 + $0xb0] sm:$0xff]
        %v482 = vld [vmem:[#allocation8 + $0xb8] sm:$0xff]
        %v483 = vld [vmem:[#allocation8 + $0xc0] sm:$0xff]
        %v484 = vld [vmem:[#allocation8 + $0xc8] sm:$0xff]
        %v485 = vld [vmem:[#allocation8 + $0xd0] sm:$0xff]
        %v486 = vld [vmem:[#allocation8 + $0xd8] sm:$0xff]
        %v487 = vld [vmem:[#allocation8 + $0xe0] sm:$0xff]
        %v488 = vld [vmem:[#allocation8 + $0xe8] sm:$0xff]
        %v489 = vld [vmem:[#allocation8 + $0xf0] sm:$0xff]
        %v490 = vld [vmem:[#allocation8 + $0xf8] sm:$0xff]
        %v491 = vld [vmem:[#allocation8 + $0x100] sm:$0xff]
        %v492 = vld [vmem:[#allocation8 + $0x108] sm:$0xff]
        %v493 = vld [vmem:[#allocation8 + $0x110] sm:$0xff]
        %v494 = vld [vmem:[#allocation8 + $0x118] sm:$0xff]
        %v495 = vld [vmem:[#allocation8 + $0x120] sm:$0xff]
        %v496 = vld [vmem:[#allocation8 + $0x128] sm:$0xff]
        %v497 = vld [vmem:[#allocation8 + $0x130] sm:$0xff]
        %v498 = vld [vmem:[#allocation8 + $0x138] sm:$0xff]
        %v499 = vld [vmem:[#allocation8 + $0x140] sm:$0xff]
        %v500 = vld [vmem:[#allocation8 + $0x148] sm:$0xff]
        %v501 = vld [vmem:[#allocation8 + $0x150] sm:$0xff]
        %v502 = vld [vmem:[#allocation8 + $0x158] sm:$0xff]
        %v503 = vld [vmem:[#allocation8 + $0x160] sm:$0xff]
        %v504 = vld [vmem:[#allocation8 + $0x168] sm:$0xff]
        %v505 = vld [vmem:[#allocation8 + $0x170] sm:$0xff]
        %v506 = vld [vmem:[#allocation8 + $0x178] sm:$0xff]
        %508 = vset.pattern.permute.xlu0 0
        %509 = vperm.xlu0 %508, %v459
        %v510 = vpop.permute.xlu0 %509
        %513 = vset.pattern.permute.xlu0 0
        %514 = vperm.xlu0 %513, %v460
        %v515 = vpop.permute.xlu0 %514
        %518 = vset.pattern.permute.xlu0 0
        %519 = vperm.xlu0 %518, %v461
        %v520 = vpop.permute.xlu0 %519
        %523 = vset.pattern.permute.xlu0 0
        %524 = vperm.xlu0 %523, %v462
        %v525 = vpop.permute.xlu0 %524
        %528 = vset.pattern.permute.xlu0 0
        %529 = vperm.xlu0 %528, %v463
        %v530 = vpop.permute.xlu0 %529
        %533 = vset.pattern.permute.xlu0 0
        %534 = vperm.xlu0 %533, %v464
        %v535 = vpop.permute.xlu0 %534
        %538 = vset.pattern.permute.xlu0 0
        %539 = vperm.xlu0 %538, %v465
        %v540 = vpop.permute.xlu0 %539
        %543 = vset.pattern.permute.xlu0 0
        %544 = vperm.xlu0 %543, %v466
        %v545 = vpop.permute.xlu0 %544
        %548 = vset.pattern.permute.xlu0 0
        %549 = vperm.xlu0 %548, %v467
        %v550 = vpop.permute.xlu0 %549
        %553 = vset.pattern.permute.xlu0 0
        %554 = vperm.xlu0 %553, %v468
        %v555 = vpop.permute.xlu0 %554
        %558 = vset.pattern.permute.xlu0 0
        %559 = vperm.xlu0 %558, %v469
        %v560 = vpop.permute.xlu0 %559
        %563 = vset.pattern.permute.xlu0 0
        %564 = vperm.xlu0 %563, %v470
        %v565 = vpop.permute.xlu0 %564
        %568 = vset.pattern.permute.xlu0 0
        %569 = vperm.xlu0 %568, %v471
        %v570 = vpop.permute.xlu0 %569
        %573 = vset.pattern.permute.xlu0 0
        %574 = vperm.xlu0 %573, %v472
        %v575 = vpop.permute.xlu0 %574
        %578 = vset.pattern.permute.xlu0 0
        %579 = vperm.xlu0 %578, %v473
        %v580 = vpop.permute.xlu0 %579
        %583 = vset.pattern.permute.xlu0 0
        %584 = vperm.xlu0 %583, %v474
        %v585 = vpop.permute.xlu0 %584
        %588 = vset.pattern.permute.xlu0 0
        %589 = vperm.xlu0 %588, %v475
        %v590 = vpop.permute.xlu0 %589
        %593 = vset.pattern.permute.xlu0 0
        %594 = vperm.xlu0 %593, %v476
        %v595 = vpop.permute.xlu0 %594
        %598 = vset.pattern.permute.xlu0 0
        %599 = vperm.xlu0 %598, %v477
        %v600 = vpop.permute.xlu0 %599
        %603 = vset.pattern.permute.xlu0 0
        %604 = vperm.xlu0 %603, %v478
        %v605 = vpop.permute.xlu0 %604
        %608 = vset.pattern.permute.xlu0 0
        %609 = vperm.xlu0 %608, %v479
        %v610 = vpop.permute.xlu0 %609
        %613 = vset.pattern.permute.xlu0 0
        %614 = vperm.xlu0 %613, %v480
        %v615 = vpop.permute.xlu0 %614
        %618 = vset.pattern.permute.xlu0 0
        %619 = vperm.xlu0 %618, %v481
        %v620 = vpop.permute.xlu0 %619
        %623 = vset.pattern.permute.xlu0 0
        %624 = vperm.xlu0 %623, %v482
        %v625 = vpop.permute.xlu0 %624
        %628 = vset.pattern.permute.xlu0 0
        %629 = vperm.xlu0 %628, %v483
        %v630 = vpop.permute.xlu0 %629
        %633 = vset.pattern.permute.xlu0 0
        %634 = vperm.xlu0 %633, %v484
        %v635 = vpop.permute.xlu0 %634
        %638 = vset.pattern.permute.xlu0 0
        %639 = vperm.xlu0 %638, %v485
        %v640 = vpop.permute.xlu0 %639
        %643 = vset.pattern.permute.xlu0 0
        %644 = vperm.xlu0 %643, %v486
        %v645 = vpop.permute.xlu0 %644
        %648 = vset.pattern.permute.xlu0 0
        %649 = vperm.xlu0 %648, %v487
        %v650 = vpop.permute.xlu0 %649
        %653 = vset.pattern.permute.xlu0 0
        %654 = vperm.xlu0 %653, %v488
        %v655 = vpop.permute.xlu0 %654
        %658 = vset.pattern.permute.xlu0 0
        %659 = vperm.xlu0 %658, %v489
        %v660 = vpop.permute.xlu0 %659
        %663 = vset.pattern.permute.xlu0 0
        %664 = vperm.xlu0 %663, %v490
        %v665 = vpop.permute.xlu0 %664
        %668 = vset.pattern.permute.xlu0 0
        %669 = vperm.xlu0 %668, %v491
        %v670 = vpop.permute.xlu0 %669
        %673 = vset.pattern.permute.xlu0 0
        %674 = vperm.xlu0 %673, %v492
        %v675 = vpop.permute.xlu0 %674
        %678 = vset.pattern.permute.xlu0 0
        %679 = vperm.xlu0 %678, %v493
        %v680 = vpop.permute.xlu0 %679
        %683 = vset.pattern.permute.xlu0 0
        %684 = vperm.xlu0 %683, %v494
        %v685 = vpop.permute.xlu0 %684
        %688 = vset.pattern.permute.xlu0 0
        %689 = vperm.xlu0 %688, %v495
        %v690 = vpop.permute.xlu0 %689
        %693 = vset.pattern.permute.xlu0 0
        %694 = vperm.xlu0 %693, %v496
        %v695 = vpop.permute.xlu0 %694
        %698 = vset.pattern.permute.xlu0 0
        %699 = vperm.xlu0 %698, %v497
        %v700 = vpop.permute.xlu0 %699
        %703 = vset.pattern.permute.xlu0 0
        %704 = vperm.xlu0 %703, %v498
        %v705 = vpop.permute.xlu0 %704
        %708 = vset.pattern.permute.xlu0 0
        %709 = vperm.xlu0 %708, %v499
        %v710 = vpop.permute.xlu0 %709
        %713 = vset.pattern.permute.xlu0 0
        %714 = vperm.xlu0 %713, %v500
        %v715 = vpop.permute.xlu0 %714
        %718 = vset.pattern.permute.xlu0 0
        %719 = vperm.xlu0 %718, %v501
        %v720 = vpop.permute.xlu0 %719
        %723 = vset.pattern.permute.xlu0 0
        %724 = vperm.xlu0 %723, %v502
        %v725 = vpop.permute.xlu0 %724
        %728 = vset.pattern.permute.xlu0 0
        %729 = vperm.xlu0 %728, %v503
        %v730 = vpop.permute.xlu0 %729
        %733 = vset.pattern.permute.xlu0 0
        %734 = vperm.xlu0 %733, %v504
        %v735 = vpop.permute.xlu0 %734
        %738 = vset.pattern.permute.xlu0 0
        %739 = vperm.xlu0 %738, %v505
        %v740 = vpop.permute.xlu0 %739
        %743 = vset.pattern.permute.xlu0 0
        %744 = vperm.xlu0 %743, %v506
        %v745 = vpop.permute.xlu0 %744
        %v795 = vunpack.c.l.b16 %v411
        %v796 = vunpack.c.l.b16 %v412
        %v797 = vunpack.c.l.b16 %v413
        %v798 = vunpack.c.l.b16 %v414
        %v799 = vunpack.c.l.b16 %v415
        %v800 = vunpack.c.l.b16 %v416
        %v801 = vunpack.c.l.b16 %v417
        %v802 = vunpack.c.l.b16 %v418
        %v803 = vunpack.c.l.b16 %v419
        %v804 = vunpack.c.l.b16 %v420
        %v805 = vunpack.c.l.b16 %v421
        %v806 = vunpack.c.l.b16 %v422
        %v807 = vunpack.c.l.b16 %v423
        %v808 = vunpack.c.l.b16 %v424
        %v809 = vunpack.c.l.b16 %v425
        %v810 = vunpack.c.l.b16 %v426
        %v811 = vunpack.c.l.b16 %v427
        %v812 = vunpack.c.l.b16 %v428
        %v813 = vunpack.c.l.b16 %v429
        %v814 = vunpack.c.l.b16 %v430
        %v815 = vunpack.c.l.b16 %v431
        %v816 = vunpack.c.l.b16 %v432
        %v817 = vunpack.c.l.b16 %v433
        %v818 = vunpack.c.l.b16 %v434
        %v819 = vunpack.c.l.b16 %v435
        %v820 = vunpack.c.l.b16 %v436
        %v821 = vunpack.c.l.b16 %v437
        %v822 = vunpack.c.l.b16 %v438
        %v823 = vunpack.c.l.b16 %v439
        %v824 = vunpack.c.l.b16 %v440
        %v825 = vunpack.c.l.b16 %v441
        %v826 = vunpack.c.l.b16 %v442
        %v827 = vunpack.c.l.b16 %v443
        %v828 = vunpack.c.l.b16 %v444
        %v829 = vunpack.c.l.b16 %v445
        %v830 = vunpack.c.l.b16 %v446
        %v831 = vunpack.c.l.b16 %v447
        %v832 = vunpack.c.l.b16 %v448
        %v833 = vunpack.c.l.b16 %v449
        %v834 = vunpack.c.l.b16 %v450
        %v835 = vunpack.c.l.b16 %v451
        %v836 = vunpack.c.l.b16 %v452
        %v837 = vunpack.c.l.b16 %v453
        %v838 = vunpack.c.l.b16 %v454
        %v839 = vunpack.c.l.b16 %v455
        %v840 = vunpack.c.l.b16 %v456
        %v841 = vunpack.c.l.b16 %v457
        %v842 = vunpack.c.l.b16 %v458
        %v843 = vpack.c.b16 %v796, %v795
        %v844 = vpack.c.b16 %v798, %v797
        %v845 = vpack.c.b16 %v800, %v799
        %v846 = vpack.c.b16 %v802, %v801
        %v847 = vpack.c.b16 %v804, %v803
        %v848 = vpack.c.b16 %v806, %v805
        %v849 = vpack.c.b16 %v808, %v807
        %v850 = vpack.c.b16 %v810, %v809
        %v851 = vpack.c.b16 %v812, %v811
        %v852 = vpack.c.b16 %v814, %v813
        %v853 = vpack.c.b16 %v816, %v815
        %v854 = vpack.c.b16 %v818, %v817
        %v855 = vpack.c.b16 %v820, %v819
        %v856 = vpack.c.b16 %v822, %v821
        %v857 = vpack.c.b16 %v824, %v823
        %v858 = vpack.c.b16 %v826, %v825
        %v859 = vpack.c.b16 %v828, %v827
        %v860 = vpack.c.b16 %v830, %v829
        %v861 = vpack.c.b16 %v832, %v831
        %v862 = vpack.c.b16 %v834, %v833
        %v863 = vpack.c.b16 %v836, %v835
        %v864 = vpack.c.b16 %v838, %v837
        %v865 = vpack.c.b16 %v840, %v839
        %v866 = vpack.c.b16 %v842, %v841
        %v871 = vunpack.c.l.b16 %v407
        %v872 = vunpack.c.h.b16 %v407
        %v873 = vunpack.c.l.b16 %v408
        %v874 = vunpack.c.h.b16 %v408
        %v875 = vunpack.c.l.b16 %v409
        %v876 = vunpack.c.h.b16 %v409
        %v877 = vunpack.c.l.b16 %v410
        %v878 = vunpack.c.h.b16 %v410
        %v879 = vpack.c.b16 %v873, %v871
        %v880 = vpack.c.b16 %v874, %v872
        %v881 = vpack.c.b16 %v877, %v875
        %v882 = vpack.c.b16 %v878, %v876
        %vm887 = vcmask 261120
        %v889 = vsel %vm887, %v843, 0
        %v892 = vsel %vm887, %v844, 0
        %v895 = vsel %vm887, %v845, 0
        %v898 = vsel %vm887, %v846, 0
        %v901 = vsel %vm887, %v847, 0
        %v904 = vsel %vm887, %v848, 0
        %v907 = vsel %vm887, %v849, 0
        %v910 = vsel %vm887, %v850, 0
        %v913 = vsel %vm887, %v851, 0
        %v916 = vsel %vm887, %v852, 0
        %v919 = vsel %vm887, %v853, 0
        %v922 = vsel %vm887, %v854, 0
        %v925 = vsel %vm887, %v855, 0
        %v928 = vsel %vm887, %v856, 0
        %v931 = vsel %vm887, %v857, 0
        %v934 = vsel %vm887, %v858, 0
        %v937 = vsel %vm887, %v859, 0
        %v940 = vsel %vm887, %v860, 0
        %v943 = vsel %vm887, %v861, 0
        %v946 = vsel %vm887, %v862, 0
        %v949 = vsel %vm887, %v863, 0
        %v952 = vsel %vm887, %v864, 0
        %v955 = vsel %vm887, %v865, 0
        %v958 = vsel %vm887, %v866, 0
        %960 = vmatprep.subr.bf16.mxu0 %v880
        %961 = vmatpush1.bf16.msra.mxu0 %v879
        %962 = vmatprep.subr.bf16.mxu0 %v882
        %963 = vmatpush1.bf16.msra.mxu0 %v881
        %964 = vmatprep.subr.bf16.mxu0 0
        %965 = vmatpush1.bf16.msra.mxu0 0
        %966 = vmatprep.subr.bf16.mxu0 0
        %967 = vmatpush1.bf16.msra.mxu0 0
        %968 = vmatprep.subr.bf16.mxu0 0
        %969 = vmatpush1.bf16.msra.mxu0 0
        %970 = vmatprep.subr.bf16.mxu0 0
        %971 = vmatpush1.bf16.msra.mxu0 0
        %972 = vmatprep.subr.bf16.mxu0 0
        %973 = vmatpush1.bf16.msra.mxu0 0
        %974 = vmatprep.subr.bf16.mxu0 0
        %975 = vmatpush1.bf16.msra.mxu0 0
        %976 = vmatprep.subr.bf16.mxu0 0
        %977 = vmatpush1.bf16.msra.mxu0 0
        %978 = vmatprep.subr.bf16.mxu0 0
        %979 = vmatpush1.bf16.msra.mxu0 0
        %980 = vmatprep.subr.bf16.mxu0 0
        %981 = vmatpush1.bf16.msra.mxu0 0
        %982 = vmatprep.subr.bf16.mxu0 0
        %983 = vmatpush1.bf16.msra.mxu0 0
        %984 = vmatprep.subr.bf16.mxu0 0
        %985 = vmatpush1.bf16.msra.mxu0 0
        %986 = vmatprep.subr.bf16.mxu0 0
        %987 = vmatpush1.bf16.msra.mxu0 0
        %988 = vmatprep.subr.bf16.mxu0 0
        %989 = vmatpush1.bf16.msra.mxu0 0
        %990 = vmatprep.subr.bf16.mxu0 0
        %991 = vmatpush1.bf16.msra.mxu0 0
        %992 = vmatprep.mubr.bf16.mxu0 0
        %993 = vmatmul.mubr.bf16.gmra.mrb[0].mxu0 %v889
        %v994 = vpop.f32.mrb[0].mxu0
        %v995 = vadd.f32 %v510, %v994
        %v996 = vpop.f32.mrb[0].mxu0
        %v997 = vadd.f32 %v510, %v996
        %v998 = vpop.f32.mrb[0].mxu0
        %v999 = vadd.f32 %v515, %v998
        %v1000 = vpop.f32.mrb[0].mxu0
        %v1001 = vadd.f32 %v515, %v1000
        %1002 = vmatprep.mubr.bf16.mxu0 0
        %1003 = vmatmul.mubr.bf16.gmra.mrb[0].mxu0 %v892
        %v1004 = vpop.f32.mrb[0].mxu0
        %v1005 = vadd.f32 %v520, %v1004
        %v1006 = vpop.f32.mrb[0].mxu0
        %v1007 = vadd.f32 %v520, %v1006
        %v1008 = vpop.f32.mrb[0].mxu0
        %v1009 = vadd.f32 %v525, %v1008
        %v1010 = vpop.f32.mrb[0].mxu0
        %v1011 = vadd.f32 %v525, %v1010
        %1012 = vmatprep.mubr.bf16.mxu0 0
        %1013 = vmatmul.mubr.bf16.gmra.mrb[0].mxu0 %v895
        %v1014 = vpop.f32.mrb[0].mxu0
        %v1015 = vadd.f32 %v530, %v1014
        %v1016 = vpop.f32.mrb[0].mxu0
        %v1017 = vadd.f32 %v530, %v1016
        %v1018 = vpop.f32.mrb[0].mxu0
        %v1019 = vadd.f32 %v535, %v1018
        %v1020 = vpop.f32.mrb[0].mxu0
        %v1021 = vadd.f32 %v535, %v1020
        %1022 = vmatprep.mubr.bf16.mxu0 0
        %1023 = vmatmul.mubr.bf16.gmra.mrb[0].mxu0 %v898
        %v1024 = vpop.f32.mrb[0].mxu0
        %v1025 = vadd.f32 %v540, %v1024
        %v1026 = vpop.f32.mrb[0].mxu0
        %v1027 = vadd.f32 %v540, %v1026
        %v1028 = vpop.f32.mrb[0].mxu0
        %v1029 = vadd.f32 %v545, %v1028
        %v1030 = vpop.f32.mrb[0].mxu0
        %v1031 = vadd.f32 %v545, %v1030
        %1032 = vmatprep.mubr.bf16.mxu0 0
        %1033 = vmatmul.mubr.bf16.gmra.mrb[0].mxu0 %v901
        %v1034 = vpop.f32.mrb[0].mxu0
        %v1035 = vadd.f32 %v550, %v1034
        %v1036 = vpop.f32.mrb[0].mxu0
        %v1037 = vadd.f32 %v550, %v1036
        %v1038 = vpop.f32.mrb[0].mxu0
        %v1039 = vadd.f32 %v555, %v1038
        %v1040 = vpop.f32.mrb[0].mxu0
        %v1041 = vadd.f32 %v555, %v1040
        %1042 = vmatprep.mubr.bf16.mxu0 0
        %1043 = vmatmul.mubr.bf16.gmra.mrb[0].mxu0 %v904
        %v1044 = vpop.f32.mrb[0].mxu0
        %v1045 = vadd.f32 %v560, %v1044
        %v1046 = vpop.f32.mrb[0].mxu0
        %v1047 = vadd.f32 %v560, %v1046
        %v1048 = vpop.f32.mrb[0].mxu0
        %v1049 = vadd.f32 %v565, %v1048
        %v1050 = vpop.f32.mrb[0].mxu0
        %v1051 = vadd.f32 %v565, %v1050
        %1052 = vmatprep.mubr.bf16.mxu0 0
        %1053 = vmatmul.mubr.bf16.gmra.mrb[0].mxu0 %v907
        %v1054 = vpop.f32.mrb[0].mxu0
        %v1055 = vadd.f32 %v570, %v1054
        %v1056 = vpop.f32.mrb[0].mxu0
        %v1057 = vadd.f32 %v570, %v1056
        %v1058 = vpop.f32.mrb[0].mxu0
        %v1059 = vadd.f32 %v575, %v1058
        %v1060 = vpop.f32.mrb[0].mxu0
        %v1061 = vadd.f32 %v575, %v1060
        %1062 = vmatprep.mubr.bf16.mxu0 0
        %1063 = vmatmul.mubr.bf16.gmra.mrb[0].mxu0 %v910
        %v1064 = vpop.f32.mrb[0].mxu0
        %v1065 = vadd.f32 %v580, %v1064
        %v1066 = vpop.f32.mrb[0].mxu0
        %v1067 = vadd.f32 %v580, %v1066
        %v1068 = vpop.f32.mrb[0].mxu0
        %v1069 = vadd.f32 %v585, %v1068
        %v1070 = vpop.f32.mrb[0].mxu0
        %v1071 = vadd.f32 %v585, %v1070
        %1072 = vmatprep.mubr.bf16.mxu0 0
        %1073 = vmatmul.mubr.bf16.gmra.mrb[0].mxu0 %v913
        %v1074 = vpop.f32.mrb[0].mxu0
        %v1075 = vadd.f32 %v590, %v1074
        %v1076 = vpop.f32.mrb[0].mxu0
        %v1077 = vadd.f32 %v590, %v1076
        %v1078 = vpop.f32.mrb[0].mxu0
        %v1079 = vadd.f32 %v595, %v1078
        %v1080 = vpop.f32.mrb[0].mxu0
        %v1081 = vadd.f32 %v595, %v1080
        %1082 = vmatprep.mubr.bf16.mxu0 0
        %1083 = vmatmul.mubr.bf16.gmra.mrb[0].mxu0 %v916
        %v1084 = vpop.f32.mrb[0].mxu0
        %v1085 = vadd.f32 %v600, %v1084
        %v1086 = vpop.f32.mrb[0].mxu0
        %v1087 = vadd.f32 %v600, %v1086
        %v1088 = vpop.f32.mrb[0].mxu0
        %v1089 = vadd.f32 %v605, %v1088
        %v1090 = vpop.f32.mrb[0].mxu0
        %v1091 = vadd.f32 %v605, %v1090
        %1092 = vmatprep.mubr.bf16.mxu0 0
        %1093 = vmatmul.mubr.bf16.gmra.mrb[0].mxu0 %v919
        %v1094 = vpop.f32.mrb[0].mxu0
        %v1095 = vadd.f32 %v610, %v1094
        %v1096 = vpop.f32.mrb[0].mxu0
        %v1097 = vadd.f32 %v610, %v1096
        %v1098 = vpop.f32.mrb[0].mxu0
        %v1099 = vadd.f32 %v615, %v1098
        %v1100 = vpop.f32.mrb[0].mxu0
        %v1101 = vadd.f32 %v615, %v1100
        %1102 = vmatprep.mubr.bf16.mxu0 0
        %1103 = vmatmul.mubr.bf16.gmra.mrb[0].mxu0 %v922
        %v1104 = vpop.f32.mrb[0].mxu0
        %v1105 = vadd.f32 %v620, %v1104
        %v1106 = vpop.f32.mrb[0].mxu0
        %v1107 = vadd.f32 %v620, %v1106
        %v1108 = vpop.f32.mrb[0].mxu0
        %v1109 = vadd.f32 %v625, %v1108
        %v1110 = vpop.f32.mrb[0].mxu0
        %v1111 = vadd.f32 %v625, %v1110
        %1112 = vmatprep.mubr.bf16.mxu0 0
        %1113 = vmatmul.mubr.bf16.gmra.mrb[0].mxu0 %v925
        %v1114 = vpop.f32.mrb[0].mxu0
        %v1115 = vadd.f32 %v630, %v1114
        %v1116 = vpop.f32.mrb[0].mxu0
        %v1117 = vadd.f32 %v630, %v1116
        %v1118 = vpop.f32.mrb[0].mxu0
        %v1119 = vadd.f32 %v635, %v1118
        %v1120 = vpop.f32.mrb[0].mxu0
        %v1121 = vadd.f32 %v635, %v1120
        %1122 = vmatprep.mubr.bf16.mxu0 0
        %1123 = vmatmul.mubr.bf16.gmra.mrb[0].mxu0 %v928
        %v1124 = vpop.f32.mrb[0].mxu0
        %v1125 = vadd.f32 %v640, %v1124
        %v1126 = vpop.f32.mrb[0].mxu0
        %v1127 = vadd.f32 %v640, %v1126
        %v1128 = vpop.f32.mrb[0].mxu0
        %v1129 = vadd.f32 %v645, %v1128
        %v1130 = vpop.f32.mrb[0].mxu0
        %v1131 = vadd.f32 %v645, %v1130
        %1132 = vmatprep.mubr.bf16.mxu0 0
        %1133 = vmatmul.mubr.bf16.gmra.mrb[0].mxu0 %v931
        %v1134 = vpop.f32.mrb[0].mxu0
        %v1135 = vadd.f32 %v650, %v1134
        %v1136 = vpop.f32.mrb[0].mxu0
        %v1137 = vadd.f32 %v650, %v1136
        %v1138 = vpop.f32.mrb[0].mxu0
        %v1139 = vadd.f32 %v655, %v1138
        %v1140 = vpop.f32.mrb[0].mxu0
        %v1141 = vadd.f32 %v655, %v1140
        %1142 = vmatprep.mubr.bf16.mxu0 0
        %1143 = vmatmul.mubr.bf16.gmra.mrb[0].mxu0 %v934
        %v1144 = vpop.f32.mrb[0].mxu0
        %v1145 = vadd.f32 %v660, %v1144
        %v1146 = vpop.f32.mrb[0].mxu0
        %v1147 = vadd.f32 %v660, %v1146
        %v1148 = vpop.f32.mrb[0].mxu0
        %v1149 = vadd.f32 %v665, %v1148
        %v1150 = vpop.f32.mrb[0].mxu0
        %v1151 = vadd.f32 %v665, %v1150
        %1152 = vmatprep.mubr.bf16.mxu0 0
        %1153 = vmatmul.mubr.bf16.gmra.mrb[0].mxu0 %v937
        %v1154 = vpop.f32.mrb[0].mxu0
        %v1155 = vadd.f32 %v670, %v1154
        %v1156 = vpop.f32.mrb[0].mxu0
        %v1157 = vadd.f32 %v670, %v1156
        %v1158 = vpop.f32.mrb[0].mxu0
        %v1159 = vadd.f32 %v675, %v1158
        %v1160 = vpop.f32.mrb[0].mxu0
        %v1161 = vadd.f32 %v675, %v1160
        %1162 = vmatprep.mubr.bf16.mxu0 0
        %1163 = vmatmul.mubr.bf16.gmra.mrb[0].mxu0 %v940
        %v1164 = vpop.f32.mrb[0].mxu0
        %v1165 = vadd.f32 %v680, %v1164
        %v1166 = vpop.f32.mrb[0].mxu0
        %v1167 = vadd.f32 %v680, %v1166
        %v1168 = vpop.f32.mrb[0].mxu0
        %v1169 = vadd.f32 %v685, %v1168
        %v1170 = vpop.f32.mrb[0].mxu0
        %v1171 = vadd.f32 %v685, %v1170
        %1172 = vmatprep.mubr.bf16.mxu0 0
        %1173 = vmatmul.mubr.bf16.gmra.mrb[0].mxu0 %v943
        %v1174 = vpop.f32.mrb[0].mxu0
        %v1175 = vadd.f32 %v690, %v1174
        %v1176 = vpop.f32.mrb[0].mxu0
        %v1177 = vadd.f32 %v690, %v1176
        %v1178 = vpop.f32.mrb[0].mxu0
        %v1179 = vadd.f32 %v695, %v1178
        %v1180 = vpop.f32.mrb[0].mxu0
        %v1181 = vadd.f32 %v695, %v1180
        %1182 = vmatprep.mubr.bf16.mxu0 0
        %1183 = vmatmul.mubr.bf16.gmra.mrb[0].mxu0 %v946
        %v1184 = vpop.f32.mrb[0].mxu0
        %v1185 = vadd.f32 %v700, %v1184
        %v1186 = vpop.f32.mrb[0].mxu0
        %v1187 = vadd.f32 %v700, %v1186
        %v1188 = vpop.f32.mrb[0].mxu0
        %v1189 = vadd.f32 %v705, %v1188
        %v1190 = vpop.f32.mrb[0].mxu0
        %v1191 = vadd.f32 %v705, %v1190
        %1192 = vmatprep.mubr.bf16.mxu0 0
        %1193 = vmatmul.mubr.bf16.gmra.mrb[0].mxu0 %v949
        %v1194 = vpop.f32.mrb[0].mxu0
        %v1195 = vadd.f32 %v710, %v1194
        %v1196 = vpop.f32.mrb[0].mxu0
        %v1197 = vadd.f32 %v710, %v1196
        %v1198 = vpop.f32.mrb[0].mxu0
        %v1199 = vadd.f32 %v715, %v1198
        %v1200 = vpop.f32.mrb[0].mxu0
        %v1201 = vadd.f32 %v715, %v1200
        %1202 = vmatprep.mubr.bf16.mxu0 0
        %1203 = vmatmul.mubr.bf16.gmra.mrb[0].mxu0 %v952
        %v1204 = vpop.f32.mrb[0].mxu0
        %v1205 = vadd.f32 %v720, %v1204
        %v1206 = vpop.f32.mrb[0].mxu0
        %v1207 = vadd.f32 %v720, %v1206
        %v1208 = vpop.f32.mrb[0].mxu0
        %v1209 = vadd.f32 %v725, %v1208
        %v1210 = vpop.f32.mrb[0].mxu0
        %v1211 = vadd.f32 %v725, %v1210
        %1212 = vmatprep.mubr.bf16.mxu0 0
        %1213 = vmatmul.mubr.bf16.gmra.mrb[0].mxu0 %v955
        %v1214 = vpop.f32.mrb[0].mxu0
        %v1215 = vadd.f32 %v730, %v1214
        %v1216 = vpop.f32.mrb[0].mxu0
        %v1217 = vadd.f32 %v730, %v1216
        %v1218 = vpop.f32.mrb[0].mxu0
        %v1219 = vadd.f32 %v735, %v1218
        %v1220 = vpop.f32.mrb[0].mxu0
        %v1221 = vadd.f32 %v735, %v1220
        %1222 = vmatprep.mubr.bf16.mxu0 0
        %1223 = vmatmul.mubr.bf16.gmra.mrb[0].mxu0 %v958
        %v1224 = vpop.f32.mrb[0].mxu0
        %v1225 = vadd.f32 %v740, %v1224
        %v1226 = vpop.f32.mrb[0].mxu0
        %v1227 = vadd.f32 %v740, %v1226
        %v1228 = vpop.f32.mrb[0].mxu0
        %v1229 = vadd.f32 %v745, %v1228
        %v1230 = vpop.f32.mrb[0].mxu0
        %v1231 = vadd.f32 %v745, %v1230
        %1232 = vdwg.mxu0
        %v1233 = vpack.c.bf16 %v999, %v995
        %v1234 = vpack.c.bf16 %v1001, %v997
        %v1235 = vpack.c.bf16 %v1009, %v1005
        %v1236 = vpack.c.bf16 %v1011, %v1007
        %v1237 = vpack.c.bf16 %v1019, %v1015
        %v1238 = vpack.c.bf16 %v1021, %v1017
        %v1239 = vpack.c.bf16 %v1029, %v1025
        %v1240 = vpack.c.bf16 %v1031, %v1027
        %v1241 = vpack.c.bf16 %v1039, %v1035
        %v1242 = vpack.c.bf16 %v1041, %v1037
        %v1243 = vpack.c.bf16 %v1049, %v1045
        %v1244 = vpack.c.bf16 %v1051, %v1047
        %v1245 = vpack.c.bf16 %v1059, %v1055
        %v1246 = vpack.c.bf16 %v1061, %v1057
        %v1247 = vpack.c.bf16 %v1069, %v1065
        %v1248 = vpack.c.bf16 %v1071, %v1067
        %v1249 = vpack.c.bf16 %v1079, %v1075
        %v1250 = vpack.c.bf16 %v1081, %v1077
        %v1251 = vpack.c.bf16 %v1089, %v1085
        %v1252 = vpack.c.bf16 %v1091, %v1087
        %v1253 = vpack.c.bf16 %v1099, %v1095
        %v1254 = vpack.c.bf16 %v1101, %v1097
        %v1255 = vpack.c.bf16 %v1109, %v1105
        %v1256 = vpack.c.bf16 %v1111, %v1107
        %v1257 = vpack.c.bf16 %v1119, %v1115
        %v1258 = vpack.c.bf16 %v1121, %v1117
        %v1259 = vpack.c.bf16 %v1129, %v1125
        %v1260 = vpack.c.bf16 %v1131, %v1127
        %v1261 = vpack.c.bf16 %v1139, %v1135
        %v1262 = vpack.c.bf16 %v1141, %v1137
        %v1263 = vpack.c.bf16 %v1149, %v1145
        %v1264 = vpack.c.bf16 %v1151, %v1147
        %v1265 = vpack.c.bf16 %v1159, %v1155
        %v1266 = vpack.c.bf16 %v1161, %v1157
        %v1267 = vpack.c.bf16 %v1169, %v1165
        %v1268 = vpack.c.bf16 %v1171, %v1167
        %v1269 = vpack.c.bf16 %v1179, %v1175
        %v1270 = vpack.c.bf16 %v1181, %v1177
        %v1271 = vpack.c.bf16 %v1189, %v1185
        %v1272 = vpack.c.bf16 %v1191, %v1187
        %v1273 = vpack.c.bf16 %v1199, %v1195
        %v1274 = vpack.c.bf16 %v1201, %v1197
        %v1275 = vpack.c.bf16 %v1209, %v1205
        %v1276 = vpack.c.bf16 %v1211, %v1207
        %v1277 = vpack.c.bf16 %v1219, %v1215
        %v1278 = vpack.c.bf16 %v1221, %v1217
        %v1279 = vpack.c.bf16 %v1229, %v1225
        %v1280 = vpack.c.bf16 %v1231, %v1227
        %1281 = vxpose.xlu0.c.b16.start [1/8] %v1233, 128
        %1282 = vxpose.xlu0.c.b16.cont [2/8] %v1235, 128
        %1283 = vxpose.xlu0.c.b16.cont [3/8] %v1237, 128
        %1284 = vxpose.xlu0.c.b16.cont [4/8] %v1239, 128
        %1285 = vxpose.xlu0.c.b16.cont [5/8] %v1241, 128
        %1286 = vxpose.xlu0.c.b16.cont [6/8] %v1243, 128
        %1287 = vxpose.xlu0.c.b16.cont [7/8] %v1245, 128
        %1288 = vxpose.xlu0.c.b16.end [8/8] %v1247, 128
        %v1289 = vpop.trf.xlu0
        %v1290 = vpop.trf.xlu0
        %v1291 = vpop.trf.xlu0
        %v1292 = vpop.trf.xlu0
        %v1293 = vpop.trf.xlu0
        %v1294 = vpop.trf.xlu0
        %v1295 = vpop.trf.xlu0
        %v1296 = vpop.trf.xlu0
        %1297 = vxpose.xlu0.c.b16.start [1/8] %v1234, 128
        %1298 = vxpose.xlu0.c.b16.cont [2/8] %v1236, 128
        %1299 = vxpose.xlu0.c.b16.cont [3/8] %v1238, 128
        %1300 = vxpose.xlu0.c.b16.cont [4/8] %v1240, 128
        %1301 = vxpose.xlu0.c.b16.cont [5/8] %v1242, 128
        %1302 = vxpose.xlu0.c.b16.cont [6/8] %v1244, 128
        %1303 = vxpose.xlu0.c.b16.cont [7/8] %v1246, 128
        %1304 = vxpose.xlu0.c.b16.end [8/8] %v1248, 128
        %v1305 = vpop.trf.xlu0
        %v1306 = vpop.trf.xlu0
        %v1307 = vpop.trf.xlu0
        %v1308 = vpop.trf.xlu0
        %v1309 = vpop.trf.xlu0
        %v1310 = vpop.trf.xlu0
        %v1311 = vpop.trf.xlu0
        %v1312 = vpop.trf.xlu0
        %1313 = vmatprep.subr.bf16.mxu0 %v1250
        %1314 = vmatpush1.bf16.msra.mxu0 %v1249
        %1315 = vmatprep.subr.bf16.mxu0 %v1252
        %1316 = vmatpush1.bf16.msra.mxu0 %v1251
        %1317 = vmatprep.subr.bf16.mxu0 %v1254
        %1318 = vmatpush1.bf16.msra.mxu0 %v1253
        %1319 = vmatprep.subr.bf16.mxu0 %v1256
        %1320 = vmatpush1.bf16.msra.mxu0 %v1255
        %1321 = vmatprep.subr.bf16.mxu0 %v1258
        %1322 = vmatpush1.bf16.msra.mxu0 %v1257
        %1323 = vmatprep.subr.bf16.mxu0 %v1260
        %1324 = vmatpush1.bf16.msra.mxu0 %v1259
        %1325 = vmatprep.subr.bf16.mxu0 %v1262
        %1326 = vmatpush1.bf16.msra.mxu0 %v1261
        %1327 = vmatprep.subr.bf16.mxu0 %v1264
        %1328 = vmatpush1.bf16.msra.mxu0 %v1263
        %1329 = vmatprep.subr.bf16.mxu0 0
        %1330 = vmatpush1.bf16.msra.mxu0 0
        %1331 = vmatprep.subr.bf16.mxu0 0
        %1332 = vmatpush1.bf16.msra.mxu0 0
        %1333 = vmatprep.subr.bf16.mxu0 0
        %1334 = vmatpush1.bf16.msra.mxu0 0
        %1335 = vmatprep.subr.bf16.mxu0 0
        %1336 = vmatpush1.bf16.msra.mxu0 0
        %1337 = vmatprep.subr.bf16.mxu0 0
        %1338 = vmatpush1.bf16.msra.mxu0 0
        %1339 = vmatprep.subr.bf16.mxu0 0
        %1340 = vmatpush1.bf16.msra.mxu0 0
        %1341 = vmatprep.subr.bf16.mxu0 0
        %1342 = vmatpush1.bf16.msra.mxu0 0
        %1343 = vmatprep.subr.bf16.mxu0 0
        %1344 = vmatpush1.bf16.msra.mxu0 0
        %1345 = vmatprep.mubr.bf16.mxu0 0
        %1346 = vmatmul.mubr.bf16.gmra.mrb[0].mxu0 %v1289
        %v1347 = vpop.f32.mrb[0].mxu0
        %v1348 = vadd.f32 0.0, %v1347
        %v1349 = vpop.f32.mrb[0].mxu0
        %v1350 = vadd.f32 0.0, %v1349
        %v1351 = vpop.f32.mrb[0].mxu0
        %v1352 = vadd.f32 0.0, %v1351
        %v1353 = vpop.f32.mrb[0].mxu0
        %v1354 = vadd.f32 0.0, %v1353
        %1355 = vmatprep.mubr.bf16.mxu0 0
        %1356 = vmatmul.mubr.bf16.gmra.mrb[0].mxu0 %v1290
        %v1357 = vpop.f32.mrb[0].mxu0
        %v1358 = vadd.f32 0.0, %v1357
        %v1359 = vpop.f32.mrb[0].mxu0
        %v1360 = vadd.f32 0.0, %v1359
        %v1361 = vpop.f32.mrb[0].mxu0
        %v1362 = vadd.f32 0.0, %v1361
        %v1363 = vpop.f32.mrb[0].mxu0
        %v1364 = vadd.f32 0.0, %v1363
        %1365 = vmatprep.mubr.bf16.mxu0 0
        %1366 = vmatmul.mubr.bf16.gmra.mrb[0].mxu0 %v1291
        %v1367 = vpop.f32.mrb[0].mxu0
        %v1368 = vadd.f32 0.0, %v1367
        %v1369 = vpop.f32.mrb[0].mxu0
        %v1370 = vadd.f32 0.0, %v1369
        %v1371 = vpop.f32.mrb[0].mxu0
        %v1372 = vadd.f32 0.0, %v1371
        %v1373 = vpop.f32.mrb[0].mxu0
        %v1374 = vadd.f32 0.0, %v1373
        %1375 = vmatprep.mubr.bf16.mxu0 0
        %1376 = vmatmul.mubr.bf16.gmra.mrb[0].mxu0 %v1292
        %v1377 = vpop.f32.mrb[0].mxu0
        %v1378 = vadd.f32 0.0, %v1377
        %v1379 = vpop.f32.mrb[0].mxu0
        %v1380 = vadd.f32 0.0, %v1379
        %v1381 = vpop.f32.mrb[0].mxu0
        %v1382 = vadd.f32 0.0, %v1381
        %v1383 = vpop.f32.mrb[0].mxu0
        %v1384 = vadd.f32 0.0, %v1383
        %1385 = vmatprep.mubr.bf16.mxu0 0
        %1386 = vmatmul.mubr.bf16.gmra.mrb[0].mxu0 %v1293
        %v1387 = vpop.f32.mrb[0].mxu0
        %v1388 = vadd.f32 0.0, %v1387
        %v1389 = vpop.f32.mrb[0].mxu0
        %v1390 = vadd.f32 0.0, %v1389
        %v1391 = vpop.f32.mrb[0].mxu0
        %v1392 = vadd.f32 0.0, %v1391
        %v1393 = vpop.f32.mrb[0].mxu0
        %v1394 = vadd.f32 0.0, %v1393
        %1395 = vmatprep.mubr.bf16.mxu0 0
        %1396 = vmatmul.mubr.bf16.gmra.mrb[0].mxu0 %v1294
        %v1397 = vpop.f32.mrb[0].mxu0
        %v1398 = vadd.f32 0.0, %v1397
        %v1399 = vpop.f32.mrb[0].mxu0
        %v1400 = vadd.f32 0.0, %v1399
        %v1401 = vpop.f32.mrb[0].mxu0
        %v1402 = vadd.f32 0.0, %v1401
        %v1403 = vpop.f32.mrb[0].mxu0
        %v1404 = vadd.f32 0.0, %v1403
        %1405 = vmatprep.mubr.bf16.mxu0 0
        %1406 = vmatmul.mubr.bf16.gmra.mrb[0].mxu0 %v1295
        %v1407 = vpop.f32.mrb[0].mxu0
        %v1408 = vadd.f32 0.0, %v1407
        %v1409 = vpop.f32.mrb[0].mxu0
        %v1410 = vadd.f32 0.0, %v1409
        %v1411 = vpop.f32.mrb[0].mxu0
        %v1412 = vadd.f32 0.0, %v1411
        %v1413 = vpop.f32.mrb[0].mxu0
        %v1414 = vadd.f32 0.0, %v1413
        %1415 = vmatprep.mubr.bf16.mxu0 0
        %1416 = vmatmul.mubr.bf16.gmra.mrb[0].mxu0 %v1296
        %v1417 = vpop.f32.mrb[0].mxu0
        %v1418 = vadd.f32 0.0, %v1417
        %v1419 = vpop.f32.mrb[0].mxu0
        %v1420 = vadd.f32 0.0, %v1419
        %v1421 = vpop.f32.mrb[0].mxu0
        %v1422 = vadd.f32 0.0, %v1421
        %v1423 = vpop.f32.mrb[0].mxu0
        %v1424 = vadd.f32 0.0, %v1423
        %1425 = vmatprep.mubr.bf16.mxu0 0
        %1426 = vmatmul.mubr.bf16.gmra.mrb[0].mxu0 %v1305
        %v1427 = vpop.f32.mrb[0].mxu0
        %v1428 = vadd.f32 0.0, %v1427
        %v1429 = vpop.f32.mrb[0].mxu0
        %v1430 = vadd.f32 0.0, %v1429
        %v1431 = vpop.f32.mrb[0].mxu0
        %v1432 = vadd.f32 0.0, %v1431
        %v1433 = vpop.f32.mrb[0].mxu0
        %v1434 = vadd.f32 0.0, %v1433
        %1435 = vmatprep.mubr.bf16.mxu0 0
        %1436 = vmatmul.mubr.bf16.gmra.mrb[0].mxu0 %v1306
        %v1437 = vpop.f32.mrb[0].mxu0
        %v1438 = vadd.f32 0.0, %v1437
        %v1439 = vpop.f32.mrb[0].mxu0
        %v1440 = vadd.f32 0.0, %v1439
        %v1441 = vpop.f32.mrb[0].mxu0
        %v1442 = vadd.f32 0.0, %v1441
        %v1443 = vpop.f32.mrb[0].mxu0
        %v1444 = vadd.f32 0.0, %v1443
        %1445 = vmatprep.mubr.bf16.mxu0 0
        %1446 = vmatmul.mubr.bf16.gmra.mrb[0].mxu0 %v1307
        %v1447 = vpop.f32.mrb[0].mxu0
        %v1448 = vadd.f32 0.0, %v1447
        %v1449 = vpop.f32.mrb[0].mxu0
        %v1450 = vadd.f32 0.0, %v1449
        %v1451 = vpop.f32.mrb[0].mxu0
        %v1452 = vadd.f32 0.0, %v1451
        %v1453 = vpop.f32.mrb[0].mxu0
        %v1454 = vadd.f32 0.0, %v1453
        %1455 = vmatprep.mubr.bf16.mxu0 0
        %1456 = vmatmul.mubr.bf16.gmra.mrb[0].mxu0 %v1308
        %v1457 = vpop.f32.mrb[0].mxu0
        %v1458 = vadd.f32 0.0, %v1457
        %v1459 = vpop.f32.mrb[0].mxu0
        %v1460 = vadd.f32 0.0, %v1459
        %v1461 = vpop.f32.mrb[0].mxu0
        %v1462 = vadd.f32 0.0, %v1461
        %v1463 = vpop.f32.mrb[0].mxu0
        %v1464 = vadd.f32 0.0, %v1463
        %1465 = vmatprep.mubr.bf16.mxu0 0
        %1466 = vmatmul.mubr.bf16.gmra.mrb[0].mxu0 %v1309
        %v1467 = vpop.f32.mrb[0].mxu0
        %v1468 = vadd.f32 0.0, %v1467
        %v1469 = vpop.f32.mrb[0].mxu0
        %v1470 = vadd.f32 0.0, %v1469
        %v1471 = vpop.f32.mrb[0].mxu0
        %v1472 = vadd.f32 0.0, %v1471
        %v1473 = vpop.f32.mrb[0].mxu0
        %v1474 = vadd.f32 0.0, %v1473
        %1475 = vmatprep.mubr.bf16.mxu0 0
        %1476 = vmatmul.mubr.bf16.gmra.mrb[0].mxu0 %v1310
        %v1477 = vpop.f32.mrb[0].mxu0
        %v1478 = vadd.f32 0.0, %v1477
        %v1479 = vpop.f32.mrb[0].mxu0
        %v1480 = vadd.f32 0.0, %v1479
        %v1481 = vpop.f32.mrb[0].mxu0
        %v1482 = vadd.f32 0.0, %v1481
        %v1483 = vpop.f32.mrb[0].mxu0
        %v1484 = vadd.f32 0.0, %v1483
        %1485 = vmatprep.mubr.bf16.mxu0 0
        %1486 = vmatmul.mubr.bf16.gmra.mrb[0].mxu0 %v1311
        %v1487 = vpop.f32.mrb[0].mxu0
        %v1488 = vadd.f32 0.0, %v1487
        %v1489 = vpop.f32.mrb[0].mxu0
        %v1490 = vadd.f32 0.0, %v1489
        %v1491 = vpop.f32.mrb[0].mxu0
        %v1492 = vadd.f32 0.0, %v1491
        %v1493 = vpop.f32.mrb[0].mxu0
        %v1494 = vadd.f32 0.0, %v1493
        %1495 = vmatprep.mubr.bf16.mxu0 0
        %1496 = vmatmul.mubr.bf16.gmra.mrb[0].mxu0 %v1312
        %v1497 = vpop.f32.mrb[0].mxu0
        %v1498 = vadd.f32 0.0, %v1497
        %v1499 = vpop.f32.mrb[0].mxu0
        %v1500 = vadd.f32 0.0, %v1499
        %v1501 = vpop.f32.mrb[0].mxu0
        %v1502 = vadd.f32 0.0, %v1501
        %v1503 = vpop.f32.mrb[0].mxu0
        %v1504 = vadd.f32 0.0, %v1503
        %1505 = vdwg.mxu0
        %v1506 = vmax.f32 %v1348, %v1350
        %1507 = vmax.xlane.f32.xlu0 %v1506
        %v1508 = vpop.xlane.xlu0 %1507
        %v1509 = vmax.f32 %v1352, %v1354
        %1510 = vmax.xlane.f32.xlu0 %v1509
        %v1511 = vpop.xlane.xlu0 %1510
        %v1512 = vmax.f32 %v1358, %v1360
        %1513 = vmax.xlane.f32.xlu0 %v1512
        %v1514 = vpop.xlane.xlu0 %1513
        %v1515 = vmax.f32 %v1362, %v1364
        %1516 = vmax.xlane.f32.xlu0 %v1515
        %v1517 = vpop.xlane.xlu0 %1516
        %v1518 = vmax.f32 %v1368, %v1370
        %1519 = vmax.xlane.f32.xlu0 %v1518
        %v1520 = vpop.xlane.xlu0 %1519
        %v1521 = vmax.f32 %v1372, %v1374
        %1522 = vmax.xlane.f32.xlu0 %v1521
        %v1523 = vpop.xlane.xlu0 %1522
        %v1524 = vmax.f32 %v1378, %v1380
        %1525 = vmax.xlane.f32.xlu0 %v1524
        %v1526 = vpop.xlane.xlu0 %1525
        %v1527 = vmax.f32 %v1382, %v1384
        %1528 = vmax.xlane.f32.xlu0 %v1527
        %v1529 = vpop.xlane.xlu0 %1528
        %v1530 = vmax.f32 %v1388, %v1390
        %1531 = vmax.xlane.f32.xlu0 %v1530
        %v1532 = vpop.xlane.xlu0 %1531
        %v1533 = vmax.f32 %v1392, %v1394
        %1534 = vmax.xlane.f32.xlu0 %v1533
        %v1535 = vpop.xlane.xlu0 %1534
        %v1536 = vmax.f32 %v1398, %v1400
        %1537 = vmax.xlane.f32.xlu0 %v1536
        %v1538 = vpop.xlane.xlu0 %1537
        %v1539 = vmax.f32 %v1402, %v1404
        %1540 = vmax.xlane.f32.xlu0 %v1539
        %v1541 = vpop.xlane.xlu0 %1540
        %v1542 = vmax.f32 %v1408, %v1410
        %1543 = vmax.xlane.f32.xlu0 %v1542
        %v1544 = vpop.xlane.xlu0 %1543
        %v1545 = vmax.f32 %v1412, %v1414
        %1546 = vmax.xlane.f32.xlu0 %v1545
        %v1547 = vpop.xlane.xlu0 %1546
        %v1548 = vmax.f32 %v1418, %v1420
        %1549 = vmax.xlane.f32.xlu0 %v1548
        %v1550 = vpop.xlane.xlu0 %1549
        %v1551 = vmax.f32 %v1422, %v1424
        %1552 = vmax.xlane.f32.xlu0 %v1551
        %v1553 = vpop.xlane.xlu0 %1552
        %v1554 = vmax.f32 %v1428, %v1430
        %1555 = vmax.xlane.f32.xlu0 %v1554
        %v1556 = vpop.xlane.xlu0 %1555
        %v1557 = vmax.f32 %v1432, %v1434
        %1558 = vmax.xlane.f32.xlu0 %v1557
        %v1559 = vpop.xlane.xlu0 %1558
        %v1560 = vmax.f32 %v1438, %v1440
        %1561 = vmax.xlane.f32.xlu0 %v1560
        %v1562 = vpop.xlane.xlu0 %1561
        %v1563 = vmax.f32 %v1442, %v1444
        %1564 = vmax.xlane.f32.xlu0 %v1563
        %v1565 = vpop.xlane.xlu0 %1564
        %v1566 = vmax.f32 %v1448, %v1450
        %1567 = vmax.xlane.f32.xlu0 %v1566
        %v1568 = vpop.xlane.xlu0 %1567
        %v1569 = vmax.f32 %v1452, %v1454
        %1570 = vmax.xlane.f32.xlu0 %v1569
        %v1571 = vpop.xlane.xlu0 %1570
        %v1572 = vmax.f32 %v1458, %v1460
        %1573 = vmax.xlane.f32.xlu0 %v1572
        %v1574 = vpop.xlane.xlu0 %1573
        %v1575 = vmax.f32 %v1462, %v1464
        %1576 = vmax.xlane.f32.xlu0 %v1575
        %v1577 = vpop.xlane.xlu0 %1576
        %v1578 = vmax.f32 %v1468, %v1470
        %1579 = vmax.xlane.f32.xlu0 %v1578
        %v1580 = vpop.xlane.xlu0 %1579
        %v1581 = vmax.f32 %v1472, %v1474
        %1582 = vmax.xlane.f32.xlu0 %v1581
        %v1583 = vpop.xlane.xlu0 %1582
        %v1584 = vmax.f32 %v1478, %v1480
        %1585 = vmax.xlane.f32.xlu0 %v1584
        %v1586 = vpop.xlane.xlu0 %1585
        %v1587 = vmax.f32 %v1482, %v1484
        %1588 = vmax.xlane.f32.xlu0 %v1587
        %v1589 = vpop.xlane.xlu0 %1588
        %v1590 = vmax.f32 %v1488, %v1490
        %1591 = vmax.xlane.f32.xlu0 %v1590
        %v1592 = vpop.xlane.xlu0 %1591
        %v1593 = vmax.f32 %v1492, %v1494
        %1594 = vmax.xlane.f32.xlu0 %v1593
        %v1595 = vpop.xlane.xlu0 %1594
        %v1596 = vmax.f32 %v1498, %v1500
        %1597 = vmax.xlane.f32.xlu0 %v1596
        %v1598 = vpop.xlane.xlu0 %1597
        %v1599 = vmax.f32 %v1502, %v1504
        %1600 = vmax.xlane.f32.xlu0 %v1599
        %v1601 = vpop.xlane.xlu0 %1600
        %v1602 = vsub.f32 %v1348, %v1508
        %v1603 = vsub.f32 %v1350, %v1508
        %v1604 = vsub.f32 %v1352, %v1511
        %v1605 = vsub.f32 %v1354, %v1511
        %v1606 = vsub.f32 %v1358, %v1514
        %v1607 = vsub.f32 %v1360, %v1514
        %v1608 = vsub.f32 %v1362, %v1517
        %v1609 = vsub.f32 %v1364, %v1517
        %v1610 = vsub.f32 %v1368, %v1520
        %v1611 = vsub.f32 %v1370, %v1520
        %v1612 = vsub.f32 %v1372, %v1523
        %v1613 = vsub.f32 %v1374, %v1523
        %v1614 = vsub.f32 %v1378, %v1526
        %v1615 = vsub.f32 %v1380, %v1526
        %v1616 = vsub.f32 %v1382, %v1529
        %v1617 = vsub.f32 %v1384, %v1529
        %v1618 = vsub.f32 %v1388, %v1532
        %v1619 = vsub.f32 %v1390, %v1532
        %v1620 = vsub.f32 %v1392, %v1535
        %v1621 = vsub.f32 %v1394, %v1535
        %v1622 = vsub.f32 %v1398, %v1538
        %v1623 = vsub.f32 %v1400, %v1538
        %v1624 = vsub.f32 %v1402, %v1541
        %v1625 = vsub.f32 %v1404, %v1541
        %v1626 = vsub.f32 %v1408, %v1544
        %v1627 = vsub.f32 %v1410, %v1544
        %v1628 = vsub.f32 %v1412, %v1547
        %v1629 = vsub.f32 %v1414, %v1547
        %v1630 = vsub.f32 %v1418, %v1550
        %v1631 = vsub.f32 %v1420, %v1550
        %v1632 = vsub.f32 %v1422, %v1553
        %v1633 = vsub.f32 %v1424, %v1553
        %v1634 = vsub.f32 %v1428, %v1556
        %v1635 = vsub.f32 %v1430, %v1556
        %v1636 = vsub.f32 %v1432, %v1559
        %v1637 = vsub.f32 %v1434, %v1559
        %v1638 = vsub.f32 %v1438, %v1562
        %v1639 = vsub.f32 %v1440, %v1562
        %v1640 = vsub.f32 %v1442, %v1565
        %v1641 = vsub.f32 %v1444, %v1565
        %v1642 = vsub.f32 %v1448, %v1568
        %v1643 = vsub.f32 %v1450, %v1568
        %v1644 = vsub.f32 %v1452, %v1571
        %v1645 = vsub.f32 %v1454, %v1571
        %v1646 = vsub.f32 %v1458, %v1574
        %v1647 = vsub.f32 %v1460, %v1574
        %v1648 = vsub.f32 %v1462, %v1577
        %v1649 = vsub.f32 %v1464, %v1577
        %v1650 = vsub.f32 %v1468, %v1580
        %v1651 = vsub.f32 %v1470, %v1580
        %v1652 = vsub.f32 %v1472, %v1583
        %v1653 = vsub.f32 %v1474, %v1583
        %v1654 = vsub.f32 %v1478, %v1586
        %v1655 = vsub.f32 %v1480, %v1586
        %v1656 = vsub.f32 %v1482, %v1589
        %v1657 = vsub.f32 %v1484, %v1589
        %v1658 = vsub.f32 %v1488, %v1592
        %v1659 = vsub.f32 %v1490, %v1592
        %v1660 = vsub.f32 %v1492, %v1595
        %v1661 = vsub.f32 %v1494, %v1595
        %v1662 = vsub.f32 %v1498, %v1598
        %v1663 = vsub.f32 %v1500, %v1598
        %v1664 = vsub.f32 %v1502, %v1601
        %v1665 = vsub.f32 %v1504, %v1601
        %v1666 = vmul.f32 %v1602, 1.442695
        %v1667 = vpow.pop %v1666
        %v1668 = vmul.f32 %v1603, 1.442695
        %v1669 = vpow.pop %v1668
        %v1670 = vmul.f32 %v1604, 1.442695
        %v1671 = vpow.pop %v1670
        %v1672 = vmul.f32 %v1605, 1.442695
        %v1673 = vpow.pop %v1672
        %v1674 = vmul.f32 %v1606, 1.442695
        %v1675 = vpow.pop %v1674
        %v1676 = vmul.f32 %v1607, 1.442695
        %v1677 = vpow.pop %v1676
        %v1678 = vmul.f32 %v1608, 1.442695
        %v1679 = vpow.pop %v1678
        %v1680 = vmul.f32 %v1609, 1.442695
        %v1681 = vpow.pop %v1680
        %v1682 = vmul.f32 %v1610, 1.442695
        %v1683 = vpow.pop %v1682
        %v1684 = vmul.f32 %v1611, 1.442695
        %v1685 = vpow.pop %v1684
        %v1686 = vmul.f32 %v1612, 1.442695
        %v1687 = vpow.pop %v1686
        %v1688 = vmul.f32 %v1613, 1.442695
        %v1689 = vpow.pop %v1688
        %v1690 = vmul.f32 %v1614, 1.442695
        %v1691 = vpow.pop %v1690
        %v1692 = vmul.f32 %v1615, 1.442695
        %v1693 = vpow.pop %v1692
        %v1694 = vmul.f32 %v1616, 1.442695
        %v1695 = vpow.pop %v1694
        %v1696 = vmul.f32 %v1617, 1.442695
        %v1697 = vpow.pop %v1696
        %v1698 = vmul.f32 %v1618, 1.442695
        %v1699 = vpow.pop %v1698
        %v1700 = vmul.f32 %v1619, 1.442695
        %v1701 = vpow.pop %v1700
        %v1702 = vmul.f32 %v1620, 1.442695
        %v1703 = vpow.pop %v1702
        %v1704 = vmul.f32 %v1621, 1.442695
        %v1705 = vpow.pop %v1704
        %v1706 = vmul.f32 %v1622, 1.442695
        %v1707 = vpow.pop %v1706
        %v1708 = vmul.f32 %v1623, 1.442695
        %v1709 = vpow.pop %v1708
        %v1710 = vmul.f32 %v1624, 1.442695
        %v1711 = vpow.pop %v1710
        %v1712 = vmul.f32 %v1625, 1.442695
        %v1713 = vpow.pop %v1712
        %v1714 = vmul.f32 %v1626, 1.442695
        %v1715 = vpow.pop %v1714
        %v1716 = vmul.f32 %v1627, 1.442695
        %v1717 = vpow.pop %v1716
        %v1718 = vmul.f32 %v1628, 1.442695
        %v1719 = vpow.pop %v1718
        %v1720 = vmul.f32 %v1629, 1.442695
        %v1721 = vpow.pop %v1720
        %v1722 = vmul.f32 %v1630, 1.442695
        %v1723 = vpow.pop %v1722
        %v1724 = vmul.f32 %v1631, 1.442695
        %v1725 = vpow.pop %v1724
        %v1726 = vmul.f32 %v1632, 1.442695
        %v1727 = vpow.pop %v1726
        %v1728 = vmul.f32 %v1633, 1.442695
        %v1729 = vpow.pop %v1728
        %v1730 = vmul.f32 %v1634, 1.442695
        %v1731 = vpow.pop %v1730
        %v1732 = vmul.f32 %v1635, 1.442695
        %v1733 = vpow.pop %v1732
        %v1734 = vmul.f32 %v1636, 1.442695
        %v1735 = vpow.pop %v1734
        %v1736 = vmul.f32 %v1637, 1.442695
        %v1737 = vpow.pop %v1736
        %v1738 = vmul.f32 %v1638, 1.442695
        %v1739 = vpow.pop %v1738
        %v1740 = vmul.f32 %v1639, 1.442695
        %v1741 = vpow.pop %v1740
        %v1742 = vmul.f32 %v1640, 1.442695
        %v1743 = vpow.pop %v1742
        %v1744 = vmul.f32 %v1641, 1.442695
        %v1745 = vpow.pop %v1744
        %v1746 = vmul.f32 %v1642, 1.442695
        %v1747 = vpow.pop %v1746
        %v1748 = vmul.f32 %v1643, 1.442695
        %v1749 = vpow.pop %v1748
        %v1750 = vmul.f32 %v1644, 1.442695
        %v1751 = vpow.pop %v1750
        %v1752 = vmul.f32 %v1645, 1.442695
        %v1753 = vpow.pop %v1752
        %v1754 = vmul.f32 %v1646, 1.442695
        %v1755 = vpow.pop %v1754
        %v1756 = vmul.f32 %v1647, 1.442695
        %v1757 = vpow.pop %v1756
        %v1758 = vmul.f32 %v1648, 1.442695
        %v1759 = vpow.pop %v1758
        %v1760 = vmul.f32 %v1649, 1.442695
        %v1761 = vpow.pop %v1760
        %v1762 = vmul.f32 %v1650, 1.442695
        %v1763 = vpow.pop %v1762
        %v1764 = vmul.f32 %v1651, 1.442695
        %v1765 = vpow.pop %v1764
        %v1766 = vmul.f32 %v1652, 1.442695
        %v1767 = vpow.pop %v1766
        %v1768 = vmul.f32 %v1653, 1.442695
        %v1769 = vpow.pop %v1768
        %v1770 = vmul.f32 %v1654, 1.442695
        %v1771 = vpow.pop %v1770
        %v1772 = vmul.f32 %v1655, 1.442695
        %v1773 = vpow.pop %v1772
        %v1774 = vmul.f32 %v1656, 1.442695
        %v1775 = vpow.pop %v1774
        %v1776 = vmul.f32 %v1657, 1.442695
        %v1777 = vpow.pop %v1776
        %v1778 = vmul.f32 %v1658, 1.442695
        %v1779 = vpow.pop %v1778
        %v1780 = vmul.f32 %v1659, 1.442695
        %v1781 = vpow.pop %v1780
        %v1782 = vmul.f32 %v1660, 1.442695
        %v1783 = vpow.pop %v1782
        %v1784 = vmul.f32 %v1661, 1.442695
        %v1785 = vpow.pop %v1784
        %v1786 = vmul.f32 %v1662, 1.442695
        %v1787 = vpow.pop %v1786
        %v1788 = vmul.f32 %v1663, 1.442695
        %v1789 = vpow.pop %v1788
        %v1790 = vmul.f32 %v1664, 1.442695
        %v1791 = vpow.pop %v1790
        %v1792 = vmul.f32 %v1665, 1.442695
        %v1793 = vpow.pop %v1792
        %v1794 = vadd.f32 %v1667, %v1669
        %1795 = vadd.xlane.f32.xlu0 %v1794
        %v1796 = vpop.xlane.xlu0 %1795
        %v1797 = vadd.f32 %v1671, %v1673
        %1798 = vadd.xlane.f32.xlu0 %v1797
        %v1799 = vpop.xlane.xlu0 %1798
        %v1800 = vadd.f32 %v1675, %v1677
        %1801 = vadd.xlane.f32.xlu0 %v1800
        %v1802 = vpop.xlane.xlu0 %1801
        %v1803 = vadd.f32 %v1679, %v1681
        %1804 = vadd.xlane.f32.xlu0 %v1803
        %v1805 = vpop.xlane.xlu0 %1804
        %v1806 = vadd.f32 %v1683, %v1685
        %1807 = vadd.xlane.f32.xlu0 %v1806
        %v1808 = vpop.xlane.xlu0 %1807
        %v1809 = vadd.f32 %v1687, %v1689
        %1810 = vadd.xlane.f32.xlu0 %v1809
        %v1811 = vpop.xlane.xlu0 %1810
        %v1812 = vadd.f32 %v1691, %v1693
        %1813 = vadd.xlane.f32.xlu0 %v1812
        %v1814 = vpop.xlane.xlu0 %1813
        %v1815 = vadd.f32 %v1695, %v1697
        %1816 = vadd.xlane.f32.xlu0 %v1815
        %v1817 = vpop.xlane.xlu0 %1816
        %v1818 = vadd.f32 %v1699, %v1701
        %1819 = vadd.xlane.f32.xlu0 %v1818
        %v1820 = vpop.xlane.xlu0 %1819
        %v1821 = vadd.f32 %v1703, %v1705
        %1822 = vadd.xlane.f32.xlu0 %v1821
        %v1823 = vpop.xlane.xlu0 %1822
        %v1824 = vadd.f32 %v1707, %v1709
        %1825 = vadd.xlane.f32.xlu0 %v1824
        %v1826 = vpop.xlane.xlu0 %1825
        %v1827 = vadd.f32 %v1711, %v1713
        %1828 = vadd.xlane.f32.xlu0 %v1827
        %v1829 = vpop.xlane.xlu0 %1828
        %v1830 = vadd.f32 %v1715, %v1717
        %1831 = vadd.xlane.f32.xlu0 %v1830
        %v1832 = vpop.xlane.xlu0 %1831
        %v1833 = vadd.f32 %v1719, %v1721
        %1834 = vadd.xlane.f32.xlu0 %v1833
        %v1835 = vpop.xlane.xlu0 %1834
        %v1836 = vadd.f32 %v1723, %v1725
        %1837 = vadd.xlane.f32.xlu0 %v1836
        %v1838 = vpop.xlane.xlu0 %1837
        %v1839 = vadd.f32 %v1727, %v1729
        %1840 = vadd.xlane.f32.xlu0 %v1839
        %v1841 = vpop.xlane.xlu0 %1840
        %v1842 = vadd.f32 %v1731, %v1733
        %1843 = vadd.xlane.f32.xlu0 %v1842
        %v1844 = vpop.xlane.xlu0 %1843
        %v1845 = vadd.f32 %v1735, %v1737
        %1846 = vadd.xlane.f32.xlu0 %v1845
        %v1847 = vpop.xlane.xlu0 %1846
        %v1848 = vadd.f32 %v1739, %v1741
        %1849 = vadd.xlane.f32.xlu0 %v1848
        %v1850 = vpop.xlane.xlu0 %1849
        %v1851 = vadd.f32 %v1743, %v1745
        %1852 = vadd.xlane.f32.xlu0 %v1851
        %v1853 = vpop.xlane.xlu0 %1852
        %v1854 = vadd.f32 %v1747, %v1749
        %1855 = vadd.xlane.f32.xlu0 %v1854
        %v1856 = vpop.xlane.xlu0 %1855
        %v1857 = vadd.f32 %v1751, %v1753
        %1858 = vadd.xlane.f32.xlu0 %v1857
        %v1859 = vpop.xlane.xlu0 %1858
        %v1860 = vadd.f32 %v1755, %v1757
        %1861 = vadd.xlane.f32.xlu0 %v1860
        %v1862 = vpop.xlane.xlu0 %1861
        %v1863 = vadd.f32 %v1759, %v1761
        %1864 = vadd.xlane.f32.xlu0 %v1863
        %v1865 = vpop.xlane.xlu0 %1864
        %v1866 = vadd.f32 %v1763, %v1765
        %1867 = vadd.xlane.f32.xlu0 %v1866
        %v1868 = vpop.xlane.xlu0 %1867
        %v1869 = vadd.f32 %v1767, %v1769
        %1870 = vadd.xlane.f32.xlu0 %v1869
        %v1871 = vpop.xlane.xlu0 %1870
        %v1872 = vadd.f32 %v1771, %v1773
        %1873 = vadd.xlane.f32.xlu0 %v1872
        %v1874 = vpop.xlane.xlu0 %1873
        %v1875 = vadd.f32 %v1775, %v1777
        %1876 = vadd.xlane.f32.xlu0 %v1875
        %v1877 = vpop.xlane.xlu0 %1876
        %v1878 = vadd.f32 %v1779, %v1781
        %1879 = vadd.xlane.f32.xlu0 %v1878
        %v1880 = vpop.xlane.xlu0 %1879
        %v1881 = vadd.f32 %v1783, %v1785
        %1882 = vadd.xlane.f32.xlu0 %v1881
        %v1883 = vpop.xlane.xlu0 %1882
        %v1884 = vadd.f32 %v1787, %v1789
        %1885 = vadd.xlane.f32.xlu0 %v1884
        %v1886 = vpop.xlane.xlu0 %1885
        %v1887 = vadd.f32 %v1791, %v1793
        %1888 = vadd.xlane.f32.xlu0 %v1887
        %v1889 = vpop.xlane.xlu0 %1888
        %v1890 = vrcp.pop %v1796
        %v1891 = vrcp.pop %v1799
        %v1892 = vrcp.pop %v1802
        %v1893 = vrcp.pop %v1805
        %v1894 = vrcp.pop %v1808
        %v1895 = vrcp.pop %v1811
        %v1896 = vrcp.pop %v1814
        %v1897 = vrcp.pop %v1817
        %v1898 = vrcp.pop %v1820
        %v1899 = vrcp.pop %v1823
        %v1900 = vrcp.pop %v1826
        %v1901 = vrcp.pop %v1829
        %v1902 = vrcp.pop %v1832
        %v1903 = vrcp.pop %v1835
        %v1904 = vrcp.pop %v1838
        %v1905 = vrcp.pop %v1841
        %v1906 = vrcp.pop %v1844
        %v1907 = vrcp.pop %v1847
        %v1908 = vrcp.pop %v1850
        %v1909 = vrcp.pop %v1853
        %v1910 = vrcp.pop %v1856
        %v1911 = vrcp.pop %v1859
        %v1912 = vrcp.pop %v1862
        %v1913 = vrcp.pop %v1865
        %v1914 = vrcp.pop %v1868
        %v1915 = vrcp.pop %v1871
        %v1916 = vrcp.pop %v1874
        %v1917 = vrcp.pop %v1877
        %v1918 = vrcp.pop %v1880
        %v1919 = vrcp.pop %v1883
        %v1920 = vrcp.pop %v1886
        %v1921 = vrcp.pop %v1889
        %v1922 = vmul.f32 %v1667, %v1890
        %v1923 = vmul.f32 %v1669, %v1890
        %v1924 = vmul.f32 %v1671, %v1891
        %v1925 = vmul.f32 %v1673, %v1891
        %v1926 = vmul.f32 %v1675, %v1892
        %v1927 = vmul.f32 %v1677, %v1892
        %v1928 = vmul.f32 %v1679, %v1893
        %v1929 = vmul.f32 %v1681, %v1893
        %v1930 = vmul.f32 %v1683, %v1894
        %v1931 = vmul.f32 %v1685, %v1894
        %v1932 = vmul.f32 %v1687, %v1895
        %v1933 = vmul.f32 %v1689, %v1895
        %v1934 = vmul.f32 %v1691, %v1896
        %v1935 = vmul.f32 %v1693, %v1896
        %v1936 = vmul.f32 %v1695, %v1897
        %v1937 = vmul.f32 %v1697, %v1897
        %v1938 = vmul.f32 %v1699, %v1898
        %v1939 = vmul.f32 %v1701, %v1898
        %v1940 = vmul.f32 %v1703, %v1899
        %v1941 = vmul.f32 %v1705, %v1899
        %v1942 = vmul.f32 %v1707, %v1900
        %v1943 = vmul.f32 %v1709, %v1900
        %v1944 = vmul.f32 %v1711, %v1901
        %v1945 = vmul.f32 %v1713, %v1901
        %v1946 = vmul.f32 %v1715, %v1902
        %v1947 = vmul.f32 %v1717, %v1902
        %v1948 = vmul.f32 %v1719, %v1903
        %v1949 = vmul.f32 %v1721, %v1903
        %v1950 = vmul.f32 %v1723, %v1904
        %v1951 = vmul.f32 %v1725, %v1904
        %v1952 = vmul.f32 %v1727, %v1905
        %v1953 = vmul.f32 %v1729, %v1905
        %v1954 = vmul.f32 %v1731, %v1906
        %v1955 = vmul.f32 %v1733, %v1906
        %v1956 = vmul.f32 %v1735, %v1907
        %v1957 = vmul.f32 %v1737, %v1907
        %v1958 = vmul.f32 %v1739, %v1908
        %v1959 = vmul.f32 %v1741, %v1908
        %v1960 = vmul.f32 %v1743, %v1909
        %v1961 = vmul.f32 %v1745, %v1909
        %v1962 = vmul.f32 %v1747, %v1910
        %v1963 = vmul.f32 %v1749, %v1910
        %v1964 = vmul.f32 %v1751, %v1911
        %v1965 = vmul.f32 %v1753, %v1911
        %v1966 = vmul.f32 %v1755, %v1912
        %v1967 = vmul.f32 %v1757, %v1912
        %v1968 = vmul.f32 %v1759, %v1913
        %v1969 = vmul.f32 %v1761, %v1913
        %v1970 = vmul.f32 %v1763, %v1914
        %v1971 = vmul.f32 %v1765, %v1914
        %v1972 = vmul.f32 %v1767, %v1915
        %v1973 = vmul.f32 %v1769, %v1915
        %v1974 = vmul.f32 %v1771, %v1916
        %v1975 = vmul.f32 %v1773, %v1916
        %v1976 = vmul.f32 %v1775, %v1917
        %v1977 = vmul.f32 %v1777, %v1917
        %v1978 = vmul.f32 %v1779, %v1918
        %v1979 = vmul.f32 %v1781, %v1918
        %v1980 = vmul.f32 %v1783, %v1919
        %v1981 = vmul.f32 %v1785, %v1919
        %v1982 = vmul.f32 %v1787, %v1920
        %v1983 = vmul.f32 %v1789, %v1920
        %v1984 = vmul.f32 %v1791, %v1921
        %v1985 = vmul.f32 %v1793, %v1921
        %1986 = vst [vmem:[%s405] sm:$0xff] %v1922
        %1987 = vst [vmem:[%s405 + $0x8] sm:$0xff] %v1923
        %1988 = vst [vmem:[%s405 + $0x10] sm:$0xff] %v1924
        %1989 = vst [vmem:[%s405 + $0x18] sm:$0xff] %v1925
        %1990 = vst [vmem:[%s405 + $0x20] sm:$0xff] %v1926
        %1991 = vst [vmem:[%s405 + $0x28] sm:$0xff] %v1927
        %1992 = vst [vmem:[%s405 + $0x30] sm:$0xff] %v1928
        %1993 = vst [vmem:[%s405 + $0x38] sm:$0xff] %v1929
        %1994 = vst [vmem:[%s405 + $0x40] sm:$0xff] %v1930
        %1995 = vst [vmem:[%s405 + $0x48] sm:$0xff] %v1931
        %1996 = vst [vmem:[%s405 + $0x50] sm:$0xff] %v1932
        %1997 = vst [vmem:[%s405 + $0x58] sm:$0xff] %v1933
        %1998 = vst [vmem:[%s405 + $0x60] sm:$0xff] %v1934
        %1999 = vst [vmem:[%s405 + $0x68] sm:$0xff] %v1935
        %2000 = vst [vmem:[%s405 + $0x70] sm:$0xff] %v1936
        %2001 = vst [vmem:[%s405 + $0x78] sm:$0xff] %v1937
        %2002 = vst [vmem:[%s405 + $0x80] sm:$0xff] %v1938
        %2003 = vst [vmem:[%s405 + $0x88] sm:$0xff] %v1939
        %2004 = vst [vmem:[%s405 + $0x90] sm:$0xff] %v1940
        %2005 = vst [vmem:[%s405 + $0x98] sm:$0xff] %v1941
        %2006 = vst [vmem:[%s405 + $0xa0] sm:$0xff] %v1942
        %2007 = vst [vmem:[%s405 + $0xa8] sm:$0xff] %v1943
        %2008 = vst [vmem:[%s405 + $0xb0] sm:$0xff] %v1944
        %2009 = vst [vmem:[%s405 + $0xb8] sm:$0xff] %v1945
        %2010 = vst [vmem:[%s405 + $0xc0] sm:$0xff] %v1946
        %2011 = vst [vmem:[%s405 + $0xc8] sm:$0xff] %v1947
        %2012 = vst [vmem:[%s405 + $0xd0] sm:$0xff] %v1948
        %2013 = vst [vmem:[%s405 + $0xd8] sm:$0xff] %v1949
        %2014 = vst [vmem:[%s405 + $0xe0] sm:$0xff] %v1950
        %2015 = vst [vmem:[%s405 + $0xe8] sm:$0xff] %v1951
        %2016 = vst [vmem:[%s405 + $0xf0] sm:$0xff] %v1952
        %2017 = vst [vmem:[%s405 + $0xf8] sm:$0xff] %v1953
        %2018 = vst [vmem:[%s405 + $0x100] sm:$0xff] %v1954
        %2019 = vst [vmem:[%s405 + $0x108] sm:$0xff] %v1955
        %2020 = vst [vmem:[%s405 + $0x110] sm:$0xff] %v1956
        %2021 = vst [vmem:[%s405 + $0x118] sm:$0xff] %v1957
        %2022 = vst [vmem:[%s405 + $0x120] sm:$0xff] %v1958
        %2023 = vst [vmem:[%s405 + $0x128] sm:$0xff] %v1959
        %2024 = vst [vmem:[%s405 + $0x130] sm:$0xff] %v1960
        %2025 = vst [vmem:[%s405 + $0x138] sm:$0xff] %v1961
        %2026 = vst [vmem:[%s405 + $0x140] sm:$0xff] %v1962
        %2027 = vst [vmem:[%s405 + $0x148] sm:$0xff] %v1963
        %2028 = vst [vmem:[%s405 + $0x150] sm:$0xff] %v1964
        %2029 = vst [vmem:[%s405 + $0x158] sm:$0xff] %v1965
        %2030 = vst [vmem:[%s405 + $0x160] sm:$0xff] %v1966
        %2031 = vst [vmem:[%s405 + $0x168] sm:$0xff] %v1967
        %2032 = vst [vmem:[%s405 + $0x170] sm:$0xff] %v1968
        %2033 = vst [vmem:[%s405 + $0x178] sm:$0xff] %v1969
        %2034 = vst [vmem:[%s405 + $0x180] sm:$0xff] %v1970
        %2035 = vst [vmem:[%s405 + $0x188] sm:$0xff] %v1971
        %2036 = vst [vmem:[%s405 + $0x190] sm:$0xff] %v1972
        %2037 = vst [vmem:[%s405 + $0x198] sm:$0xff] %v1973
        %2038 = vst [vmem:[%s405 + $0x1a0] sm:$0xff] %v1974
        %2039 = vst [vmem:[%s405 + $0x1a8] sm:$0xff] %v1975
        %2040 = vst [vmem:[%s405 + $0x1b0] sm:$0xff] %v1976
        %2041 = vst [vmem:[%s405 + $0x1b8] sm:$0xff] %v1977
        %2042 = vst [vmem:[%s405 + $0x1c0] sm:$0xff] %v1978
        %2043 = vst [vmem:[%s405 + $0x1c8] sm:$0xff] %v1979
        %2044 = vst [vmem:[%s405 + $0x1d0] sm:$0xff] %v1980
        %2045 = vst [vmem:[%s405 + $0x1d8] sm:$0xff] %v1981
        %2046 = vst [vmem:[%s405 + $0x1e0] sm:$0xff] %v1982
        %2047 = vst [vmem:[%s405 + $0x1e8] sm:$0xff] %v1983
        %2048 = vst [vmem:[%s405 + $0x1f0] sm:$0xff] %v1984
        %2049 = vst [vmem:[%s405 + $0x1f8] sm:$0xff] %v1985
        %v2050 = vpack.c.bf16 %v1924, %v1922
        %v2051 = vpack.c.bf16 %v1925, %v1923
        %v2052 = vpack.c.bf16 %v1928, %v1926
        %v2053 = vpack.c.bf16 %v1929, %v1927
        %v2054 = vpack.c.bf16 %v1932, %v1930
        %v2055 = vpack.c.bf16 %v1933, %v1931
        %v2056 = vpack.c.bf16 %v1936, %v1934
        %v2057 = vpack.c.bf16 %v1937, %v1935
        %v2058 = vpack.c.bf16 %v1940, %v1938
        %v2059 = vpack.c.bf16 %v1941, %v1939
        %v2060 = vpack.c.bf16 %v1944, %v1942
        %v2061 = vpack.c.bf16 %v1945, %v1943
        %v2062 = vpack.c.bf16 %v1948, %v1946
        %v2063 = vpack.c.bf16 %v1949, %v1947
        %v2064 = vpack.c.bf16 %v1952, %v1950
        %v2065 = vpack.c.bf16 %v1953, %v1951
        %v2066 = vpack.c.bf16 %v1956, %v1954
        %v2067 = vpack.c.bf16 %v1957, %v1955
        %v2068 = vpack.c.bf16 %v1960, %v1958
        %v2069 = vpack.c.bf16 %v1961, %v1959
        %v2070 = vpack.c.bf16 %v1964, %v1962
        %v2071 = vpack.c.bf16 %v1965, %v1963
        %v2072 = vpack.c.bf16 %v1968, %v1966
        %v2073 = vpack.c.bf16 %v1969, %v1967
        %v2074 = vpack.c.bf16 %v1972, %v1970
        %v2075 = vpack.c.bf16 %v1973, %v1971
        %v2076 = vpack.c.bf16 %v1976, %v1974
        %v2077 = vpack.c.bf16 %v1977, %v1975
        %v2078 = vpack.c.bf16 %v1980, %v1978
        %v2079 = vpack.c.bf16 %v1981, %v1979
        %v2080 = vpack.c.bf16 %v1984, %v1982
        %v2081 = vpack.c.bf16 %v1985, %v1983
        %2082 = vmatprep.subr.bf16.mxu0 %v1266
        %2083 = vmatpush1.bf16.xpose.msra.mxu0 %v1265
        %2084 = vmatprep.subr.bf16.mxu0 %v1268
        %2085 = vmatpush1.bf16.xpose.msra.mxu0 %v1267
        %2086 = vmatprep.subr.bf16.mxu0 %v1270
        %2087 = vmatpush1.bf16.xpose.msra.mxu0 %v1269
        %2088 = vmatprep.subr.bf16.mxu0 %v1272
        %2089 = vmatpush1.bf16.xpose.msra.mxu0 %v1271
        %2090 = vmatprep.subr.bf16.mxu0 %v1274
        %2091 = vmatpush1.bf16.xpose.msra.mxu0 %v1273
        %2092 = vmatprep.subr.bf16.mxu0 %v1276
        %2093 = vmatpush1.bf16.xpose.msra.mxu0 %v1275
        %2094 = vmatprep.subr.bf16.mxu0 %v1278
        %2095 = vmatpush1.bf16.xpose.msra.mxu0 %v1277
        %2096 = vmatprep.subr.bf16.mxu0 %v1280
        %2097 = vmatpush1.bf16.xpose.msra.mxu0 %v1279
        %2098 = vmatprep.subr.bf16.mxu0 0
        %2099 = vmatpush1.bf16.xpose.msra.mxu0 0
        %2100 = vmatprep.subr.bf16.mxu0 0
        %2101 = vmatpush1.bf16.xpose.msra.mxu0 0
        %2102 = vmatprep.subr.bf16.mxu0 0
        %2103 = vmatpush1.bf16.xpose.msra.mxu0 0
        %2104 = vmatprep.subr.bf16.mxu0 0
        %2105 = vmatpush1.bf16.xpose.msra.mxu0 0
        %2106 = vmatprep.subr.bf16.mxu0 0
        %2107 = vmatpush1.bf16.xpose.msra.mxu0 0
        %2108 = vmatprep.subr.bf16.mxu0 0
        %2109 = vmatpush1.bf16.xpose.msra.mxu0 0
        %2110 = vmatprep.subr.bf16.mxu0 0
        %2111 = vmatpush1.bf16.xpose.msra.mxu0 0
        %2112 = vmatprep.subr.bf16.mxu0 0
        %2113 = vmatpush1.bf16.xpose.msra.mxu0 0
        %2114 = vmatprep.mubr.bf16.mxu0 %v2051
        %2115 = vmatmul.mubr.bf16.gmra.mrb[0].mxu0 %v2050
        %v2116 = vpop.f32.mrb[0].mxu0
        %v2117 = vadd.f32 0.0, %v2116
        %v2118 = vpop.f32.mrb[0].mxu0
        %v2119 = vpop.f32.mrb[0].mxu0
        %v2120 = vadd.f32 0.0, %v2119
        %v2121 = vpop.f32.mrb[0].mxu0
        %2122 = vmatprep.mubr.bf16.mxu0 %v2053
        %2123 = vmatmul.mubr.bf16.gmra.mrb[0].mxu0 %v2052
        %v2124 = vpop.f32.mrb[0].mxu0
        %v2125 = vadd.f32 0.0, %v2124
        %v2126 = vpop.f32.mrb[0].mxu0
        %v2127 = vpop.f32.mrb[0].mxu0
        %v2128 = vadd.f32 0.0, %v2127
        %v2129 = vpop.f32.mrb[0].mxu0
        %2130 = vmatprep.mubr.bf16.mxu0 %v2055
        %2131 = vmatmul.mubr.bf16.gmra.mrb[0].mxu0 %v2054
        %v2132 = vpop.f32.mrb[0].mxu0
        %v2133 = vadd.f32 0.0, %v2132
        %v2134 = vpop.f32.mrb[0].mxu0
        %v2135 = vpop.f32.mrb[0].mxu0
        %v2136 = vadd.f32 0.0, %v2135
        %v2137 = vpop.f32.mrb[0].mxu0
        %2138 = vmatprep.mubr.bf16.mxu0 %v2057
        %2139 = vmatmul.mubr.bf16.gmra.mrb[0].mxu0 %v2056
        %v2140 = vpop.f32.mrb[0].mxu0
        %v2141 = vadd.f32 0.0, %v2140
        %v2142 = vpop.f32.mrb[0].mxu0
        %v2143 = vpop.f32.mrb[0].mxu0
        %v2144 = vadd.f32 0.0, %v2143
        %v2145 = vpop.f32.mrb[0].mxu0
        %2146 = vmatprep.mubr.bf16.mxu0 %v2059
        %2147 = vmatmul.mubr.bf16.gmra.mrb[0].mxu0 %v2058
        %v2148 = vpop.f32.mrb[0].mxu0
        %v2149 = vadd.f32 0.0, %v2148
        %v2150 = vpop.f32.mrb[0].mxu0
        %v2151 = vpop.f32.mrb[0].mxu0
        %v2152 = vadd.f32 0.0, %v2151
        %v2153 = vpop.f32.mrb[0].mxu0
        %2154 = vmatprep.mubr.bf16.mxu0 %v2061
        %2155 = vmatmul.mubr.bf16.gmra.mrb[0].mxu0 %v2060
        %v2156 = vpop.f32.mrb[0].mxu0
        %v2157 = vadd.f32 0.0, %v2156
        %v2158 = vpop.f32.mrb[0].mxu0
        %v2159 = vpop.f32.mrb[0].mxu0
        %v2160 = vadd.f32 0.0, %v2159
        %v2161 = vpop.f32.mrb[0].mxu0
        %2162 = vmatprep.mubr.bf16.mxu0 %v2063
        %2163 = vmatmul.mubr.bf16.gmra.mrb[0].mxu0 %v2062
        %v2164 = vpop.f32.mrb[0].mxu0
        %v2165 = vadd.f32 0.0, %v2164
        %v2166 = vpop.f32.mrb[0].mxu0
        %v2167 = vpop.f32.mrb[0].mxu0
        %v2168 = vadd.f32 0.0, %v2167
        %v2169 = vpop.f32.mrb[0].mxu0
        %2170 = vmatprep.mubr.bf16.mxu0 %v2065
        %2171 = vmatmul.mubr.bf16.gmra.mrb[0].mxu0 %v2064
        %v2172 = vpop.f32.mrb[0].mxu0
        %v2173 = vadd.f32 0.0, %v2172
        %v2174 = vpop.f32.mrb[0].mxu0
        %v2175 = vpop.f32.mrb[0].mxu0
        %v2176 = vadd.f32 0.0, %v2175
        %v2177 = vpop.f32.mrb[0].mxu0
        %2178 = vmatprep.mubr.bf16.mxu0 %v2067
        %2179 = vmatmul.mubr.bf16.gmra.mrb[0].mxu0 %v2066
        %v2180 = vpop.f32.mrb[0].mxu0
        %v2181 = vadd.f32 0.0, %v2180
        %v2182 = vpop.f32.mrb[0].mxu0
        %v2183 = vpop.f32.mrb[0].mxu0
        %v2184 = vadd.f32 0.0, %v2183
        %v2185 = vpop.f32.mrb[0].mxu0
        %2186 = vmatprep.mubr.bf16.mxu0 %v2069
        %2187 = vmatmul.mubr.bf16.gmra.mrb[0].mxu0 %v2068
        %v2188 = vpop.f32.mrb[0].mxu0
        %v2189 = vadd.f32 0.0, %v2188
        %v2190 = vpop.f32.mrb[0].mxu0
        %v2191 = vpop.f32.mrb[0].mxu0
        %v2192 = vadd.f32 0.0, %v2191
        %v2193 = vpop.f32.mrb[0].mxu0
        %2194 = vmatprep.mubr.bf16.mxu0 %v2071
        %2195 = vmatmul.mubr.bf16.gmra.mrb[0].mxu0 %v2070
        %v2196 = vpop.f32.mrb[0].mxu0
        %v2197 = vadd.f32 0.0, %v2196
        %v2198 = vpop.f32.mrb[0].mxu0
        %v2199 = vpop.f32.mrb[0].mxu0
        %v2200 = vadd.f32 0.0, %v2199
        %v2201 = vpop.f32.mrb[0].mxu0
        %2202 = vmatprep.mubr.bf16.mxu0 %v2073
        %2203 = vmatmul.mubr.bf16.gmra.mrb[0].mxu0 %v2072
        %v2204 = vpop.f32.mrb[0].mxu0
        %v2205 = vadd.f32 0.0, %v2204
        %v2206 = vpop.f32.mrb[0].mxu0
        %v2207 = vpop.f32.mrb[0].mxu0
        %v2208 = vadd.f32 0.0, %v2207
        %v2209 = vpop.f32.mrb[0].mxu0
        %2210 = vmatprep.mubr.bf16.mxu0 %v2075
        %2211 = vmatmul.mubr.bf16.gmra.mrb[0].mxu0 %v2074
        %v2212 = vpop.f32.mrb[0].mxu0
        %v2213 = vadd.f32 0.0, %v2212
        %v2214 = vpop.f32.mrb[0].mxu0
        %v2215 = vpop.f32.mrb[0].mxu0
        %v2216 = vadd.f32 0.0, %v2215
        %v2217 = vpop.f32.mrb[0].mxu0
        %2218 = vmatprep.mubr.bf16.mxu0 %v2077
        %2219 = vmatmul.mubr.bf16.gmra.mrb[0].mxu0 %v2076
        %v2220 = vpop.f32.mrb[0].mxu0
        %v2221 = vadd.f32 0.0, %v2220
        %v2222 = vpop.f32.mrb[0].mxu0
        %v2223 = vpop.f32.mrb[0].mxu0
        %v2224 = vadd.f32 0.0, %v2223
        %v2225 = vpop.f32.mrb[0].mxu0
        %2226 = vmatprep.mubr.bf16.mxu0 %v2079
        %2227 = vmatmul.mubr.bf16.gmra.mrb[0].mxu0 %v2078
        %v2228 = vpop.f32.mrb[0].mxu0
        %v2229 = vadd.f32 0.0, %v2228
        %v2230 = vpop.f32.mrb[0].mxu0
        %v2231 = vpop.f32.mrb[0].mxu0
        %v2232 = vadd.f32 0.0, %v2231
        %v2233 = vpop.f32.mrb[0].mxu0
        %2234 = vmatprep.mubr.bf16.mxu0 %v2081
        %2235 = vmatmul.mubr.bf16.gmra.mrb[0].mxu0 %v2080
        %v2236 = vpop.f32.mrb[0].mxu0
        %v2237 = vadd.f32 0.0, %v2236
        %v2238 = vpop.f32.mrb[0].mxu0
        %v2239 = vpop.f32.mrb[0].mxu0
        %v2240 = vadd.f32 0.0, %v2239
        %v2241 = vpop.f32.mrb[0].mxu0
        %2242 = vdwg.mxu0
        %v2243 = vld [vmem:[%s349] sm:$0xff]
        %v2244 = vld [vmem:[%s349 + $0x8] sm:$0xff]
        %v2245 = vld [vmem:[%s349 + $0x10] sm:$0xff]
        %v2246 = vld [vmem:[%s349 + $0x18] sm:$0xff]
        %v2247 = vld [vmem:[%s349 + $0x20] sm:$0xff]
        %v2248 = vld [vmem:[%s349 + $0x28] sm:$0xff]
        %v2249 = vld [vmem:[%s349 + $0x30] sm:$0xff]
        %v2250 = vld [vmem:[%s349 + $0x38] sm:$0xff]
        %v2251 = vld [vmem:[%s349 + $0x40] sm:$0xff]
        %v2252 = vld [vmem:[%s349 + $0x48] sm:$0xff]
        %v2253 = vld [vmem:[%s349 + $0x50] sm:$0xff]
        %v2254 = vld [vmem:[%s349 + $0x58] sm:$0xff]
        %v2255 = vld [vmem:[%s349 + $0x60] sm:$0xff]
        %v2256 = vld [vmem:[%s349 + $0x68] sm:$0xff]
        %v2257 = vld [vmem:[%s349 + $0x70] sm:$0xff]
        %v2258 = vld [vmem:[%s349 + $0x78] sm:$0xff]
        %v2259 = vld [vmem:[%s349 + $0x80] sm:$0xff]
        %v2260 = vld [vmem:[%s349 + $0x88] sm:$0xff]
        %v2261 = vld [vmem:[%s349 + $0x90] sm:$0xff]
        %v2262 = vld [vmem:[%s349 + $0x98] sm:$0xff]
        %v2263 = vld [vmem:[%s349 + $0xa0] sm:$0xff]
        %v2264 = vld [vmem:[%s349 + $0xa8] sm:$0xff]
        %v2265 = vld [vmem:[%s349 + $0xb0] sm:$0xff]
        %v2266 = vld [vmem:[%s349 + $0xb8] sm:$0xff]
        %v2267 = vld [vmem:[%s349 + $0xc0] sm:$0xff]
        %v2268 = vld [vmem:[%s349 + $0xc8] sm:$0xff]
        %v2269 = vld [vmem:[%s349 + $0xd0] sm:$0xff]
        %v2270 = vld [vmem:[%s349 + $0xd8] sm:$0xff]
        %v2271 = vld [vmem:[%s349 + $0xe0] sm:$0xff]
        %v2272 = vld [vmem:[%s349 + $0xe8] sm:$0xff]
        %v2273 = vld [vmem:[%s349 + $0xf0] sm:$0xff]
        %v2274 = vld [vmem:[%s349 + $0xf8] sm:$0xff]
        %v2275 = vld [vmem:[%s349 + $0x100] sm:$0xff]
        %v2276 = vld [vmem:[%s349 + $0x108] sm:$0xff]
        %v2277 = vld [vmem:[%s349 + $0x110] sm:$0xff]
        %v2278 = vld [vmem:[%s349 + $0x118] sm:$0xff]
        %v2279 = vld [vmem:[%s349 + $0x120] sm:$0xff]
        %v2280 = vld [vmem:[%s349 + $0x128] sm:$0xff]
        %v2281 = vld [vmem:[%s349 + $0x130] sm:$0xff]
        %v2282 = vld [vmem:[%s349 + $0x138] sm:$0xff]
        %v2283 = vld [vmem:[%s349 + $0x140] sm:$0xff]
        %v2284 = vld [vmem:[%s349 + $0x148] sm:$0xff]
        %v2285 = vld [vmem:[%s349 + $0x150] sm:$0xff]
        %v2286 = vld [vmem:[%s349 + $0x158] sm:$0xff]
        %v2287 = vld [vmem:[%s349 + $0x160] sm:$0xff]
        %v2288 = vld [vmem:[%s349 + $0x168] sm:$0xff]
        %v2289 = vld [vmem:[%s349 + $0x170] sm:$0xff]
        %v2290 = vld [vmem:[%s349 + $0x178] sm:$0xff]
        %v2291 = vld [vmem:[%s349 + $0x180] sm:$0xff]
        %v2292 = vld [vmem:[%s349 + $0x188] sm:$0xff]
        %v2293 = vld [vmem:[%s349 + $0x190] sm:$0xff]
        %v2294 = vld [vmem:[%s349 + $0x198] sm:$0xff]
        %v2295 = vld [vmem:[%s349 + $0x1a0] sm:$0xff]
        %v2296 = vld [vmem:[%s349 + $0x1a8] sm:$0xff]
        %v2297 = vld [vmem:[%s349 + $0x1b0] sm:$0xff]
        %v2298 = vld [vmem:[%s349 + $0x1b8] sm:$0xff]
        %v2299 = vld [vmem:[%s349 + $0x1c0] sm:$0xff]
        %v2300 = vld [vmem:[%s349 + $0x1c8] sm:$0xff]
        %v2301 = vld [vmem:[%s349 + $0x1d0] sm:$0xff]
        %v2302 = vld [vmem:[%s349 + $0x1d8] sm:$0xff]
        %v2303 = vld [vmem:[%s349 + $0x1e0] sm:$0xff]
        %v2304 = vld [vmem:[%s349 + $0x1e8] sm:$0xff]
        %v2305 = vld [vmem:[%s349 + $0x1f0] sm:$0xff]
        %v2306 = vld [vmem:[%s349 + $0x1f8] sm:$0xff]
        %v2307 = vld [vmem:[%s349 + $0x200] sm:$0xff]
        %v2308 = vld [vmem:[%s349 + $0x208] sm:$0xff]
        %v2309 = vld [vmem:[%s349 + $0x210] sm:$0xff]
        %v2310 = vld [vmem:[%s349 + $0x218] sm:$0xff]
        %v2311 = vld [vmem:[%s349 + $0x220] sm:$0xff]
        %v2312 = vld [vmem:[%s349 + $0x228] sm:$0xff]
        %v2313 = vld [vmem:[%s349 + $0x230] sm:$0xff]
        %v2314 = vld [vmem:[%s349 + $0x238] sm:$0xff]
        %v2315 = vld [vmem:[%s349 + $0x240] sm:$0xff]
        %v2316 = vld [vmem:[%s349 + $0x248] sm:$0xff]
        %v2317 = vld [vmem:[%s349 + $0x250] sm:$0xff]
        %v2318 = vld [vmem:[%s349 + $0x258] sm:$0xff]
        %v2319 = vld [vmem:[%s349 + $0x260] sm:$0xff]
        %v2320 = vld [vmem:[%s349 + $0x268] sm:$0xff]
        %v2321 = vld [vmem:[%s349 + $0x270] sm:$0xff]
        %v2322 = vld [vmem:[%s349 + $0x278] sm:$0xff]
        %v2323 = vld [vmem:[%s349 + $0x280] sm:$0xff]
        %v2324 = vld [vmem:[%s349 + $0x288] sm:$0xff]
        %v2325 = vld [vmem:[%s349 + $0x290] sm:$0xff]
        %v2326 = vld [vmem:[%s349 + $0x298] sm:$0xff]
        %v2327 = vld [vmem:[%s349 + $0x2a0] sm:$0xff]
        %v2328 = vld [vmem:[%s349 + $0x2a8] sm:$0xff]
        %v2329 = vld [vmem:[%s349 + $0x2b0] sm:$0xff]
        %v2330 = vld [vmem:[%s349 + $0x2b8] sm:$0xff]
        %v2331 = vld [vmem:[%s349 + $0x2c0] sm:$0xff]
        %v2332 = vld [vmem:[%s349 + $0x2c8] sm:$0xff]
        %v2333 = vld [vmem:[%s349 + $0x2d0] sm:$0xff]
        %v2334 = vld [vmem:[%s349 + $0x2d8] sm:$0xff]
        %v2335 = vld [vmem:[%s349 + $0x2e0] sm:$0xff]
        %v2336 = vld [vmem:[%s349 + $0x2e8] sm:$0xff]
        %v2337 = vld [vmem:[%s349 + $0x2f0] sm:$0xff]
        %v2338 = vld [vmem:[%s349 + $0x2f8] sm:$0xff]
        %v2339 = vld [vmem:[%s349 + $0x300] sm:$0xff]
        %v2340 = vld [vmem:[%s349 + $0x308] sm:$0xff]
        %v2341 = vld [vmem:[%s349 + $0x310] sm:$0xff]
        %v2342 = vld [vmem:[%s349 + $0x318] sm:$0xff]
        %v2343 = vld [vmem:[%s349 + $0x320] sm:$0xff]
        %v2344 = vld [vmem:[%s349 + $0x328] sm:$0xff]
        %v2345 = vld [vmem:[%s349 + $0x330] sm:$0xff]
        %v2346 = vld [vmem:[%s349 + $0x338] sm:$0xff]
        %v2347 = vld [vmem:[%s349 + $0x340] sm:$0xff]
        %v2348 = vld [vmem:[%s349 + $0x348] sm:$0xff]
        %v2349 = vld [vmem:[%s349 + $0x350] sm:$0xff]
        %v2350 = vld [vmem:[%s349 + $0x358] sm:$0xff]
        %v2351 = vld [vmem:[%s349 + $0x360] sm:$0xff]
        %v2352 = vld [vmem:[%s349 + $0x368] sm:$0xff]
        %v2353 = vld [vmem:[%s349 + $0x370] sm:$0xff]
        %v2354 = vld [vmem:[%s349 + $0x378] sm:$0xff]
        %v2355 = vld [vmem:[%s349 + $0x380] sm:$0xff]
        %v2356 = vld [vmem:[%s349 + $0x388] sm:$0xff]
        %v2357 = vld [vmem:[%s349 + $0x390] sm:$0xff]
        %v2358 = vld [vmem:[%s349 + $0x398] sm:$0xff]
        %v2359 = vld [vmem:[%s349 + $0x3a0] sm:$0xff]
        %v2360 = vld [vmem:[%s349 + $0x3a8] sm:$0xff]
        %v2361 = vld [vmem:[%s349 + $0x3b0] sm:$0xff]
        %v2362 = vld [vmem:[%s349 + $0x3b8] sm:$0xff]
        %v2363 = vld [vmem:[%s349 + $0x3c0] sm:$0xff]
        %v2364 = vld [vmem:[%s349 + $0x3c8] sm:$0xff]
        %v2365 = vld [vmem:[%s349 + $0x3d0] sm:$0xff]
        %v2366 = vld [vmem:[%s349 + $0x3d8] sm:$0xff]
        %v2367 = vld [vmem:[%s349 + $0x3e0] sm:$0xff]
        %v2368 = vld [vmem:[%s349 + $0x3e8] sm:$0xff]
        %v2369 = vld [vmem:[%s349 + $0x3f0] sm:$0xff]
        %v2370 = vld [vmem:[%s349 + $0x3f8] sm:$0xff]
        %v2371 = vld [vmem:[%s349 + $0x400] sm:$0xff]
        %v2372 = vld [vmem:[%s349 + $0x408] sm:$0xff]
        %v2373 = vld [vmem:[%s349 + $0x410] sm:$0xff]
        %v2374 = vld [vmem:[%s349 + $0x418] sm:$0xff]
        %v2375 = vld [vmem:[%s349 + $0x420] sm:$0xff]
        %v2376 = vld [vmem:[%s349 + $0x428] sm:$0xff]
        %v2377 = vld [vmem:[%s349 + $0x430] sm:$0xff]
        %v2378 = vld [vmem:[%s349 + $0x438] sm:$0xff]
        %v2379 = vld [vmem:[%s349 + $0x440] sm:$0xff]
        %v2380 = vld [vmem:[%s349 + $0x448] sm:$0xff]
        %v2381 = vld [vmem:[%s349 + $0x450] sm:$0xff]
        %v2382 = vld [vmem:[%s349 + $0x458] sm:$0xff]
        %v2383 = vld [vmem:[%s349 + $0x460] sm:$0xff]
        %v2384 = vld [vmem:[%s349 + $0x468] sm:$0xff]
        %v2385 = vld [vmem:[%s349 + $0x470] sm:$0xff]
        %v2386 = vld [vmem:[%s349 + $0x478] sm:$0xff]
        %v2387 = vld [vmem:[%s349 + $0x480] sm:$0xff]
        %v2388 = vld [vmem:[%s349 + $0x488] sm:$0xff]
        %v2389 = vld [vmem:[%s349 + $0x490] sm:$0xff]
        %v2390 = vld [vmem:[%s349 + $0x498] sm:$0xff]
        %v2391 = vld [vmem:[%s349 + $0x4a0] sm:$0xff]
        %v2392 = vld [vmem:[%s349 + $0x4a8] sm:$0xff]
        %v2393 = vld [vmem:[%s349 + $0x4b0] sm:$0xff]
        %v2394 = vld [vmem:[%s349 + $0x4b8] sm:$0xff]
        %v2395 = vld [vmem:[%s349 + $0x4c0] sm:$0xff]
        %v2396 = vld [vmem:[%s349 + $0x4c8] sm:$0xff]
        %v2397 = vld [vmem:[%s349 + $0x4d0] sm:$0xff]
        %v2398 = vld [vmem:[%s349 + $0x4d8] sm:$0xff]
        %v2399 = vld [vmem:[%s349 + $0x4e0] sm:$0xff]
        %v2400 = vld [vmem:[%s349 + $0x4e8] sm:$0xff]
        %v2401 = vld [vmem:[%s349 + $0x4f0] sm:$0xff]
        %v2402 = vld [vmem:[%s349 + $0x4f8] sm:$0xff]
        %v2403 = vld [vmem:[%s349 + $0x500] sm:$0xff]
        %v2404 = vld [vmem:[%s349 + $0x508] sm:$0xff]
        %v2405 = vld [vmem:[%s349 + $0x510] sm:$0xff]
        %v2406 = vld [vmem:[%s349 + $0x518] sm:$0xff]
        %v2407 = vld [vmem:[%s349 + $0x520] sm:$0xff]
        %v2408 = vld [vmem:[%s349 + $0x528] sm:$0xff]
        %v2409 = vld [vmem:[%s349 + $0x530] sm:$0xff]
        %v2410 = vld [vmem:[%s349 + $0x538] sm:$0xff]
        %v2411 = vld [vmem:[%s349 + $0x540] sm:$0xff]
        %v2412 = vld [vmem:[%s349 + $0x548] sm:$0xff]
        %v2413 = vld [vmem:[%s349 + $0x550] sm:$0xff]
        %v2414 = vld [vmem:[%s349 + $0x558] sm:$0xff]
        %v2415 = vld [vmem:[%s349 + $0x560] sm:$0xff]
        %v2416 = vld [vmem:[%s349 + $0x568] sm:$0xff]
        %v2417 = vld [vmem:[%s349 + $0x570] sm:$0xff]
        %v2418 = vld [vmem:[%s349 + $0x578] sm:$0xff]
        %v2419 = vld [vmem:[%s349 + $0x580] sm:$0xff]
        %v2420 = vld [vmem:[%s349 + $0x588] sm:$0xff]
        %v2421 = vld [vmem:[%s349 + $0x590] sm:$0xff]
        %v2422 = vld [vmem:[%s349 + $0x598] sm:$0xff]
        %v2423 = vld [vmem:[%s349 + $0x5a0] sm:$0xff]
        %v2424 = vld [vmem:[%s349 + $0x5a8] sm:$0xff]
        %v2425 = vld [vmem:[%s349 + $0x5b0] sm:$0xff]
        %v2426 = vld [vmem:[%s349 + $0x5b8] sm:$0xff]
        %v2427 = vld [vmem:[%s349 + $0x5c0] sm:$0xff]
        %v2428 = vld [vmem:[%s349 + $0x5c8] sm:$0xff]
        %v2429 = vld [vmem:[%s349 + $0x5d0] sm:$0xff]
        %v2430 = vld [vmem:[%s349 + $0x5d8] sm:$0xff]
        %v2431 = vld [vmem:[%s349 + $0x5e0] sm:$0xff]
        %v2432 = vld [vmem:[%s349 + $0x5e8] sm:$0xff]
        %v2433 = vld [vmem:[%s349 + $0x5f0] sm:$0xff]
        %v2434 = vld [vmem:[%s349 + $0x5f8] sm:$0xff]
        %v2435 = vld [vmem:[%s349 + $0x600] sm:$0xff]
        %v2436 = vld [vmem:[%s349 + $0x608] sm:$0xff]
        %v2437 = vld [vmem:[%s349 + $0x610] sm:$0xff]
        %v2438 = vld [vmem:[%s349 + $0x618] sm:$0xff]
        %v2439 = vld [vmem:[%s349 + $0x620] sm:$0xff]
        %v2440 = vld [vmem:[%s349 + $0x628] sm:$0xff]
        %v2441 = vld [vmem:[%s349 + $0x630] sm:$0xff]
        %v2442 = vld [vmem:[%s349 + $0x638] sm:$0xff]
        %v2443 = vld [vmem:[%s349 + $0x640] sm:$0xff]
        %v2444 = vld [vmem:[%s349 + $0x648] sm:$0xff]
        %v2445 = vld [vmem:[%s349 + $0x650] sm:$0xff]
        %v2446 = vld [vmem:[%s349 + $0x658] sm:$0xff]
        %v2447 = vld [vmem:[%s349 + $0x660] sm:$0xff]
        %v2448 = vld [vmem:[%s349 + $0x668] sm:$0xff]
        %v2449 = vld [vmem:[%s349 + $0x670] sm:$0xff]
        %v2450 = vld [vmem:[%s349 + $0x678] sm:$0xff]
        %v2451 = vld [vmem:[%s349 + $0x680] sm:$0xff]
        %v2452 = vld [vmem:[%s349 + $0x688] sm:$0xff]
        %v2453 = vld [vmem:[%s349 + $0x690] sm:$0xff]
        %v2454 = vld [vmem:[%s349 + $0x698] sm:$0xff]
        %v2455 = vld [vmem:[%s349 + $0x6a0] sm:$0xff]
        %v2456 = vld [vmem:[%s349 + $0x6a8] sm:$0xff]
        %v2457 = vld [vmem:[%s349 + $0x6b0] sm:$0xff]
        %v2458 = vld [vmem:[%s349 + $0x6b8] sm:$0xff]
        %v2459 = vld [vmem:[%s349 + $0x6c0] sm:$0xff]
        %v2460 = vld [vmem:[%s349 + $0x6c8] sm:$0xff]
        %v2461 = vld [vmem:[%s349 + $0x6d0] sm:$0xff]
        %v2462 = vld [vmem:[%s349 + $0x6d8] sm:$0xff]
        %v2463 = vld [vmem:[%s349 + $0x6e0] sm:$0xff]
        %v2464 = vld [vmem:[%s349 + $0x6e8] sm:$0xff]
        %v2465 = vld [vmem:[%s349 + $0x6f0] sm:$0xff]
        %v2466 = vld [vmem:[%s349 + $0x6f8] sm:$0xff]
        %v2467 = vld [vmem:[%s349 + $0x700] sm:$0xff]
        %v2468 = vld [vmem:[%s349 + $0x708] sm:$0xff]
        %v2469 = vld [vmem:[%s349 + $0x710] sm:$0xff]
        %v2470 = vld [vmem:[%s349 + $0x718] sm:$0xff]
        %v2471 = vld [vmem:[%s349 + $0x720] sm:$0xff]
        %v2472 = vld [vmem:[%s349 + $0x728] sm:$0xff]
        %v2473 = vld [vmem:[%s349 + $0x730] sm:$0xff]
        %v2474 = vld [vmem:[%s349 + $0x738] sm:$0xff]
        %v2475 = vld [vmem:[%s349 + $0x740] sm:$0xff]
        %v2476 = vld [vmem:[%s349 + $0x748] sm:$0xff]
        %v2477 = vld [vmem:[%s349 + $0x750] sm:$0xff]
        %v2478 = vld [vmem:[%s349 + $0x758] sm:$0xff]
        %v2479 = vld [vmem:[%s349 + $0x760] sm:$0xff]
        %v2480 = vld [vmem:[%s349 + $0x768] sm:$0xff]
        %v2481 = vld [vmem:[%s349 + $0x770] sm:$0xff]
        %v2482 = vld [vmem:[%s349 + $0x778] sm:$0xff]
        %v2483 = vld [vmem:[%s349 + $0x780] sm:$0xff]
        %v2484 = vld [vmem:[%s349 + $0x788] sm:$0xff]
        %v2485 = vld [vmem:[%s349 + $0x790] sm:$0xff]
        %v2486 = vld [vmem:[%s349 + $0x798] sm:$0xff]
        %v2487 = vld [vmem:[%s349 + $0x7a0] sm:$0xff]
        %v2488 = vld [vmem:[%s349 + $0x7a8] sm:$0xff]
        %v2489 = vld [vmem:[%s349 + $0x7b0] sm:$0xff]
        %v2490 = vld [vmem:[%s349 + $0x7b8] sm:$0xff]
        %v2491 = vld [vmem:[%s349 + $0x7c0] sm:$0xff]
        %v2492 = vld [vmem:[%s349 + $0x7c8] sm:$0xff]
        %v2493 = vld [vmem:[%s349 + $0x7d0] sm:$0xff]
        %v2494 = vld [vmem:[%s349 + $0x7d8] sm:$0xff]
        %v2495 = vld [vmem:[%s349 + $0x7e0] sm:$0xff]
        %v2496 = vld [vmem:[%s349 + $0x7e8] sm:$0xff]
        %v2497 = vld [vmem:[%s349 + $0x7f0] sm:$0xff]
        %v2498 = vld [vmem:[%s349 + $0x7f8] sm:$0xff]
        %v2499 = vld [vmem:[#allocation11] sm:$0x1]
        %v2500 = vld [vmem:[#allocation11 + $0x1] sm:$0x1]
        %v2501 = vld [vmem:[#allocation11 + $0x2] sm:$0x1]
        %v2502 = vld [vmem:[#allocation11 + $0x3] sm:$0x1]
        %v2503 = vld [vmem:[#allocation11 + $0x4] sm:$0x1]
        %v2504 = vld [vmem:[#allocation11 + $0x5] sm:$0x1]
        %v2505 = vld [vmem:[#allocation11 + $0x6] sm:$0x1]
        %v2506 = vld [vmem:[#allocation11 + $0x7] sm:$0x1]
        %v2507 = vld [vmem:[#allocation11 + $0x8] sm:$0x1]
        %v2508 = vld [vmem:[#allocation11 + $0x9] sm:$0x1]
        %v2509 = vld [vmem:[#allocation11 + $0xa] sm:$0x1]
        %v2510 = vld [vmem:[#allocation11 + $0xb] sm:$0x1]
        %v2511 = vld [vmem:[#allocation11 + $0xc] sm:$0x1]
        %v2512 = vld [vmem:[#allocation11 + $0xd] sm:$0x1]
        %v2513 = vld [vmem:[#allocation11 + $0xe] sm:$0x1]
        %v2514 = vld [vmem:[#allocation11 + $0xf] sm:$0x1]
        %v2515 = vld [vmem:[#allocation11 + $0x10] sm:$0x1]
        %v2516 = vld [vmem:[#allocation11 + $0x11] sm:$0x1]
        %v2517 = vld [vmem:[#allocation11 + $0x12] sm:$0x1]
        %v2518 = vld [vmem:[#allocation11 + $0x13] sm:$0x1]
        %v2519 = vld [vmem:[#allocation11 + $0x14] sm:$0x1]
        %v2520 = vld [vmem:[#allocation11 + $0x15] sm:$0x1]
        %v2521 = vld [vmem:[#allocation11 + $0x16] sm:$0x1]
        %v2522 = vld [vmem:[#allocation11 + $0x17] sm:$0x1]
        %v2523 = vld [vmem:[#allocation11 + $0x18] sm:$0x1]
        %v2524 = vld [vmem:[#allocation11 + $0x19] sm:$0x1]
        %v2525 = vld [vmem:[#allocation11 + $0x1a] sm:$0x1]
        %v2526 = vld [vmem:[#allocation11 + $0x1b] sm:$0x1]
        %v2527 = vld [vmem:[#allocation11 + $0x1c] sm:$0x1]
        %v2528 = vld [vmem:[#allocation11 + $0x1d] sm:$0x1]
        %v2529 = vld [vmem:[#allocation11 + $0x1e] sm:$0x1]
        %v2530 = vld [vmem:[#allocation11 + $0x1f] sm:$0x1]
        %v2563 = vlaneseq
        %v2564 = vshrl.u32 %v2563, 7
        %v2565 = vsub.s32 0, %v2564
        %v2566 = vrot.slane %v2499, %v2565
        %v2567 = vlaneseq
        %v2568 = vshrl.u32 %v2567, 7
        %v2569 = vsub.s32 0, %v2568
        %v2570 = vrot.slane %v2500, %v2569
        %v2571 = vlaneseq
        %v2572 = vshrl.u32 %v2571, 7
        %v2573 = vsub.s32 0, %v2572
        %v2574 = vrot.slane %v2501, %v2573
        %v2575 = vlaneseq
        %v2576 = vshrl.u32 %v2575, 7
        %v2577 = vsub.s32 0, %v2576
        %v2578 = vrot.slane %v2502, %v2577
        %v2579 = vlaneseq
        %v2580 = vshrl.u32 %v2579, 7
        %v2581 = vsub.s32 0, %v2580
        %v2582 = vrot.slane %v2503, %v2581
        %v2583 = vlaneseq
        %v2584 = vshrl.u32 %v2583, 7
        %v2585 = vsub.s32 0, %v2584
        %v2586 = vrot.slane %v2504, %v2585
        %v2587 = vlaneseq
        %v2588 = vshrl.u32 %v2587, 7
        %v2589 = vsub.s32 0, %v2588
        %v2590 = vrot.slane %v2505, %v2589
        %v2591 = vlaneseq
        %v2592 = vshrl.u32 %v2591, 7
        %v2593 = vsub.s32 0, %v2592
        %v2594 = vrot.slane %v2506, %v2593
        %v2595 = vlaneseq
        %v2596 = vshrl.u32 %v2595, 7
        %v2597 = vsub.s32 0, %v2596
        %v2598 = vrot.slane %v2507, %v2597
        %v2599 = vlaneseq
        %v2600 = vshrl.u32 %v2599, 7
        %v2601 = vsub.s32 0, %v2600
        %v2602 = vrot.slane %v2508, %v2601
        %v2603 = vlaneseq
        %v2604 = vshrl.u32 %v2603, 7
        %v2605 = vsub.s32 0, %v2604
        %v2606 = vrot.slane %v2509, %v2605
        %v2607 = vlaneseq
        %v2608 = vshrl.u32 %v2607, 7
        %v2609 = vsub.s32 0, %v2608
        %v2610 = vrot.slane %v2510, %v2609
        %v2611 = vlaneseq
        %v2612 = vshrl.u32 %v2611, 7
        %v2613 = vsub.s32 0, %v2612
        %v2614 = vrot.slane %v2511, %v2613
        %v2615 = vlaneseq
        %v2616 = vshrl.u32 %v2615, 7
        %v2617 = vsub.s32 0, %v2616
        %v2618 = vrot.slane %v2512, %v2617
        %v2619 = vlaneseq
        %v2620 = vshrl.u32 %v2619, 7
        %v2621 = vsub.s32 0, %v2620
        %v2622 = vrot.slane %v2513, %v2621
        %v2623 = vlaneseq
        %v2624 = vshrl.u32 %v2623, 7
        %v2625 = vsub.s32 0, %v2624
        %v2626 = vrot.slane %v2514, %v2625
        %v2627 = vlaneseq
        %v2628 = vshrl.u32 %v2627, 7
        %v2629 = vsub.s32 0, %v2628
        %v2630 = vrot.slane %v2515, %v2629
        %v2631 = vlaneseq
        %v2632 = vshrl.u32 %v2631, 7
        %v2633 = vsub.s32 0, %v2632
        %v2634 = vrot.slane %v2516, %v2633
        %v2635 = vlaneseq
        %v2636 = vshrl.u32 %v2635, 7
        %v2637 = vsub.s32 0, %v2636
        %v2638 = vrot.slane %v2517, %v2637
        %v2639 = vlaneseq
        %v2640 = vshrl.u32 %v2639, 7
        %v2641 = vsub.s32 0, %v2640
        %v2642 = vrot.slane %v2518, %v2641
        %v2643 = vlaneseq
        %v2644 = vshrl.u32 %v2643, 7
        %v2645 = vsub.s32 0, %v2644
        %v2646 = vrot.slane %v2519, %v2645
        %v2647 = vlaneseq
        %v2648 = vshrl.u32 %v2647, 7
        %v2649 = vsub.s32 0, %v2648
        %v2650 = vrot.slane %v2520, %v2649
        %v2651 = vlaneseq
        %v2652 = vshrl.u32 %v2651, 7
        %v2653 = vsub.s32 0, %v2652
        %v2654 = vrot.slane %v2521, %v2653
        %v2655 = vlaneseq
        %v2656 = vshrl.u32 %v2655, 7
        %v2657 = vsub.s32 0, %v2656
        %v2658 = vrot.slane %v2522, %v2657
        %v2659 = vlaneseq
        %v2660 = vshrl.u32 %v2659, 7
        %v2661 = vsub.s32 0, %v2660
        %v2662 = vrot.slane %v2523, %v2661
        %v2663 = vlaneseq
        %v2664 = vshrl.u32 %v2663, 7
        %v2665 = vsub.s32 0, %v2664
        %v2666 = vrot.slane %v2524, %v2665
        %v2667 = vlaneseq
        %v2668 = vshrl.u32 %v2667, 7
        %v2669 = vsub.s32 0, %v2668
        %v2670 = vrot.slane %v2525, %v2669
        %v2671 = vlaneseq
        %v2672 = vshrl.u32 %v2671, 7
        %v2673 = vsub.s32 0, %v2672
        %v2674 = vrot.slane %v2526, %v2673
        %v2675 = vlaneseq
        %v2676 = vshrl.u32 %v2675, 7
        %v2677 = vsub.s32 0, %v2676
        %v2678 = vrot.slane %v2527, %v2677
        %v2679 = vlaneseq
        %v2680 = vshrl.u32 %v2679, 7
        %v2681 = vsub.s32 0, %v2680
        %v2682 = vrot.slane %v2528, %v2681
        %v2683 = vlaneseq
        %v2684 = vshrl.u32 %v2683, 7
        %v2685 = vsub.s32 0, %v2684
        %v2686 = vrot.slane %v2529, %v2685
        %v2687 = vlaneseq
        %v2688 = vshrl.u32 %v2687, 7
        %v2689 = vsub.s32 0, %v2688
        %v2690 = vrot.slane %v2530, %v2689
        %2691 = vset.pattern.permute.xlu0 0
        %2692 = vperm.xlu0 %2691, %v2566
        %v2693 = vpop.permute.xlu0 %2692
        %2695 = vset.pattern.permute.xlu0 0
        %2696 = vperm.xlu0 %2695, %v2570
        %v2697 = vpop.permute.xlu0 %2696
        %2699 = vset.pattern.permute.xlu0 0
        %2700 = vperm.xlu0 %2699, %v2574
        %v2701 = vpop.permute.xlu0 %2700
        %2703 = vset.pattern.permute.xlu0 0
        %2704 = vperm.xlu0 %2703, %v2578
        %v2705 = vpop.permute.xlu0 %2704
        %2707 = vset.pattern.permute.xlu0 0
        %2708 = vperm.xlu0 %2707, %v2582
        %v2709 = vpop.permute.xlu0 %2708
        %2711 = vset.pattern.permute.xlu0 0
        %2712 = vperm.xlu0 %2711, %v2586
        %v2713 = vpop.permute.xlu0 %2712
        %2715 = vset.pattern.permute.xlu0 0
        %2716 = vperm.xlu0 %2715, %v2590
        %v2717 = vpop.permute.xlu0 %2716
        %2719 = vset.pattern.permute.xlu0 0
        %2720 = vperm.xlu0 %2719, %v2594
        %v2721 = vpop.permute.xlu0 %2720
        %2723 = vset.pattern.permute.xlu0 0
        %2724 = vperm.xlu0 %2723, %v2598
        %v2725 = vpop.permute.xlu0 %2724
        %2727 = vset.pattern.permute.xlu0 0
        %2728 = vperm.xlu0 %2727, %v2602
        %v2729 = vpop.permute.xlu0 %2728
        %2731 = vset.pattern.permute.xlu0 0
        %2732 = vperm.xlu0 %2731, %v2606
        %v2733 = vpop.permute.xlu0 %2732
        %2735 = vset.pattern.permute.xlu0 0
        %2736 = vperm.xlu0 %2735, %v2610
        %v2737 = vpop.permute.xlu0 %2736
        %2739 = vset.pattern.permute.xlu0 0
        %2740 = vperm.xlu0 %2739, %v2614
        %v2741 = vpop.permute.xlu0 %2740
        %2743 = vset.pattern.permute.xlu0 0
        %2744 = vperm.xlu0 %2743, %v2618
        %v2745 = vpop.permute.xlu0 %2744
        %2747 = vset.pattern.permute.xlu0 0
        %2748 = vperm.xlu0 %2747, %v2622
        %v2749 = vpop.permute.xlu0 %2748
        %2751 = vset.pattern.permute.xlu0 0
        %2752 = vperm.xlu0 %2751, %v2626
        %v2753 = vpop.permute.xlu0 %2752
        %2755 = vset.pattern.permute.xlu0 0
        %2756 = vperm.xlu0 %2755, %v2630
        %v2757 = vpop.permute.xlu0 %2756
        %2759 = vset.pattern.permute.xlu0 0
        %2760 = vperm.xlu0 %2759, %v2634
        %v2761 = vpop.permute.xlu0 %2760
        %2763 = vset.pattern.permute.xlu0 0
        %2764 = vperm.xlu0 %2763, %v2638
        %v2765 = vpop.permute.xlu0 %2764
        %2767 = vset.pattern.permute.xlu0 0
        %2768 = vperm.xlu0 %2767, %v2642
        %v2769 = vpop.permute.xlu0 %2768
        %2771 = vset.pattern.permute.xlu0 0
        %2772 = vperm.xlu0 %2771, %v2646
        %v2773 = vpop.permute.xlu0 %2772
        %2775 = vset.pattern.permute.xlu0 0
        %2776 = vperm.xlu0 %2775, %v2650
        %v2777 = vpop.permute.xlu0 %2776
        %2779 = vset.pattern.permute.xlu0 0
        %2780 = vperm.xlu0 %2779, %v2654
        %v2781 = vpop.permute.xlu0 %2780
        %2783 = vset.pattern.permute.xlu0 0
        %2784 = vperm.xlu0 %2783, %v2658
        %v2785 = vpop.permute.xlu0 %2784
        %2787 = vset.pattern.permute.xlu0 0
        %2788 = vperm.xlu0 %2787, %v2662
        %v2789 = vpop.permute.xlu0 %2788
        %2791 = vset.pattern.permute.xlu0 0
        %2792 = vperm.xlu0 %2791, %v2666
        %v2793 = vpop.permute.xlu0 %2792
        %2795 = vset.pattern.permute.xlu0 0
        %2796 = vperm.xlu0 %2795, %v2670
        %v2797 = vpop.permute.xlu0 %2796
        %2799 = vset.pattern.permute.xlu0 0
        %2800 = vperm.xlu0 %2799, %v2674
        %v2801 = vpop.permute.xlu0 %2800
        %2803 = vset.pattern.permute.xlu0 0
        %2804 = vperm.xlu0 %2803, %v2678
        %v2805 = vpop.permute.xlu0 %2804
        %2807 = vset.pattern.permute.xlu0 0
        %2808 = vperm.xlu0 %2807, %v2682
        %v2809 = vpop.permute.xlu0 %2808
        %2811 = vset.pattern.permute.xlu0 0
        %2812 = vperm.xlu0 %2811, %v2686
        %v2813 = vpop.permute.xlu0 %2812
        %2815 = vset.pattern.permute.xlu0 0
        %2816 = vperm.xlu0 %2815, %v2690
        %v2817 = vpop.permute.xlu0 %2816
        %v2819 = vadd.f32 %v2243, %v2693
        %v2820 = vadd.f32 %v2244, %v2693
        %v2821 = vadd.f32 %v2245, %v2693
        %v2822 = vadd.f32 %v2246, %v2693
        %v2823 = vadd.f32 %v2247, %v2693
        %v2824 = vadd.f32 %v2248, %v2693
        %v2825 = vadd.f32 %v2249, %v2693
        %v2826 = vadd.f32 %v2250, %v2693
        %v2827 = vadd.f32 %v2251, %v2697
        %v2828 = vadd.f32 %v2252, %v2697
        %v2829 = vadd.f32 %v2253, %v2697
        %v2830 = vadd.f32 %v2254, %v2697
        %v2831 = vadd.f32 %v2255, %v2697
        %v2832 = vadd.f32 %v2256, %v2697
        %v2833 = vadd.f32 %v2257, %v2697
        %v2834 = vadd.f32 %v2258, %v2697
        %v2835 = vadd.f32 %v2259, %v2701
        %v2836 = vadd.f32 %v2260, %v2701
        %v2837 = vadd.f32 %v2261, %v2701
        %v2838 = vadd.f32 %v2262, %v2701
        %v2839 = vadd.f32 %v2263, %v2701
        %v2840 = vadd.f32 %v2264, %v2701
        %v2841 = vadd.f32 %v2265, %v2701
        %v2842 = vadd.f32 %v2266, %v2701
        %v2843 = vadd.f32 %v2267, %v2705
        %v2844 = vadd.f32 %v2268, %v2705
        %v2845 = vadd.f32 %v2269, %v2705
        %v2846 = vadd.f32 %v2270, %v2705
        %v2847 = vadd.f32 %v2271, %v2705
        %v2848 = vadd.f32 %v2272, %v2705
        %v2849 = vadd.f32 %v2273, %v2705
        %v2850 = vadd.f32 %v2274, %v2705
        %v2851 = vadd.f32 %v2275, %v2709
        %v2852 = vadd.f32 %v2276, %v2709
        %v2853 = vadd.f32 %v2277, %v2709
        %v2854 = vadd.f32 %v2278, %v2709
        %v2855 = vadd.f32 %v2279, %v2709
        %v2856 = vadd.f32 %v2280, %v2709
        %v2857 = vadd.f32 %v2281, %v2709
        %v2858 = vadd.f32 %v2282, %v2709
        %v2859 = vadd.f32 %v2283, %v2713
        %v2860 = vadd.f32 %v2284, %v2713
        %v2861 = vadd.f32 %v2285, %v2713
        %v2862 = vadd.f32 %v2286, %v2713
        %v2863 = vadd.f32 %v2287, %v2713
        %v2864 = vadd.f32 %v2288, %v2713
        %v2865 = vadd.f32 %v2289, %v2713
        %v2866 = vadd.f32 %v2290, %v2713
        %v2867 = vadd.f32 %v2291, %v2717
        %v2868 = vadd.f32 %v2292, %v2717
        %v2869 = vadd.f32 %v2293, %v2717
        %v2870 = vadd.f32 %v2294, %v2717
        %v2871 = vadd.f32 %v2295, %v2717
        %v2872 = vadd.f32 %v2296, %v2717
        %v2873 = vadd.f32 %v2297, %v2717
        %v2874 = vadd.f32 %v2298, %v2717
        %v2875 = vadd.f32 %v2299, %v2721
        %v2876 = vadd.f32 %v2300, %v2721
        %v2877 = vadd.f32 %v2301, %v2721
        %v2878 = vadd.f32 %v2302, %v2721
        %v2879 = vadd.f32 %v2303, %v2721
        %v2880 = vadd.f32 %v2304, %v2721
        %v2881 = vadd.f32 %v2305, %v2721
        %v2882 = vadd.f32 %v2306, %v2721
        %v2883 = vadd.f32 %v2307, %v2725
        %v2884 = vadd.f32 %v2308, %v2725
        %v2885 = vadd.f32 %v2309, %v2725
        %v2886 = vadd.f32 %v2310, %v2725
        %v2887 = vadd.f32 %v2311, %v2725
        %v2888 = vadd.f32 %v2312, %v2725
        %v2889 = vadd.f32 %v2313, %v2725
        %v2890 = vadd.f32 %v2314, %v2725
        %v2891 = vadd.f32 %v2315, %v2729
        %v2892 = vadd.f32 %v2316, %v2729
        %v2893 = vadd.f32 %v2317, %v2729
        %v2894 = vadd.f32 %v2318, %v2729
        %v2895 = vadd.f32 %v2319, %v2729
        %v2896 = vadd.f32 %v2320, %v2729
        %v2897 = vadd.f32 %v2321, %v2729
        %v2898 = vadd.f32 %v2322, %v2729
        %v2899 = vadd.f32 %v2323, %v2733
        %v2900 = vadd.f32 %v2324, %v2733
        %v2901 = vadd.f32 %v2325, %v2733
        %v2902 = vadd.f32 %v2326, %v2733
        %v2903 = vadd.f32 %v2327, %v2733
        %v2904 = vadd.f32 %v2328, %v2733
        %v2905 = vadd.f32 %v2329, %v2733
        %v2906 = vadd.f32 %v2330, %v2733
        %v2907 = vadd.f32 %v2331, %v2737
        %v2908 = vadd.f32 %v2332, %v2737
        %v2909 = vadd.f32 %v2333, %v2737
        %v2910 = vadd.f32 %v2334, %v2737
        %v2911 = vadd.f32 %v2335, %v2737
        %v2912 = vadd.f32 %v2336, %v2737
        %v2913 = vadd.f32 %v2337, %v2737
        %v2914 = vadd.f32 %v2338, %v2737
        %v2915 = vadd.f32 %v2339, %v2741
        %v2916 = vadd.f32 %v2340, %v2741
        %v2917 = vadd.f32 %v2341, %v2741
        %v2918 = vadd.f32 %v2342, %v2741
        %v2919 = vadd.f32 %v2343, %v2741
        %v2920 = vadd.f32 %v2344, %v2741
        %v2921 = vadd.f32 %v2345, %v2741
        %v2922 = vadd.f32 %v2346, %v2741
        %v2923 = vadd.f32 %v2347, %v2745
        %v2924 = vadd.f32 %v2348, %v2745
        %v2925 = vadd.f32 %v2349, %v2745
        %v2926 = vadd.f32 %v2350, %v2745
        %v2927 = vadd.f32 %v2351, %v2745
        %v2928 = vadd.f32 %v2352, %v2745
        %v2929 = vadd.f32 %v2353, %v2745
        %v2930 = vadd.f32 %v2354, %v2745
        %v2931 = vadd.f32 %v2355, %v2749
        %v2932 = vadd.f32 %v2356, %v2749
        %v2933 = vadd.f32 %v2357, %v2749
        %v2934 = vadd.f32 %v2358, %v2749
        %v2935 = vadd.f32 %v2359, %v2749
        %v2936 = vadd.f32 %v2360, %v2749
        %v2937 = vadd.f32 %v2361, %v2749
        %v2938 = vadd.f32 %v2362, %v2749
        %v2939 = vadd.f32 %v2363, %v2753
        %v2940 = vadd.f32 %v2364, %v2753
        %v2941 = vadd.f32 %v2365, %v2753
        %v2942 = vadd.f32 %v2366, %v2753
        %v2943 = vadd.f32 %v2367, %v2753
        %v2944 = vadd.f32 %v2368, %v2753
        %v2945 = vadd.f32 %v2369, %v2753
        %v2946 = vadd.f32 %v2370, %v2753
        %v2947 = vadd.f32 %v2371, %v2757
        %v2948 = vadd.f32 %v2372, %v2757
        %v2949 = vadd.f32 %v2373, %v2757
        %v2950 = vadd.f32 %v2374, %v2757
        %v2951 = vadd.f32 %v2375, %v2757
        %v2952 = vadd.f32 %v2376, %v2757
        %v2953 = vadd.f32 %v2377, %v2757
        %v2954 = vadd.f32 %v2378, %v2757
        %v2955 = vadd.f32 %v2379, %v2761
        %v2956 = vadd.f32 %v2380, %v2761
        %v2957 = vadd.f32 %v2381, %v2761
        %v2958 = vadd.f32 %v2382, %v2761
        %v2959 = vadd.f32 %v2383, %v2761
        %v2960 = vadd.f32 %v2384, %v2761
        %v2961 = vadd.f32 %v2385, %v2761
        %v2962 = vadd.f32 %v2386, %v2761
        %v2963 = vadd.f32 %v2387, %v2765
        %v2964 = vadd.f32 %v2388, %v2765
        %v2965 = vadd.f32 %v2389, %v2765
        %v2966 = vadd.f32 %v2390, %v2765
        %v2967 = vadd.f32 %v2391, %v2765
        %v2968 = vadd.f32 %v2392, %v2765
        %v2969 = vadd.f32 %v2393, %v2765
        %v2970 = vadd.f32 %v2394, %v2765
        %v2971 = vadd.f32 %v2395, %v2769
        %v2972 = vadd.f32 %v2396, %v2769
        %v2973 = vadd.f32 %v2397, %v2769
        %v2974 = vadd.f32 %v2398, %v2769
        %v2975 = vadd.f32 %v2399, %v2769
        %v2976 = vadd.f32 %v2400, %v2769
        %v2977 = vadd.f32 %v2401, %v2769
        %v2978 = vadd.f32 %v2402, %v2769
        %v2979 = vadd.f32 %v2403, %v2773
        %v2980 = vadd.f32 %v2404, %v2773
        %v2981 = vadd.f32 %v2405, %v2773
        %v2982 = vadd.f32 %v2406, %v2773
        %v2983 = vadd.f32 %v2407, %v2773
        %v2984 = vadd.f32 %v2408, %v2773
        %v2985 = vadd.f32 %v2409, %v2773
        %v2986 = vadd.f32 %v2410, %v2773
        %v2987 = vadd.f32 %v2411, %v2777
        %v2988 = vadd.f32 %v2412, %v2777
        %v2989 = vadd.f32 %v2413, %v2777
        %v2990 = vadd.f32 %v2414, %v2777
        %v2991 = vadd.f32 %v2415, %v2777
        %v2992 = vadd.f32 %v2416, %v2777
        %v2993 = vadd.f32 %v2417, %v2777
        %v2994 = vadd.f32 %v2418, %v2777
        %v2995 = vadd.f32 %v2419, %v2781
        %v2996 = vadd.f32 %v2420, %v2781
        %v2997 = vadd.f32 %v2421, %v2781
        %v2998 = vadd.f32 %v2422, %v2781
        %v2999 = vadd.f32 %v2423, %v2781
        %v3000 = vadd.f32 %v2424, %v2781
        %v3001 = vadd.f32 %v2425, %v2781
        %v3002 = vadd.f32 %v2426, %v2781
        %v3003 = vadd.f32 %v2427, %v2785
        %v3004 = vadd.f32 %v2428, %v2785
        %v3005 = vadd.f32 %v2429, %v2785
        %v3006 = vadd.f32 %v2430, %v2785
        %v3007 = vadd.f32 %v2431, %v2785
        %v3008 = vadd.f32 %v2432, %v2785
        %v3009 = vadd.f32 %v2433, %v2785
        %v3010 = vadd.f32 %v2434, %v2785
        %v3011 = vadd.f32 %v2435, %v2789
        %v3012 = vadd.f32 %v2436, %v2789
        %v3013 = vadd.f32 %v2437, %v2789
        %v3014 = vadd.f32 %v2438, %v2789
        %v3015 = vadd.f32 %v2439, %v2789
        %v3016 = vadd.f32 %v2440, %v2789
        %v3017 = vadd.f32 %v2441, %v2789
        %v3018 = vadd.f32 %v2442, %v2789
        %v3019 = vadd.f32 %v2443, %v2793
        %v3020 = vadd.f32 %v2444, %v2793
        %v3021 = vadd.f32 %v2445, %v2793
        %v3022 = vadd.f32 %v2446, %v2793
        %v3023 = vadd.f32 %v2447, %v2793
        %v3024 = vadd.f32 %v2448, %v2793
        %v3025 = vadd.f32 %v2449, %v2793
        %v3026 = vadd.f32 %v2450, %v2793
        %v3027 = vadd.f32 %v2451, %v2797
        %v3028 = vadd.f32 %v2452, %v2797
        %v3029 = vadd.f32 %v2453, %v2797
        %v3030 = vadd.f32 %v2454, %v2797
        %v3031 = vadd.f32 %v2455, %v2797
        %v3032 = vadd.f32 %v2456, %v2797
        %v3033 = vadd.f32 %v2457, %v2797
        %v3034 = vadd.f32 %v2458, %v2797
        %v3035 = vadd.f32 %v2459, %v2801
        %v3036 = vadd.f32 %v2460, %v2801
        %v3037 = vadd.f32 %v2461, %v2801
        %v3038 = vadd.f32 %v2462, %v2801
        %v3039 = vadd.f32 %v2463, %v2801
        %v3040 = vadd.f32 %v2464, %v2801
        %v3041 = vadd.f32 %v2465, %v2801
        %v3042 = vadd.f32 %v2466, %v2801
        %v3043 = vadd.f32 %v2467, %v2805
        %v3044 = vadd.f32 %v2468, %v2805
        %v3045 = vadd.f32 %v2469, %v2805
        %v3046 = vadd.f32 %v2470, %v2805
        %v3047 = vadd.f32 %v2471, %v2805
        %v3048 = vadd.f32 %v2472, %v2805
        %v3049 = vadd.f32 %v2473, %v2805
        %v3050 = vadd.f32 %v2474, %v2805
        %v3051 = vadd.f32 %v2475, %v2809
        %v3052 = vadd.f32 %v2476, %v2809
        %v3053 = vadd.f32 %v2477, %v2809
        %v3054 = vadd.f32 %v2478, %v2809
        %v3055 = vadd.f32 %v2479, %v2809
        %v3056 = vadd.f32 %v2480, %v2809
        %v3057 = vadd.f32 %v2481, %v2809
        %v3058 = vadd.f32 %v2482, %v2809
        %v3059 = vadd.f32 %v2483, %v2813
        %v3060 = vadd.f32 %v2484, %v2813
        %v3061 = vadd.f32 %v2485, %v2813
        %v3062 = vadd.f32 %v2486, %v2813
        %v3063 = vadd.f32 %v2487, %v2813
        %v3064 = vadd.f32 %v2488, %v2813
        %v3065 = vadd.f32 %v2489, %v2813
        %v3066 = vadd.f32 %v2490, %v2813
        %v3067 = vadd.f32 %v2491, %v2817
        %v3068 = vadd.f32 %v2492, %v2817
        %v3069 = vadd.f32 %v2493, %v2817
        %v3070 = vadd.f32 %v2494, %v2817
        %v3071 = vadd.f32 %v2495, %v2817
        %v3072 = vadd.f32 %v2496, %v2817
        %v3073 = vadd.f32 %v2497, %v2817
        %v3074 = vadd.f32 %v2498, %v2817
        %v3075 = vld [vmem:[#allocation10] sm:$0x1]
        %v3076 = vld [vmem:[#allocation10 + $0x1] sm:$0x1]
        %v3077 = vld [vmem:[#allocation10 + $0x2] sm:$0x1]
        %v3078 = vld [vmem:[#allocation10 + $0x3] sm:$0x1]
        %v3079 = vld [vmem:[#allocation10 + $0x4] sm:$0x1]
        %v3080 = vld [vmem:[#allocation10 + $0x5] sm:$0x1]
        %v3081 = vld [vmem:[#allocation10 + $0x6] sm:$0x1]
        %v3082 = vld [vmem:[#allocation10 + $0x7] sm:$0x1]
        %v3083 = vld [vmem:[#allocation10 + $0x8] sm:$0x1]
        %v3084 = vld [vmem:[#allocation10 + $0x9] sm:$0x1]
        %v3085 = vld [vmem:[#allocation10 + $0xa] sm:$0x1]
        %v3086 = vld [vmem:[#allocation10 + $0xb] sm:$0x1]
        %v3087 = vld [vmem:[#allocation10 + $0xc] sm:$0x1]
        %v3088 = vld [vmem:[#allocation10 + $0xd] sm:$0x1]
        %v3089 = vld [vmem:[#allocation10 + $0xe] sm:$0x1]
        %v3090 = vld [vmem:[#allocation10 + $0xf] sm:$0x1]
        %v3091 = vld [vmem:[#allocation10 + $0x10] sm:$0x1]
        %v3092 = vld [vmem:[#allocation10 + $0x11] sm:$0x1]
        %v3093 = vld [vmem:[#allocation10 + $0x12] sm:$0x1]
        %v3094 = vld [vmem:[#allocation10 + $0x13] sm:$0x1]
        %v3095 = vld [vmem:[#allocation10 + $0x14] sm:$0x1]
        %v3096 = vld [vmem:[#allocation10 + $0x15] sm:$0x1]
        %v3097 = vld [vmem:[#allocation10 + $0x16] sm:$0x1]
        %v3098 = vld [vmem:[#allocation10 + $0x17] sm:$0x1]
        %v3099 = vld [vmem:[#allocation10 + $0x18] sm:$0x1]
        %v3100 = vld [vmem:[#allocation10 + $0x19] sm:$0x1]
        %v3101 = vld [vmem:[#allocation10 + $0x1a] sm:$0x1]
        %v3102 = vld [vmem:[#allocation10 + $0x1b] sm:$0x1]
        %v3103 = vld [vmem:[#allocation10 + $0x1c] sm:$0x1]
        %v3104 = vld [vmem:[#allocation10 + $0x1d] sm:$0x1]
        %v3105 = vld [vmem:[#allocation10 + $0x1e] sm:$0x1]
        %v3106 = vld [vmem:[#allocation10 + $0x1f] sm:$0x1]
        %v3139 = vlaneseq
        %v3140 = vshrl.u32 %v3139, 7
        %v3141 = vsub.s32 0, %v3140
        %v3142 = vrot.slane %v3075, %v3141
        %v3143 = vlaneseq
        %v3144 = vshrl.u32 %v3143, 7
        %v3145 = vsub.s32 0, %v3144
        %v3146 = vrot.slane %v3076, %v3145
        %v3147 = vlaneseq
        %v3148 = vshrl.u32 %v3147, 7
        %v3149 = vsub.s32 0, %v3148
        %v3150 = vrot.slane %v3077, %v3149
        %v3151 = vlaneseq
        %v3152 = vshrl.u32 %v3151, 7
        %v3153 = vsub.s32 0, %v3152
        %v3154 = vrot.slane %v3078, %v3153
        %v3155 = vlaneseq
        %v3156 = vshrl.u32 %v3155, 7
        %v3157 = vsub.s32 0, %v3156
        %v3158 = vrot.slane %v3079, %v3157
        %v3159 = vlaneseq
        %v3160 = vshrl.u32 %v3159, 7
        %v3161 = vsub.s32 0, %v3160
        %v3162 = vrot.slane %v3080, %v3161
        %v3163 = vlaneseq
        %v3164 = vshrl.u32 %v3163, 7
        %v3165 = vsub.s32 0, %v3164
        %v3166 = vrot.slane %v3081, %v3165
        %v3167 = vlaneseq
        %v3168 = vshrl.u32 %v3167, 7
        %v3169 = vsub.s32 0, %v3168
        %v3170 = vrot.slane %v3082, %v3169
        %v3171 = vlaneseq
        %v3172 = vshrl.u32 %v3171, 7
        %v3173 = vsub.s32 0, %v3172
        %v3174 = vrot.slane %v3083, %v3173
        %v3175 = vlaneseq
        %v3176 = vshrl.u32 %v3175, 7
        %v3177 = vsub.s32 0, %v3176
        %v3178 = vrot.slane %v3084, %v3177
        %v3179 = vlaneseq
        %v3180 = vshrl.u32 %v3179, 7
        %v3181 = vsub.s32 0, %v3180
        %v3182 = vrot.slane %v3085, %v3181
        %v3183 = vlaneseq
        %v3184 = vshrl.u32 %v3183, 7
        %v3185 = vsub.s32 0, %v3184
        %v3186 = vrot.slane %v3086, %v3185
        %v3187 = vlaneseq
        %v3188 = vshrl.u32 %v3187, 7
        %v3189 = vsub.s32 0, %v3188
        %v3190 = vrot.slane %v3087, %v3189
        %v3191 = vlaneseq
        %v3192 = vshrl.u32 %v3191, 7
        %v3193 = vsub.s32 0, %v3192
        %v3194 = vrot.slane %v3088, %v3193
        %v3195 = vlaneseq
        %v3196 = vshrl.u32 %v3195, 7
        %v3197 = vsub.s32 0, %v3196
        %v3198 = vrot.slane %v3089, %v3197
        %v3199 = vlaneseq
        %v3200 = vshrl.u32 %v3199, 7
        %v3201 = vsub.s32 0, %v3200
        %v3202 = vrot.slane %v3090, %v3201
        %v3203 = vlaneseq
        %v3204 = vshrl.u32 %v3203, 7
        %v3205 = vsub.s32 0, %v3204
        %v3206 = vrot.slane %v3091, %v3205
        %v3207 = vlaneseq
        %v3208 = vshrl.u32 %v3207, 7
        %v3209 = vsub.s32 0, %v3208
        %v3210 = vrot.slane %v3092, %v3209
        %v3211 = vlaneseq
        %v3212 = vshrl.u32 %v3211, 7
        %v3213 = vsub.s32 0, %v3212
        %v3214 = vrot.slane %v3093, %v3213
        %v3215 = vlaneseq
        %v3216 = vshrl.u32 %v3215, 7
        %v3217 = vsub.s32 0, %v3216
        %v3218 = vrot.slane %v3094, %v3217
        %v3219 = vlaneseq
        %v3220 = vshrl.u32 %v3219, 7
        %v3221 = vsub.s32 0, %v3220
        %v3222 = vrot.slane %v3095, %v3221
        %v3223 = vlaneseq
        %v3224 = vshrl.u32 %v3223, 7
        %v3225 = vsub.s32 0, %v3224
        %v3226 = vrot.slane %v3096, %v3225
        %v3227 = vlaneseq
        %v3228 = vshrl.u32 %v3227, 7
        %v3229 = vsub.s32 0, %v3228
        %v3230 = vrot.slane %v3097, %v3229
        %v3231 = vlaneseq
        %v3232 = vshrl.u32 %v3231, 7
        %v3233 = vsub.s32 0, %v3232
        %v3234 = vrot.slane %v3098, %v3233
        %v3235 = vlaneseq
        %v3236 = vshrl.u32 %v3235, 7
        %v3237 = vsub.s32 0, %v3236
        %v3238 = vrot.slane %v3099, %v3237
        %v3239 = vlaneseq
        %v3240 = vshrl.u32 %v3239, 7
        %v3241 = vsub.s32 0, %v3240
        %v3242 = vrot.slane %v3100, %v3241
        %v3243 = vlaneseq
        %v3244 = vshrl.u32 %v3243, 7
        %v3245 = vsub.s32 0, %v3244
        %v3246 = vrot.slane %v3101, %v3245
        %v3247 = vlaneseq
        %v3248 = vshrl.u32 %v3247, 7
        %v3249 = vsub.s32 0, %v3248
        %v3250 = vrot.slane %v3102, %v3249
        %v3251 = vlaneseq
        %v3252 = vshrl.u32 %v3251, 7
        %v3253 = vsub.s32 0, %v3252
        %v3254 = vrot.slane %v3103, %v3253
        %v3255 = vlaneseq
        %v3256 = vshrl.u32 %v3255, 7
        %v3257 = vsub.s32 0, %v3256
        %v3258 = vrot.slane %v3104, %v3257
        %v3259 = vlaneseq
        %v3260 = vshrl.u32 %v3259, 7
        %v3261 = vsub.s32 0, %v3260
        %v3262 = vrot.slane %v3105, %v3261
        %v3263 = vlaneseq
        %v3264 = vshrl.u32 %v3263, 7
        %v3265 = vsub.s32 0, %v3264
        %v3266 = vrot.slane %v3106, %v3265
        %3267 = vset.pattern.permute.xlu0 0
        %3268 = vperm.xlu0 %3267, %v3142
        %v3269 = vpop.permute.xlu0 %3268
        %3271 = vset.pattern.permute.xlu0 0
        %3272 = vperm.xlu0 %3271, %v3146
        %v3273 = vpop.permute.xlu0 %3272
        %3275 = vset.pattern.permute.xlu0 0
        %3276 = vperm.xlu0 %3275, %v3150
        %v3277 = vpop.permute.xlu0 %3276
        %3279 = vset.pattern.permute.xlu0 0
        %3280 = vperm.xlu0 %3279, %v3154
        %v3281 = vpop.permute.xlu0 %3280
        %3283 = vset.pattern.permute.xlu0 0
        %3284 = vperm.xlu0 %3283, %v3158
        %v3285 = vpop.permute.xlu0 %3284
        %3287 = vset.pattern.permute.xlu0 0
        %3288 = vperm.xlu0 %3287, %v3162
        %v3289 = vpop.permute.xlu0 %3288
        %3291 = vset.pattern.permute.xlu0 0
        %3292 = vperm.xlu0 %3291, %v3166
        %v3293 = vpop.permute.xlu0 %3292
        %3295 = vset.pattern.permute.xlu0 0
        %3296 = vperm.xlu0 %3295, %v3170
        %v3297 = vpop.permute.xlu0 %3296
        %3299 = vset.pattern.permute.xlu0 0
        %3300 = vperm.xlu0 %3299, %v3174
        %v3301 = vpop.permute.xlu0 %3300
        %3303 = vset.pattern.permute.xlu0 0
        %3304 = vperm.xlu0 %3303, %v3178
        %v3305 = vpop.permute.xlu0 %3304
        %3307 = vset.pattern.permute.xlu0 0
        %3308 = vperm.xlu0 %3307, %v3182
        %v3309 = vpop.permute.xlu0 %3308
        %3311 = vset.pattern.permute.xlu0 0
        %3312 = vperm.xlu0 %3311, %v3186
        %v3313 = vpop.permute.xlu0 %3312
        %3315 = vset.pattern.permute.xlu0 0
        %3316 = vperm.xlu0 %3315, %v3190
        %v3317 = vpop.permute.xlu0 %3316
        %3319 = vset.pattern.permute.xlu0 0
        %3320 = vperm.xlu0 %3319, %v3194
        %v3321 = vpop.permute.xlu0 %3320
        %3323 = vset.pattern.permute.xlu0 0
        %3324 = vperm.xlu0 %3323, %v3198
        %v3325 = vpop.permute.xlu0 %3324
        %3327 = vset.pattern.permute.xlu0 0
        %3328 = vperm.xlu0 %3327, %v3202
        %v3329 = vpop.permute.xlu0 %3328
        %3331 = vset.pattern.permute.xlu0 0
        %3332 = vperm.xlu0 %3331, %v3206
        %v3333 = vpop.permute.xlu0 %3332
        %3335 = vset.pattern.permute.xlu0 0
        %3336 = vperm.xlu0 %3335, %v3210
        %v3337 = vpop.permute.xlu0 %3336
        %3339 = vset.pattern.permute.xlu0 0
        %3340 = vperm.xlu0 %3339, %v3214
        %v3341 = vpop.permute.xlu0 %3340
        %3343 = vset.pattern.permute.xlu0 0
        %3344 = vperm.xlu0 %3343, %v3218
        %v3345 = vpop.permute.xlu0 %3344
        %3347 = vset.pattern.permute.xlu0 0
        %3348 = vperm.xlu0 %3347, %v3222
        %v3349 = vpop.permute.xlu0 %3348
        %3351 = vset.pattern.permute.xlu0 0
        %3352 = vperm.xlu0 %3351, %v3226
        %v3353 = vpop.permute.xlu0 %3352
        %3355 = vset.pattern.permute.xlu0 0
        %3356 = vperm.xlu0 %3355, %v3230
        %v3357 = vpop.permute.xlu0 %3356
        %3359 = vset.pattern.permute.xlu0 0
        %3360 = vperm.xlu0 %3359, %v3234
        %v3361 = vpop.permute.xlu0 %3360
        %3363 = vset.pattern.permute.xlu0 0
        %3364 = vperm.xlu0 %3363, %v3238
        %v3365 = vpop.permute.xlu0 %3364
        %3367 = vset.pattern.permute.xlu0 0
        %3368 = vperm.xlu0 %3367, %v3242
        %v3369 = vpop.permute.xlu0 %3368
        %3371 = vset.pattern.permute.xlu0 0
        %3372 = vperm.xlu0 %3371, %v3246
        %v3373 = vpop.permute.xlu0 %3372
        %3375 = vset.pattern.permute.xlu0 0
        %3376 = vperm.xlu0 %3375, %v3250
        %v3377 = vpop.permute.xlu0 %3376
        %3379 = vset.pattern.permute.xlu0 0
        %3380 = vperm.xlu0 %3379, %v3254
        %v3381 = vpop.permute.xlu0 %3380
        %3383 = vset.pattern.permute.xlu0 0
        %3384 = vperm.xlu0 %3383, %v3258
        %v3385 = vpop.permute.xlu0 %3384
        %3387 = vset.pattern.permute.xlu0 0
        %3388 = vperm.xlu0 %3387, %v3262
        %v3389 = vpop.permute.xlu0 %3388
        %3391 = vset.pattern.permute.xlu0 0
        %3392 = vperm.xlu0 %3391, %v3266
        %v3393 = vpop.permute.xlu0 %3392
        %v3395 = vmul.f32 %v3269, %v2117
        %v3396 = vmul.f32 %v3269, %v2120
        %v3397 = vmul.f32 %v3269, %v2125
        %v3398 = vmul.f32 %v3269, %v2128
        %v3399 = vmul.f32 %v3269, %v2133
        %v3400 = vmul.f32 %v3269, %v2136
        %v3401 = vmul.f32 %v3269, %v2141
        %v3402 = vmul.f32 %v3269, %v2144
        %v3403 = vmul.f32 %v3273, %v2117
        %v3404 = vmul.f32 %v3273, %v2120
        %v3405 = vmul.f32 %v3273, %v2125
        %v3406 = vmul.f32 %v3273, %v2128
        %v3407 = vmul.f32 %v3273, %v2133
        %v3408 = vmul.f32 %v3273, %v2136
        %v3409 = vmul.f32 %v3273, %v2141
        %v3410 = vmul.f32 %v3273, %v2144
        %v3411 = vmul.f32 %v3277, %v2117
        %v3412 = vmul.f32 %v3277, %v2120
        %v3413 = vmul.f32 %v3277, %v2125
        %v3414 = vmul.f32 %v3277, %v2128
        %v3415 = vmul.f32 %v3277, %v2133
        %v3416 = vmul.f32 %v3277, %v2136
        %v3417 = vmul.f32 %v3277, %v2141
        %v3418 = vmul.f32 %v3277, %v2144
        %v3419 = vmul.f32 %v3281, %v2117
        %v3420 = vmul.f32 %v3281, %v2120
        %v3421 = vmul.f32 %v3281, %v2125
        %v3422 = vmul.f32 %v3281, %v2128
        %v3423 = vmul.f32 %v3281, %v2133
        %v3424 = vmul.f32 %v3281, %v2136
        %v3425 = vmul.f32 %v3281, %v2141
        %v3426 = vmul.f32 %v3281, %v2144
        %v3427 = vmul.f32 %v3285, %v2117
        %v3428 = vmul.f32 %v3285, %v2120
        %v3429 = vmul.f32 %v3285, %v2125
        %v3430 = vmul.f32 %v3285, %v2128
        %v3431 = vmul.f32 %v3285, %v2133
        %v3432 = vmul.f32 %v3285, %v2136
        %v3433 = vmul.f32 %v3285, %v2141
        %v3434 = vmul.f32 %v3285, %v2144
        %v3435 = vmul.f32 %v3289, %v2117
        %v3436 = vmul.f32 %v3289, %v2120
        %v3437 = vmul.f32 %v3289, %v2125
        %v3438 = vmul.f32 %v3289, %v2128
        %v3439 = vmul.f32 %v3289, %v2133
        %v3440 = vmul.f32 %v3289, %v2136
        %v3441 = vmul.f32 %v3289, %v2141
        %v3442 = vmul.f32 %v3289, %v2144
        %v3443 = vmul.f32 %v3293, %v2117
        %v3444 = vmul.f32 %v3293, %v2120
        %v3445 = vmul.f32 %v3293, %v2125
        %v3446 = vmul.f32 %v3293, %v2128
        %v3447 = vmul.f32 %v3293, %v2133
        %v3448 = vmul.f32 %v3293, %v2136
        %v3449 = vmul.f32 %v3293, %v2141
        %v3450 = vmul.f32 %v3293, %v2144
        %v3451 = vmul.f32 %v3297, %v2117
        %v3452 = vmul.f32 %v3297, %v2120
        %v3453 = vmul.f32 %v3297, %v2125
        %v3454 = vmul.f32 %v3297, %v2128
        %v3455 = vmul.f32 %v3297, %v2133
        %v3456 = vmul.f32 %v3297, %v2136
        %v3457 = vmul.f32 %v3297, %v2141
        %v3458 = vmul.f32 %v3297, %v2144
        %v3459 = vmul.f32 %v3301, %v2117
        %v3460 = vmul.f32 %v3301, %v2120
        %v3461 = vmul.f32 %v3301, %v2125
        %v3462 = vmul.f32 %v3301, %v2128
        %v3463 = vmul.f32 %v3301, %v2133
        %v3464 = vmul.f32 %v3301, %v2136
        %v3465 = vmul.f32 %v3301, %v2141
        %v3466 = vmul.f32 %v3301, %v2144
        %v3467 = vmul.f32 %v3305, %v2117
        %v3468 = vmul.f32 %v3305, %v2120
        %v3469 = vmul.f32 %v3305, %v2125
        %v3470 = vmul.f32 %v3305, %v2128
        %v3471 = vmul.f32 %v3305, %v2133
        %v3472 = vmul.f32 %v3305, %v2136
        %v3473 = vmul.f32 %v3305, %v2141
        %v3474 = vmul.f32 %v3305, %v2144
        %v3475 = vmul.f32 %v3309, %v2117
        %v3476 = vmul.f32 %v3309, %v2120
        %v3477 = vmul.f32 %v3309, %v2125
        %v3478 = vmul.f32 %v3309, %v2128
        %v3479 = vmul.f32 %v3309, %v2133
        %v3480 = vmul.f32 %v3309, %v2136
        %v3481 = vmul.f32 %v3309, %v2141
        %v3482 = vmul.f32 %v3309, %v2144
        %v3483 = vmul.f32 %v3313, %v2117
        %v3484 = vmul.f32 %v3313, %v2120
        %v3485 = vmul.f32 %v3313, %v2125
        %v3486 = vmul.f32 %v3313, %v2128
        %v3487 = vmul.f32 %v3313, %v2133
        %v3488 = vmul.f32 %v3313, %v2136
        %v3489 = vmul.f32 %v3313, %v2141
        %v3490 = vmul.f32 %v3313, %v2144
        %v3491 = vmul.f32 %v3317, %v2117
        %v3492 = vmul.f32 %v3317, %v2120
        %v3493 = vmul.f32 %v3317, %v2125
        %v3494 = vmul.f32 %v3317, %v2128
        %v3495 = vmul.f32 %v3317, %v2133
        %v3496 = vmul.f32 %v3317, %v2136
        %v3497 = vmul.f32 %v3317, %v2141
        %v3498 = vmul.f32 %v3317, %v2144
        %v3499 = vmul.f32 %v3321, %v2117
        %v3500 = vmul.f32 %v3321, %v2120
        %v3501 = vmul.f32 %v3321, %v2125
        %v3502 = vmul.f32 %v3321, %v2128
        %v3503 = vmul.f32 %v3321, %v2133
        %v3504 = vmul.f32 %v3321, %v2136
        %v3505 = vmul.f32 %v3321, %v2141
        %v3506 = vmul.f32 %v3321, %v2144
        %v3507 = vmul.f32 %v3325, %v2117
        %v3508 = vmul.f32 %v3325, %v2120
        %v3509 = vmul.f32 %v3325, %v2125
        %v3510 = vmul.f32 %v3325, %v2128
        %v3511 = vmul.f32 %v3325, %v2133
        %v3512 = vmul.f32 %v3325, %v2136
        %v3513 = vmul.f32 %v3325, %v2141
        %v3514 = vmul.f32 %v3325, %v2144
        %v3515 = vmul.f32 %v3329, %v2117
        %v3516 = vmul.f32 %v3329, %v2120
        %v3517 = vmul.f32 %v3329, %v2125
        %v3518 = vmul.f32 %v3329, %v2128
        %v3519 = vmul.f32 %v3329, %v2133
        %v3520 = vmul.f32 %v3329, %v2136
        %v3521 = vmul.f32 %v3329, %v2141
        %v3522 = vmul.f32 %v3329, %v2144
        %v3523 = vmul.f32 %v3333, %v2117
        %v3524 = vmul.f32 %v3333, %v2120
        %v3525 = vmul.f32 %v3333, %v2125
        %v3526 = vmul.f32 %v3333, %v2128
        %v3527 = vmul.f32 %v3333, %v2133
        %v3528 = vmul.f32 %v3333, %v2136
        %v3529 = vmul.f32 %v3333, %v2141
        %v3530 = vmul.f32 %v3333, %v2144
        %v3531 = vmul.f32 %v3337, %v2117
        %v3532 = vmul.f32 %v3337, %v2120
        %v3533 = vmul.f32 %v3337, %v2125
        %v3534 = vmul.f32 %v3337, %v2128
        %v3535 = vmul.f32 %v3337, %v2133
        %v3536 = vmul.f32 %v3337, %v2136
        %v3537 = vmul.f32 %v3337, %v2141
        %v3538 = vmul.f32 %v3337, %v2144
        %v3539 = vmul.f32 %v3341, %v2117
        %v3540 = vmul.f32 %v3341, %v2120
        %v3541 = vmul.f32 %v3341, %v2125
        %v3542 = vmul.f32 %v3341, %v2128
        %v3543 = vmul.f32 %v3341, %v2133
        %v3544 = vmul.f32 %v3341, %v2136
        %v3545 = vmul.f32 %v3341, %v2141
        %v3546 = vmul.f32 %v3341, %v2144
        %v3547 = vmul.f32 %v3345, %v2117
        %v3548 = vmul.f32 %v3345, %v2120
        %v3549 = vmul.f32 %v3345, %v2125
        %v3550 = vmul.f32 %v3345, %v2128
        %v3551 = vmul.f32 %v3345, %v2133
        %v3552 = vmul.f32 %v3345, %v2136
        %v3553 = vmul.f32 %v3345, %v2141
        %v3554 = vmul.f32 %v3345, %v2144
        %v3555 = vmul.f32 %v3349, %v2117
        %v3556 = vmul.f32 %v3349, %v2120
        %v3557 = vmul.f32 %v3349, %v2125
        %v3558 = vmul.f32 %v3349, %v2128
        %v3559 = vmul.f32 %v3349, %v2133
        %v3560 = vmul.f32 %v3349, %v2136
        %v3561 = vmul.f32 %v3349, %v2141
        %v3562 = vmul.f32 %v3349, %v2144
        %v3563 = vmul.f32 %v3353, %v2117
        %v3564 = vmul.f32 %v3353, %v2120
        %v3565 = vmul.f32 %v3353, %v2125
        %v3566 = vmul.f32 %v3353, %v2128
        %v3567 = vmul.f32 %v3353, %v2133
        %v3568 = vmul.f32 %v3353, %v2136
        %v3569 = vmul.f32 %v3353, %v2141
        %v3570 = vmul.f32 %v3353, %v2144
        %v3571 = vmul.f32 %v3357, %v2117
        %v3572 = vmul.f32 %v3357, %v2120
        %v3573 = vmul.f32 %v3357, %v2125
        %v3574 = vmul.f32 %v3357, %v2128
        %v3575 = vmul.f32 %v3357, %v2133
        %v3576 = vmul.f32 %v3357, %v2136
        %v3577 = vmul.f32 %v3357, %v2141
        %v3578 = vmul.f32 %v3357, %v2144
        %v3579 = vmul.f32 %v3361, %v2117
        %v3580 = vmul.f32 %v3361, %v2120
        %v3581 = vmul.f32 %v3361, %v2125
        %v3582 = vmul.f32 %v3361, %v2128
        %v3583 = vmul.f32 %v3361, %v2133
        %v3584 = vmul.f32 %v3361, %v2136
        %v3585 = vmul.f32 %v3361, %v2141
        %v3586 = vmul.f32 %v3361, %v2144
        %v3587 = vmul.f32 %v3365, %v2117
        %v3588 = vmul.f32 %v3365, %v2120
        %v3589 = vmul.f32 %v3365, %v2125
        %v3590 = vmul.f32 %v3365, %v2128
        %v3591 = vmul.f32 %v3365, %v2133
        %v3592 = vmul.f32 %v3365, %v2136
        %v3593 = vmul.f32 %v3365, %v2141
        %v3594 = vmul.f32 %v3365, %v2144
        %v3595 = vmul.f32 %v3369, %v2117
        %v3596 = vmul.f32 %v3369, %v2120
        %v3597 = vmul.f32 %v3369, %v2125
        %v3598 = vmul.f32 %v3369, %v2128
        %v3599 = vmul.f32 %v3369, %v2133
        %v3600 = vmul.f32 %v3369, %v2136
        %v3601 = vmul.f32 %v3369, %v2141
        %v3602 = vmul.f32 %v3369, %v2144
        %v3603 = vmul.f32 %v3373, %v2117
        %v3604 = vmul.f32 %v3373, %v2120
        %v3605 = vmul.f32 %v3373, %v2125
        %v3606 = vmul.f32 %v3373, %v2128
        %v3607 = vmul.f32 %v3373, %v2133
        %v3608 = vmul.f32 %v3373, %v2136
        %v3609 = vmul.f32 %v3373, %v2141
        %v3610 = vmul.f32 %v3373, %v2144
        %v3611 = vmul.f32 %v3377, %v2117
        %v3612 = vmul.f32 %v3377, %v2120
        %v3613 = vmul.f32 %v3377, %v2125
        %v3614 = vmul.f32 %v3377, %v2128
        %v3615 = vmul.f32 %v3377, %v2133
        %v3616 = vmul.f32 %v3377, %v2136
        %v3617 = vmul.f32 %v3377, %v2141
        %v3618 = vmul.f32 %v3377, %v2144
        %v3619 = vmul.f32 %v3381, %v2117
        %v3620 = vmul.f32 %v3381, %v2120
        %v3621 = vmul.f32 %v3381, %v2125
        %v3622 = vmul.f32 %v3381, %v2128
        %v3623 = vmul.f32 %v3381, %v2133
        %v3624 = vmul.f32 %v3381, %v2136
        %v3625 = vmul.f32 %v3381, %v2141
        %v3626 = vmul.f32 %v3381, %v2144
        %v3627 = vmul.f32 %v3385, %v2117
        %v3628 = vmul.f32 %v3385, %v2120
        %v3629 = vmul.f32 %v3385, %v2125
        %v3630 = vmul.f32 %v3385, %v2128
        %v3631 = vmul.f32 %v3385, %v2133
        %v3632 = vmul.f32 %v3385, %v2136
        %v3633 = vmul.f32 %v3385, %v2141
        %v3634 = vmul.f32 %v3385, %v2144
        %v3635 = vmul.f32 %v3389, %v2117
        %v3636 = vmul.f32 %v3389, %v2120
        %v3637 = vmul.f32 %v3389, %v2125
        %v3638 = vmul.f32 %v3389, %v2128
        %v3639 = vmul.f32 %v3389, %v2133
        %v3640 = vmul.f32 %v3389, %v2136
        %v3641 = vmul.f32 %v3389, %v2141
        %v3642 = vmul.f32 %v3389, %v2144
        %v3643 = vmul.f32 %v3393, %v2117
        %v3644 = vmul.f32 %v3393, %v2120
        %v3645 = vmul.f32 %v3393, %v2125
        %v3646 = vmul.f32 %v3393, %v2128
        %v3647 = vmul.f32 %v3393, %v2133
        %v3648 = vmul.f32 %v3393, %v2136
        %v3649 = vmul.f32 %v3393, %v2141
        %v3650 = vmul.f32 %v3393, %v2144
        %v3651 = vadd.f32 %v2819, %v3395
        %v3652 = vadd.f32 %v2820, %v3396
        %v3653 = vadd.f32 %v2821, %v3397
        %v3654 = vadd.f32 %v2822, %v3398
        %v3655 = vadd.f32 %v2823, %v3399
        %v3656 = vadd.f32 %v2824, %v3400
        %v3657 = vadd.f32 %v2825, %v3401
        %v3658 = vadd.f32 %v2826, %v3402
        %v3659 = vadd.f32 %v2827, %v3403
        %v3660 = vadd.f32 %v2828, %v3404
        %v3661 = vadd.f32 %v2829, %v3405
        %v3662 = vadd.f32 %v2830, %v3406
        %v3663 = vadd.f32 %v2831, %v3407
        %v3664 = vadd.f32 %v2832, %v3408
        %v3665 = vadd.f32 %v2833, %v3409
        %v3666 = vadd.f32 %v2834, %v3410
        %v3667 = vadd.f32 %v2835, %v3411
        %v3668 = vadd.f32 %v2836, %v3412
        %v3669 = vadd.f32 %v2837, %v3413
        %v3670 = vadd.f32 %v2838, %v3414
        %v3671 = vadd.f32 %v2839, %v3415
        %v3672 = vadd.f32 %v2840, %v3416
        %v3673 = vadd.f32 %v2841, %v3417
        %v3674 = vadd.f32 %v2842, %v3418
        %v3675 = vadd.f32 %v2843, %v3419
        %v3676 = vadd.f32 %v2844, %v3420
        %v3677 = vadd.f32 %v2845, %v3421
        %v3678 = vadd.f32 %v2846, %v3422
        %v3679 = vadd.f32 %v2847, %v3423
        %v3680 = vadd.f32 %v2848, %v3424
        %v3681 = vadd.f32 %v2849, %v3425
        %v3682 = vadd.f32 %v2850, %v3426
        %v3683 = vadd.f32 %v2851, %v3427
        %v3684 = vadd.f32 %v2852, %v3428
        %v3685 = vadd.f32 %v2853, %v3429
        %v3686 = vadd.f32 %v2854, %v3430
        %v3687 = vadd.f32 %v2855, %v3431
        %v3688 = vadd.f32 %v2856, %v3432
        %v3689 = vadd.f32 %v2857, %v3433
        %v3690 = vadd.f32 %v2858, %v3434
        %v3691 = vadd.f32 %v2859, %v3435
        %v3692 = vadd.f32 %v2860, %v3436
        %v3693 = vadd.f32 %v2861, %v3437
        %v3694 = vadd.f32 %v2862, %v3438
        %v3695 = vadd.f32 %v2863, %v3439
        %v3696 = vadd.f32 %v2864, %v3440
        %v3697 = vadd.f32 %v2865, %v3441
        %v3698 = vadd.f32 %v2866, %v3442
        %v3699 = vadd.f32 %v2867, %v3443
        %v3700 = vadd.f32 %v2868, %v3444
        %v3701 = vadd.f32 %v2869, %v3445
        %v3702 = vadd.f32 %v2870, %v3446
        %v3703 = vadd.f32 %v2871, %v3447
        %v3704 = vadd.f32 %v2872, %v3448
        %v3705 = vadd.f32 %v2873, %v3449
        %v3706 = vadd.f32 %v2874, %v3450
        %v3707 = vadd.f32 %v2875, %v3451
        %v3708 = vadd.f32 %v2876, %v3452
        %v3709 = vadd.f32 %v2877, %v3453
        %v3710 = vadd.f32 %v2878, %v3454
        %v3711 = vadd.f32 %v2879, %v3455
        %v3712 = vadd.f32 %v2880, %v3456
        %v3713 = vadd.f32 %v2881, %v3457
        %v3714 = vadd.f32 %v2882, %v3458
        %v3715 = vadd.f32 %v2883, %v3459
        %v3716 = vadd.f32 %v2884, %v3460
        %v3717 = vadd.f32 %v2885, %v3461
        %v3718 = vadd.f32 %v2886, %v3462
        %v3719 = vadd.f32 %v2887, %v3463
        %v3720 = vadd.f32 %v2888, %v3464
        %v3721 = vadd.f32 %v2889, %v3465
        %v3722 = vadd.f32 %v2890, %v3466
        %v3723 = vadd.f32 %v2891, %v3467
        %v3724 = vadd.f32 %v2892, %v3468
        %v3725 = vadd.f32 %v2893, %v3469
        %v3726 = vadd.f32 %v2894, %v3470
        %v3727 = vadd.f32 %v2895, %v3471
        %v3728 = vadd.f32 %v2896, %v3472
        %v3729 = vadd.f32 %v2897, %v3473
        %v3730 = vadd.f32 %v2898, %v3474
        %v3731 = vadd.f32 %v2899, %v3475
        %v3732 = vadd.f32 %v2900, %v3476
        %v3733 = vadd.f32 %v2901, %v3477
        %v3734 = vadd.f32 %v2902, %v3478
        %v3735 = vadd.f32 %v2903, %v3479
        %v3736 = vadd.f32 %v2904, %v3480
        %v3737 = vadd.f32 %v2905, %v3481
        %v3738 = vadd.f32 %v2906, %v3482
        %v3739 = vadd.f32 %v2907, %v3483
        %v3740 = vadd.f32 %v2908, %v3484
        %v3741 = vadd.f32 %v2909, %v3485
        %v3742 = vadd.f32 %v2910, %v3486
        %v3743 = vadd.f32 %v2911, %v3487
        %v3744 = vadd.f32 %v2912, %v3488
        %v3745 = vadd.f32 %v2913, %v3489
        %v3746 = vadd.f32 %v2914, %v3490
        %v3747 = vadd.f32 %v2915, %v3491
        %v3748 = vadd.f32 %v2916, %v3492
        %v3749 = vadd.f32 %v2917, %v3493
        %v3750 = vadd.f32 %v2918, %v3494
        %v3751 = vadd.f32 %v2919, %v3495
        %v3752 = vadd.f32 %v2920, %v3496
        %v3753 = vadd.f32 %v2921, %v3497
        %v3754 = vadd.f32 %v2922, %v3498
        %v3755 = vadd.f32 %v2923, %v3499
        %v3756 = vadd.f32 %v2924, %v3500
        %v3757 = vadd.f32 %v2925, %v3501
        %v3758 = vadd.f32 %v2926, %v3502
        %v3759 = vadd.f32 %v2927, %v3503
        %v3760 = vadd.f32 %v2928, %v3504
        %v3761 = vadd.f32 %v2929, %v3505
        %v3762 = vadd.f32 %v2930, %v3506
        %v3763 = vadd.f32 %v2931, %v3507
        %v3764 = vadd.f32 %v2932, %v3508
        %v3765 = vadd.f32 %v2933, %v3509
        %v3766 = vadd.f32 %v2934, %v3510
        %v3767 = vadd.f32 %v2935, %v3511
        %v3768 = vadd.f32 %v2936, %v3512
        %v3769 = vadd.f32 %v2937, %v3513
        %v3770 = vadd.f32 %v2938, %v3514
        %v3771 = vadd.f32 %v2939, %v3515
        %v3772 = vadd.f32 %v2940, %v3516
        %v3773 = vadd.f32 %v2941, %v3517
        %v3774 = vadd.f32 %v2942, %v3518
        %v3775 = vadd.f32 %v2943, %v3519
        %v3776 = vadd.f32 %v2944, %v3520
        %v3777 = vadd.f32 %v2945, %v3521
        %v3778 = vadd.f32 %v2946, %v3522
        %v3779 = vadd.f32 %v2947, %v3523
        %v3780 = vadd.f32 %v2948, %v3524
        %v3781 = vadd.f32 %v2949, %v3525
        %v3782 = vadd.f32 %v2950, %v3526
        %v3783 = vadd.f32 %v2951, %v3527
        %v3784 = vadd.f32 %v2952, %v3528
        %v3785 = vadd.f32 %v2953, %v3529
        %v3786 = vadd.f32 %v2954, %v3530
        %v3787 = vadd.f32 %v2955, %v3531
        %v3788 = vadd.f32 %v2956, %v3532
        %v3789 = vadd.f32 %v2957, %v3533
        %v3790 = vadd.f32 %v2958, %v3534
        %v3791 = vadd.f32 %v2959, %v3535
        %v3792 = vadd.f32 %v2960, %v3536
        %v3793 = vadd.f32 %v2961, %v3537
        %v3794 = vadd.f32 %v2962, %v3538
        %v3795 = vadd.f32 %v2963, %v3539
        %v3796 = vadd.f32 %v2964, %v3540
        %v3797 = vadd.f32 %v2965, %v3541
        %v3798 = vadd.f32 %v2966, %v3542
        %v3799 = vadd.f32 %v2967, %v3543
        %v3800 = vadd.f32 %v2968, %v3544
        %v3801 = vadd.f32 %v2969, %v3545
        %v3802 = vadd.f32 %v2970, %v3546
        %v3803 = vadd.f32 %v2971, %v3547
        %v3804 = vadd.f32 %v2972, %v3548
        %v3805 = vadd.f32 %v2973, %v3549
        %v3806 = vadd.f32 %v2974, %v3550
        %v3807 = vadd.f32 %v2975, %v3551
        %v3808 = vadd.f32 %v2976, %v3552
        %v3809 = vadd.f32 %v2977, %v3553
        %v3810 = vadd.f32 %v2978, %v3554
        %v3811 = vadd.f32 %v2979, %v3555
        %v3812 = vadd.f32 %v2980, %v3556
        %v3813 = vadd.f32 %v2981, %v3557
        %v3814 = vadd.f32 %v2982, %v3558
        %v3815 = vadd.f32 %v2983, %v3559
        %v3816 = vadd.f32 %v2984, %v3560
        %v3817 = vadd.f32 %v2985, %v3561
        %v3818 = vadd.f32 %v2986, %v3562
        %v3819 = vadd.f32 %v2987, %v3563
        %v3820 = vadd.f32 %v2988, %v3564
        %v3821 = vadd.f32 %v2989, %v3565
        %v3822 = vadd.f32 %v2990, %v3566
        %v3823 = vadd.f32 %v2991, %v3567
        %v3824 = vadd.f32 %v2992, %v3568
        %v3825 = vadd.f32 %v2993, %v3569
        %v3826 = vadd.f32 %v2994, %v3570
        %v3827 = vadd.f32 %v2995, %v3571
        %v3828 = vadd.f32 %v2996, %v3572
        %v3829 = vadd.f32 %v2997, %v3573
        %v3830 = vadd.f32 %v2998, %v3574
        %v3831 = vadd.f32 %v2999, %v3575
        %v3832 = vadd.f32 %v3000, %v3576
        %v3833 = vadd.f32 %v3001, %v3577
        %v3834 = vadd.f32 %v3002, %v3578
        %v3835 = vadd.f32 %v3003, %v3579
        %v3836 = vadd.f32 %v3004, %v3580
        %v3837 = vadd.f32 %v3005, %v3581
        %v3838 = vadd.f32 %v3006, %v3582
        %v3839 = vadd.f32 %v3007, %v3583
        %v3840 = vadd.f32 %v3008, %v3584
        %v3841 = vadd.f32 %v3009, %v3585
        %v3842 = vadd.f32 %v3010, %v3586
        %v3843 = vadd.f32 %v3011, %v3587
        %v3844 = vadd.f32 %v3012, %v3588
        %v3845 = vadd.f32 %v3013, %v3589
        %v3846 = vadd.f32 %v3014, %v3590
        %v3847 = vadd.f32 %v3015, %v3591
        %v3848 = vadd.f32 %v3016, %v3592
        %v3849 = vadd.f32 %v3017, %v3593
        %v3850 = vadd.f32 %v3018, %v3594
        %v3851 = vadd.f32 %v3019, %v3595
        %v3852 = vadd.f32 %v3020, %v3596
        %v3853 = vadd.f32 %v3021, %v3597
        %v3854 = vadd.f32 %v3022, %v3598
        %v3855 = vadd.f32 %v3023, %v3599
        %v3856 = vadd.f32 %v3024, %v3600
        %v3857 = vadd.f32 %v3025, %v3601
        %v3858 = vadd.f32 %v3026, %v3602
        %v3859 = vadd.f32 %v3027, %v3603
        %v3860 = vadd.f32 %v3028, %v3604
        %v3861 = vadd.f32 %v3029, %v3605
        %v3862 = vadd.f32 %v3030, %v3606
        %v3863 = vadd.f32 %v3031, %v3607
        %v3864 = vadd.f32 %v3032, %v3608
        %v3865 = vadd.f32 %v3033, %v3609
        %v3866 = vadd.f32 %v3034, %v3610
        %v3867 = vadd.f32 %v3035, %v3611
        %v3868 = vadd.f32 %v3036, %v3612
        %v3869 = vadd.f32 %v3037, %v3613
        %v3870 = vadd.f32 %v3038, %v3614
        %v3871 = vadd.f32 %v3039, %v3615
        %v3872 = vadd.f32 %v3040, %v3616
        %v3873 = vadd.f32 %v3041, %v3617
        %v3874 = vadd.f32 %v3042, %v3618
        %v3875 = vadd.f32 %v3043, %v3619
        %v3876 = vadd.f32 %v3044, %v3620
        %v3877 = vadd.f32 %v3045, %v3621
        %v3878 = vadd.f32 %v3046, %v3622
        %v3879 = vadd.f32 %v3047, %v3623
        %v3880 = vadd.f32 %v3048, %v3624
        %v3881 = vadd.f32 %v3049, %v3625
        %v3882 = vadd.f32 %v3050, %v3626
        %v3883 = vadd.f32 %v3051, %v3627
        %v3884 = vadd.f32 %v3052, %v3628
        %v3885 = vadd.f32 %v3053, %v3629
        %v3886 = vadd.f32 %v3054, %v3630
        %v3887 = vadd.f32 %v3055, %v3631
        %v3888 = vadd.f32 %v3056, %v3632
        %v3889 = vadd.f32 %v3057, %v3633
        %v3890 = vadd.f32 %v3058, %v3634
        %v3891 = vadd.f32 %v3059, %v3635
        %v3892 = vadd.f32 %v3060, %v3636
        %v3893 = vadd.f32 %v3061, %v3637
        %v3894 = vadd.f32 %v3062, %v3638
        %v3895 = vadd.f32 %v3063, %v3639
        %v3896 = vadd.f32 %v3064, %v3640
        %v3897 = vadd.f32 %v3065, %v3641
        %v3898 = vadd.f32 %v3066, %v3642
        %v3899 = vadd.f32 %v3067, %v3643
        %v3900 = vadd.f32 %v3068, %v3644
        %v3901 = vadd.f32 %v3069, %v3645
        %v3902 = vadd.f32 %v3070, %v3646
        %v3903 = vadd.f32 %v3071, %v3647
        %v3904 = vadd.f32 %v3072, %v3648
        %v3905 = vadd.f32 %v3073, %v3649
        %v3906 = vadd.f32 %v3074, %v3650
        %s3907 = scalar_lea.vmem [#allocation10], 32
        %v3908 = vld [vmem:[%s3907] sm:$0x1]
        %v3909 = vld [vmem:[%s3907 + $0x1] sm:$0x1]
        %v3910 = vld [vmem:[%s3907 + $0x2] sm:$0x1]
        %v3911 = vld [vmem:[%s3907 + $0x3] sm:$0x1]
        %v3912 = vld [vmem:[%s3907 + $0x4] sm:$0x1]
        %v3913 = vld [vmem:[%s3907 + $0x5] sm:$0x1]
        %v3914 = vld [vmem:[%s3907 + $0x6] sm:$0x1]
        %v3915 = vld [vmem:[%s3907 + $0x7] sm:$0x1]
        %v3916 = vld [vmem:[%s3907 + $0x8] sm:$0x1]
        %v3917 = vld [vmem:[%s3907 + $0x9] sm:$0x1]
        %v3918 = vld [vmem:[%s3907 + $0xa] sm:$0x1]
        %v3919 = vld [vmem:[%s3907 + $0xb] sm:$0x1]
        %v3920 = vld [vmem:[%s3907 + $0xc] sm:$0x1]
        %v3921 = vld [vmem:[%s3907 + $0xd] sm:$0x1]
        %v3922 = vld [vmem:[%s3907 + $0xe] sm:$0x1]
        %v3923 = vld [vmem:[%s3907 + $0xf] sm:$0x1]
        %v3924 = vld [vmem:[%s3907 + $0x10] sm:$0x1]
        %v3925 = vld [vmem:[%s3907 + $0x11] sm:$0x1]
        %v3926 = vld [vmem:[%s3907 + $0x12] sm:$0x1]
        %v3927 = vld [vmem:[%s3907 + $0x13] sm:$0x1]
        %v3928 = vld [vmem:[%s3907 + $0x14] sm:$0x1]
        %v3929 = vld [vmem:[%s3907 + $0x15] sm:$0x1]
        %v3930 = vld [vmem:[%s3907 + $0x16] sm:$0x1]
        %v3931 = vld [vmem:[%s3907 + $0x17] sm:$0x1]
        %v3932 = vld [vmem:[%s3907 + $0x18] sm:$0x1]
        %v3933 = vld [vmem:[%s3907 + $0x19] sm:$0x1]
        %v3934 = vld [vmem:[%s3907 + $0x1a] sm:$0x1]
        %v3935 = vld [vmem:[%s3907 + $0x1b] sm:$0x1]
        %v3936 = vld [vmem:[%s3907 + $0x1c] sm:$0x1]
        %v3937 = vld [vmem:[%s3907 + $0x1d] sm:$0x1]
        %v3938 = vld [vmem:[%s3907 + $0x1e] sm:$0x1]
        %v3939 = vld [vmem:[%s3907 + $0x1f] sm:$0x1]
        %v3972 = vlaneseq
        %v3973 = vshrl.u32 %v3972, 7
        %v3974 = vsub.s32 0, %v3973
        %v3975 = vrot.slane %v3908, %v3974
        %v3976 = vlaneseq
        %v3977 = vshrl.u32 %v3976, 7
        %v3978 = vsub.s32 0, %v3977
        %v3979 = vrot.slane %v3909, %v3978
        %v3980 = vlaneseq
        %v3981 = vshrl.u32 %v3980, 7
        %v3982 = vsub.s32 0, %v3981
        %v3983 = vrot.slane %v3910, %v3982
        %v3984 = vlaneseq
        %v3985 = vshrl.u32 %v3984, 7
        %v3986 = vsub.s32 0, %v3985
        %v3987 = vrot.slane %v3911, %v3986
        %v3988 = vlaneseq
        %v3989 = vshrl.u32 %v3988, 7
        %v3990 = vsub.s32 0, %v3989
        %v3991 = vrot.slane %v3912, %v3990
        %v3992 = vlaneseq
        %v3993 = vshrl.u32 %v3992, 7
        %v3994 = vsub.s32 0, %v3993
        %v3995 = vrot.slane %v3913, %v3994
        %v3996 = vlaneseq
        %v3997 = vshrl.u32 %v3996, 7
        %v3998 = vsub.s32 0, %v3997
        %v3999 = vrot.slane %v3914, %v3998
        %v4000 = vlaneseq
        %v4001 = vshrl.u32 %v4000, 7
        %v4002 = vsub.s32 0, %v4001
        %v4003 = vrot.slane %v3915, %v4002
        %v4004 = vlaneseq
        %v4005 = vshrl.u32 %v4004, 7
        %v4006 = vsub.s32 0, %v4005
        %v4007 = vrot.slane %v3916, %v4006
        %v4008 = vlaneseq
        %v4009 = vshrl.u32 %v4008, 7
        %v4010 = vsub.s32 0, %v4009
        %v4011 = vrot.slane %v3917, %v4010
        %v4012 = vlaneseq
        %v4013 = vshrl.u32 %v4012, 7
        %v4014 = vsub.s32 0, %v4013
        %v4015 = vrot.slane %v3918, %v4014
        %v4016 = vlaneseq
        %v4017 = vshrl.u32 %v4016, 7
        %v4018 = vsub.s32 0, %v4017
        %v4019 = vrot.slane %v3919, %v4018
        %v4020 = vlaneseq
        %v4021 = vshrl.u32 %v4020, 7
        %v4022 = vsub.s32 0, %v4021
        %v4023 = vrot.slane %v3920, %v4022
        %v4024 = vlaneseq
        %v4025 = vshrl.u32 %v4024, 7
        %v4026 = vsub.s32 0, %v4025
        %v4027 = vrot.slane %v3921, %v4026
        %v4028 = vlaneseq
        %v4029 = vshrl.u32 %v4028, 7
        %v4030 = vsub.s32 0, %v4029
        %v4031 = vrot.slane %v3922, %v4030
        %v4032 = vlaneseq
        %v4033 = vshrl.u32 %v4032, 7
        %v4034 = vsub.s32 0, %v4033
        %v4035 = vrot.slane %v3923, %v4034
        %v4036 = vlaneseq
        %v4037 = vshrl.u32 %v4036, 7
        %v4038 = vsub.s32 0, %v4037
        %v4039 = vrot.slane %v3924, %v4038
        %v4040 = vlaneseq
        %v4041 = vshrl.u32 %v4040, 7
        %v4042 = vsub.s32 0, %v4041
        %v4043 = vrot.slane %v3925, %v4042
        %v4044 = vlaneseq
        %v4045 = vshrl.u32 %v4044, 7
        %v4046 = vsub.s32 0, %v4045
        %v4047 = vrot.slane %v3926, %v4046
        %v4048 = vlaneseq
        %v4049 = vshrl.u32 %v4048, 7
        %v4050 = vsub.s32 0, %v4049
        %v4051 = vrot.slane %v3927, %v4050
        %v4052 = vlaneseq
        %v4053 = vshrl.u32 %v4052, 7
        %v4054 = vsub.s32 0, %v4053
        %v4055 = vrot.slane %v3928, %v4054
        %v4056 = vlaneseq
        %v4057 = vshrl.u32 %v4056, 7
        %v4058 = vsub.s32 0, %v4057
        %v4059 = vrot.slane %v3929, %v4058
        %v4060 = vlaneseq
        %v4061 = vshrl.u32 %v4060, 7
        %v4062 = vsub.s32 0, %v4061
        %v4063 = vrot.slane %v3930, %v4062
        %v4064 = vlaneseq
        %v4065 = vshrl.u32 %v4064, 7
        %v4066 = vsub.s32 0, %v4065
        %v4067 = vrot.slane %v3931, %v4066
        %v4068 = vlaneseq
        %v4069 = vshrl.u32 %v4068, 7
        %v4070 = vsub.s32 0, %v4069
        %v4071 = vrot.slane %v3932, %v4070
        %v4072 = vlaneseq
        %v4073 = vshrl.u32 %v4072, 7
        %v4074 = vsub.s32 0, %v4073
        %v4075 = vrot.slane %v3933, %v4074
        %v4076 = vlaneseq
        %v4077 = vshrl.u32 %v4076, 7
        %v4078 = vsub.s32 0, %v4077
        %v4079 = vrot.slane %v3934, %v4078
        %v4080 = vlaneseq
        %v4081 = vshrl.u32 %v4080, 7
        %v4082 = vsub.s32 0, %v4081
        %v4083 = vrot.slane %v3935, %v4082
        %v4084 = vlaneseq
        %v4085 = vshrl.u32 %v4084, 7
        %v4086 = vsub.s32 0, %v4085
        %v4087 = vrot.slane %v3936, %v4086
        %v4088 = vlaneseq
        %v4089 = vshrl.u32 %v4088, 7
        %v4090 = vsub.s32 0, %v4089
        %v4091 = vrot.slane %v3937, %v4090
        %v4092 = vlaneseq
        %v4093 = vshrl.u32 %v4092, 7
        %v4094 = vsub.s32 0, %v4093
        %v4095 = vrot.slane %v3938, %v4094
        %v4096 = vlaneseq
        %v4097 = vshrl.u32 %v4096, 7
        %v4098 = vsub.s32 0, %v4097
        %v4099 = vrot.slane %v3939, %v4098
        %4100 = vset.pattern.permute.xlu0 0
        %4101 = vperm.xlu0 %4100, %v3975
        %v4102 = vpop.permute.xlu0 %4101
        %4104 = vset.pattern.permute.xlu0 0
        %4105 = vperm.xlu0 %4104, %v3979
        %v4106 = vpop.permute.xlu0 %4105
        %4108 = vset.pattern.permute.xlu0 0
        %4109 = vperm.xlu0 %4108, %v3983
        %v4110 = vpop.permute.xlu0 %4109
        %4112 = vset.pattern.permute.xlu0 0
        %4113 = vperm.xlu0 %4112, %v3987
        %v4114 = vpop.permute.xlu0 %4113
        %4116 = vset.pattern.permute.xlu0 0
        %4117 = vperm.xlu0 %4116, %v3991
        %v4118 = vpop.permute.xlu0 %4117
        %4120 = vset.pattern.permute.xlu0 0
        %4121 = vperm.xlu0 %4120, %v3995
        %v4122 = vpop.permute.xlu0 %4121
        %4124 = vset.pattern.permute.xlu0 0
        %4125 = vperm.xlu0 %4124, %v3999
        %v4126 = vpop.permute.xlu0 %4125
        %4128 = vset.pattern.permute.xlu0 0
        %4129 = vperm.xlu0 %4128, %v4003
        %v4130 = vpop.permute.xlu0 %4129
        %4132 = vset.pattern.permute.xlu0 0
        %4133 = vperm.xlu0 %4132, %v4007
        %v4134 = vpop.permute.xlu0 %4133
        %4136 = vset.pattern.permute.xlu0 0
        %4137 = vperm.xlu0 %4136, %v4011
        %v4138 = vpop.permute.xlu0 %4137
        %4140 = vset.pattern.permute.xlu0 0
        %4141 = vperm.xlu0 %4140, %v4015
        %v4142 = vpop.permute.xlu0 %4141
        %4144 = vset.pattern.permute.xlu0 0
        %4145 = vperm.xlu0 %4144, %v4019
        %v4146 = vpop.permute.xlu0 %4145
        %4148 = vset.pattern.permute.xlu0 0
        %4149 = vperm.xlu0 %4148, %v4023
        %v4150 = vpop.permute.xlu0 %4149
        %4152 = vset.pattern.permute.xlu0 0
        %4153 = vperm.xlu0 %4152, %v4027
        %v4154 = vpop.permute.xlu0 %4153
        %4156 = vset.pattern.permute.xlu0 0
        %4157 = vperm.xlu0 %4156, %v4031
        %v4158 = vpop.permute.xlu0 %4157
        %4160 = vset.pattern.permute.xlu0 0
        %4161 = vperm.xlu0 %4160, %v4035
        %v4162 = vpop.permute.xlu0 %4161
        %4164 = vset.pattern.permute.xlu0 0
        %4165 = vperm.xlu0 %4164, %v4039
        %v4166 = vpop.permute.xlu0 %4165
        %4168 = vset.pattern.permute.xlu0 0
        %4169 = vperm.xlu0 %4168, %v4043
        %v4170 = vpop.permute.xlu0 %4169
        %4172 = vset.pattern.permute.xlu0 0
        %4173 = vperm.xlu0 %4172, %v4047
        %v4174 = vpop.permute.xlu0 %4173
        %4176 = vset.pattern.permute.xlu0 0
        %4177 = vperm.xlu0 %4176, %v4051
        %v4178 = vpop.permute.xlu0 %4177
        %4180 = vset.pattern.permute.xlu0 0
        %4181 = vperm.xlu0 %4180, %v4055
        %v4182 = vpop.permute.xlu0 %4181
        %4184 = vset.pattern.permute.xlu0 0
        %4185 = vperm.xlu0 %4184, %v4059
        %v4186 = vpop.permute.xlu0 %4185
        %4188 = vset.pattern.permute.xlu0 0
        %4189 = vperm.xlu0 %4188, %v4063
        %v4190 = vpop.permute.xlu0 %4189
        %4192 = vset.pattern.permute.xlu0 0
        %4193 = vperm.xlu0 %4192, %v4067
        %v4194 = vpop.permute.xlu0 %4193
        %4196 = vset.pattern.permute.xlu0 0
        %4197 = vperm.xlu0 %4196, %v4071
        %v4198 = vpop.permute.xlu0 %4197
        %4200 = vset.pattern.permute.xlu0 0
        %4201 = vperm.xlu0 %4200, %v4075
        %v4202 = vpop.permute.xlu0 %4201
        %4204 = vset.pattern.permute.xlu0 0
        %4205 = vperm.xlu0 %4204, %v4079
        %v4206 = vpop.permute.xlu0 %4205
        %4208 = vset.pattern.permute.xlu0 0
        %4209 = vperm.xlu0 %4208, %v4083
        %v4210 = vpop.permute.xlu0 %4209
        %4212 = vset.pattern.permute.xlu0 0
        %4213 = vperm.xlu0 %4212, %v4087
        %v4214 = vpop.permute.xlu0 %4213
        %4216 = vset.pattern.permute.xlu0 0
        %4217 = vperm.xlu0 %4216, %v4091
        %v4218 = vpop.permute.xlu0 %4217
        %4220 = vset.pattern.permute.xlu0 0
        %4221 = vperm.xlu0 %4220, %v4095
        %v4222 = vpop.permute.xlu0 %4221
        %4224 = vset.pattern.permute.xlu0 0
        %4225 = vperm.xlu0 %4224, %v4099
        %v4226 = vpop.permute.xlu0 %4225
        %v4228 = vmul.f32 %v4102, %v2149
        %v4229 = vmul.f32 %v4102, %v2152
        %v4230 = vmul.f32 %v4102, %v2157
        %v4231 = vmul.f32 %v4102, %v2160
        %v4232 = vmul.f32 %v4102, %v2165
        %v4233 = vmul.f32 %v4102, %v2168
        %v4234 = vmul.f32 %v4102, %v2173
        %v4235 = vmul.f32 %v4102, %v2176
        %v4236 = vmul.f32 %v4106, %v2149
        %v4237 = vmul.f32 %v4106, %v2152
        %v4238 = vmul.f32 %v4106, %v2157
        %v4239 = vmul.f32 %v4106, %v2160
        %v4240 = vmul.f32 %v4106, %v2165
        %v4241 = vmul.f32 %v4106, %v2168
        %v4242 = vmul.f32 %v4106, %v2173
        %v4243 = vmul.f32 %v4106, %v2176
        %v4244 = vmul.f32 %v4110, %v2149
        %v4245 = vmul.f32 %v4110, %v2152
        %v4246 = vmul.f32 %v4110, %v2157
        %v4247 = vmul.f32 %v4110, %v2160
        %v4248 = vmul.f32 %v4110, %v2165
        %v4249 = vmul.f32 %v4110, %v2168
        %v4250 = vmul.f32 %v4110, %v2173
        %v4251 = vmul.f32 %v4110, %v2176
        %v4252 = vmul.f32 %v4114, %v2149
        %v4253 = vmul.f32 %v4114, %v2152
        %v4254 = vmul.f32 %v4114, %v2157
        %v4255 = vmul.f32 %v4114, %v2160
        %v4256 = vmul.f32 %v4114, %v2165
        %v4257 = vmul.f32 %v4114, %v2168
        %v4258 = vmul.f32 %v4114, %v2173
        %v4259 = vmul.f32 %v4114, %v2176
        %v4260 = vmul.f32 %v4118, %v2149
        %v4261 = vmul.f32 %v4118, %v2152
        %v4262 = vmul.f32 %v4118, %v2157
        %v4263 = vmul.f32 %v4118, %v2160
        %v4264 = vmul.f32 %v4118, %v2165
        %v4265 = vmul.f32 %v4118, %v2168
        %v4266 = vmul.f32 %v4118, %v2173
        %v4267 = vmul.f32 %v4118, %v2176
        %v4268 = vmul.f32 %v4122, %v2149
        %v4269 = vmul.f32 %v4122, %v2152
        %v4270 = vmul.f32 %v4122, %v2157
        %v4271 = vmul.f32 %v4122, %v2160
        %v4272 = vmul.f32 %v4122, %v2165
        %v4273 = vmul.f32 %v4122, %v2168
        %v4274 = vmul.f32 %v4122, %v2173
        %v4275 = vmul.f32 %v4122, %v2176
        %v4276 = vmul.f32 %v4126, %v2149
        %v4277 = vmul.f32 %v4126, %v2152
        %v4278 = vmul.f32 %v4126, %v2157
        %v4279 = vmul.f32 %v4126, %v2160
        %v4280 = vmul.f32 %v4126, %v2165
        %v4281 = vmul.f32 %v4126, %v2168
        %v4282 = vmul.f32 %v4126, %v2173
        %v4283 = vmul.f32 %v4126, %v2176
        %v4284 = vmul.f32 %v4130, %v2149
        %v4285 = vmul.f32 %v4130, %v2152
        %v4286 = vmul.f32 %v4130, %v2157
        %v4287 = vmul.f32 %v4130, %v2160
        %v4288 = vmul.f32 %v4130, %v2165
        %v4289 = vmul.f32 %v4130, %v2168
        %v4290 = vmul.f32 %v4130, %v2173
        %v4291 = vmul.f32 %v4130, %v2176
        %v4292 = vmul.f32 %v4134, %v2149
        %v4293 = vmul.f32 %v4134, %v2152
        %v4294 = vmul.f32 %v4134, %v2157
        %v4295 = vmul.f32 %v4134, %v2160
        %v4296 = vmul.f32 %v4134, %v2165
        %v4297 = vmul.f32 %v4134, %v2168
        %v4298 = vmul.f32 %v4134, %v2173
        %v4299 = vmul.f32 %v4134, %v2176
        %v4300 = vmul.f32 %v4138, %v2149
        %v4301 = vmul.f32 %v4138, %v2152
        %v4302 = vmul.f32 %v4138, %v2157
        %v4303 = vmul.f32 %v4138, %v2160
        %v4304 = vmul.f32 %v4138, %v2165
        %v4305 = vmul.f32 %v4138, %v2168
        %v4306 = vmul.f32 %v4138, %v2173
        %v4307 = vmul.f32 %v4138, %v2176
        %v4308 = vmul.f32 %v4142, %v2149
        %v4309 = vmul.f32 %v4142, %v2152
        %v4310 = vmul.f32 %v4142, %v2157
        %v4311 = vmul.f32 %v4142, %v2160
        %v4312 = vmul.f32 %v4142, %v2165
        %v4313 = vmul.f32 %v4142, %v2168
        %v4314 = vmul.f32 %v4142, %v2173
        %v4315 = vmul.f32 %v4142, %v2176
        %v4316 = vmul.f32 %v4146, %v2149
        %v4317 = vmul.f32 %v4146, %v2152
        %v4318 = vmul.f32 %v4146, %v2157
        %v4319 = vmul.f32 %v4146, %v2160
        %v4320 = vmul.f32 %v4146, %v2165
        %v4321 = vmul.f32 %v4146, %v2168
        %v4322 = vmul.f32 %v4146, %v2173
        %v4323 = vmul.f32 %v4146, %v2176
        %v4324 = vmul.f32 %v4150, %v2149
        %v4325 = vmul.f32 %v4150, %v2152
        %v4326 = vmul.f32 %v4150, %v2157
        %v4327 = vmul.f32 %v4150, %v2160
        %v4328 = vmul.f32 %v4150, %v2165
        %v4329 = vmul.f32 %v4150, %v2168
        %v4330 = vmul.f32 %v4150, %v2173
        %v4331 = vmul.f32 %v4150, %v2176
        %v4332 = vmul.f32 %v4154, %v2149
        %v4333 = vmul.f32 %v4154, %v2152
        %v4334 = vmul.f32 %v4154, %v2157
        %v4335 = vmul.f32 %v4154, %v2160
        %v4336 = vmul.f32 %v4154, %v2165
        %v4337 = vmul.f32 %v4154, %v2168
        %v4338 = vmul.f32 %v4154, %v2173
        %v4339 = vmul.f32 %v4154, %v2176
        %v4340 = vmul.f32 %v4158, %v2149
        %v4341 = vmul.f32 %v4158, %v2152
        %v4342 = vmul.f32 %v4158, %v2157
        %v4343 = vmul.f32 %v4158, %v2160
        %v4344 = vmul.f32 %v4158, %v2165
        %v4345 = vmul.f32 %v4158, %v2168
        %v4346 = vmul.f32 %v4158, %v2173
        %v4347 = vmul.f32 %v4158, %v2176
        %v4348 = vmul.f32 %v4162, %v2149
        %v4349 = vmul.f32 %v4162, %v2152
        %v4350 = vmul.f32 %v4162, %v2157
        %v4351 = vmul.f32 %v4162, %v2160
        %v4352 = vmul.f32 %v4162, %v2165
        %v4353 = vmul.f32 %v4162, %v2168
        %v4354 = vmul.f32 %v4162, %v2173
        %v4355 = vmul.f32 %v4162, %v2176
        %v4356 = vmul.f32 %v4166, %v2149
        %v4357 = vmul.f32 %v4166, %v2152
        %v4358 = vmul.f32 %v4166, %v2157
        %v4359 = vmul.f32 %v4166, %v2160
        %v4360 = vmul.f32 %v4166, %v2165
        %v4361 = vmul.f32 %v4166, %v2168
        %v4362 = vmul.f32 %v4166, %v2173
        %v4363 = vmul.f32 %v4166, %v2176
        %v4364 = vmul.f32 %v4170, %v2149
        %v4365 = vmul.f32 %v4170, %v2152
        %v4366 = vmul.f32 %v4170, %v2157
        %v4367 = vmul.f32 %v4170, %v2160
        %v4368 = vmul.f32 %v4170, %v2165
        %v4369 = vmul.f32 %v4170, %v2168
        %v4370 = vmul.f32 %v4170, %v2173
        %v4371 = vmul.f32 %v4170, %v2176
        %v4372 = vmul.f32 %v4174, %v2149
        %v4373 = vmul.f32 %v4174, %v2152
        %v4374 = vmul.f32 %v4174, %v2157
        %v4375 = vmul.f32 %v4174, %v2160
        %v4376 = vmul.f32 %v4174, %v2165
        %v4377 = vmul.f32 %v4174, %v2168
        %v4378 = vmul.f32 %v4174, %v2173
        %v4379 = vmul.f32 %v4174, %v2176
        %v4380 = vmul.f32 %v4178, %v2149
        %v4381 = vmul.f32 %v4178, %v2152
        %v4382 = vmul.f32 %v4178, %v2157
        %v4383 = vmul.f32 %v4178, %v2160
        %v4384 = vmul.f32 %v4178, %v2165
        %v4385 = vmul.f32 %v4178, %v2168
        %v4386 = vmul.f32 %v4178, %v2173
        %v4387 = vmul.f32 %v4178, %v2176
        %v4388 = vmul.f32 %v4182, %v2149
        %v4389 = vmul.f32 %v4182, %v2152
        %v4390 = vmul.f32 %v4182, %v2157
        %v4391 = vmul.f32 %v4182, %v2160
        %v4392 = vmul.f32 %v4182, %v2165
        %v4393 = vmul.f32 %v4182, %v2168
        %v4394 = vmul.f32 %v4182, %v2173
        %v4395 = vmul.f32 %v4182, %v2176
        %v4396 = vmul.f32 %v4186, %v2149
        %v4397 = vmul.f32 %v4186, %v2152
        %v4398 = vmul.f32 %v4186, %v2157
        %v4399 = vmul.f32 %v4186, %v2160
        %v4400 = vmul.f32 %v4186, %v2165
        %v4401 = vmul.f32 %v4186, %v2168
        %v4402 = vmul.f32 %v4186, %v2173
        %v4403 = vmul.f32 %v4186, %v2176
        %v4404 = vmul.f32 %v4190, %v2149
        %v4405 = vmul.f32 %v4190, %v2152
        %v4406 = vmul.f32 %v4190, %v2157
        %v4407 = vmul.f32 %v4190, %v2160
        %v4408 = vmul.f32 %v4190, %v2165
        %v4409 = vmul.f32 %v4190, %v2168
        %v4410 = vmul.f32 %v4190, %v2173
        %v4411 = vmul.f32 %v4190, %v2176
        %v4412 = vmul.f32 %v4194, %v2149
        %v4413 = vmul.f32 %v4194, %v2152
        %v4414 = vmul.f32 %v4194, %v2157
        %v4415 = vmul.f32 %v4194, %v2160
        %v4416 = vmul.f32 %v4194, %v2165
        %v4417 = vmul.f32 %v4194, %v2168
        %v4418 = vmul.f32 %v4194, %v2173
        %v4419 = vmul.f32 %v4194, %v2176
        %v4420 = vmul.f32 %v4198, %v2149
        %v4421 = vmul.f32 %v4198, %v2152
        %v4422 = vmul.f32 %v4198, %v2157
        %v4423 = vmul.f32 %v4198, %v2160
        %v4424 = vmul.f32 %v4198, %v2165
        %v4425 = vmul.f32 %v4198, %v2168
        %v4426 = vmul.f32 %v4198, %v2173
        %v4427 = vmul.f32 %v4198, %v2176
        %v4428 = vmul.f32 %v4202, %v2149
        %v4429 = vmul.f32 %v4202, %v2152
        %v4430 = vmul.f32 %v4202, %v2157
        %v4431 = vmul.f32 %v4202, %v2160
        %v4432 = vmul.f32 %v4202, %v2165
        %v4433 = vmul.f32 %v4202, %v2168
        %v4434 = vmul.f32 %v4202, %v2173
        %v4435 = vmul.f32 %v4202, %v2176
        %v4436 = vmul.f32 %v4206, %v2149
        %v4437 = vmul.f32 %v4206, %v2152
        %v4438 = vmul.f32 %v4206, %v2157
        %v4439 = vmul.f32 %v4206, %v2160
        %v4440 = vmul.f32 %v4206, %v2165
        %v4441 = vmul.f32 %v4206, %v2168
        %v4442 = vmul.f32 %v4206, %v2173
        %v4443 = vmul.f32 %v4206, %v2176
        %v4444 = vmul.f32 %v4210, %v2149
        %v4445 = vmul.f32 %v4210, %v2152
        %v4446 = vmul.f32 %v4210, %v2157
        %v4447 = vmul.f32 %v4210, %v2160
        %v4448 = vmul.f32 %v4210, %v2165
        %v4449 = vmul.f32 %v4210, %v2168
        %v4450 = vmul.f32 %v4210, %v2173
        %v4451 = vmul.f32 %v4210, %v2176
        %v4452 = vmul.f32 %v4214, %v2149
        %v4453 = vmul.f32 %v4214, %v2152
        %v4454 = vmul.f32 %v4214, %v2157
        %v4455 = vmul.f32 %v4214, %v2160
        %v4456 = vmul.f32 %v4214, %v2165
        %v4457 = vmul.f32 %v4214, %v2168
        %v4458 = vmul.f32 %v4214, %v2173
        %v4459 = vmul.f32 %v4214, %v2176
        %v4460 = vmul.f32 %v4218, %v2149
        %v4461 = vmul.f32 %v4218, %v2152
        %v4462 = vmul.f32 %v4218, %v2157
        %v4463 = vmul.f32 %v4218, %v2160
        %v4464 = vmul.f32 %v4218, %v2165
        %v4465 = vmul.f32 %v4218, %v2168
        %v4466 = vmul.f32 %v4218, %v2173
        %v4467 = vmul.f32 %v4218, %v2176
        %v4468 = vmul.f32 %v4222, %v2149
        %v4469 = vmul.f32 %v4222, %v2152
        %v4470 = vmul.f32 %v4222, %v2157
        %v4471 = vmul.f32 %v4222, %v2160
        %v4472 = vmul.f32 %v4222, %v2165
        %v4473 = vmul.f32 %v4222, %v2168
        %v4474 = vmul.f32 %v4222, %v2173
        %v4475 = vmul.f32 %v4222, %v2176
        %v4476 = vmul.f32 %v4226, %v2149
        %v4477 = vmul.f32 %v4226, %v2152
        %v4478 = vmul.f32 %v4226, %v2157
        %v4479 = vmul.f32 %v4226, %v2160
        %v4480 = vmul.f32 %v4226, %v2165
        %v4481 = vmul.f32 %v4226, %v2168
        %v4482 = vmul.f32 %v4226, %v2173
        %v4483 = vmul.f32 %v4226, %v2176
        %v4484 = vadd.f32 %v3651, %v4228
        %v4485 = vadd.f32 %v3652, %v4229
        %v4486 = vadd.f32 %v3653, %v4230
        %v4487 = vadd.f32 %v3654, %v4231
        %v4488 = vadd.f32 %v3655, %v4232
        %v4489 = vadd.f32 %v3656, %v4233
        %v4490 = vadd.f32 %v3657, %v4234
        %v4491 = vadd.f32 %v3658, %v4235
        %v4492 = vadd.f32 %v3659, %v4236
        %v4493 = vadd.f32 %v3660, %v4237
        %v4494 = vadd.f32 %v3661, %v4238
        %v4495 = vadd.f32 %v3662, %v4239
        %v4496 = vadd.f32 %v3663, %v4240
        %v4497 = vadd.f32 %v3664, %v4241
        %v4498 = vadd.f32 %v3665, %v4242
        %v4499 = vadd.f32 %v3666, %v4243
        %v4500 = vadd.f32 %v3667, %v4244
        %v4501 = vadd.f32 %v3668, %v4245
        %v4502 = vadd.f32 %v3669, %v4246
        %v4503 = vadd.f32 %v3670, %v4247
        %v4504 = vadd.f32 %v3671, %v4248
        %v4505 = vadd.f32 %v3672, %v4249
        %v4506 = vadd.f32 %v3673, %v4250
        %v4507 = vadd.f32 %v3674, %v4251
        %v4508 = vadd.f32 %v3675, %v4252
        %v4509 = vadd.f32 %v3676, %v4253
        %v4510 = vadd.f32 %v3677, %v4254
        %v4511 = vadd.f32 %v3678, %v4255
        %v4512 = vadd.f32 %v3679, %v4256
        %v4513 = vadd.f32 %v3680, %v4257
        %v4514 = vadd.f32 %v3681, %v4258
        %v4515 = vadd.f32 %v3682, %v4259
        %v4516 = vadd.f32 %v3683, %v4260
        %v4517 = vadd.f32 %v3684, %v4261
        %v4518 = vadd.f32 %v3685, %v4262
        %v4519 = vadd.f32 %v3686, %v4263
        %v4520 = vadd.f32 %v3687, %v4264
        %v4521 = vadd.f32 %v3688, %v4265
        %v4522 = vadd.f32 %v3689, %v4266
        %v4523 = vadd.f32 %v3690, %v4267
        %v4524 = vadd.f32 %v3691, %v4268
        %v4525 = vadd.f32 %v3692, %v4269
        %v4526 = vadd.f32 %v3693, %v4270
        %v4527 = vadd.f32 %v3694, %v4271
        %v4528 = vadd.f32 %v3695, %v4272
        %v4529 = vadd.f32 %v3696, %v4273
        %v4530 = vadd.f32 %v3697, %v4274
        %v4531 = vadd.f32 %v3698, %v4275
        %v4532 = vadd.f32 %v3699, %v4276
        %v4533 = vadd.f32 %v3700, %v4277
        %v4534 = vadd.f32 %v3701, %v4278
        %v4535 = vadd.f32 %v3702, %v4279
        %v4536 = vadd.f32 %v3703, %v4280
        %v4537 = vadd.f32 %v3704, %v4281
        %v4538 = vadd.f32 %v3705, %v4282
        %v4539 = vadd.f32 %v3706, %v4283
        %v4540 = vadd.f32 %v3707, %v4284
        %v4541 = vadd.f32 %v3708, %v4285
        %v4542 = vadd.f32 %v3709, %v4286
        %v4543 = vadd.f32 %v3710, %v4287
        %v4544 = vadd.f32 %v3711, %v4288
        %v4545 = vadd.f32 %v3712, %v4289
        %v4546 = vadd.f32 %v3713, %v4290
        %v4547 = vadd.f32 %v3714, %v4291
        %v4548 = vadd.f32 %v3715, %v4292
        %v4549 = vadd.f32 %v3716, %v4293
        %v4550 = vadd.f32 %v3717, %v4294
        %v4551 = vadd.f32 %v3718, %v4295
        %v4552 = vadd.f32 %v3719, %v4296
        %v4553 = vadd.f32 %v3720, %v4297
        %v4554 = vadd.f32 %v3721, %v4298
        %v4555 = vadd.f32 %v3722, %v4299
        %v4556 = vadd.f32 %v3723, %v4300
        %v4557 = vadd.f32 %v3724, %v4301
        %v4558 = vadd.f32 %v3725, %v4302
        %v4559 = vadd.f32 %v3726, %v4303
        %v4560 = vadd.f32 %v3727, %v4304
        %v4561 = vadd.f32 %v3728, %v4305
        %v4562 = vadd.f32 %v3729, %v4306
        %v4563 = vadd.f32 %v3730, %v4307
        %v4564 = vadd.f32 %v3731, %v4308
        %v4565 = vadd.f32 %v3732, %v4309
        %v4566 = vadd.f32 %v3733, %v4310
        %v4567 = vadd.f32 %v3734, %v4311
        %v4568 = vadd.f32 %v3735, %v4312
        %v4569 = vadd.f32 %v3736, %v4313
        %v4570 = vadd.f32 %v3737, %v4314
        %v4571 = vadd.f32 %v3738, %v4315
        %v4572 = vadd.f32 %v3739, %v4316
        %v4573 = vadd.f32 %v3740, %v4317
        %v4574 = vadd.f32 %v3741, %v4318
        %v4575 = vadd.f32 %v3742, %v4319
        %v4576 = vadd.f32 %v3743, %v4320
        %v4577 = vadd.f32 %v3744, %v4321
        %v4578 = vadd.f32 %v3745, %v4322
        %v4579 = vadd.f32 %v3746, %v4323
        %v4580 = vadd.f32 %v3747, %v4324
        %v4581 = vadd.f32 %v3748, %v4325
        %v4582 = vadd.f32 %v3749, %v4326
        %v4583 = vadd.f32 %v3750, %v4327
        %v4584 = vadd.f32 %v3751, %v4328
        %v4585 = vadd.f32 %v3752, %v4329
        %v4586 = vadd.f32 %v3753, %v4330
        %v4587 = vadd.f32 %v3754, %v4331
        %v4588 = vadd.f32 %v3755, %v4332
        %v4589 = vadd.f32 %v3756, %v4333
        %v4590 = vadd.f32 %v3757, %v4334
        %v4591 = vadd.f32 %v3758, %v4335
        %v4592 = vadd.f32 %v3759, %v4336
        %v4593 = vadd.f32 %v3760, %v4337
        %v4594 = vadd.f32 %v3761, %v4338
        %v4595 = vadd.f32 %v3762, %v4339
        %v4596 = vadd.f32 %v3763, %v4340
        %v4597 = vadd.f32 %v3764, %v4341
        %v4598 = vadd.f32 %v3765, %v4342
        %v4599 = vadd.f32 %v3766, %v4343
        %v4600 = vadd.f32 %v3767, %v4344
        %v4601 = vadd.f32 %v3768, %v4345
        %v4602 = vadd.f32 %v3769, %v4346
        %v4603 = vadd.f32 %v3770, %v4347
        %v4604 = vadd.f32 %v3771, %v4348
        %v4605 = vadd.f32 %v3772, %v4349
        %v4606 = vadd.f32 %v3773, %v4350
        %v4607 = vadd.f32 %v3774, %v4351
        %v4608 = vadd.f32 %v3775, %v4352
        %v4609 = vadd.f32 %v3776, %v4353
        %v4610 = vadd.f32 %v3777, %v4354
        %v4611 = vadd.f32 %v3778, %v4355
        %v4612 = vadd.f32 %v3779, %v4356
        %v4613 = vadd.f32 %v3780, %v4357
        %v4614 = vadd.f32 %v3781, %v4358
        %v4615 = vadd.f32 %v3782, %v4359
        %v4616 = vadd.f32 %v3783, %v4360
        %v4617 = vadd.f32 %v3784, %v4361
        %v4618 = vadd.f32 %v3785, %v4362
        %v4619 = vadd.f32 %v3786, %v4363
        %v4620 = vadd.f32 %v3787, %v4364
        %v4621 = vadd.f32 %v3788, %v4365
        %v4622 = vadd.f32 %v3789, %v4366
        %v4623 = vadd.f32 %v3790, %v4367
        %v4624 = vadd.f32 %v3791, %v4368
        %v4625 = vadd.f32 %v3792, %v4369
        %v4626 = vadd.f32 %v3793, %v4370
        %v4627 = vadd.f32 %v3794, %v4371
        %v4628 = vadd.f32 %v3795, %v4372
        %v4629 = vadd.f32 %v3796, %v4373
        %v4630 = vadd.f32 %v3797, %v4374
        %v4631 = vadd.f32 %v3798, %v4375
        %v4632 = vadd.f32 %v3799, %v4376
        %v4633 = vadd.f32 %v3800, %v4377
        %v4634 = vadd.f32 %v3801, %v4378
        %v4635 = vadd.f32 %v3802, %v4379
        %v4636 = vadd.f32 %v3803, %v4380
        %v4637 = vadd.f32 %v3804, %v4381
        %v4638 = vadd.f32 %v3805, %v4382
        %v4639 = vadd.f32 %v3806, %v4383
        %v4640 = vadd.f32 %v3807, %v4384
        %v4641 = vadd.f32 %v3808, %v4385
        %v4642 = vadd.f32 %v3809, %v4386
        %v4643 = vadd.f32 %v3810, %v4387
        %v4644 = vadd.f32 %v3811, %v4388
        %v4645 = vadd.f32 %v3812, %v4389
        %v4646 = vadd.f32 %v3813, %v4390
        %v4647 = vadd.f32 %v3814, %v4391
        %v4648 = vadd.f32 %v3815, %v4392
        %v4649 = vadd.f32 %v3816, %v4393
        %v4650 = vadd.f32 %v3817, %v4394
        %v4651 = vadd.f32 %v3818, %v4395
        %v4652 = vadd.f32 %v3819, %v4396
        %v4653 = vadd.f32 %v3820, %v4397
        %v4654 = vadd.f32 %v3821, %v4398
        %v4655 = vadd.f32 %v3822, %v4399
        %v4656 = vadd.f32 %v3823, %v4400
        %v4657 = vadd.f32 %v3824, %v4401
        %v4658 = vadd.f32 %v3825, %v4402
        %v4659 = vadd.f32 %v3826, %v4403
        %v4660 = vadd.f32 %v3827, %v4404
        %v4661 = vadd.f32 %v3828, %v4405
        %v4662 = vadd.f32 %v3829, %v4406
        %v4663 = vadd.f32 %v3830, %v4407
        %v4664 = vadd.f32 %v3831, %v4408
        %v4665 = vadd.f32 %v3832, %v4409
        %v4666 = vadd.f32 %v3833, %v4410
        %v4667 = vadd.f32 %v3834, %v4411
        %v4668 = vadd.f32 %v3835, %v4412
        %v4669 = vadd.f32 %v3836, %v4413
        %v4670 = vadd.f32 %v3837, %v4414
        %v4671 = vadd.f32 %v3838, %v4415
        %v4672 = vadd.f32 %v3839, %v4416
        %v4673 = vadd.f32 %v3840, %v4417
        %v4674 = vadd.f32 %v3841, %v4418
        %v4675 = vadd.f32 %v3842, %v4419
        %v4676 = vadd.f32 %v3843, %v4420
        %v4677 = vadd.f32 %v3844, %v4421
        %v4678 = vadd.f32 %v3845, %v4422
        %v4679 = vadd.f32 %v3846, %v4423
        %v4680 = vadd.f32 %v3847, %v4424
        %v4681 = vadd.f32 %v3848, %v4425
        %v4682 = vadd.f32 %v3849, %v4426
        %v4683 = vadd.f32 %v3850, %v4427
        %v4684 = vadd.f32 %v3851, %v4428
        %v4685 = vadd.f32 %v3852, %v4429
        %v4686 = vadd.f32 %v3853, %v4430
        %v4687 = vadd.f32 %v3854, %v4431
        %v4688 = vadd.f32 %v3855, %v4432
        %v4689 = vadd.f32 %v3856, %v4433
        %v4690 = vadd.f32 %v3857, %v4434
        %v4691 = vadd.f32 %v3858, %v4435
        %v4692 = vadd.f32 %v3859, %v4436
        %v4693 = vadd.f32 %v3860, %v4437
        %v4694 = vadd.f32 %v3861, %v4438
        %v4695 = vadd.f32 %v3862, %v4439
        %v4696 = vadd.f32 %v3863, %v4440
        %v4697 = vadd.f32 %v3864, %v4441
        %v4698 = vadd.f32 %v3865, %v4442
        %v4699 = vadd.f32 %v3866, %v4443
        %v4700 = vadd.f32 %v3867, %v4444
        %v4701 = vadd.f32 %v3868, %v4445
        %v4702 = vadd.f32 %v3869, %v4446
        %v4703 = vadd.f32 %v3870, %v4447
        %v4704 = vadd.f32 %v3871, %v4448
        %v4705 = vadd.f32 %v3872, %v4449
        %v4706 = vadd.f32 %v3873, %v4450
        %v4707 = vadd.f32 %v3874, %v4451
        %v4708 = vadd.f32 %v3875, %v4452
        %v4709 = vadd.f32 %v3876, %v4453
        %v4710 = vadd.f32 %v3877, %v4454
        %v4711 = vadd.f32 %v3878, %v4455
        %v4712 = vadd.f32 %v3879, %v4456
        %v4713 = vadd.f32 %v3880, %v4457
        %v4714 = vadd.f32 %v3881, %v4458
        %v4715 = vadd.f32 %v3882, %v4459
        %v4716 = vadd.f32 %v3883, %v4460
        %v4717 = vadd.f32 %v3884, %v4461
        %v4718 = vadd.f32 %v3885, %v4462
        %v4719 = vadd.f32 %v3886, %v4463
        %v4720 = vadd.f32 %v3887, %v4464
        %v4721 = vadd.f32 %v3888, %v4465
        %v4722 = vadd.f32 %v3889, %v4466
        %v4723 = vadd.f32 %v3890, %v4467
        %v4724 = vadd.f32 %v3891, %v4468
        %v4725 = vadd.f32 %v3892, %v4469
        %v4726 = vadd.f32 %v3893, %v4470
        %v4727 = vadd.f32 %v3894, %v4471
        %v4728 = vadd.f32 %v3895, %v4472
        %v4729 = vadd.f32 %v3896, %v4473
        %v4730 = vadd.f32 %v3897, %v4474
        %v4731 = vadd.f32 %v3898, %v4475
        %v4732 = vadd.f32 %v3899, %v4476
        %v4733 = vadd.f32 %v3900, %v4477
        %v4734 = vadd.f32 %v3901, %v4478
        %v4735 = vadd.f32 %v3902, %v4479
        %v4736 = vadd.f32 %v3903, %v4480
        %v4737 = vadd.f32 %v3904, %v4481
        %v4738 = vadd.f32 %v3905, %v4482
        %v4739 = vadd.f32 %v3906, %v4483
        %s4740 = scalar_lea.vmem [#allocation10], 64
        %v4741 = vld [vmem:[%s4740] sm:$0x1]
        %v4742 = vld [vmem:[%s4740 + $0x1] sm:$0x1]
        %v4743 = vld [vmem:[%s4740 + $0x2] sm:$0x1]
        %v4744 = vld [vmem:[%s4740 + $0x3] sm:$0x1]
        %v4745 = vld [vmem:[%s4740 + $0x4] sm:$0x1]
        %v4746 = vld [vmem:[%s4740 + $0x5] sm:$0x1]
        %v4747 = vld [vmem:[%s4740 + $0x6] sm:$0x1]
        %v4748 = vld [vmem:[%s4740 + $0x7] sm:$0x1]
        %v4749 = vld [vmem:[%s4740 + $0x8] sm:$0x1]
        %v4750 = vld [vmem:[%s4740 + $0x9] sm:$0x1]
        %v4751 = vld [vmem:[%s4740 + $0xa] sm:$0x1]
        %v4752 = vld [vmem:[%s4740 + $0xb] sm:$0x1]
        %v4753 = vld [vmem:[%s4740 + $0xc] sm:$0x1]
        %v4754 = vld [vmem:[%s4740 + $0xd] sm:$0x1]
        %v4755 = vld [vmem:[%s4740 + $0xe] sm:$0x1]
        %v4756 = vld [vmem:[%s4740 + $0xf] sm:$0x1]
        %v4757 = vld [vmem:[%s4740 + $0x10] sm:$0x1]
        %v4758 = vld [vmem:[%s4740 + $0x11] sm:$0x1]
        %v4759 = vld [vmem:[%s4740 + $0x12] sm:$0x1]
        %v4760 = vld [vmem:[%s4740 + $0x13] sm:$0x1]
        %v4761 = vld [vmem:[%s4740 + $0x14] sm:$0x1]
        %v4762 = vld [vmem:[%s4740 + $0x15] sm:$0x1]
        %v4763 = vld [vmem:[%s4740 + $0x16] sm:$0x1]
        %v4764 = vld [vmem:[%s4740 + $0x17] sm:$0x1]
        %v4765 = vld [vmem:[%s4740 + $0x18] sm:$0x1]
        %v4766 = vld [vmem:[%s4740 + $0x19] sm:$0x1]
        %v4767 = vld [vmem:[%s4740 + $0x1a] sm:$0x1]
        %v4768 = vld [vmem:[%s4740 + $0x1b] sm:$0x1]
        %v4769 = vld [vmem:[%s4740 + $0x1c] sm:$0x1]
        %v4770 = vld [vmem:[%s4740 + $0x1d] sm:$0x1]
        %v4771 = vld [vmem:[%s4740 + $0x1e] sm:$0x1]
        %v4772 = vld [vmem:[%s4740 + $0x1f] sm:$0x1]
        %v4805 = vlaneseq
        %v4806 = vshrl.u32 %v4805, 7
        %v4807 = vsub.s32 0, %v4806
        %v4808 = vrot.slane %v4741, %v4807
        %v4809 = vlaneseq
        %v4810 = vshrl.u32 %v4809, 7
        %v4811 = vsub.s32 0, %v4810
        %v4812 = vrot.slane %v4742, %v4811
        %v4813 = vlaneseq
        %v4814 = vshrl.u32 %v4813, 7
        %v4815 = vsub.s32 0, %v4814
        %v4816 = vrot.slane %v4743, %v4815
        %v4817 = vlaneseq
        %v4818 = vshrl.u32 %v4817, 7
        %v4819 = vsub.s32 0, %v4818
        %v4820 = vrot.slane %v4744, %v4819
        %v4821 = vlaneseq
        %v4822 = vshrl.u32 %v4821, 7
        %v4823 = vsub.s32 0, %v4822
        %v4824 = vrot.slane %v4745, %v4823
        %v4825 = vlaneseq
        %v4826 = vshrl.u32 %v4825, 7
        %v4827 = vsub.s32 0, %v4826
        %v4828 = vrot.slane %v4746, %v4827
        %v4829 = vlaneseq
        %v4830 = vshrl.u32 %v4829, 7
        %v4831 = vsub.s32 0, %v4830
        %v4832 = vrot.slane %v4747, %v4831
        %v4833 = vlaneseq
        %v4834 = vshrl.u32 %v4833, 7
        %v4835 = vsub.s32 0, %v4834
        %v4836 = vrot.slane %v4748, %v4835
        %v4837 = vlaneseq
        %v4838 = vshrl.u32 %v4837, 7
        %v4839 = vsub.s32 0, %v4838
        %v4840 = vrot.slane %v4749, %v4839
        %v4841 = vlaneseq
        %v4842 = vshrl.u32 %v4841, 7
        %v4843 = vsub.s32 0, %v4842
        %v4844 = vrot.slane %v4750, %v4843
        %v4845 = vlaneseq
        %v4846 = vshrl.u32 %v4845, 7
        %v4847 = vsub.s32 0, %v4846
        %v4848 = vrot.slane %v4751, %v4847
        %v4849 = vlaneseq
        %v4850 = vshrl.u32 %v4849, 7
        %v4851 = vsub.s32 0, %v4850
        %v4852 = vrot.slane %v4752, %v4851
        %v4853 = vlaneseq
        %v4854 = vshrl.u32 %v4853, 7
        %v4855 = vsub.s32 0, %v4854
        %v4856 = vrot.slane %v4753, %v4855
        %v4857 = vlaneseq
        %v4858 = vshrl.u32 %v4857, 7
        %v4859 = vsub.s32 0, %v4858
        %v4860 = vrot.slane %v4754, %v4859
        %v4861 = vlaneseq
        %v4862 = vshrl.u32 %v4861, 7
        %v4863 = vsub.s32 0, %v4862
        %v4864 = vrot.slane %v4755, %v4863
        %v4865 = vlaneseq
        %v4866 = vshrl.u32 %v4865, 7
        %v4867 = vsub.s32 0, %v4866
        %v4868 = vrot.slane %v4756, %v4867
        %v4869 = vlaneseq
        %v4870 = vshrl.u32 %v4869, 7
        %v4871 = vsub.s32 0, %v4870
        %v4872 = vrot.slane %v4757, %v4871
        %v4873 = vlaneseq
        %v4874 = vshrl.u32 %v4873, 7
        %v4875 = vsub.s32 0, %v4874
        %v4876 = vrot.slane %v4758, %v4875
        %v4877 = vlaneseq
        %v4878 = vshrl.u32 %v4877, 7
        %v4879 = vsub.s32 0, %v4878
        %v4880 = vrot.slane %v4759, %v4879
        %v4881 = vlaneseq
        %v4882 = vshrl.u32 %v4881, 7
        %v4883 = vsub.s32 0, %v4882
        %v4884 = vrot.slane %v4760, %v4883
        %v4885 = vlaneseq
        %v4886 = vshrl.u32 %v4885, 7
        %v4887 = vsub.s32 0, %v4886
        %v4888 = vrot.slane %v4761, %v4887
        %v4889 = vlaneseq
        %v4890 = vshrl.u32 %v4889, 7
        %v4891 = vsub.s32 0, %v4890
        %v4892 = vrot.slane %v4762, %v4891
        %v4893 = vlaneseq
        %v4894 = vshrl.u32 %v4893, 7
        %v4895 = vsub.s32 0, %v4894
        %v4896 = vrot.slane %v4763, %v4895
        %v4897 = vlaneseq
        %v4898 = vshrl.u32 %v4897, 7
        %v4899 = vsub.s32 0, %v4898
        %v4900 = vrot.slane %v4764, %v4899
        %v4901 = vlaneseq
        %v4902 = vshrl.u32 %v4901, 7
        %v4903 = vsub.s32 0, %v4902
        %v4904 = vrot.slane %v4765, %v4903
        %v4905 = vlaneseq
        %v4906 = vshrl.u32 %v4905, 7
        %v4907 = vsub.s32 0, %v4906
        %v4908 = vrot.slane %v4766, %v4907
        %v4909 = vlaneseq
        %v4910 = vshrl.u32 %v4909, 7
        %v4911 = vsub.s32 0, %v4910
        %v4912 = vrot.slane %v4767, %v4911
        %v4913 = vlaneseq
        %v4914 = vshrl.u32 %v4913, 7
        %v4915 = vsub.s32 0, %v4914
        %v4916 = vrot.slane %v4768, %v4915
        %v4917 = vlaneseq
        %v4918 = vshrl.u32 %v4917, 7
        %v4919 = vsub.s32 0, %v4918
        %v4920 = vrot.slane %v4769, %v4919
        %v4921 = vlaneseq
        %v4922 = vshrl.u32 %v4921, 7
        %v4923 = vsub.s32 0, %v4922
        %v4924 = vrot.slane %v4770, %v4923
        %v4925 = vlaneseq
        %v4926 = vshrl.u32 %v4925, 7
        %v4927 = vsub.s32 0, %v4926
        %v4928 = vrot.slane %v4771, %v4927
        %v4929 = vlaneseq
        %v4930 = vshrl.u32 %v4929, 7
        %v4931 = vsub.s32 0, %v4930
        %v4932 = vrot.slane %v4772, %v4931
        %4933 = vset.pattern.permute.xlu0 0
        %4934 = vperm.xlu0 %4933, %v4808
        %v4935 = vpop.permute.xlu0 %4934
        %4937 = vset.pattern.permute.xlu0 0
        %4938 = vperm.xlu0 %4937, %v4812
        %v4939 = vpop.permute.xlu0 %4938
        %4941 = vset.pattern.permute.xlu0 0
        %4942 = vperm.xlu0 %4941, %v4816
        %v4943 = vpop.permute.xlu0 %4942
        %4945 = vset.pattern.permute.xlu0 0
        %4946 = vperm.xlu0 %4945, %v4820
        %v4947 = vpop.permute.xlu0 %4946
        %4949 = vset.pattern.permute.xlu0 0
        %4950 = vperm.xlu0 %4949, %v4824
        %v4951 = vpop.permute.xlu0 %4950
        %4953 = vset.pattern.permute.xlu0 0
        %4954 = vperm.xlu0 %4953, %v4828
        %v4955 = vpop.permute.xlu0 %4954
        %4957 = vset.pattern.permute.xlu0 0
        %4958 = vperm.xlu0 %4957, %v4832
        %v4959 = vpop.permute.xlu0 %4958
        %4961 = vset.pattern.permute.xlu0 0
        %4962 = vperm.xlu0 %4961, %v4836
        %v4963 = vpop.permute.xlu0 %4962
        %4965 = vset.pattern.permute.xlu0 0
        %4966 = vperm.xlu0 %4965, %v4840
        %v4967 = vpop.permute.xlu0 %4966
        %4969 = vset.pattern.permute.xlu0 0
        %4970 = vperm.xlu0 %4969, %v4844
        %v4971 = vpop.permute.xlu0 %4970
        %4973 = vset.pattern.permute.xlu0 0
        %4974 = vperm.xlu0 %4973, %v4848
        %v4975 = vpop.permute.xlu0 %4974
        %4977 = vset.pattern.permute.xlu0 0
        %4978 = vperm.xlu0 %4977, %v4852
        %v4979 = vpop.permute.xlu0 %4978
        %4981 = vset.pattern.permute.xlu0 0
        %4982 = vperm.xlu0 %4981, %v4856
        %v4983 = vpop.permute.xlu0 %4982
        %4985 = vset.pattern.permute.xlu0 0
        %4986 = vperm.xlu0 %4985, %v4860
        %v4987 = vpop.permute.xlu0 %4986
        %4989 = vset.pattern.permute.xlu0 0
        %4990 = vperm.xlu0 %4989, %v4864
        %v4991 = vpop.permute.xlu0 %4990
        %4993 = vset.pattern.permute.xlu0 0
        %4994 = vperm.xlu0 %4993, %v4868
        %v4995 = vpop.permute.xlu0 %4994
        %4997 = vset.pattern.permute.xlu0 0
        %4998 = vperm.xlu0 %4997, %v4872
        %v4999 = vpop.permute.xlu0 %4998
        %5001 = vset.pattern.permute.xlu0 0
        %5002 = vperm.xlu0 %5001, %v4876
        %v5003 = vpop.permute.xlu0 %5002
        %5005 = vset.pattern.permute.xlu0 0
        %5006 = vperm.xlu0 %5005, %v4880
        %v5007 = vpop.permute.xlu0 %5006
        %5009 = vset.pattern.permute.xlu0 0
        %5010 = vperm.xlu0 %5009, %v4884
        %v5011 = vpop.permute.xlu0 %5010
        %5013 = vset.pattern.permute.xlu0 0
        %5014 = vperm.xlu0 %5013, %v4888
        %v5015 = vpop.permute.xlu0 %5014
        %5017 = vset.pattern.permute.xlu0 0
        %5018 = vperm.xlu0 %5017, %v4892
        %v5019 = vpop.permute.xlu0 %5018
        %5021 = vset.pattern.permute.xlu0 0
        %5022 = vperm.xlu0 %5021, %v4896
        %v5023 = vpop.permute.xlu0 %5022
        %5025 = vset.pattern.permute.xlu0 0
        %5026 = vperm.xlu0 %5025, %v4900
        %v5027 = vpop.permute.xlu0 %5026
        %5029 = vset.pattern.permute.xlu0 0
        %5030 = vperm.xlu0 %5029, %v4904
        %v5031 = vpop.permute.xlu0 %5030
        %5033 = vset.pattern.permute.xlu0 0
        %5034 = vperm.xlu0 %5033, %v4908
        %v5035 = vpop.permute.xlu0 %5034
        %5037 = vset.pattern.permute.xlu0 0
        %5038 = vperm.xlu0 %5037, %v4912
        %v5039 = vpop.permute.xlu0 %5038
        %5041 = vset.pattern.permute.xlu0 0
        %5042 = vperm.xlu0 %5041, %v4916
        %v5043 = vpop.permute.xlu0 %5042
        %5045 = vset.pattern.permute.xlu0 0
        %5046 = vperm.xlu0 %5045, %v4920
        %v5047 = vpop.permute.xlu0 %5046
        %5049 = vset.pattern.permute.xlu0 0
        %5050 = vperm.xlu0 %5049, %v4924
        %v5051 = vpop.permute.xlu0 %5050
        %5053 = vset.pattern.permute.xlu0 0
        %5054 = vperm.xlu0 %5053, %v4928
        %v5055 = vpop.permute.xlu0 %5054
        %5057 = vset.pattern.permute.xlu0 0
        %5058 = vperm.xlu0 %5057, %v4932
        %v5059 = vpop.permute.xlu0 %5058
        %v5061 = vmul.f32 %v4935, %v2181
        %v5062 = vmul.f32 %v4935, %v2184
        %v5063 = vmul.f32 %v4935, %v2189
        %v5064 = vmul.f32 %v4935, %v2192
        %v5065 = vmul.f32 %v4935, %v2197
        %v5066 = vmul.f32 %v4935, %v2200
        %v5067 = vmul.f32 %v4935, %v2205
        %v5068 = vmul.f32 %v4935, %v2208
        %v5069 = vmul.f32 %v4939, %v2181
        %v5070 = vmul.f32 %v4939, %v2184
        %v5071 = vmul.f32 %v4939, %v2189
        %v5072 = vmul.f32 %v4939, %v2192
        %v5073 = vmul.f32 %v4939, %v2197
        %v5074 = vmul.f32 %v4939, %v2200
        %v5075 = vmul.f32 %v4939, %v2205
        %v5076 = vmul.f32 %v4939, %v2208
        %v5077 = vmul.f32 %v4943, %v2181
        %v5078 = vmul.f32 %v4943, %v2184
        %v5079 = vmul.f32 %v4943, %v2189
        %v5080 = vmul.f32 %v4943, %v2192
        %v5081 = vmul.f32 %v4943, %v2197
        %v5082 = vmul.f32 %v4943, %v2200
        %v5083 = vmul.f32 %v4943, %v2205
        %v5084 = vmul.f32 %v4943, %v2208
        %v5085 = vmul.f32 %v4947, %v2181
        %v5086 = vmul.f32 %v4947, %v2184
        %v5087 = vmul.f32 %v4947, %v2189
        %v5088 = vmul.f32 %v4947, %v2192
        %v5089 = vmul.f32 %v4947, %v2197
        %v5090 = vmul.f32 %v4947, %v2200
        %v5091 = vmul.f32 %v4947, %v2205
        %v5092 = vmul.f32 %v4947, %v2208
        %v5093 = vmul.f32 %v4951, %v2181
        %v5094 = vmul.f32 %v4951, %v2184
        %v5095 = vmul.f32 %v4951, %v2189
        %v5096 = vmul.f32 %v4951, %v2192
        %v5097 = vmul.f32 %v4951, %v2197
        %v5098 = vmul.f32 %v4951, %v2200
        %v5099 = vmul.f32 %v4951, %v2205
        %v5100 = vmul.f32 %v4951, %v2208
        %v5101 = vmul.f32 %v4955, %v2181
        %v5102 = vmul.f32 %v4955, %v2184
        %v5103 = vmul.f32 %v4955, %v2189
        %v5104 = vmul.f32 %v4955, %v2192
        %v5105 = vmul.f32 %v4955, %v2197
        %v5106 = vmul.f32 %v4955, %v2200
        %v5107 = vmul.f32 %v4955, %v2205
        %v5108 = vmul.f32 %v4955, %v2208
        %v5109 = vmul.f32 %v4959, %v2181
        %v5110 = vmul.f32 %v4959, %v2184
        %v5111 = vmul.f32 %v4959, %v2189
        %v5112 = vmul.f32 %v4959, %v2192
        %v5113 = vmul.f32 %v4959, %v2197
        %v5114 = vmul.f32 %v4959, %v2200
        %v5115 = vmul.f32 %v4959, %v2205
        %v5116 = vmul.f32 %v4959, %v2208
        %v5117 = vmul.f32 %v4963, %v2181
        %v5118 = vmul.f32 %v4963, %v2184
        %v5119 = vmul.f32 %v4963, %v2189
        %v5120 = vmul.f32 %v4963, %v2192
        %v5121 = vmul.f32 %v4963, %v2197
        %v5122 = vmul.f32 %v4963, %v2200
        %v5123 = vmul.f32 %v4963, %v2205
        %v5124 = vmul.f32 %v4963, %v2208
        %v5125 = vmul.f32 %v4967, %v2181
        %v5126 = vmul.f32 %v4967, %v2184
        %v5127 = vmul.f32 %v4967, %v2189
        %v5128 = vmul.f32 %v4967, %v2192
        %v5129 = vmul.f32 %v4967, %v2197
        %v5130 = vmul.f32 %v4967, %v2200
        %v5131 = vmul.f32 %v4967, %v2205
        %v5132 = vmul.f32 %v4967, %v2208
        %v5133 = vmul.f32 %v4971, %v2181
        %v5134 = vmul.f32 %v4971, %v2184
        %v5135 = vmul.f32 %v4971, %v2189
        %v5136 = vmul.f32 %v4971, %v2192
        %v5137 = vmul.f32 %v4971, %v2197
        %v5138 = vmul.f32 %v4971, %v2200
        %v5139 = vmul.f32 %v4971, %v2205
        %v5140 = vmul.f32 %v4971, %v2208
        %v5141 = vmul.f32 %v4975, %v2181
        %v5142 = vmul.f32 %v4975, %v2184
        %v5143 = vmul.f32 %v4975, %v2189
        %v5144 = vmul.f32 %v4975, %v2192
        %v5145 = vmul.f32 %v4975, %v2197
        %v5146 = vmul.f32 %v4975, %v2200
        %v5147 = vmul.f32 %v4975, %v2205
        %v5148 = vmul.f32 %v4975, %v2208
        %v5149 = vmul.f32 %v4979, %v2181
        %v5150 = vmul.f32 %v4979, %v2184
        %v5151 = vmul.f32 %v4979, %v2189
        %v5152 = vmul.f32 %v4979, %v2192
        %v5153 = vmul.f32 %v4979, %v2197
        %v5154 = vmul.f32 %v4979, %v2200
        %v5155 = vmul.f32 %v4979, %v2205
        %v5156 = vmul.f32 %v4979, %v2208
        %v5157 = vmul.f32 %v4983, %v2181
        %v5158 = vmul.f32 %v4983, %v2184
        %v5159 = vmul.f32 %v4983, %v2189
        %v5160 = vmul.f32 %v4983, %v2192
        %v5161 = vmul.f32 %v4983, %v2197
        %v5162 = vmul.f32 %v4983, %v2200
        %v5163 = vmul.f32 %v4983, %v2205
        %v5164 = vmul.f32 %v4983, %v2208
        %v5165 = vmul.f32 %v4987, %v2181
        %v5166 = vmul.f32 %v4987, %v2184
        %v5167 = vmul.f32 %v4987, %v2189
        %v5168 = vmul.f32 %v4987, %v2192
        %v5169 = vmul.f32 %v4987, %v2197
        %v5170 = vmul.f32 %v4987, %v2200
        %v5171 = vmul.f32 %v4987, %v2205
        %v5172 = vmul.f32 %v4987, %v2208
        %v5173 = vmul.f32 %v4991, %v2181
        %v5174 = vmul.f32 %v4991, %v2184
        %v5175 = vmul.f32 %v4991, %v2189
        %v5176 = vmul.f32 %v4991, %v2192
        %v5177 = vmul.f32 %v4991, %v2197
        %v5178 = vmul.f32 %v4991, %v2200
        %v5179 = vmul.f32 %v4991, %v2205
        %v5180 = vmul.f32 %v4991, %v2208
        %v5181 = vmul.f32 %v4995, %v2181
        %v5182 = vmul.f32 %v4995, %v2184
        %v5183 = vmul.f32 %v4995, %v2189
        %v5184 = vmul.f32 %v4995, %v2192
        %v5185 = vmul.f32 %v4995, %v2197
        %v5186 = vmul.f32 %v4995, %v2200
        %v5187 = vmul.f32 %v4995, %v2205
        %v5188 = vmul.f32 %v4995, %v2208
        %v5189 = vmul.f32 %v4999, %v2181
        %v5190 = vmul.f32 %v4999, %v2184
        %v5191 = vmul.f32 %v4999, %v2189
        %v5192 = vmul.f32 %v4999, %v2192
        %v5193 = vmul.f32 %v4999, %v2197
        %v5194 = vmul.f32 %v4999, %v2200
        %v5195 = vmul.f32 %v4999, %v2205
        %v5196 = vmul.f32 %v4999, %v2208
        %v5197 = vmul.f32 %v5003, %v2181
        %v5198 = vmul.f32 %v5003, %v2184
        %v5199 = vmul.f32 %v5003, %v2189
        %v5200 = vmul.f32 %v5003, %v2192
        %v5201 = vmul.f32 %v5003, %v2197
        %v5202 = vmul.f32 %v5003, %v2200
        %v5203 = vmul.f32 %v5003, %v2205
        %v5204 = vmul.f32 %v5003, %v2208
        %v5205 = vmul.f32 %v5007, %v2181
        %v5206 = vmul.f32 %v5007, %v2184
        %v5207 = vmul.f32 %v5007, %v2189
        %v5208 = vmul.f32 %v5007, %v2192
        %v5209 = vmul.f32 %v5007, %v2197
        %v5210 = vmul.f32 %v5007, %v2200
        %v5211 = vmul.f32 %v5007, %v2205
        %v5212 = vmul.f32 %v5007, %v2208
        %v5213 = vmul.f32 %v5011, %v2181
        %v5214 = vmul.f32 %v5011, %v2184
        %v5215 = vmul.f32 %v5011, %v2189
        %v5216 = vmul.f32 %v5011, %v2192
        %v5217 = vmul.f32 %v5011, %v2197
        %v5218 = vmul.f32 %v5011, %v2200
        %v5219 = vmul.f32 %v5011, %v2205
        %v5220 = vmul.f32 %v5011, %v2208
        %v5221 = vmul.f32 %v5015, %v2181
        %v5222 = vmul.f32 %v5015, %v2184
        %v5223 = vmul.f32 %v5015, %v2189
        %v5224 = vmul.f32 %v5015, %v2192
        %v5225 = vmul.f32 %v5015, %v2197
        %v5226 = vmul.f32 %v5015, %v2200
        %v5227 = vmul.f32 %v5015, %v2205
        %v5228 = vmul.f32 %v5015, %v2208
        %v5229 = vmul.f32 %v5019, %v2181
        %v5230 = vmul.f32 %v5019, %v2184
        %v5231 = vmul.f32 %v5019, %v2189
        %v5232 = vmul.f32 %v5019, %v2192
        %v5233 = vmul.f32 %v5019, %v2197
        %v5234 = vmul.f32 %v5019, %v2200
        %v5235 = vmul.f32 %v5019, %v2205
        %v5236 = vmul.f32 %v5019, %v2208
        %v5237 = vmul.f32 %v5023, %v2181
        %v5238 = vmul.f32 %v5023, %v2184
        %v5239 = vmul.f32 %v5023, %v2189
        %v5240 = vmul.f32 %v5023, %v2192
        %v5241 = vmul.f32 %v5023, %v2197
        %v5242 = vmul.f32 %v5023, %v2200
        %v5243 = vmul.f32 %v5023, %v2205
        %v5244 = vmul.f32 %v5023, %v2208
        %v5245 = vmul.f32 %v5027, %v2181
        %v5246 = vmul.f32 %v5027, %v2184
        %v5247 = vmul.f32 %v5027, %v2189
        %v5248 = vmul.f32 %v5027, %v2192
        %v5249 = vmul.f32 %v5027, %v2197
        %v5250 = vmul.f32 %v5027, %v2200
        %v5251 = vmul.f32 %v5027, %v2205
        %v5252 = vmul.f32 %v5027, %v2208
        %v5253 = vmul.f32 %v5031, %v2181
        %v5254 = vmul.f32 %v5031, %v2184
        %v5255 = vmul.f32 %v5031, %v2189
        %v5256 = vmul.f32 %v5031, %v2192
        %v5257 = vmul.f32 %v5031, %v2197
        %v5258 = vmul.f32 %v5031, %v2200
        %v5259 = vmul.f32 %v5031, %v2205
        %v5260 = vmul.f32 %v5031, %v2208
        %v5261 = vmul.f32 %v5035, %v2181
        %v5262 = vmul.f32 %v5035, %v2184
        %v5263 = vmul.f32 %v5035, %v2189
        %v5264 = vmul.f32 %v5035, %v2192
        %v5265 = vmul.f32 %v5035, %v2197
        %v5266 = vmul.f32 %v5035, %v2200
        %v5267 = vmul.f32 %v5035, %v2205
        %v5268 = vmul.f32 %v5035, %v2208
        %v5269 = vmul.f32 %v5039, %v2181
        %v5270 = vmul.f32 %v5039, %v2184
        %v5271 = vmul.f32 %v5039, %v2189
        %v5272 = vmul.f32 %v5039, %v2192
        %v5273 = vmul.f32 %v5039, %v2197
        %v5274 = vmul.f32 %v5039, %v2200
        %v5275 = vmul.f32 %v5039, %v2205
        %v5276 = vmul.f32 %v5039, %v2208
        %v5277 = vmul.f32 %v5043, %v2181
        %v5278 = vmul.f32 %v5043, %v2184
        %v5279 = vmul.f32 %v5043, %v2189
        %v5280 = vmul.f32 %v5043, %v2192
        %v5281 = vmul.f32 %v5043, %v2197
        %v5282 = vmul.f32 %v5043, %v2200
        %v5283 = vmul.f32 %v5043, %v2205
        %v5284 = vmul.f32 %v5043, %v2208
        %v5285 = vmul.f32 %v5047, %v2181
        %v5286 = vmul.f32 %v5047, %v2184
        %v5287 = vmul.f32 %v5047, %v2189
        %v5288 = vmul.f32 %v5047, %v2192
        %v5289 = vmul.f32 %v5047, %v2197
        %v5290 = vmul.f32 %v5047, %v2200
        %v5291 = vmul.f32 %v5047, %v2205
        %v5292 = vmul.f32 %v5047, %v2208
        %v5293 = vmul.f32 %v5051, %v2181
        %v5294 = vmul.f32 %v5051, %v2184
        %v5295 = vmul.f32 %v5051, %v2189
        %v5296 = vmul.f32 %v5051, %v2192
        %v5297 = vmul.f32 %v5051, %v2197
        %v5298 = vmul.f32 %v5051, %v2200
        %v5299 = vmul.f32 %v5051, %v2205
        %v5300 = vmul.f32 %v5051, %v2208
        %v5301 = vmul.f32 %v5055, %v2181
        %v5302 = vmul.f32 %v5055, %v2184
        %v5303 = vmul.f32 %v5055, %v2189
        %v5304 = vmul.f32 %v5055, %v2192
        %v5305 = vmul.f32 %v5055, %v2197
        %v5306 = vmul.f32 %v5055, %v2200
        %v5307 = vmul.f32 %v5055, %v2205
        %v5308 = vmul.f32 %v5055, %v2208
        %v5309 = vmul.f32 %v5059, %v2181
        %v5310 = vmul.f32 %v5059, %v2184
        %v5311 = vmul.f32 %v5059, %v2189
        %v5312 = vmul.f32 %v5059, %v2192
        %v5313 = vmul.f32 %v5059, %v2197
        %v5314 = vmul.f32 %v5059, %v2200
        %v5315 = vmul.f32 %v5059, %v2205
        %v5316 = vmul.f32 %v5059, %v2208
        %v5317 = vadd.f32 %v4484, %v5061
        %v5318 = vadd.f32 %v4485, %v5062
        %v5319 = vadd.f32 %v4486, %v5063
        %v5320 = vadd.f32 %v4487, %v5064
        %v5321 = vadd.f32 %v4488, %v5065
        %v5322 = vadd.f32 %v4489, %v5066
        %v5323 = vadd.f32 %v4490, %v5067
        %v5324 = vadd.f32 %v4491, %v5068
        %v5325 = vadd.f32 %v4492, %v5069
        %v5326 = vadd.f32 %v4493, %v5070
        %v5327 = vadd.f32 %v4494, %v5071
        %v5328 = vadd.f32 %v4495, %v5072
        %v5329 = vadd.f32 %v4496, %v5073
        %v5330 = vadd.f32 %v4497, %v5074
        %v5331 = vadd.f32 %v4498, %v5075
        %v5332 = vadd.f32 %v4499, %v5076
        %v5333 = vadd.f32 %v4500, %v5077
        %v5334 = vadd.f32 %v4501, %v5078
        %v5335 = vadd.f32 %v4502, %v5079
        %v5336 = vadd.f32 %v4503, %v5080
        %v5337 = vadd.f32 %v4504, %v5081
        %v5338 = vadd.f32 %v4505, %v5082
        %v5339 = vadd.f32 %v4506, %v5083
        %v5340 = vadd.f32 %v4507, %v5084
        %v5341 = vadd.f32 %v4508, %v5085
        %v5342 = vadd.f32 %v4509, %v5086
        %v5343 = vadd.f32 %v4510, %v5087
        %v5344 = vadd.f32 %v4511, %v5088
        %v5345 = vadd.f32 %v4512, %v5089
        %v5346 = vadd.f32 %v4513, %v5090
        %v5347 = vadd.f32 %v4514, %v5091
        %v5348 = vadd.f32 %v4515, %v5092
        %v5349 = vadd.f32 %v4516, %v5093
        %v5350 = vadd.f32 %v4517, %v5094
        %v5351 = vadd.f32 %v4518, %v5095
        %v5352 = vadd.f32 %v4519, %v5096
        %v5353 = vadd.f32 %v4520, %v5097
        %v5354 = vadd.f32 %v4521, %v5098
        %v5355 = vadd.f32 %v4522, %v5099
        %v5356 = vadd.f32 %v4523, %v5100
        %v5357 = vadd.f32 %v4524, %v5101
        %v5358 = vadd.f32 %v4525, %v5102
        %v5359 = vadd.f32 %v4526, %v5103
        %v5360 = vadd.f32 %v4527, %v5104
        %v5361 = vadd.f32 %v4528, %v5105
        %v5362 = vadd.f32 %v4529, %v5106
        %v5363 = vadd.f32 %v4530, %v5107
        %v5364 = vadd.f32 %v4531, %v5108
        %v5365 = vadd.f32 %v4532, %v5109
        %v5366 = vadd.f32 %v4533, %v5110
        %v5367 = vadd.f32 %v4534, %v5111
        %v5368 = vadd.f32 %v4535, %v5112
        %v5369 = vadd.f32 %v4536, %v5113
        %v5370 = vadd.f32 %v4537, %v5114
        %v5371 = vadd.f32 %v4538, %v5115
        %v5372 = vadd.f32 %v4539, %v5116
        %v5373 = vadd.f32 %v4540, %v5117
        %v5374 = vadd.f32 %v4541, %v5118
        %v5375 = vadd.f32 %v4542, %v5119
        %v5376 = vadd.f32 %v4543, %v5120
        %v5377 = vadd.f32 %v4544, %v5121
        %v5378 = vadd.f32 %v4545, %v5122
        %v5379 = vadd.f32 %v4546, %v5123
        %v5380 = vadd.f32 %v4547, %v5124
        %v5381 = vadd.f32 %v4548, %v5125
        %v5382 = vadd.f32 %v4549, %v5126
        %v5383 = vadd.f32 %v4550, %v5127
        %v5384 = vadd.f32 %v4551, %v5128
        %v5385 = vadd.f32 %v4552, %v5129
        %v5386 = vadd.f32 %v4553, %v5130
        %v5387 = vadd.f32 %v4554, %v5131
        %v5388 = vadd.f32 %v4555, %v5132
        %v5389 = vadd.f32 %v4556, %v5133
        %v5390 = vadd.f32 %v4557, %v5134
        %v5391 = vadd.f32 %v4558, %v5135
        %v5392 = vadd.f32 %v4559, %v5136
        %v5393 = vadd.f32 %v4560, %v5137
        %v5394 = vadd.f32 %v4561, %v5138
        %v5395 = vadd.f32 %v4562, %v5139
        %v5396 = vadd.f32 %v4563, %v5140
        %v5397 = vadd.f32 %v4564, %v5141
        %v5398 = vadd.f32 %v4565, %v5142
        %v5399 = vadd.f32 %v4566, %v5143
        %v5400 = vadd.f32 %v4567, %v5144
        %v5401 = vadd.f32 %v4568, %v5145
        %v5402 = vadd.f32 %v4569, %v5146
        %v5403 = vadd.f32 %v4570, %v5147
        %v5404 = vadd.f32 %v4571, %v5148
        %v5405 = vadd.f32 %v4572, %v5149
        %v5406 = vadd.f32 %v4573, %v5150
        %v5407 = vadd.f32 %v4574, %v5151
        %v5408 = vadd.f32 %v4575, %v5152
        %v5409 = vadd.f32 %v4576, %v5153
        %v5410 = vadd.f32 %v4577, %v5154
        %v5411 = vadd.f32 %v4578, %v5155
        %v5412 = vadd.f32 %v4579, %v5156
        %v5413 = vadd.f32 %v4580, %v5157
        %v5414 = vadd.f32 %v4581, %v5158
        %v5415 = vadd.f32 %v4582, %v5159
        %v5416 = vadd.f32 %v4583, %v5160
        %v5417 = vadd.f32 %v4584, %v5161
        %v5418 = vadd.f32 %v4585, %v5162
        %v5419 = vadd.f32 %v4586, %v5163
        %v5420 = vadd.f32 %v4587, %v5164
        %v5421 = vadd.f32 %v4588, %v5165
        %v5422 = vadd.f32 %v4589, %v5166
        %v5423 = vadd.f32 %v4590, %v5167
        %v5424 = vadd.f32 %v4591, %v5168
        %v5425 = vadd.f32 %v4592, %v5169
        %v5426 = vadd.f32 %v4593, %v5170
        %v5427 = vadd.f32 %v4594, %v5171
        %v5428 = vadd.f32 %v4595, %v5172
        %v5429 = vadd.f32 %v4596, %v5173
        %v5430 = vadd.f32 %v4597, %v5174
        %v5431 = vadd.f32 %v4598, %v5175
        %v5432 = vadd.f32 %v4599, %v5176
        %v5433 = vadd.f32 %v4600, %v5177
        %v5434 = vadd.f32 %v4601, %v5178
        %v5435 = vadd.f32 %v4602, %v5179
        %v5436 = vadd.f32 %v4603, %v5180
        %v5437 = vadd.f32 %v4604, %v5181
        %v5438 = vadd.f32 %v4605, %v5182
        %v5439 = vadd.f32 %v4606, %v5183
        %v5440 = vadd.f32 %v4607, %v5184
        %v5441 = vadd.f32 %v4608, %v5185
        %v5442 = vadd.f32 %v4609, %v5186
        %v5443 = vadd.f32 %v4610, %v5187
        %v5444 = vadd.f32 %v4611, %v5188
        %v5445 = vadd.f32 %v4612, %v5189
        %v5446 = vadd.f32 %v4613, %v5190
        %v5447 = vadd.f32 %v4614, %v5191
        %v5448 = vadd.f32 %v4615, %v5192
        %v5449 = vadd.f32 %v4616, %v5193
        %v5450 = vadd.f32 %v4617, %v5194
        %v5451 = vadd.f32 %v4618, %v5195
        %v5452 = vadd.f32 %v4619, %v5196
        %v5453 = vadd.f32 %v4620, %v5197
        %v5454 = vadd.f32 %v4621, %v5198
        %v5455 = vadd.f32 %v4622, %v5199
        %v5456 = vadd.f32 %v4623, %v5200
        %v5457 = vadd.f32 %v4624, %v5201
        %v5458 = vadd.f32 %v4625, %v5202
        %v5459 = vadd.f32 %v4626, %v5203
        %v5460 = vadd.f32 %v4627, %v5204
        %v5461 = vadd.f32 %v4628, %v5205
        %v5462 = vadd.f32 %v4629, %v5206
        %v5463 = vadd.f32 %v4630, %v5207
        %v5464 = vadd.f32 %v4631, %v5208
        %v5465 = vadd.f32 %v4632, %v5209
        %v5466 = vadd.f32 %v4633, %v5210
        %v5467 = vadd.f32 %v4634, %v5211
        %v5468 = vadd.f32 %v4635, %v5212
        %v5469 = vadd.f32 %v4636, %v5213
        %v5470 = vadd.f32 %v4637, %v5214
        %v5471 = vadd.f32 %v4638, %v5215
        %v5472 = vadd.f32 %v4639, %v5216
        %v5473 = vadd.f32 %v4640, %v5217
        %v5474 = vadd.f32 %v4641, %v5218
        %v5475 = vadd.f32 %v4642, %v5219
        %v5476 = vadd.f32 %v4643, %v5220
        %v5477 = vadd.f32 %v4644, %v5221
        %v5478 = vadd.f32 %v4645, %v5222
        %v5479 = vadd.f32 %v4646, %v5223
        %v5480 = vadd.f32 %v4647, %v5224
        %v5481 = vadd.f32 %v4648, %v5225
        %v5482 = vadd.f32 %v4649, %v5226
        %v5483 = vadd.f32 %v4650, %v5227
        %v5484 = vadd.f32 %v4651, %v5228
        %v5485 = vadd.f32 %v4652, %v5229
        %v5486 = vadd.f32 %v4653, %v5230
        %v5487 = vadd.f32 %v4654, %v5231
        %v5488 = vadd.f32 %v4655, %v5232
        %v5489 = vadd.f32 %v4656, %v5233
        %v5490 = vadd.f32 %v4657, %v5234
        %v5491 = vadd.f32 %v4658, %v5235
        %v5492 = vadd.f32 %v4659, %v5236
        %v5493 = vadd.f32 %v4660, %v5237
        %v5494 = vadd.f32 %v4661, %v5238
        %v5495 = vadd.f32 %v4662, %v5239
        %v5496 = vadd.f32 %v4663, %v5240
        %v5497 = vadd.f32 %v4664, %v5241
        %v5498 = vadd.f32 %v4665, %v5242
        %v5499 = vadd.f32 %v4666, %v5243
        %v5500 = vadd.f32 %v4667, %v5244
        %v5501 = vadd.f32 %v4668, %v5245
        %v5502 = vadd.f32 %v4669, %v5246
        %v5503 = vadd.f32 %v4670, %v5247
        %v5504 = vadd.f32 %v4671, %v5248
        %v5505 = vadd.f32 %v4672, %v5249
        %v5506 = vadd.f32 %v4673, %v5250
        %v5507 = vadd.f32 %v4674, %v5251
        %v5508 = vadd.f32 %v4675, %v5252
        %v5509 = vadd.f32 %v4676, %v5253
        %v5510 = vadd.f32 %v4677, %v5254
        %v5511 = vadd.f32 %v4678, %v5255
        %v5512 = vadd.f32 %v4679, %v5256
        %v5513 = vadd.f32 %v4680, %v5257
        %v5514 = vadd.f32 %v4681, %v5258
        %v5515 = vadd.f32 %v4682, %v5259
        %v5516 = vadd.f32 %v4683, %v5260
        %v5517 = vadd.f32 %v4684, %v5261
        %v5518 = vadd.f32 %v4685, %v5262
        %v5519 = vadd.f32 %v4686, %v5263
        %v5520 = vadd.f32 %v4687, %v5264
        %v5521 = vadd.f32 %v4688, %v5265
        %v5522 = vadd.f32 %v4689, %v5266
        %v5523 = vadd.f32 %v4690, %v5267
        %v5524 = vadd.f32 %v4691, %v5268
        %v5525 = vadd.f32 %v4692, %v5269
        %v5526 = vadd.f32 %v4693, %v5270
        %v5527 = vadd.f32 %v4694, %v5271
        %v5528 = vadd.f32 %v4695, %v5272
        %v5529 = vadd.f32 %v4696, %v5273
        %v5530 = vadd.f32 %v4697, %v5274
        %v5531 = vadd.f32 %v4698, %v5275
        %v5532 = vadd.f32 %v4699, %v5276
        %v5533 = vadd.f32 %v4700, %v5277
        %v5534 = vadd.f32 %v4701, %v5278
        %v5535 = vadd.f32 %v4702, %v5279
        %v5536 = vadd.f32 %v4703, %v5280
        %v5537 = vadd.f32 %v4704, %v5281
        %v5538 = vadd.f32 %v4705, %v5282
        %v5539 = vadd.f32 %v4706, %v5283
        %v5540 = vadd.f32 %v4707, %v5284
        %v5541 = vadd.f32 %v4708, %v5285
        %v5542 = vadd.f32 %v4709, %v5286
        %v5543 = vadd.f32 %v4710, %v5287
        %v5544 = vadd.f32 %v4711, %v5288
        %v5545 = vadd.f32 %v4712, %v5289
        %v5546 = vadd.f32 %v4713, %v5290
        %v5547 = vadd.f32 %v4714, %v5291
        %v5548 = vadd.f32 %v4715, %v5292
        %v5549 = vadd.f32 %v4716, %v5293
        %v5550 = vadd.f32 %v4717, %v5294
        %v5551 = vadd.f32 %v4718, %v5295
        %v5552 = vadd.f32 %v4719, %v5296
        %v5553 = vadd.f32 %v4720, %v5297
        %v5554 = vadd.f32 %v4721, %v5298
        %v5555 = vadd.f32 %v4722, %v5299
        %v5556 = vadd.f32 %v4723, %v5300
        %v5557 = vadd.f32 %v4724, %v5301
        %v5558 = vadd.f32 %v4725, %v5302
        %v5559 = vadd.f32 %v4726, %v5303
        %v5560 = vadd.f32 %v4727, %v5304
        %v5561 = vadd.f32 %v4728, %v5305
        %v5562 = vadd.f32 %v4729, %v5306
        %v5563 = vadd.f32 %v4730, %v5307
        %v5564 = vadd.f32 %v4731, %v5308
        %v5565 = vadd.f32 %v4732, %v5309
        %v5566 = vadd.f32 %v4733, %v5310
        %v5567 = vadd.f32 %v4734, %v5311
        %v5568 = vadd.f32 %v4735, %v5312
        %v5569 = vadd.f32 %v4736, %v5313
        %v5570 = vadd.f32 %v4737, %v5314
        %v5571 = vadd.f32 %v4738, %v5315
        %v5572 = vadd.f32 %v4739, %v5316
        %s5573 = scalar_lea.vmem [#allocation10], 96
        %v5574 = vld [vmem:[%s5573] sm:$0x1]
        %v5575 = vld [vmem:[%s5573 + $0x1] sm:$0x1]
        %v5576 = vld [vmem:[%s5573 + $0x2] sm:$0x1]
        %v5577 = vld [vmem:[%s5573 + $0x3] sm:$0x1]
        %v5578 = vld [vmem:[%s5573 + $0x4] sm:$0x1]
        %v5579 = vld [vmem:[%s5573 + $0x5] sm:$0x1]
        %v5580 = vld [vmem:[%s5573 + $0x6] sm:$0x1]
        %v5581 = vld [vmem:[%s5573 + $0x7] sm:$0x1]
        %v5582 = vld [vmem:[%s5573 + $0x8] sm:$0x1]
        %v5583 = vld [vmem:[%s5573 + $0x9] sm:$0x1]
        %v5584 = vld [vmem:[%s5573 + $0xa] sm:$0x1]
        %v5585 = vld [vmem:[%s5573 + $0xb] sm:$0x1]
        %v5586 = vld [vmem:[%s5573 + $0xc] sm:$0x1]
        %v5587 = vld [vmem:[%s5573 + $0xd] sm:$0x1]
        %v5588 = vld [vmem:[%s5573 + $0xe] sm:$0x1]
        %v5589 = vld [vmem:[%s5573 + $0xf] sm:$0x1]
        %v5590 = vld [vmem:[%s5573 + $0x10] sm:$0x1]
        %v5591 = vld [vmem:[%s5573 + $0x11] sm:$0x1]
        %v5592 = vld [vmem:[%s5573 + $0x12] sm:$0x1]
        %v5593 = vld [vmem:[%s5573 + $0x13] sm:$0x1]
        %v5594 = vld [vmem:[%s5573 + $0x14] sm:$0x1]
        %v5595 = vld [vmem:[%s5573 + $0x15] sm:$0x1]
        %v5596 = vld [vmem:[%s5573 + $0x16] sm:$0x1]
        %v5597 = vld [vmem:[%s5573 + $0x17] sm:$0x1]
        %v5598 = vld [vmem:[%s5573 + $0x18] sm:$0x1]
        %v5599 = vld [vmem:[%s5573 + $0x19] sm:$0x1]
        %v5600 = vld [vmem:[%s5573 + $0x1a] sm:$0x1]
        %v5601 = vld [vmem:[%s5573 + $0x1b] sm:$0x1]
        %v5602 = vld [vmem:[%s5573 + $0x1c] sm:$0x1]
        %v5603 = vld [vmem:[%s5573 + $0x1d] sm:$0x1]
        %v5604 = vld [vmem:[%s5573 + $0x1e] sm:$0x1]
        %v5605 = vld [vmem:[%s5573 + $0x1f] sm:$0x1]
        %v5638 = vlaneseq
        %v5639 = vshrl.u32 %v5638, 7
        %v5640 = vsub.s32 0, %v5639
        %v5641 = vrot.slane %v5574, %v5640
        %v5642 = vlaneseq
        %v5643 = vshrl.u32 %v5642, 7
        %v5644 = vsub.s32 0, %v5643
        %v5645 = vrot.slane %v5575, %v5644
        %v5646 = vlaneseq
        %v5647 = vshrl.u32 %v5646, 7
        %v5648 = vsub.s32 0, %v5647
        %v5649 = vrot.slane %v5576, %v5648
        %v5650 = vlaneseq
        %v5651 = vshrl.u32 %v5650, 7
        %v5652 = vsub.s32 0, %v5651
        %v5653 = vrot.slane %v5577, %v5652
        %v5654 = vlaneseq
        %v5655 = vshrl.u32 %v5654, 7
        %v5656 = vsub.s32 0, %v5655
        %v5657 = vrot.slane %v5578, %v5656
        %v5658 = vlaneseq
        %v5659 = vshrl.u32 %v5658, 7
        %v5660 = vsub.s32 0, %v5659
        %v5661 = vrot.slane %v5579, %v5660
        %v5662 = vlaneseq
        %v5663 = vshrl.u32 %v5662, 7
        %v5664 = vsub.s32 0, %v5663
        %v5665 = vrot.slane %v5580, %v5664
        %v5666 = vlaneseq
        %v5667 = vshrl.u32 %v5666, 7
        %v5668 = vsub.s32 0, %v5667
        %v5669 = vrot.slane %v5581, %v5668
        %v5670 = vlaneseq
        %v5671 = vshrl.u32 %v5670, 7
        %v5672 = vsub.s32 0, %v5671
        %v5673 = vrot.slane %v5582, %v5672
        %v5674 = vlaneseq
        %v5675 = vshrl.u32 %v5674, 7
        %v5676 = vsub.s32 0, %v5675
        %v5677 = vrot.slane %v5583, %v5676
        %v5678 = vlaneseq
        %v5679 = vshrl.u32 %v5678, 7
        %v5680 = vsub.s32 0, %v5679
        %v5681 = vrot.slane %v5584, %v5680
        %v5682 = vlaneseq
        %v5683 = vshrl.u32 %v5682, 7
        %v5684 = vsub.s32 0, %v5683
        %v5685 = vrot.slane %v5585, %v5684
        %v5686 = vlaneseq
        %v5687 = vshrl.u32 %v5686, 7
        %v5688 = vsub.s32 0, %v5687
        %v5689 = vrot.slane %v5586, %v5688
        %v5690 = vlaneseq
        %v5691 = vshrl.u32 %v5690, 7
        %v5692 = vsub.s32 0, %v5691
        %v5693 = vrot.slane %v5587, %v5692
        %v5694 = vlaneseq
        %v5695 = vshrl.u32 %v5694, 7
        %v5696 = vsub.s32 0, %v5695
        %v5697 = vrot.slane %v5588, %v5696
        %v5698 = vlaneseq
        %v5699 = vshrl.u32 %v5698, 7
        %v5700 = vsub.s32 0, %v5699
        %v5701 = vrot.slane %v5589, %v5700
        %v5702 = vlaneseq
        %v5703 = vshrl.u32 %v5702, 7
        %v5704 = vsub.s32 0, %v5703
        %v5705 = vrot.slane %v5590, %v5704
        %v5706 = vlaneseq
        %v5707 = vshrl.u32 %v5706, 7
        %v5708 = vsub.s32 0, %v5707
        %v5709 = vrot.slane %v5591, %v5708
        %v5710 = vlaneseq
        %v5711 = vshrl.u32 %v5710, 7
        %v5712 = vsub.s32 0, %v5711
        %v5713 = vrot.slane %v5592, %v5712
        %v5714 = vlaneseq
        %v5715 = vshrl.u32 %v5714, 7
        %v5716 = vsub.s32 0, %v5715
        %v5717 = vrot.slane %v5593, %v5716
        %v5718 = vlaneseq
        %v5719 = vshrl.u32 %v5718, 7
        %v5720 = vsub.s32 0, %v5719
        %v5721 = vrot.slane %v5594, %v5720
        %v5722 = vlaneseq
        %v5723 = vshrl.u32 %v5722, 7
        %v5724 = vsub.s32 0, %v5723
        %v5725 = vrot.slane %v5595, %v5724
        %v5726 = vlaneseq
        %v5727 = vshrl.u32 %v5726, 7
        %v5728 = vsub.s32 0, %v5727
        %v5729 = vrot.slane %v5596, %v5728
        %v5730 = vlaneseq
        %v5731 = vshrl.u32 %v5730, 7
        %v5732 = vsub.s32 0, %v5731
        %v5733 = vrot.slane %v5597, %v5732
        %v5734 = vlaneseq
        %v5735 = vshrl.u32 %v5734, 7
        %v5736 = vsub.s32 0, %v5735
        %v5737 = vrot.slane %v5598, %v5736
        %v5738 = vlaneseq
        %v5739 = vshrl.u32 %v5738, 7
        %v5740 = vsub.s32 0, %v5739
        %v5741 = vrot.slane %v5599, %v5740
        %v5742 = vlaneseq
        %v5743 = vshrl.u32 %v5742, 7
        %v5744 = vsub.s32 0, %v5743
        %v5745 = vrot.slane %v5600, %v5744
        %v5746 = vlaneseq
        %v5747 = vshrl.u32 %v5746, 7
        %v5748 = vsub.s32 0, %v5747
        %v5749 = vrot.slane %v5601, %v5748
        %v5750 = vlaneseq
        %v5751 = vshrl.u32 %v5750, 7
        %v5752 = vsub.s32 0, %v5751
        %v5753 = vrot.slane %v5602, %v5752
        %v5754 = vlaneseq
        %v5755 = vshrl.u32 %v5754, 7
        %v5756 = vsub.s32 0, %v5755
        %v5757 = vrot.slane %v5603, %v5756
        %v5758 = vlaneseq
        %v5759 = vshrl.u32 %v5758, 7
        %v5760 = vsub.s32 0, %v5759
        %v5761 = vrot.slane %v5604, %v5760
        %v5762 = vlaneseq
        %v5763 = vshrl.u32 %v5762, 7
        %v5764 = vsub.s32 0, %v5763
        %v5765 = vrot.slane %v5605, %v5764
        %5766 = vset.pattern.permute.xlu0 0
        %5767 = vperm.xlu0 %5766, %v5641
        %v5768 = vpop.permute.xlu0 %5767
        %5770 = vset.pattern.permute.xlu0 0
        %5771 = vperm.xlu0 %5770, %v5645
        %v5772 = vpop.permute.xlu0 %5771
        %5774 = vset.pattern.permute.xlu0 0
        %5775 = vperm.xlu0 %5774, %v5649
        %v5776 = vpop.permute.xlu0 %5775
        %5778 = vset.pattern.permute.xlu0 0
        %5779 = vperm.xlu0 %5778, %v5653
        %v5780 = vpop.permute.xlu0 %5779
        %5782 = vset.pattern.permute.xlu0 0
        %5783 = vperm.xlu0 %5782, %v5657
        %v5784 = vpop.permute.xlu0 %5783
        %5786 = vset.pattern.permute.xlu0 0
        %5787 = vperm.xlu0 %5786, %v5661
        %v5788 = vpop.permute.xlu0 %5787
        %5790 = vset.pattern.permute.xlu0 0
        %5791 = vperm.xlu0 %5790, %v5665
        %v5792 = vpop.permute.xlu0 %5791
        %5794 = vset.pattern.permute.xlu0 0
        %5795 = vperm.xlu0 %5794, %v5669
        %v5796 = vpop.permute.xlu0 %5795
        %5798 = vset.pattern.permute.xlu0 0
        %5799 = vperm.xlu0 %5798, %v5673
        %v5800 = vpop.permute.xlu0 %5799
        %5802 = vset.pattern.permute.xlu0 0
        %5803 = vperm.xlu0 %5802, %v5677
        %v5804 = vpop.permute.xlu0 %5803
        %5806 = vset.pattern.permute.xlu0 0
        %5807 = vperm.xlu0 %5806, %v5681
        %v5808 = vpop.permute.xlu0 %5807
        %5810 = vset.pattern.permute.xlu0 0
        %5811 = vperm.xlu0 %5810, %v5685
        %v5812 = vpop.permute.xlu0 %5811
        %5814 = vset.pattern.permute.xlu0 0
        %5815 = vperm.xlu0 %5814, %v5689
        %v5816 = vpop.permute.xlu0 %5815
        %5818 = vset.pattern.permute.xlu0 0
        %5819 = vperm.xlu0 %5818, %v5693
        %v5820 = vpop.permute.xlu0 %5819
        %5822 = vset.pattern.permute.xlu0 0
        %5823 = vperm.xlu0 %5822, %v5697
        %v5824 = vpop.permute.xlu0 %5823
        %5826 = vset.pattern.permute.xlu0 0
        %5827 = vperm.xlu0 %5826, %v5701
        %v5828 = vpop.permute.xlu0 %5827
        %5830 = vset.pattern.permute.xlu0 0
        %5831 = vperm.xlu0 %5830, %v5705
        %v5832 = vpop.permute.xlu0 %5831
        %5834 = vset.pattern.permute.xlu0 0
        %5835 = vperm.xlu0 %5834, %v5709
        %v5836 = vpop.permute.xlu0 %5835
        %5838 = vset.pattern.permute.xlu0 0
        %5839 = vperm.xlu0 %5838, %v5713
        %v5840 = vpop.permute.xlu0 %5839
        %5842 = vset.pattern.permute.xlu0 0
        %5843 = vperm.xlu0 %5842, %v5717
        %v5844 = vpop.permute.xlu0 %5843
        %5846 = vset.pattern.permute.xlu0 0
        %5847 = vperm.xlu0 %5846, %v5721
        %v5848 = vpop.permute.xlu0 %5847
        %5850 = vset.pattern.permute.xlu0 0
        %5851 = vperm.xlu0 %5850, %v5725
        %v5852 = vpop.permute.xlu0 %5851
        %5854 = vset.pattern.permute.xlu0 0
        %5855 = vperm.xlu0 %5854, %v5729
        %v5856 = vpop.permute.xlu0 %5855
        %5858 = vset.pattern.permute.xlu0 0
        %5859 = vperm.xlu0 %5858, %v5733
        %v5860 = vpop.permute.xlu0 %5859
        %5862 = vset.pattern.permute.xlu0 0
        %5863 = vperm.xlu0 %5862, %v5737
        %v5864 = vpop.permute.xlu0 %5863
        %5866 = vset.pattern.permute.xlu0 0
        %5867 = vperm.xlu0 %5866, %v5741
        %v5868 = vpop.permute.xlu0 %5867
        %5870 = vset.pattern.permute.xlu0 0
        %5871 = vperm.xlu0 %5870, %v5745
        %v5872 = vpop.permute.xlu0 %5871
        %5874 = vset.pattern.permute.xlu0 0
        %5875 = vperm.xlu0 %5874, %v5749
        %v5876 = vpop.permute.xlu0 %5875
        %5878 = vset.pattern.permute.xlu0 0
        %5879 = vperm.xlu0 %5878, %v5753
        %v5880 = vpop.permute.xlu0 %5879
        %5882 = vset.pattern.permute.xlu0 0
        %5883 = vperm.xlu0 %5882, %v5757
        %v5884 = vpop.permute.xlu0 %5883
        %5886 = vset.pattern.permute.xlu0 0
        %5887 = vperm.xlu0 %5886, %v5761
        %v5888 = vpop.permute.xlu0 %5887
        %5890 = vset.pattern.permute.xlu0 0
        %5891 = vperm.xlu0 %5890, %v5765
        %v5892 = vpop.permute.xlu0 %5891
        %v5894 = vmul.f32 %v5768, %v2213
        %v5895 = vmul.f32 %v5768, %v2216
        %v5896 = vmul.f32 %v5768, %v2221
        %v5897 = vmul.f32 %v5768, %v2224
        %v5898 = vmul.f32 %v5768, %v2229
        %v5899 = vmul.f32 %v5768, %v2232
        %v5900 = vmul.f32 %v5768, %v2237
        %v5901 = vmul.f32 %v5768, %v2240
        %v5902 = vmul.f32 %v5772, %v2213
        %v5903 = vmul.f32 %v5772, %v2216
        %v5904 = vmul.f32 %v5772, %v2221
        %v5905 = vmul.f32 %v5772, %v2224
        %v5906 = vmul.f32 %v5772, %v2229
        %v5907 = vmul.f32 %v5772, %v2232
        %v5908 = vmul.f32 %v5772, %v2237
        %v5909 = vmul.f32 %v5772, %v2240
        %v5910 = vmul.f32 %v5776, %v2213
        %v5911 = vmul.f32 %v5776, %v2216
        %v5912 = vmul.f32 %v5776, %v2221
        %v5913 = vmul.f32 %v5776, %v2224
        %v5914 = vmul.f32 %v5776, %v2229
        %v5915 = vmul.f32 %v5776, %v2232
        %v5916 = vmul.f32 %v5776, %v2237
        %v5917 = vmul.f32 %v5776, %v2240
        %v5918 = vmul.f32 %v5780, %v2213
        %v5919 = vmul.f32 %v5780, %v2216
        %v5920 = vmul.f32 %v5780, %v2221
        %v5921 = vmul.f32 %v5780, %v2224
        %v5922 = vmul.f32 %v5780, %v2229
        %v5923 = vmul.f32 %v5780, %v2232
        %v5924 = vmul.f32 %v5780, %v2237
        %v5925 = vmul.f32 %v5780, %v2240
        %v5926 = vmul.f32 %v5784, %v2213
        %v5927 = vmul.f32 %v5784, %v2216
        %v5928 = vmul.f32 %v5784, %v2221
        %v5929 = vmul.f32 %v5784, %v2224
        %v5930 = vmul.f32 %v5784, %v2229
        %v5931 = vmul.f32 %v5784, %v2232
        %v5932 = vmul.f32 %v5784, %v2237
        %v5933 = vmul.f32 %v5784, %v2240
        %v5934 = vmul.f32 %v5788, %v2213
        %v5935 = vmul.f32 %v5788, %v2216
        %v5936 = vmul.f32 %v5788, %v2221
        %v5937 = vmul.f32 %v5788, %v2224
        %v5938 = vmul.f32 %v5788, %v2229
        %v5939 = vmul.f32 %v5788, %v2232
        %v5940 = vmul.f32 %v5788, %v2237
        %v5941 = vmul.f32 %v5788, %v2240
        %v5942 = vmul.f32 %v5792, %v2213
        %v5943 = vmul.f32 %v5792, %v2216
        %v5944 = vmul.f32 %v5792, %v2221
        %v5945 = vmul.f32 %v5792, %v2224
        %v5946 = vmul.f32 %v5792, %v2229
        %v5947 = vmul.f32 %v5792, %v2232
        %v5948 = vmul.f32 %v5792, %v2237
        %v5949 = vmul.f32 %v5792, %v2240
        %v5950 = vmul.f32 %v5796, %v2213
        %v5951 = vmul.f32 %v5796, %v2216
        %v5952 = vmul.f32 %v5796, %v2221
        %v5953 = vmul.f32 %v5796, %v2224
        %v5954 = vmul.f32 %v5796, %v2229
        %v5955 = vmul.f32 %v5796, %v2232
        %v5956 = vmul.f32 %v5796, %v2237
        %v5957 = vmul.f32 %v5796, %v2240
        %v5958 = vmul.f32 %v5800, %v2213
        %v5959 = vmul.f32 %v5800, %v2216
        %v5960 = vmul.f32 %v5800, %v2221
        %v5961 = vmul.f32 %v5800, %v2224
        %v5962 = vmul.f32 %v5800, %v2229
        %v5963 = vmul.f32 %v5800, %v2232
        %v5964 = vmul.f32 %v5800, %v2237
        %v5965 = vmul.f32 %v5800, %v2240
        %v5966 = vmul.f32 %v5804, %v2213
        %v5967 = vmul.f32 %v5804, %v2216
        %v5968 = vmul.f32 %v5804, %v2221
        %v5969 = vmul.f32 %v5804, %v2224
        %v5970 = vmul.f32 %v5804, %v2229
        %v5971 = vmul.f32 %v5804, %v2232
        %v5972 = vmul.f32 %v5804, %v2237
        %v5973 = vmul.f32 %v5804, %v2240
        %v5974 = vmul.f32 %v5808, %v2213
        %v5975 = vmul.f32 %v5808, %v2216
        %v5976 = vmul.f32 %v5808, %v2221
        %v5977 = vmul.f32 %v5808, %v2224
        %v5978 = vmul.f32 %v5808, %v2229
        %v5979 = vmul.f32 %v5808, %v2232
        %v5980 = vmul.f32 %v5808, %v2237
        %v5981 = vmul.f32 %v5808, %v2240
        %v5982 = vmul.f32 %v5812, %v2213
        %v5983 = vmul.f32 %v5812, %v2216
        %v5984 = vmul.f32 %v5812, %v2221
        %v5985 = vmul.f32 %v5812, %v2224
        %v5986 = vmul.f32 %v5812, %v2229
        %v5987 = vmul.f32 %v5812, %v2232
        %v5988 = vmul.f32 %v5812, %v2237
        %v5989 = vmul.f32 %v5812, %v2240
        %v5990 = vmul.f32 %v5816, %v2213
        %v5991 = vmul.f32 %v5816, %v2216
        %v5992 = vmul.f32 %v5816, %v2221
        %v5993 = vmul.f32 %v5816, %v2224
        %v5994 = vmul.f32 %v5816, %v2229
        %v5995 = vmul.f32 %v5816, %v2232
        %v5996 = vmul.f32 %v5816, %v2237
        %v5997 = vmul.f32 %v5816, %v2240
        %v5998 = vmul.f32 %v5820, %v2213
        %v5999 = vmul.f32 %v5820, %v2216
        %v6000 = vmul.f32 %v5820, %v2221
        %v6001 = vmul.f32 %v5820, %v2224
        %v6002 = vmul.f32 %v5820, %v2229
        %v6003 = vmul.f32 %v5820, %v2232
        %v6004 = vmul.f32 %v5820, %v2237
        %v6005 = vmul.f32 %v5820, %v2240
        %v6006 = vmul.f32 %v5824, %v2213
        %v6007 = vmul.f32 %v5824, %v2216
        %v6008 = vmul.f32 %v5824, %v2221
        %v6009 = vmul.f32 %v5824, %v2224
        %v6010 = vmul.f32 %v5824, %v2229
        %v6011 = vmul.f32 %v5824, %v2232
        %v6012 = vmul.f32 %v5824, %v2237
        %v6013 = vmul.f32 %v5824, %v2240
        %v6014 = vmul.f32 %v5828, %v2213
        %v6015 = vmul.f32 %v5828, %v2216
        %v6016 = vmul.f32 %v5828, %v2221
        %v6017 = vmul.f32 %v5828, %v2224
        %v6018 = vmul.f32 %v5828, %v2229
        %v6019 = vmul.f32 %v5828, %v2232
        %v6020 = vmul.f32 %v5828, %v2237
        %v6021 = vmul.f32 %v5828, %v2240
        %v6022 = vmul.f32 %v5832, %v2213
        %v6023 = vmul.f32 %v5832, %v2216
        %v6024 = vmul.f32 %v5832, %v2221
        %v6025 = vmul.f32 %v5832, %v2224
        %v6026 = vmul.f32 %v5832, %v2229
        %v6027 = vmul.f32 %v5832, %v2232
        %v6028 = vmul.f32 %v5832, %v2237
        %v6029 = vmul.f32 %v5832, %v2240
        %v6030 = vmul.f32 %v5836, %v2213
        %v6031 = vmul.f32 %v5836, %v2216
        %v6032 = vmul.f32 %v5836, %v2221
        %v6033 = vmul.f32 %v5836, %v2224
        %v6034 = vmul.f32 %v5836, %v2229
        %v6035 = vmul.f32 %v5836, %v2232
        %v6036 = vmul.f32 %v5836, %v2237
        %v6037 = vmul.f32 %v5836, %v2240
        %v6038 = vmul.f32 %v5840, %v2213
        %v6039 = vmul.f32 %v5840, %v2216
        %v6040 = vmul.f32 %v5840, %v2221
        %v6041 = vmul.f32 %v5840, %v2224
        %v6042 = vmul.f32 %v5840, %v2229
        %v6043 = vmul.f32 %v5840, %v2232
        %v6044 = vmul.f32 %v5840, %v2237
        %v6045 = vmul.f32 %v5840, %v2240
        %v6046 = vmul.f32 %v5844, %v2213
        %v6047 = vmul.f32 %v5844, %v2216
        %v6048 = vmul.f32 %v5844, %v2221
        %v6049 = vmul.f32 %v5844, %v2224
        %v6050 = vmul.f32 %v5844, %v2229
        %v6051 = vmul.f32 %v5844, %v2232
        %v6052 = vmul.f32 %v5844, %v2237
        %v6053 = vmul.f32 %v5844, %v2240
        %v6054 = vmul.f32 %v5848, %v2213
        %v6055 = vmul.f32 %v5848, %v2216
        %v6056 = vmul.f32 %v5848, %v2221
        %v6057 = vmul.f32 %v5848, %v2224
        %v6058 = vmul.f32 %v5848, %v2229
        %v6059 = vmul.f32 %v5848, %v2232
        %v6060 = vmul.f32 %v5848, %v2237
        %v6061 = vmul.f32 %v5848, %v2240
        %v6062 = vmul.f32 %v5852, %v2213
        %v6063 = vmul.f32 %v5852, %v2216
        %v6064 = vmul.f32 %v5852, %v2221
        %v6065 = vmul.f32 %v5852, %v2224
        %v6066 = vmul.f32 %v5852, %v2229
        %v6067 = vmul.f32 %v5852, %v2232
        %v6068 = vmul.f32 %v5852, %v2237
        %v6069 = vmul.f32 %v5852, %v2240
        %v6070 = vmul.f32 %v5856, %v2213
        %v6071 = vmul.f32 %v5856, %v2216
        %v6072 = vmul.f32 %v5856, %v2221
        %v6073 = vmul.f32 %v5856, %v2224
        %v6074 = vmul.f32 %v5856, %v2229
        %v6075 = vmul.f32 %v5856, %v2232
        %v6076 = vmul.f32 %v5856, %v2237
        %v6077 = vmul.f32 %v5856, %v2240
        %v6078 = vmul.f32 %v5860, %v2213
        %v6079 = vmul.f32 %v5860, %v2216
        %v6080 = vmul.f32 %v5860, %v2221
        %v6081 = vmul.f32 %v5860, %v2224
        %v6082 = vmul.f32 %v5860, %v2229
        %v6083 = vmul.f32 %v5860, %v2232
        %v6084 = vmul.f32 %v5860, %v2237
        %v6085 = vmul.f32 %v5860, %v2240
        %v6086 = vmul.f32 %v5864, %v2213
        %v6087 = vmul.f32 %v5864, %v2216
        %v6088 = vmul.f32 %v5864, %v2221
        %v6089 = vmul.f32 %v5864, %v2224
        %v6090 = vmul.f32 %v5864, %v2229
        %v6091 = vmul.f32 %v5864, %v2232
        %v6092 = vmul.f32 %v5864, %v2237
        %v6093 = vmul.f32 %v5864, %v2240
        %v6094 = vmul.f32 %v5868, %v2213
        %v6095 = vmul.f32 %v5868, %v2216
        %v6096 = vmul.f32 %v5868, %v2221
        %v6097 = vmul.f32 %v5868, %v2224
        %v6098 = vmul.f32 %v5868, %v2229
        %v6099 = vmul.f32 %v5868, %v2232
        %v6100 = vmul.f32 %v5868, %v2237
        %v6101 = vmul.f32 %v5868, %v2240
        %v6102 = vmul.f32 %v5872, %v2213
        %v6103 = vmul.f32 %v5872, %v2216
        %v6104 = vmul.f32 %v5872, %v2221
        %v6105 = vmul.f32 %v5872, %v2224
        %v6106 = vmul.f32 %v5872, %v2229
        %v6107 = vmul.f32 %v5872, %v2232
        %v6108 = vmul.f32 %v5872, %v2237
        %v6109 = vmul.f32 %v5872, %v2240
        %v6110 = vmul.f32 %v5876, %v2213
        %v6111 = vmul.f32 %v5876, %v2216
        %v6112 = vmul.f32 %v5876, %v2221
        %v6113 = vmul.f32 %v5876, %v2224
        %v6114 = vmul.f32 %v5876, %v2229
        %v6115 = vmul.f32 %v5876, %v2232
        %v6116 = vmul.f32 %v5876, %v2237
        %v6117 = vmul.f32 %v5876, %v2240
        %v6118 = vmul.f32 %v5880, %v2213
        %v6119 = vmul.f32 %v5880, %v2216
        %v6120 = vmul.f32 %v5880, %v2221
        %v6121 = vmul.f32 %v5880, %v2224
        %v6122 = vmul.f32 %v5880, %v2229
        %v6123 = vmul.f32 %v5880, %v2232
        %v6124 = vmul.f32 %v5880, %v2237
        %v6125 = vmul.f32 %v5880, %v2240
        %v6126 = vmul.f32 %v5884, %v2213
        %v6127 = vmul.f32 %v5884, %v2216
        %v6128 = vmul.f32 %v5884, %v2221
        %v6129 = vmul.f32 %v5884, %v2224
        %v6130 = vmul.f32 %v5884, %v2229
        %v6131 = vmul.f32 %v5884, %v2232
        %v6132 = vmul.f32 %v5884, %v2237
        %v6133 = vmul.f32 %v5884, %v2240
        %v6134 = vmul.f32 %v5888, %v2213
        %v6135 = vmul.f32 %v5888, %v2216
        %v6136 = vmul.f32 %v5888, %v2221
        %v6137 = vmul.f32 %v5888, %v2224
        %v6138 = vmul.f32 %v5888, %v2229
        %v6139 = vmul.f32 %v5888, %v2232
        %v6140 = vmul.f32 %v5888, %v2237
        %v6141 = vmul.f32 %v5888, %v2240
        %v6142 = vmul.f32 %v5892, %v2213
        %v6143 = vmul.f32 %v5892, %v2216
        %v6144 = vmul.f32 %v5892, %v2221
        %v6145 = vmul.f32 %v5892, %v2224
        %v6146 = vmul.f32 %v5892, %v2229
        %v6147 = vmul.f32 %v5892, %v2232
        %v6148 = vmul.f32 %v5892, %v2237
        %v6149 = vmul.f32 %v5892, %v2240
        %v6150 = vadd.f32 %v5317, %v5894
        %v6151 = vadd.f32 %v5318, %v5895
        %v6152 = vadd.f32 %v5319, %v5896
        %v6153 = vadd.f32 %v5320, %v5897
        %v6154 = vadd.f32 %v5321, %v5898
        %v6155 = vadd.f32 %v5322, %v5899
        %v6156 = vadd.f32 %v5323, %v5900
        %v6157 = vadd.f32 %v5324, %v5901
        %v6158 = vadd.f32 %v5325, %v5902
        %v6159 = vadd.f32 %v5326, %v5903
        %v6160 = vadd.f32 %v5327, %v5904
        %v6161 = vadd.f32 %v5328, %v5905
        %v6162 = vadd.f32 %v5329, %v5906
        %v6163 = vadd.f32 %v5330, %v5907
        %v6164 = vadd.f32 %v5331, %v5908
        %v6165 = vadd.f32 %v5332, %v5909
        %v6166 = vadd.f32 %v5333, %v5910
        %v6167 = vadd.f32 %v5334, %v5911
        %v6168 = vadd.f32 %v5335, %v5912
        %v6169 = vadd.f32 %v5336, %v5913
        %v6170 = vadd.f32 %v5337, %v5914
        %v6171 = vadd.f32 %v5338, %v5915
        %v6172 = vadd.f32 %v5339, %v5916
        %v6173 = vadd.f32 %v5340, %v5917
        %v6174 = vadd.f32 %v5341, %v5918
        %v6175 = vadd.f32 %v5342, %v5919
        %v6176 = vadd.f32 %v5343, %v5920
        %v6177 = vadd.f32 %v5344, %v5921
        %v6178 = vadd.f32 %v5345, %v5922
        %v6179 = vadd.f32 %v5346, %v5923
        %v6180 = vadd.f32 %v5347, %v5924
        %v6181 = vadd.f32 %v5348, %v5925
        %v6182 = vadd.f32 %v5349, %v5926
        %v6183 = vadd.f32 %v5350, %v5927
        %v6184 = vadd.f32 %v5351, %v5928
        %v6185 = vadd.f32 %v5352, %v5929
        %v6186 = vadd.f32 %v5353, %v5930
        %v6187 = vadd.f32 %v5354, %v5931
        %v6188 = vadd.f32 %v5355, %v5932
        %v6189 = vadd.f32 %v5356, %v5933
        %v6190 = vadd.f32 %v5357, %v5934
        %v6191 = vadd.f32 %v5358, %v5935
        %v6192 = vadd.f32 %v5359, %v5936
        %v6193 = vadd.f32 %v5360, %v5937
        %v6194 = vadd.f32 %v5361, %v5938
        %v6195 = vadd.f32 %v5362, %v5939
        %v6196 = vadd.f32 %v5363, %v5940
        %v6197 = vadd.f32 %v5364, %v5941
        %v6198 = vadd.f32 %v5365, %v5942
        %v6199 = vadd.f32 %v5366, %v5943
        %v6200 = vadd.f32 %v5367, %v5944
        %v6201 = vadd.f32 %v5368, %v5945
        %v6202 = vadd.f32 %v5369, %v5946
        %v6203 = vadd.f32 %v5370, %v5947
        %v6204 = vadd.f32 %v5371, %v5948
        %v6205 = vadd.f32 %v5372, %v5949
        %v6206 = vadd.f32 %v5373, %v5950
        %v6207 = vadd.f32 %v5374, %v5951
        %v6208 = vadd.f32 %v5375, %v5952
        %v6209 = vadd.f32 %v5376, %v5953
        %v6210 = vadd.f32 %v5377, %v5954
        %v6211 = vadd.f32 %v5378, %v5955
        %v6212 = vadd.f32 %v5379, %v5956
        %v6213 = vadd.f32 %v5380, %v5957
        %v6214 = vadd.f32 %v5381, %v5958
        %v6215 = vadd.f32 %v5382, %v5959
        %v6216 = vadd.f32 %v5383, %v5960
        %v6217 = vadd.f32 %v5384, %v5961
        %v6218 = vadd.f32 %v5385, %v5962
        %v6219 = vadd.f32 %v5386, %v5963
        %v6220 = vadd.f32 %v5387, %v5964
        %v6221 = vadd.f32 %v5388, %v5965
        %v6222 = vadd.f32 %v5389, %v5966
        %v6223 = vadd.f32 %v5390, %v5967
        %v6224 = vadd.f32 %v5391, %v5968
        %v6225 = vadd.f32 %v5392, %v5969
        %v6226 = vadd.f32 %v5393, %v5970
        %v6227 = vadd.f32 %v5394, %v5971
        %v6228 = vadd.f32 %v5395, %v5972
        %v6229 = vadd.f32 %v5396, %v5973
        %v6230 = vadd.f32 %v5397, %v5974
        %v6231 = vadd.f32 %v5398, %v5975
        %v6232 = vadd.f32 %v5399, %v5976
        %v6233 = vadd.f32 %v5400, %v5977
        %v6234 = vadd.f32 %v5401, %v5978
        %v6235 = vadd.f32 %v5402, %v5979
        %v6236 = vadd.f32 %v5403, %v5980
        %v6237 = vadd.f32 %v5404, %v5981
        %v6238 = vadd.f32 %v5405, %v5982
        %v6239 = vadd.f32 %v5406, %v5983
        %v6240 = vadd.f32 %v5407, %v5984
        %v6241 = vadd.f32 %v5408, %v5985
        %v6242 = vadd.f32 %v5409, %v5986
        %v6243 = vadd.f32 %v5410, %v5987
        %v6244 = vadd.f32 %v5411, %v5988
        %v6245 = vadd.f32 %v5412, %v5989
        %v6246 = vadd.f32 %v5413, %v5990
        %v6247 = vadd.f32 %v5414, %v5991
        %v6248 = vadd.f32 %v5415, %v5992
        %v6249 = vadd.f32 %v5416, %v5993
        %v6250 = vadd.f32 %v5417, %v5994
        %v6251 = vadd.f32 %v5418, %v5995
        %v6252 = vadd.f32 %v5419, %v5996
        %v6253 = vadd.f32 %v5420, %v5997
        %v6254 = vadd.f32 %v5421, %v5998
        %v6255 = vadd.f32 %v5422, %v5999
        %v6256 = vadd.f32 %v5423, %v6000
        %v6257 = vadd.f32 %v5424, %v6001
        %v6258 = vadd.f32 %v5425, %v6002
        %v6259 = vadd.f32 %v5426, %v6003
        %v6260 = vadd.f32 %v5427, %v6004
        %v6261 = vadd.f32 %v5428, %v6005
        %v6262 = vadd.f32 %v5429, %v6006
        %v6263 = vadd.f32 %v5430, %v6007
        %v6264 = vadd.f32 %v5431, %v6008
        %v6265 = vadd.f32 %v5432, %v6009
        %v6266 = vadd.f32 %v5433, %v6010
        %v6267 = vadd.f32 %v5434, %v6011
        %v6268 = vadd.f32 %v5435, %v6012
        %v6269 = vadd.f32 %v5436, %v6013
        %v6270 = vadd.f32 %v5437, %v6014
        %v6271 = vadd.f32 %v5438, %v6015
        %v6272 = vadd.f32 %v5439, %v6016
        %v6273 = vadd.f32 %v5440, %v6017
        %v6274 = vadd.f32 %v5441, %v6018
        %v6275 = vadd.f32 %v5442, %v6019
        %v6276 = vadd.f32 %v5443, %v6020
        %v6277 = vadd.f32 %v5444, %v6021
        %v6278 = vadd.f32 %v5445, %v6022
        %v6279 = vadd.f32 %v5446, %v6023
        %v6280 = vadd.f32 %v5447, %v6024
        %v6281 = vadd.f32 %v5448, %v6025
        %v6282 = vadd.f32 %v5449, %v6026
        %v6283 = vadd.f32 %v5450, %v6027
        %v6284 = vadd.f32 %v5451, %v6028
        %v6285 = vadd.f32 %v5452, %v6029
        %v6286 = vadd.f32 %v5453, %v6030
        %v6287 = vadd.f32 %v5454, %v6031
        %v6288 = vadd.f32 %v5455, %v6032
        %v6289 = vadd.f32 %v5456, %v6033
        %v6290 = vadd.f32 %v5457, %v6034
        %v6291 = vadd.f32 %v5458, %v6035
        %v6292 = vadd.f32 %v5459, %v6036
        %v6293 = vadd.f32 %v5460, %v6037
        %v6294 = vadd.f32 %v5461, %v6038
        %v6295 = vadd.f32 %v5462, %v6039
        %v6296 = vadd.f32 %v5463, %v6040
        %v6297 = vadd.f32 %v5464, %v6041
        %v6298 = vadd.f32 %v5465, %v6042
        %v6299 = vadd.f32 %v5466, %v6043
        %v6300 = vadd.f32 %v5467, %v6044
        %v6301 = vadd.f32 %v5468, %v6045
        %v6302 = vadd.f32 %v5469, %v6046
        %v6303 = vadd.f32 %v5470, %v6047
        %v6304 = vadd.f32 %v5471, %v6048
        %v6305 = vadd.f32 %v5472, %v6049
        %v6306 = vadd.f32 %v5473, %v6050
        %v6307 = vadd.f32 %v5474, %v6051
        %v6308 = vadd.f32 %v5475, %v6052
        %v6309 = vadd.f32 %v5476, %v6053
        %v6310 = vadd.f32 %v5477, %v6054
        %v6311 = vadd.f32 %v5478, %v6055
        %v6312 = vadd.f32 %v5479, %v6056
        %v6313 = vadd.f32 %v5480, %v6057
        %v6314 = vadd.f32 %v5481, %v6058
        %v6315 = vadd.f32 %v5482, %v6059
        %v6316 = vadd.f32 %v5483, %v6060
        %v6317 = vadd.f32 %v5484, %v6061
        %v6318 = vadd.f32 %v5485, %v6062
        %v6319 = vadd.f32 %v5486, %v6063
        %v6320 = vadd.f32 %v5487, %v6064
        %v6321 = vadd.f32 %v5488, %v6065
        %v6322 = vadd.f32 %v5489, %v6066
        %v6323 = vadd.f32 %v5490, %v6067
        %v6324 = vadd.f32 %v5491, %v6068
        %v6325 = vadd.f32 %v5492, %v6069
        %v6326 = vadd.f32 %v5493, %v6070
        %v6327 = vadd.f32 %v5494, %v6071
        %v6328 = vadd.f32 %v5495, %v6072
        %v6329 = vadd.f32 %v5496, %v6073
        %v6330 = vadd.f32 %v5497, %v6074
        %v6331 = vadd.f32 %v5498, %v6075
        %v6332 = vadd.f32 %v5499, %v6076
        %v6333 = vadd.f32 %v5500, %v6077
        %v6334 = vadd.f32 %v5501, %v6078
        %v6335 = vadd.f32 %v5502, %v6079
        %v6336 = vadd.f32 %v5503, %v6080
        %v6337 = vadd.f32 %v5504, %v6081
        %v6338 = vadd.f32 %v5505, %v6082
        %v6339 = vadd.f32 %v5506, %v6083
        %v6340 = vadd.f32 %v5507, %v6084
        %v6341 = vadd.f32 %v5508, %v6085
        %v6342 = vadd.f32 %v5509, %v6086
        %v6343 = vadd.f32 %v5510, %v6087
        %v6344 = vadd.f32 %v5511, %v6088
        %v6345 = vadd.f32 %v5512, %v6089
        %v6346 = vadd.f32 %v5513, %v6090
        %v6347 = vadd.f32 %v5514, %v6091
        %v6348 = vadd.f32 %v5515, %v6092
        %v6349 = vadd.f32 %v5516, %v6093
        %v6350 = vadd.f32 %v5517, %v6094
        %v6351 = vadd.f32 %v5518, %v6095
        %v6352 = vadd.f32 %v5519, %v6096
        %v6353 = vadd.f32 %v5520, %v6097
        %v6354 = vadd.f32 %v5521, %v6098
        %v6355 = vadd.f32 %v5522, %v6099
        %v6356 = vadd.f32 %v5523, %v6100
        %v6357 = vadd.f32 %v5524, %v6101
        %v6358 = vadd.f32 %v5525, %v6102
        %v6359 = vadd.f32 %v5526, %v6103
        %v6360 = vadd.f32 %v5527, %v6104
        %v6361 = vadd.f32 %v5528, %v6105
        %v6362 = vadd.f32 %v5529, %v6106
        %v6363 = vadd.f32 %v5530, %v6107
        %v6364 = vadd.f32 %v5531, %v6108
        %v6365 = vadd.f32 %v5532, %v6109
        %v6366 = vadd.f32 %v5533, %v6110
        %v6367 = vadd.f32 %v5534, %v6111
        %v6368 = vadd.f32 %v5535, %v6112
        %v6369 = vadd.f32 %v5536, %v6113
        %v6370 = vadd.f32 %v5537, %v6114
        %v6371 = vadd.f32 %v5538, %v6115
        %v6372 = vadd.f32 %v5539, %v6116
        %v6373 = vadd.f32 %v5540, %v6117
        %v6374 = vadd.f32 %v5541, %v6118
        %v6375 = vadd.f32 %v5542, %v6119
        %v6376 = vadd.f32 %v5543, %v6120
        %v6377 = vadd.f32 %v5544, %v6121
        %v6378 = vadd.f32 %v5545, %v6122
        %v6379 = vadd.f32 %v5546, %v6123
        %v6380 = vadd.f32 %v5547, %v6124
        %v6381 = vadd.f32 %v5548, %v6125
        %v6382 = vadd.f32 %v5549, %v6126
        %v6383 = vadd.f32 %v5550, %v6127
        %v6384 = vadd.f32 %v5551, %v6128
        %v6385 = vadd.f32 %v5552, %v6129
        %v6386 = vadd.f32 %v5553, %v6130
        %v6387 = vadd.f32 %v5554, %v6131
        %v6388 = vadd.f32 %v5555, %v6132
        %v6389 = vadd.f32 %v5556, %v6133
        %v6390 = vadd.f32 %v5557, %v6134
        %v6391 = vadd.f32 %v5558, %v6135
        %v6392 = vadd.f32 %v5559, %v6136
        %v6393 = vadd.f32 %v5560, %v6137
        %v6394 = vadd.f32 %v5561, %v6138
        %v6395 = vadd.f32 %v5562, %v6139
        %v6396 = vadd.f32 %v5563, %v6140
        %v6397 = vadd.f32 %v5564, %v6141
        %v6398 = vadd.f32 %v5565, %v6142
        %v6399 = vadd.f32 %v5566, %v6143
        %v6400 = vadd.f32 %v5567, %v6144
        %v6401 = vadd.f32 %v5568, %v6145
        %v6402 = vadd.f32 %v5569, %v6146
        %v6403 = vadd.f32 %v5570, %v6147
        %v6404 = vadd.f32 %v5571, %v6148
        %v6405 = vadd.f32 %v5572, %v6149
        %vm6406 = vcmask 31744
        %6407 = vst.msk [vmem:[%s398] sm:$0xff] %vm6406, %v6150
        %6408 = vst.msk [vmem:[%s398 + $0x8] sm:$0xff] %vm6406, %v6151
        %6409 = vst.msk [vmem:[%s398 + $0x10] sm:$0xff] %vm6406, %v6152
        %6410 = vst.msk [vmem:[%s398 + $0x18] sm:$0xff] %vm6406, %v6153
        %6411 = vst.msk [vmem:[%s398 + $0x20] sm:$0xff] %vm6406, %v6154
        %6412 = vst.msk [vmem:[%s398 + $0x28] sm:$0xff] %vm6406, %v6155
        %6413 = vst.msk [vmem:[%s398 + $0x30] sm:$0xff] %vm6406, %v6156
        %6414 = vst.msk [vmem:[%s398 + $0x38] sm:$0xff] %vm6406, %v6157
        %6415 = vst.msk [vmem:[%s398 + $0x40] sm:$0xff] %vm6406, %v6158
        %6416 = vst.msk [vmem:[%s398 + $0x48] sm:$0xff] %vm6406, %v6159
        %6417 = vst.msk [vmem:[%s398 + $0x50] sm:$0xff] %vm6406, %v6160
        %6418 = vst.msk [vmem:[%s398 + $0x58] sm:$0xff] %vm6406, %v6161
        %6419 = vst.msk [vmem:[%s398 + $0x60] sm:$0xff] %vm6406, %v6162
        %6420 = vst.msk [vmem:[%s398 + $0x68] sm:$0xff] %vm6406, %v6163
        %6421 = vst.msk [vmem:[%s398 + $0x70] sm:$0xff] %vm6406, %v6164
        %6422 = vst.msk [vmem:[%s398 + $0x78] sm:$0xff] %vm6406, %v6165
        %6423 = vst.msk [vmem:[%s398 + $0x80] sm:$0xff] %vm6406, %v6166
        %6424 = vst.msk [vmem:[%s398 + $0x88] sm:$0xff] %vm6406, %v6167
        %6425 = vst.msk [vmem:[%s398 + $0x90] sm:$0xff] %vm6406, %v6168
        %6426 = vst.msk [vmem:[%s398 + $0x98] sm:$0xff] %vm6406, %v6169
        %6427 = vst.msk [vmem:[%s398 + $0xa0] sm:$0xff] %vm6406, %v6170
        %6428 = vst.msk [vmem:[%s398 + $0xa8] sm:$0xff] %vm6406, %v6171
        %6429 = vst.msk [vmem:[%s398 + $0xb0] sm:$0xff] %vm6406, %v6172
        %6430 = vst.msk [vmem:[%s398 + $0xb8] sm:$0xff] %vm6406, %v6173
        %6431 = vst.msk [vmem:[%s398 + $0xc0] sm:$0xff] %vm6406, %v6174
        %6432 = vst.msk [vmem:[%s398 + $0xc8] sm:$0xff] %vm6406, %v6175
        %6433 = vst.msk [vmem:[%s398 + $0xd0] sm:$0xff] %vm6406, %v6176
        %6434 = vst.msk [vmem:[%s398 + $0xd8] sm:$0xff] %vm6406, %v6177
        %6435 = vst.msk [vmem:[%s398 + $0xe0] sm:$0xff] %vm6406, %v6178
        %6436 = vst.msk [vmem:[%s398 + $0xe8] sm:$0xff] %vm6406, %v6179
        %6437 = vst.msk [vmem:[%s398 + $0xf0] sm:$0xff] %vm6406, %v6180
        %6438 = vst.msk [vmem:[%s398 + $0xf8] sm:$0xff] %vm6406, %v6181
        %6439 = vst.msk [vmem:[%s398 + $0x100] sm:$0xff] %vm6406, %v6182
        %6440 = vst.msk [vmem:[%s398 + $0x108] sm:$0xff] %vm6406, %v6183
        %6441 = vst.msk [vmem:[%s398 + $0x110] sm:$0xff] %vm6406, %v6184
        %6442 = vst.msk [vmem:[%s398 + $0x118] sm:$0xff] %vm6406, %v6185
        %6443 = vst.msk [vmem:[%s398 + $0x120] sm:$0xff] %vm6406, %v6186
        %6444 = vst.msk [vmem:[%s398 + $0x128] sm:$0xff] %vm6406, %v6187
        %6445 = vst.msk [vmem:[%s398 + $0x130] sm:$0xff] %vm6406, %v6188
        %6446 = vst.msk [vmem:[%s398 + $0x138] sm:$0xff] %vm6406, %v6189
        %6447 = vst.msk [vmem:[%s398 + $0x140] sm:$0xff] %vm6406, %v6190
        %6448 = vst.msk [vmem:[%s398 + $0x148] sm:$0xff] %vm6406, %v6191
        %6449 = vst.msk [vmem:[%s398 + $0x150] sm:$0xff] %vm6406, %v6192
        %6450 = vst.msk [vmem:[%s398 + $0x158] sm:$0xff] %vm6406, %v6193
        %6451 = vst.msk [vmem:[%s398 + $0x160] sm:$0xff] %vm6406, %v6194
        %6452 = vst.msk [vmem:[%s398 + $0x168] sm:$0xff] %vm6406, %v6195
        %6453 = vst.msk [vmem:[%s398 + $0x170] sm:$0xff] %vm6406, %v6196
        %6454 = vst.msk [vmem:[%s398 + $0x178] sm:$0xff] %vm6406, %v6197
        %6455 = vst.msk [vmem:[%s398 + $0x180] sm:$0xff] %vm6406, %v6198
        %6456 = vst.msk [vmem:[%s398 + $0x188] sm:$0xff] %vm6406, %v6199
        %6457 = vst.msk [vmem:[%s398 + $0x190] sm:$0xff] %vm6406, %v6200
        %6458 = vst.msk [vmem:[%s398 + $0x198] sm:$0xff] %vm6406, %v6201
        %6459 = vst.msk [vmem:[%s398 + $0x1a0] sm:$0xff] %vm6406, %v6202
        %6460 = vst.msk [vmem:[%s398 + $0x1a8] sm:$0xff] %vm6406, %v6203
        %6461 = vst.msk [vmem:[%s398 + $0x1b0] sm:$0xff] %vm6406, %v6204
        %6462 = vst.msk [vmem:[%s398 + $0x1b8] sm:$0xff] %vm6406, %v6205
        %6463 = vst.msk [vmem:[%s398 + $0x1c0] sm:$0xff] %vm6406, %v6206
        %6464 = vst.msk [vmem:[%s398 + $0x1c8] sm:$0xff] %vm6406, %v6207
        %6465 = vst.msk [vmem:[%s398 + $0x1d0] sm:$0xff] %vm6406, %v6208
        %6466 = vst.msk [vmem:[%s398 + $0x1d8] sm:$0xff] %vm6406, %v6209
        %6467 = vst.msk [vmem:[%s398 + $0x1e0] sm:$0xff] %vm6406, %v6210
        %6468 = vst.msk [vmem:[%s398 + $0x1e8] sm:$0xff] %vm6406, %v6211
        %6469 = vst.msk [vmem:[%s398 + $0x1f0] sm:$0xff] %vm6406, %v6212
        %6470 = vst.msk [vmem:[%s398 + $0x1f8] sm:$0xff] %vm6406, %v6213
        %6471 = vst.msk [vmem:[%s398 + $0x200] sm:$0xff] %vm6406, %v6214
        %6472 = vst.msk [vmem:[%s398 + $0x208] sm:$0xff] %vm6406, %v6215
        %6473 = vst.msk [vmem:[%s398 + $0x210] sm:$0xff] %vm6406, %v6216
        %6474 = vst.msk [vmem:[%s398 + $0x218] sm:$0xff] %vm6406, %v6217
        %6475 = vst.msk [vmem:[%s398 + $0x220] sm:$0xff] %vm6406, %v6218
        %6476 = vst.msk [vmem:[%s398 + $0x228] sm:$0xff] %vm6406, %v6219
        %6477 = vst.msk [vmem:[%s398 + $0x230] sm:$0xff] %vm6406, %v6220
        %6478 = vst.msk [vmem:[%s398 + $0x238] sm:$0xff] %vm6406, %v6221
        %6479 = vst.msk [vmem:[%s398 + $0x240] sm:$0xff] %vm6406, %v6222
        %6480 = vst.msk [vmem:[%s398 + $0x248] sm:$0xff] %vm6406, %v6223
        %6481 = vst.msk [vmem:[%s398 + $0x250] sm:$0xff] %vm6406, %v6224
        %6482 = vst.msk [vmem:[%s398 + $0x258] sm:$0xff] %vm6406, %v6225
        %6483 = vst.msk [vmem:[%s398 + $0x260] sm:$0xff] %vm6406, %v6226
        %6484 = vst.msk [vmem:[%s398 + $0x268] sm:$0xff] %vm6406, %v6227
        %6485 = vst.msk [vmem:[%s398 + $0x270] sm:$0xff] %vm6406, %v6228
        %6486 = vst.msk [vmem:[%s398 + $0x278] sm:$0xff] %vm6406, %v6229
        %6487 = vst.msk [vmem:[%s398 + $0x280] sm:$0xff] %vm6406, %v6230
        %6488 = vst.msk [vmem:[%s398 + $0x288] sm:$0xff] %vm6406, %v6231
        %6489 = vst.msk [vmem:[%s398 + $0x290] sm:$0xff] %vm6406, %v6232
        %6490 = vst.msk [vmem:[%s398 + $0x298] sm:$0xff] %vm6406, %v6233
        %6491 = vst.msk [vmem:[%s398 + $0x2a0] sm:$0xff] %vm6406, %v6234
        %6492 = vst.msk [vmem:[%s398 + $0x2a8] sm:$0xff] %vm6406, %v6235
        %6493 = vst.msk [vmem:[%s398 + $0x2b0] sm:$0xff] %vm6406, %v6236
        %6494 = vst.msk [vmem:[%s398 + $0x2b8] sm:$0xff] %vm6406, %v6237
        %6495 = vst.msk [vmem:[%s398 + $0x2c0] sm:$0xff] %vm6406, %v6238
        %6496 = vst.msk [vmem:[%s398 + $0x2c8] sm:$0xff] %vm6406, %v6239
        %6497 = vst.msk [vmem:[%s398 + $0x2d0] sm:$0xff] %vm6406, %v6240
        %6498 = vst.msk [vmem:[%s398 + $0x2d8] sm:$0xff] %vm6406, %v6241
        %6499 = vst.msk [vmem:[%s398 + $0x2e0] sm:$0xff] %vm6406, %v6242
        %6500 = vst.msk [vmem:[%s398 + $0x2e8] sm:$0xff] %vm6406, %v6243
        %6501 = vst.msk [vmem:[%s398 + $0x2f0] sm:$0xff] %vm6406, %v6244
        %6502 = vst.msk [vmem:[%s398 + $0x2f8] sm:$0xff] %vm6406, %v6245
        %6503 = vst.msk [vmem:[%s398 + $0x300] sm:$0xff] %vm6406, %v6246
        %6504 = vst.msk [vmem:[%s398 + $0x308] sm:$0xff] %vm6406, %v6247
        %6505 = vst.msk [vmem:[%s398 + $0x310] sm:$0xff] %vm6406, %v6248
        %6506 = vst.msk [vmem:[%s398 + $0x318] sm:$0xff] %vm6406, %v6249
        %6507 = vst.msk [vmem:[%s398 + $0x320] sm:$0xff] %vm6406, %v6250
        %6508 = vst.msk [vmem:[%s398 + $0x328] sm:$0xff] %vm6406, %v6251
        %6509 = vst.msk [vmem:[%s398 + $0x330] sm:$0xff] %vm6406, %v6252
        %6510 = vst.msk [vmem:[%s398 + $0x338] sm:$0xff] %vm6406, %v6253
        %6511 = vst.msk [vmem:[%s398 + $0x340] sm:$0xff] %vm6406, %v6254
        %6512 = vst.msk [vmem:[%s398 + $0x348] sm:$0xff] %vm6406, %v6255
        %6513 = vst.msk [vmem:[%s398 + $0x350] sm:$0xff] %vm6406, %v6256
        %6514 = vst.msk [vmem:[%s398 + $0x358] sm:$0xff] %vm6406, %v6257
        %6515 = vst.msk [vmem:[%s398 + $0x360] sm:$0xff] %vm6406, %v6258
        %6516 = vst.msk [vmem:[%s398 + $0x368] sm:$0xff] %vm6406, %v6259
        %6517 = vst.msk [vmem:[%s398 + $0x370] sm:$0xff] %vm6406, %v6260
        %6518 = vst.msk [vmem:[%s398 + $0x378] sm:$0xff] %vm6406, %v6261
        %6519 = vst.msk [vmem:[%s398 + $0x380] sm:$0xff] %vm6406, %v6262
        %6520 = vst.msk [vmem:[%s398 + $0x388] sm:$0xff] %vm6406, %v6263
        %6521 = vst.msk [vmem:[%s398 + $0x390] sm:$0xff] %vm6406, %v6264
        %6522 = vst.msk [vmem:[%s398 + $0x398] sm:$0xff] %vm6406, %v6265
        %6523 = vst.msk [vmem:[%s398 + $0x3a0] sm:$0xff] %vm6406, %v6266
        %6524 = vst.msk [vmem:[%s398 + $0x3a8] sm:$0xff] %vm6406, %v6267
        %6525 = vst.msk [vmem:[%s398 + $0x3b0] sm:$0xff] %vm6406, %v6268
        %6526 = vst.msk [vmem:[%s398 + $0x3b8] sm:$0xff] %vm6406, %v6269
        %6527 = vst.msk [vmem:[%s398 + $0x3c0] sm:$0xff] %vm6406, %v6270
        %6528 = vst.msk [vmem:[%s398 + $0x3c8] sm:$0xff] %vm6406, %v6271
        %6529 = vst.msk [vmem:[%s398 + $0x3d0] sm:$0xff] %vm6406, %v6272
        %6530 = vst.msk [vmem:[%s398 + $0x3d8] sm:$0xff] %vm6406, %v6273
        %6531 = vst.msk [vmem:[%s398 + $0x3e0] sm:$0xff] %vm6406, %v6274
        %6532 = vst.msk [vmem:[%s398 + $0x3e8] sm:$0xff] %vm6406, %v6275
        %6533 = vst.msk [vmem:[%s398 + $0x3f0] sm:$0xff] %vm6406, %v6276
        %6534 = vst.msk [vmem:[%s398 + $0x3f8] sm:$0xff] %vm6406, %v6277
        %6535 = vst.msk [vmem:[%s398 + $0x400] sm:$0xff] %vm6406, %v6278
        %6536 = vst.msk [vmem:[%s398 + $0x408] sm:$0xff] %vm6406, %v6279
        %6537 = vst.msk [vmem:[%s398 + $0x410] sm:$0xff] %vm6406, %v6280
        %6538 = vst.msk [vmem:[%s398 + $0x418] sm:$0xff] %vm6406, %v6281
        %6539 = vst.msk [vmem:[%s398 + $0x420] sm:$0xff] %vm6406, %v6282
        %6540 = vst.msk [vmem:[%s398 + $0x428] sm:$0xff] %vm6406, %v6283
        %6541 = vst.msk [vmem:[%s398 + $0x430] sm:$0xff] %vm6406, %v6284
        %6542 = vst.msk [vmem:[%s398 + $0x438] sm:$0xff] %vm6406, %v6285
        %6543 = vst.msk [vmem:[%s398 + $0x440] sm:$0xff] %vm6406, %v6286
        %6544 = vst.msk [vmem:[%s398 + $0x448] sm:$0xff] %vm6406, %v6287
        %6545 = vst.msk [vmem:[%s398 + $0x450] sm:$0xff] %vm6406, %v6288
        %6546 = vst.msk [vmem:[%s398 + $0x458] sm:$0xff] %vm6406, %v6289
        %6547 = vst.msk [vmem:[%s398 + $0x460] sm:$0xff] %vm6406, %v6290
        %6548 = vst.msk [vmem:[%s398 + $0x468] sm:$0xff] %vm6406, %v6291
        %6549 = vst.msk [vmem:[%s398 + $0x470] sm:$0xff] %vm6406, %v6292
        %6550 = vst.msk [vmem:[%s398 + $0x478] sm:$0xff] %vm6406, %v6293
        %6551 = vst.msk [vmem:[%s398 + $0x480] sm:$0xff] %vm6406, %v6294
        %6552 = vst.msk [vmem:[%s398 + $0x488] sm:$0xff] %vm6406, %v6295
        %6553 = vst.msk [vmem:[%s398 + $0x490] sm:$0xff] %vm6406, %v6296
        %6554 = vst.msk [vmem:[%s398 + $0x498] sm:$0xff] %vm6406, %v6297
        %6555 = vst.msk [vmem:[%s398 + $0x4a0] sm:$0xff] %vm6406, %v6298
        %6556 = vst.msk [vmem:[%s398 + $0x4a8] sm:$0xff] %vm6406, %v6299
        %6557 = vst.msk [vmem:[%s398 + $0x4b0] sm:$0xff] %vm6406, %v6300
        %6558 = vst.msk [vmem:[%s398 + $0x4b8] sm:$0xff] %vm6406, %v6301
        %6559 = vst.msk [vmem:[%s398 + $0x4c0] sm:$0xff] %vm6406, %v6302
        %6560 = vst.msk [vmem:[%s398 + $0x4c8] sm:$0xff] %vm6406, %v6303
        %6561 = vst.msk [vmem:[%s398 + $0x4d0] sm:$0xff] %vm6406, %v6304
        %6562 = vst.msk [vmem:[%s398 + $0x4d8] sm:$0xff] %vm6406, %v6305
        %6563 = vst.msk [vmem:[%s398 + $0x4e0] sm:$0xff] %vm6406, %v6306
        %6564 = vst.msk [vmem:[%s398 + $0x4e8] sm:$0xff] %vm6406, %v6307
        %6565 = vst.msk [vmem:[%s398 + $0x4f0] sm:$0xff] %vm6406, %v6308
        %6566 = vst.msk [vmem:[%s398 + $0x4f8] sm:$0xff] %vm6406, %v6309
        %6567 = vst.msk [vmem:[%s398 + $0x500] sm:$0xff] %vm6406, %v6310
        %6568 = vst.msk [vmem:[%s398 + $0x508] sm:$0xff] %vm6406, %v6311
        %6569 = vst.msk [vmem:[%s398 + $0x510] sm:$0xff] %vm6406, %v6312
        %6570 = vst.msk [vmem:[%s398 + $0x518] sm:$0xff] %vm6406, %v6313
        %6571 = vst.msk [vmem:[%s398 + $0x520] sm:$0xff] %vm6406, %v6314
        %6572 = vst.msk [vmem:[%s398 + $0x528] sm:$0xff] %vm6406, %v6315
        %6573 = vst.msk [vmem:[%s398 + $0x530] sm:$0xff] %vm6406, %v6316
        %6574 = vst.msk [vmem:[%s398 + $0x538] sm:$0xff] %vm6406, %v6317
        %6575 = vst.msk [vmem:[%s398 + $0x540] sm:$0xff] %vm6406, %v6318
        %6576 = vst.msk [vmem:[%s398 + $0x548] sm:$0xff] %vm6406, %v6319
        %6577 = vst.msk [vmem:[%s398 + $0x550] sm:$0xff] %vm6406, %v6320
        %6578 = vst.msk [vmem:[%s398 + $0x558] sm:$0xff] %vm6406, %v6321
        %6579 = vst.msk [vmem:[%s398 + $0x560] sm:$0xff] %vm6406, %v6322
        %6580 = vst.msk [vmem:[%s398 + $0x568] sm:$0xff] %vm6406, %v6323
        %6581 = vst.msk [vmem:[%s398 + $0x570] sm:$0xff] %vm6406, %v6324
        %6582 = vst.msk [vmem:[%s398 + $0x578] sm:$0xff] %vm6406, %v6325
        %6583 = vst.msk [vmem:[%s398 + $0x580] sm:$0xff] %vm6406, %v6326
        %6584 = vst.msk [vmem:[%s398 + $0x588] sm:$0xff] %vm6406, %v6327
        %6585 = vst.msk [vmem:[%s398 + $0x590] sm:$0xff] %vm6406, %v6328
        %6586 = vst.msk [vmem:[%s398 + $0x598] sm:$0xff] %vm6406, %v6329
        %6587 = vst.msk [vmem:[%s398 + $0x5a0] sm:$0xff] %vm6406, %v6330
        %6588 = vst.msk [vmem:[%s398 + $0x5a8] sm:$0xff] %vm6406, %v6331
        %6589 = vst.msk [vmem:[%s398 + $0x5b0] sm:$0xff] %vm6406, %v6332
        %6590 = vst.msk [vmem:[%s398 + $0x5b8] sm:$0xff] %vm6406, %v6333
        %6591 = vst.msk [vmem:[%s398 + $0x5c0] sm:$0xff] %vm6406, %v6334
        %6592 = vst.msk [vmem:[%s398 + $0x5c8] sm:$0xff] %vm6406, %v6335
        %6593 = vst.msk [vmem:[%s398 + $0x5d0] sm:$0xff] %vm6406, %v6336
        %6594 = vst.msk [vmem:[%s398 + $0x5d8] sm:$0xff] %vm6406, %v6337
        %6595 = vst.msk [vmem:[%s398 + $0x5e0] sm:$0xff] %vm6406, %v6338
        %6596 = vst.msk [vmem:[%s398 + $0x5e8] sm:$0xff] %vm6406, %v6339
        %6597 = vst.msk [vmem:[%s398 + $0x5f0] sm:$0xff] %vm6406, %v6340
        %6598 = vst.msk [vmem:[%s398 + $0x5f8] sm:$0xff] %vm6406, %v6341
        %6599 = vst.msk [vmem:[%s398 + $0x600] sm:$0xff] %vm6406, %v6342
        %6600 = vst.msk [vmem:[%s398 + $0x608] sm:$0xff] %vm6406, %v6343
        %6601 = vst.msk [vmem:[%s398 + $0x610] sm:$0xff] %vm6406, %v6344
        %6602 = vst.msk [vmem:[%s398 + $0x618] sm:$0xff] %vm6406, %v6345
        %6603 = vst.msk [vmem:[%s398 + $0x620] sm:$0xff] %vm6406, %v6346
        %6604 = vst.msk [vmem:[%s398 + $0x628] sm:$0xff] %vm6406, %v6347
        %6605 = vst.msk [vmem:[%s398 + $0x630] sm:$0xff] %vm6406, %v6348
        %6606 = vst.msk [vmem:[%s398 + $0x638] sm:$0xff] %vm6406, %v6349
        %6607 = vst.msk [vmem:[%s398 + $0x640] sm:$0xff] %vm6406, %v6350
        %6608 = vst.msk [vmem:[%s398 + $0x648] sm:$0xff] %vm6406, %v6351
        %6609 = vst.msk [vmem:[%s398 + $0x650] sm:$0xff] %vm6406, %v6352
        %6610 = vst.msk [vmem:[%s398 + $0x658] sm:$0xff] %vm6406, %v6353
        %6611 = vst.msk [vmem:[%s398 + $0x660] sm:$0xff] %vm6406, %v6354
        %6612 = vst.msk [vmem:[%s398 + $0x668] sm:$0xff] %vm6406, %v6355
        %6613 = vst.msk [vmem:[%s398 + $0x670] sm:$0xff] %vm6406, %v6356
        %6614 = vst.msk [vmem:[%s398 + $0x678] sm:$0xff] %vm6406, %v6357
        %6615 = vst.msk [vmem:[%s398 + $0x680] sm:$0xff] %vm6406, %v6358
        %6616 = vst.msk [vmem:[%s398 + $0x688] sm:$0xff] %vm6406, %v6359
        %6617 = vst.msk [vmem:[%s398 + $0x690] sm:$0xff] %vm6406, %v6360
        %6618 = vst.msk [vmem:[%s398 + $0x698] sm:$0xff] %vm6406, %v6361
        %6619 = vst.msk [vmem:[%s398 + $0x6a0] sm:$0xff] %vm6406, %v6362
        %6620 = vst.msk [vmem:[%s398 + $0x6a8] sm:$0xff] %vm6406, %v6363
        %6621 = vst.msk [vmem:[%s398 + $0x6b0] sm:$0xff] %vm6406, %v6364
        %6622 = vst.msk [vmem:[%s398 + $0x6b8] sm:$0xff] %vm6406, %v6365
        %6623 = vst.msk [vmem:[%s398 + $0x6c0] sm:$0xff] %vm6406, %v6366
        %6624 = vst.msk [vmem:[%s398 + $0x6c8] sm:$0xff] %vm6406, %v6367
        %6625 = vst.msk [vmem:[%s398 + $0x6d0] sm:$0xff] %vm6406, %v6368
        %6626 = vst.msk [vmem:[%s398 + $0x6d8] sm:$0xff] %vm6406, %v6369
        %6627 = vst.msk [vmem:[%s398 + $0x6e0] sm:$0xff] %vm6406, %v6370
        %6628 = vst.msk [vmem:[%s398 + $0x6e8] sm:$0xff] %vm6406, %v6371
        %6629 = vst.msk [vmem:[%s398 + $0x6f0] sm:$0xff] %vm6406, %v6372
        %6630 = vst.msk [vmem:[%s398 + $0x6f8] sm:$0xff] %vm6406, %v6373
        %6631 = vst.msk [vmem:[%s398 + $0x700] sm:$0xff] %vm6406, %v6374
        %6632 = vst.msk [vmem:[%s398 + $0x708] sm:$0xff] %vm6406, %v6375
        %6633 = vst.msk [vmem:[%s398 + $0x710] sm:$0xff] %vm6406, %v6376
        %6634 = vst.msk [vmem:[%s398 + $0x718] sm:$0xff] %vm6406, %v6377
        %6635 = vst.msk [vmem:[%s398 + $0x720] sm:$0xff] %vm6406, %v6378
        %6636 = vst.msk [vmem:[%s398 + $0x728] sm:$0xff] %vm6406, %v6379
        %6637 = vst.msk [vmem:[%s398 + $0x730] sm:$0xff] %vm6406, %v6380
        %6638 = vst.msk [vmem:[%s398 + $0x738] sm:$0xff] %vm6406, %v6381
        %6639 = vst.msk [vmem:[%s398 + $0x740] sm:$0xff] %vm6406, %v6382
        %6640 = vst.msk [vmem:[%s398 + $0x748] sm:$0xff] %vm6406, %v6383
        %6641 = vst.msk [vmem:[%s398 + $0x750] sm:$0xff] %vm6406, %v6384
        %6642 = vst.msk [vmem:[%s398 + $0x758] sm:$0xff] %vm6406, %v6385
        %6643 = vst.msk [vmem:[%s398 + $0x760] sm:$0xff] %vm6406, %v6386
        %6644 = vst.msk [vmem:[%s398 + $0x768] sm:$0xff] %vm6406, %v6387
        %6645 = vst.msk [vmem:[%s398 + $0x770] sm:$0xff] %vm6406, %v6388
        %6646 = vst.msk [vmem:[%s398 + $0x778] sm:$0xff] %vm6406, %v6389
        %6647 = vst.msk [vmem:[%s398 + $0x780] sm:$0xff] %vm6406, %v6390
        %6648 = vst.msk [vmem:[%s398 + $0x788] sm:$0xff] %vm6406, %v6391
        %6649 = vst.msk [vmem:[%s398 + $0x790] sm:$0xff] %vm6406, %v6392
        %6650 = vst.msk [vmem:[%s398 + $0x798] sm:$0xff] %vm6406, %v6393
        %6651 = vst.msk [vmem:[%s398 + $0x7a0] sm:$0xff] %vm6406, %v6394
        %6652 = vst.msk [vmem:[%s398 + $0x7a8] sm:$0xff] %vm6406, %v6395
        %6653 = vst.msk [vmem:[%s398 + $0x7b0] sm:$0xff] %vm6406, %v6396
        %6654 = vst.msk [vmem:[%s398 + $0x7b8] sm:$0xff] %vm6406, %v6397
        %6655 = vst.msk [vmem:[%s398 + $0x7c0] sm:$0xff] %vm6406, %v6398
        %6656 = vst.msk [vmem:[%s398 + $0x7c8] sm:$0xff] %vm6406, %v6399
        %6657 = vst.msk [vmem:[%s398 + $0x7d0] sm:$0xff] %vm6406, %v6400
        %6658 = vst.msk [vmem:[%s398 + $0x7d8] sm:$0xff] %vm6406, %v6401
        %6659 = vst.msk [vmem:[%s398 + $0x7e0] sm:$0xff] %vm6406, %v6402
        %6660 = vst.msk [vmem:[%s398 + $0x7e8] sm:$0xff] %vm6406, %v6403
        %6661 = vst.msk [vmem:[%s398 + $0x7f0] sm:$0xff] %vm6406, %v6404
        %6662 = vst.msk [vmem:[%s398 + $0x7f8] sm:$0xff] %vm6406, %v6405
        %s6663 = sand.u32 %s177, 1
        %s6664 = scalar_lea.sflag [#allocation4], %s6663
        %s6665 = sand.u32 %s177, 1
        %s6666 = smul.addr %s6665, 2048
        %s6667 = scalar_lea.vmem [#allocation13], %s6666
        %s6668 = sand.u32 %s203, 1
        %s6669 = scalar_lea.sflag [#allocation15], %s6668
        %s6670 = sand.u32 %s203, 1
        %s6671 = smul.addr %s6670, 512
        %s6672 = scalar_lea.vmem [#allocation14], %s6671
        // Predicated region
        $region69: #{tpu_custom_call.1} parent=43 // pred_check
          %p6673 = pneg %p187
        $region70: #{tpu_custom_call.1} parent=43 // pred_check_branch
          %6675 = sbr.rel (%p6673) target = $region72
        $region71: #{tpu_custom_call.1} parent=43 // pred_region
          %s6677 = ssub.s32 32768, 32768
          %6678 = vsyncadd %s6664, %s6677
          %s6679 = smul.addr %s33, 256
          %s6680 = smul.addr %s6679, 128
          %s6681 = scalar_lea.hbm %s6, %s6680
          %s6682 = sshll.u32 %s6667, 4
          %s6683 = int_to_ptr.vmem [resolvable:$true] %s6682
          %6688 = dma.vmem_to_hbm [thread:$0]  %s6683, 32768, %s6681, %s6664, 128, 128, 8
        $region72: #{tpu_custom_call.1} parent=43 // pred_fallthru
          _
        // Predicated region
        $region73: #{tpu_custom_call.1} parent=43 // pred_check
          %p6689 = pneg %p213
        $region74: #{tpu_custom_call.1} parent=43 // pred_check_branch
          %6691 = sbr.rel (%p6689) target = $region76
        $region75: #{tpu_custom_call.1} parent=43 // pred_region
          %s6693 = ssub.s32 8192, 8192
          %6694 = vsyncadd %s6669, %s6693
          %s6695 = smul.addr %s33, 64
          %s6696 = smul.addr %s6695, 128
          %s6697 = scalar_lea.hbm %s7, %s6696
          %s6698 = sshll.u32 %s6672, 4
          %s6699 = int_to_ptr.vmem [resolvable:$true] %s6698
          %6704 = dma.vmem_to_hbm [thread:$0]  %s6699, 8192, %s6697, %s6669, 256, 256, 16
        $region76: #{tpu_custom_call.1} parent=43 // pred_fallthru
          _
      $region44: #{tpu_custom_call.1} parent=5 // pred_fallthru
        _
      %p6705 = scmp.le.s32.totalorder 2, %s28
      // Predicated region
      $region77: #{tpu_custom_call.1} parent=5 // pred_check
        %p6706 = pneg %p6705
      $region78: #{tpu_custom_call.1} parent=5 // pred_check_branch
        %6708 = sbr.rel (%p6706) target = $region80
      $region79: #{tpu_custom_call.1} parent=5 // pred_region
        %s6709 = ssub.s32 %s28, 2
        // Predicated region
        $region81: #{tpu_custom_call.1} parent=79 // pred_check
          %p6710 = pneg %p193
        $region82: #{tpu_custom_call.1} parent=79 // pred_check_branch
          %6712 = sbr.rel (%p6710) target = $region84
        $region83: #{tpu_custom_call.1} parent=79 // pred_region
          %s6713 = sand.u32 %s178, 1
          %s6714 = scalar_lea.sflag [#allocation4], %s6713
          %s6715 = sand.u32 %s178, 1
          %s6716 = smul.addr %s6715, 2048
          %s6717 = scalar_lea.vmem [#allocation13], %s6716
          %6718 = dma.done %s6714, 32768
        $region84: #{tpu_custom_call.1} parent=79 // pred_fallthru
          _
        // Predicated region
        $region85: #{tpu_custom_call.1} parent=79 // pred_check
          %p6719 = pneg %p219
        $region86: #{tpu_custom_call.1} parent=79 // pred_check_branch
          %6721 = sbr.rel (%p6719) target = $region88
        $region87: #{tpu_custom_call.1} parent=79 // pred_region
          %s6722 = sand.u32 %s204, 1
          %s6723 = scalar_lea.sflag [#allocation15], %s6722
          %s6724 = sand.u32 %s204, 1
          %s6725 = smul.addr %s6724, 512
          %s6726 = scalar_lea.vmem [#allocation14], %s6725
          %6727 = dma.done %s6723, 8192
        $region88: #{tpu_custom_call.1} parent=79 // pred_fallthru
          _
      $region80: #{tpu_custom_call.1} parent=5 // pred_fallthru
        _
    $region6: #{tpu_custom_call.1} parent=1 // loop_footer
      %s32 = sadd.s32 1, %s28
    $region7: #{tpu_custom_call.1} parent=1 // loop_footer_branch
      %27 = sbr.rel target = $region3
    $region8: #{tpu_custom_call.1} parent=1 // loop_exit
      _
    %6728 = vsyncpa [#allocation3], 1
    %s6729 = scalar_lea.sflag [#allocation3], 1
    %6730 = vsyncpa %s6729, 1
    %6731 = vsyncpa [#allocation6], 1
    %s6732 = scalar_lea.sflag [#allocation6], 1
    %6733 = vsyncpa %s6732, 1
    %6734 = vsyncpa [#allocation9], 1
    %6735 = vsyncpa [#allocation12], 1
    %6736 = vsyncpa [#allocation4], 1
    %s6737 = scalar_lea.sflag [#allocation4], 1
    %6738 = vsyncpa %s6737, 1
    %6739 = vsyncpa [#allocation15], 1
    %s6740 = scalar_lea.sflag [#allocation15], 1
    %6741 = vsyncpa %s6740, 1

</llo_original>
